<compile_context>
chip_gen: v7x
topology: tpu7x:2x2x1
jax: 0.10.0
libtpu: 0.0.40
codegen_flags: <defaults>
</compile_context>

<pallas_src>
import jax
import jax.numpy as jnp
import numpy as np
from jax import lax
from jax.experimental import pallas as pl
from jax.experimental.pallas import tpu as pltpu

EPS = 1e-5
COUT_PAD = 128      # lane-dense channel padding (multiple of 128)
TARGET_ROWS = 256   # rows per MXU dot; 256 fills the v6e/v7x MXU M dimension


# -----------------------------------------------------------------------------
# Pallas kernel: one (image, row-strip) tile of the 3x3 convolution.
#   x_ref : (1, H+2, W+2, Cin)  bf16  halo'd image, resident across the r axis
#   w_ref : (9, Cin, COUT_PAD)  bf16  per-tap weights (tap = kh*3 + kw)
#   y_ref : (1, TR, COUT_PAD)   f32   conv rows, lane-dense, no relayout
#   st_ref: (1, 2, COUT_PAD)    f32   packed BN partials [sum ; sum_sq]
# -----------------------------------------------------------------------------
def conv_stats_kernel(x_ref, w_ref, y_ref, st_ref):
    _, Hp, Wp, Cin = x_ref.shape
    W = Wp - 2
    TR = y_ref.shape[1]
    tile_h = TR // W

    r = pl.program_id(1)
    row0 = pl.multiple_of(r * tile_h, tile_h)

    # Nine shifted taps, each a contiguous VMEM slice; the (tile_h, W, Cin) ->
    # (TR, Cin) reshape is free (W % 8 == 0, lane dim unchanged).  Each tap is
    # one MXU dot accumulated in fp32 -- no patch-matrix concat, no relayout.
    acc = None
    for kh in range(3):
        for kw in range(3):
            tap = x_ref[0, pl.ds(row0 + kh, tile_h), pl.ds(kw, W), :]
            d = jnp.dot(tap.reshape(TR, Cin), w_ref[kh * 3 + kw],
                        preferred_element_type=jnp.float32)
            acc = d if acc is None else acc + d

    # Lane-dense store of the conv rows: (TR sublanes, 128 lanes), unmasked.
    y_ref[0] = acc

    # Packed, lane-dense BN partials (single small DMA per tile).
    st_ref[0] = jnp.concatenate(
        [acc.sum(axis=0, keepdims=True),
         (acc * acc).sum(axis=0, keepdims=True)], axis=0)


def conv3x3_with_stats(xp, w9, *, tile_h):
    """xp: (N, H+2, W+2, Cin) bf16 halo'd input; w9: (9, Cin, COUT_PAD) bf16.

    Returns:
      y : (N, H*W, COUT_PAD) f32  conv output (channels-last, lane-dense)
      st: (N*R, 2, COUT_PAD) f32  per-tile packed [sum; sum_sq] partials
    """
    N, Hp, Wp, Cin = xp.shape
    H, W = Hp - 2, Wp - 2
    assert H % tile_h == 0
    R = H // tile_h
    TR = tile_h * W
    assert TR % 8 == 0 and COUT_PAD % 128 == 0

    return pl.pallas_call(
        conv_stats_kernel,
        out_shape=(
            jax.ShapeDtypeStruct((N, H * W, COUT_PAD), jnp.float32),
            jax.ShapeDtypeStruct((N * R, 2, COUT_PAD), jnp.float32),
        ),
        grid_spec=pltpu.PrefetchScalarGridSpec(
            num_scalar_prefetch=0,
            grid=(N, R),
            in_specs=[
                # Whole halo'd image for batch n; block index ignores r, so it
                # stays resident in VMEM across the row-strip axis (no re-DMA).
                pl.BlockSpec((1, Hp, Wp, Cin), lambda n, r: (n, 0, 0, 0)),
                pl.BlockSpec((9, Cin, COUT_PAD), lambda n, r: (0, 0, 0)),
            ],
            out_specs=[
                pl.BlockSpec((1, TR, COUT_PAD), lambda n, r: (n, r, 0)),
                pl.BlockSpec((1, 2, COUT_PAD), lambda n, r: (n * R + r, 0, 0)),
            ],
        ),
        compiler_params=pltpu.CompilerParams(
            # No accumulator is revisited across grid steps -> both axes are
            # parallel, so v7x shards the grid across its two TensorCores.
            dimension_semantics=("parallel", "parallel"),
            # Explicit VMEM budget (re-derived for v7x's 64 MiB VMEM).
            vmem_limit_bytes=32 * 1024 * 1024,
        ),
    )(xp, w9)


def _choose_tile_h(H, W):
    """Largest divisor of H with tile_h*W <= TARGET_ROWS (MXU M target)."""
    th = max(1, min(H, max(1, TARGET_ROWS // W)))
    while H % th:
        th -= 1
    return th


# -----------------------------------------------------------------------------
# Full block: conv -> BN -> ReLU -> conv -> BN -> ReLU   (NCHW in / NCHW out)
# -----------------------------------------------------------------------------
def conv_block(x_nchw, params):
    N, Cin, H, W = x_nchw.shape
    x = jnp.transpose(x_nchw, (0, 2, 3, 1)).astype(jnp.float32)      # NHWC

    def stage(a_nhwc, w9, gamma, beta):
        n, h, w, _ = a_nhwc.shape
        cout = gamma.shape[0]
        # Halo pad + bf16 cast is the only activation prep; no im2col tensor.
        xp = jnp.pad(a_nhwc, ((0, 0), (1, 1), (1, 1), (0, 0))).astype(jnp.bfloat16)
        y, st = conv3x3_with_stats(xp, w9, tile_h=_choose_tile_h(h, w))
        # Tiny glue: reduce packed per-tile partials, hoist BN scale/shift once.
        count = n * h * w
        mean = st[:, 0, :cout].sum(0) / count
        var = jnp.maximum(st[:, 1, :cout].sum(0) / count - mean * mean, 0.0)
        scale = gamma * lax.rsqrt(var + EPS)
        shift = beta - mean * scale
        # BN + ReLU on the channels-last lane-dense layout; fuses with the next
        # stage's pad/cast (or the final transpose).
        out = jnp.maximum(y[:, :, :cout] * scale + shift, 0.0)
        return out.reshape(n, h, w, cout)

    # Conv bias is intentionally not applied: it cancels exactly through the
    # training-mode BatchNorm mean subtraction, so the block output is equal.
    h1 = stage(x, params["w1"], params["g1"], params["be1"])
    h2 = stage(h1, params["w2"], params["g2"], params["be2"])
    return jnp.transpose(h2, (0, 3, 1, 2))                            # NCHW


def prep_weights(w_oihw):
    """PyTorch (O, I, 3, 3) -> (9, I, COUT_PAD) bf16 with tap index kh*3 + kw."""
    O, I = w_oihw.shape[0], w_oihw.shape[1]
    assert O <= COUT_PAD
    w = jnp.transpose(w_oihw, (2, 3, 1, 0)).reshape(9, I, O)
    w = jnp.pad(w, ((0, 0), (0, 0), (0, COUT_PAD - O)))
    return w.astype(jnp.bfloat16)


# -----------------------------------------------------------------------------
# Pure-JAX reference with matching numerics (bf16 MXU operands, fp32 acc/BN).
# -----------------------------------------------------------------------------
def reference(x_nchw, w1_oihw, b1, w2_oihw, b2):
    def conv(x, w, b):
        y = lax.conv_general_dilated(
            x.astype(jnp.bfloat16), w.astype(jnp.bfloat16),
            window_strides=(1, 1), padding=((1, 1), (1, 1)),
            dimension_numbers=("NCHW", "OIHW", "NCHW"),
            preferred_element_type=jnp.float32)
        return y + b[None, :, None, None]

    def bn_relu(y):
        mean = y.mean(axis=(0, 2, 3), keepdims=True)
        var = y.var(axis=(0, 2, 3), keepdims=True)       # biased (BN training)
        return jnp.maximum((y - mean) / jnp.sqrt(var + EPS), 0.0)  # gamma=1, beta=0

    h = bn_relu(conv(x_nchw, w1_oihw, b1))
    return bn_relu(conv(h, w2_oihw, b2))


if __name__ == "__main__":
    key = jax.random.PRNGKey(0)
    k_x, k_w1, k_b1, k_w2, k_b2 = jax.random.split(key, 5)

    N, Cin, Cout, H, W = 2, 4, 8, 16, 16
    x = jax.random.normal(k_x, (N, Cin, H, W), dtype=jnp.float32)

    w1_oihw = 0.1 * jax.random.normal(k_w1, (Cout, Cin, 3, 3), dtype=jnp.float32)
    b1 = 0.1 * jax.random.normal(k_b1, (Cout,), dtype=jnp.float32)
    w2_oihw = 0.1 * jax.random.normal(k_w2, (Cout, Cout, 3, 3), dtype=jnp.float32)
    b2 = 0.1 * jax.random.normal(k_b2, (Cout,), dtype=jnp.float32)

    params = {
        "w1": prep_weights(w1_oihw),
        "g1": jnp.ones((Cout,), jnp.float32), "be1": jnp.zeros((Cout,), jnp.float32),
        "w2": prep_weights(w2_oihw),
        "g2": jnp.ones((Cout,), jnp.float32), "be2": jnp.zeros((Cout,), jnp.float32),
    }

    out = jax.block_until_ready(jax.jit(conv_block)(x, params))
    ref = jax.block_until_ready(reference(x, w1_oihw, b1, w2_oihw, b2))

    assert out.shape == (N, Cout, H, W)
    np.testing.assert_allclose(np.asarray(out), np.asarray(ref), atol=2e-3, rtol=2e-3)
    print("KERNEL_OK")
</pallas_src>

<mosaic_0001>
module attributes {stable_mosaic.version = 11 : i64} {
  func.func @conv_stats_kernel(%arg0: i32, %arg1: i32, %arg2: memref<1x18x18x4xbf16, #tpu.memory_space<vmem>>, %arg3: memref<9x4x128xbf16, #tpu.memory_space<vmem>>, %arg4: memref<1x256x128xf32, #tpu.memory_space<vmem>>, %arg5: memref<1x2x128xf32, #tpu.memory_space<vmem>>) attributes {dimension_semantics = [#tpu.dimension_semantics<parallel>, #tpu.dimension_semantics<parallel>], iteration_bounds = array<i64: 2, 1>, scalar_prefetch = 0 : i64, scratch_operands = 0 : i64, tpu.core_type = #tpu.core_type<tc>, window_params = [{transform_indices = @transform_0, window_bounds = array<i64: 1, 18, 18, 4>}, {pipeline_mode = #tpu.pipeline_mode<synchronous>, transform_indices = @transform_1, window_bounds = array<i64: 9, 4, 128>}, {transform_indices = @transform_2, window_bounds = array<i64: 1, 256, 128>}, {transform_indices = @transform_3, window_bounds = array<i64: 1, 2, 128>}]} {
    %c16_i32 = arith.constant 16 : i32
    %0 = arith.muli %arg1, %c16_i32 : i32
    %1 = tpu.assume_multiple %0, 16 : i32
    %c0_i32 = arith.constant 0 : i32
    %2 = arith.addi %1, %c0_i32 : i32
    %c0 = arith.constant 0 : index
    %3 = arith.index_cast %2 : i32 to index
    %c0_0 = arith.constant 0 : index
    %c0_1 = arith.constant 0 : index
    %4 = vector.load %arg2[%c0, %3, %c0_0, %c0_1] : memref<1x18x18x4xbf16, #tpu.memory_space<vmem>>, vector<1x16x16x4xbf16>
    %5 = vector.shape_cast %4 : vector<1x16x16x4xbf16> to vector<16x16x4xbf16>
    %6 = vector.shape_cast %5 : vector<16x16x4xbf16> to vector<256x4xbf16>
    %c0_2 = arith.constant 0 : index
    %c0_3 = arith.constant 0 : index
    %c0_4 = arith.constant 0 : index
    %7 = vector.load %arg3[%c0_2, %c0_3, %c0_4] : memref<9x4x128xbf16, #tpu.memory_space<vmem>>, vector<1x4x128xbf16>
    %8 = vector.shape_cast %7 : vector<1x4x128xbf16> to vector<4x128xbf16>
    %cst = arith.constant dense<0.000000e+00> : vector<256x128xf32>
    %9 = tpu.matmul %6, %8, %cst {dimension_numbers = #tpu.dot_dimension_numbers<[1], [0], [0], [1], [0, 0, 1, 1], [], []>} : vector<256x4xbf16>, vector<4x128xbf16>, vector<256x128xf32> -> vector<256x128xf32>
    %c0_i32_5 = arith.constant 0 : i32
    %10 = arith.addi %1, %c0_i32_5 : i32
    %c0_6 = arith.constant 0 : index
    %11 = arith.index_cast %10 : i32 to index
    %c1 = arith.constant 1 : index
    %c0_7 = arith.constant 0 : index
    %12 = vector.load %arg2[%c0_6, %11, %c1, %c0_7] : memref<1x18x18x4xbf16, #tpu.memory_space<vmem>>, vector<1x16x16x4xbf16>
    %13 = vector.shape_cast %12 : vector<1x16x16x4xbf16> to vector<16x16x4xbf16>
    %14 = vector.shape_cast %13 : vector<16x16x4xbf16> to vector<256x4xbf16>
    %c1_8 = arith.constant 1 : index
    %c0_9 = arith.constant 0 : index
    %c0_10 = arith.constant 0 : index
    %15 = vector.load %arg3[%c1_8, %c0_9, %c0_10] : memref<9x4x128xbf16, #tpu.memory_space<vmem>>, vector<1x4x128xbf16>
    %16 = vector.shape_cast %15 : vector<1x4x128xbf16> to vector<4x128xbf16>
    %cst_11 = arith.constant dense<0.000000e+00> : vector<256x128xf32>
    %17 = tpu.matmul %14, %16, %cst_11 {dimension_numbers = #tpu.dot_dimension_numbers<[1], [0], [0], [1], [0, 0, 1, 1], [], []>} : vector<256x4xbf16>, vector<4x128xbf16>, vector<256x128xf32> -> vector<256x128xf32>
    %18 = arith.addf %9, %17 : vector<256x128xf32>
    %c0_i32_12 = arith.constant 0 : i32
    %19 = arith.addi %1, %c0_i32_12 : i32
    %c0_13 = arith.constant 0 : index
    %20 = arith.index_cast %19 : i32 to index
    %c2 = arith.constant 2 : index
    %c0_14 = arith.constant 0 : index
    %21 = vector.load %arg2[%c0_13, %20, %c2, %c0_14] : memref<1x18x18x4xbf16, #tpu.memory_space<vmem>>, vector<1x16x16x4xbf16>
    %22 = vector.shape_cast %21 : vector<1x16x16x4xbf16> to vector<16x16x4xbf16>
    %23 = vector.shape_cast %22 : vector<16x16x4xbf16> to vector<256x4xbf16>
    %c2_15 = arith.constant 2 : index
    %c0_16 = arith.constant 0 : index
    %c0_17 = arith.constant 0 : index
    %24 = vector.load %arg3[%c2_15, %c0_16, %c0_17] : memref<9x4x128xbf16, #tpu.memory_space<vmem>>, vector<1x4x128xbf16>
    %25 = vector.shape_cast %24 : vector<1x4x128xbf16> to vector<4x128xbf16>
    %cst_18 = arith.constant dense<0.000000e+00> : vector<256x128xf32>
    %26 = tpu.matmul %23, %25, %cst_18 {dimension_numbers = #tpu.dot_dimension_numbers<[1], [0], [0], [1], [0, 0, 1, 1], [], []>} : vector<256x4xbf16>, vector<4x128xbf16>, vector<256x128xf32> -> vector<256x128xf32>
    %27 = arith.addf %18, %26 : vector<256x128xf32>
    %c1_i32 = arith.constant 1 : i32
    %28 = arith.addi %1, %c1_i32 : i32
    %c0_19 = arith.constant 0 : index
    %29 = arith.index_cast %28 : i32 to index
    %c0_20 = arith.constant 0 : index
    %c0_21 = arith.constant 0 : index
    %30 = vector.load %arg2[%c0_19, %29, %c0_20, %c0_21] : memref<1x18x18x4xbf16, #tpu.memory_space<vmem>>, vector<1x16x16x4xbf16>
    %31 = vector.shape_cast %30 : vector<1x16x16x4xbf16> to vector<16x16x4xbf16>
    %32 = vector.shape_cast %31 : vector<16x16x4xbf16> to vector<256x4xbf16>
    %c3 = arith.constant 3 : index
    %c0_22 = arith.constant 0 : index
    %c0_23 = arith.constant 0 : index
    %33 = vector.load %arg3[%c3, %c0_22, %c0_23] : memref<9x4x128xbf16, #tpu.memory_space<vmem>>, vector<1x4x128xbf16>
    %34 = vector.shape_cast %33 : vector<1x4x128xbf16> to vector<4x128xbf16>
    %cst_24 = arith.constant dense<0.000000e+00> : vector<256x128xf32>
    %35 = tpu.matmul %32, %34, %cst_24 {dimension_numbers = #tpu.dot_dimension_numbers<[1], [0], [0], [1], [0, 0, 1, 1], [], []>} : vector<256x4xbf16>, vector<4x128xbf16>, vector<256x128xf32> -> vector<256x128xf32>
    %36 = arith.addf %27, %35 : vector<256x128xf32>
    %c1_i32_25 = arith.constant 1 : i32
    %37 = arith.addi %1, %c1_i32_25 : i32
    %c0_26 = arith.constant 0 : index
    %38 = arith.index_cast %37 : i32 to index
    %c1_27 = arith.constant 1 : index
    %c0_28 = arith.constant 0 : index
    %39 = vector.load %arg2[%c0_26, %38, %c1_27, %c0_28] : memref<1x18x18x4xbf16, #tpu.memory_space<vmem>>, vector<1x16x16x4xbf16>
    %40 = vector.shape_cast %39 : vector<1x16x16x4xbf16> to vector<16x16x4xbf16>
    %41 = vector.shape_cast %40 : vector<16x16x4xbf16> to vector<256x4xbf16>
    %c4 = arith.constant 4 : index
    %c0_29 = arith.constant 0 : index
    %c0_30 = arith.constant 0 : index
    %42 = vector.load %arg3[%c4, %c0_29, %c0_30] : memref<9x4x128xbf16, #tpu.memory_space<vmem>>, vector<1x4x128xbf16>
    %43 = vector.shape_cast %42 : vector<1x4x128xbf16> to vector<4x128xbf16>
    %cst_31 = arith.constant dense<0.000000e+00> : vector<256x128xf32>
    %44 = tpu.matmul %41, %43, %cst_31 {dimension_numbers = #tpu.dot_dimension_numbers<[1], [0], [0], [1], [0, 0, 1, 1], [], []>} : vector<256x4xbf16>, vector<4x128xbf16>, vector<256x128xf32> -> vector<256x128xf32>
    %45 = arith.addf %36, %44 : vector<256x128xf32>
    %c1_i32_32 = arith.constant 1 : i32
    %46 = arith.addi %1, %c1_i32_32 : i32
    %c0_33 = arith.constant 0 : index
    %47 = arith.index_cast %46 : i32 to index
    %c2_34 = arith.constant 2 : index
    %c0_35 = arith.constant 0 : index
    %48 = vector.load %arg2[%c0_33, %47, %c2_34, %c0_35] : memref<1x18x18x4xbf16, #tpu.memory_space<vmem>>, vector<1x16x16x4xbf16>
    %49 = vector.shape_cast %48 : vector<1x16x16x4xbf16> to vector<16x16x4xbf16>
    %50 = vector.shape_cast %49 : vector<16x16x4xbf16> to vector<256x4xbf16>
    %c5 = arith.constant 5 : index
    %c0_36 = arith.constant 0 : index
    %c0_37 = arith.constant 0 : index
    %51 = vector.load %arg3[%c5, %c0_36, %c0_37] : memref<9x4x128xbf16, #tpu.memory_space<vmem>>, vector<1x4x128xbf16>
    %52 = vector.shape_cast %51 : vector<1x4x128xbf16> to vector<4x128xbf16>
    %cst_38 = arith.constant dense<0.000000e+00> : vector<256x128xf32>
    %53 = tpu.matmul %50, %52, %cst_38 {dimension_numbers = #tpu.dot_dimension_numbers<[1], [0], [0], [1], [0, 0, 1, 1], [], []>} : vector<256x4xbf16>, vector<4x128xbf16>, vector<256x128xf32> -> vector<256x128xf32>
    %54 = arith.addf %45, %53 : vector<256x128xf32>
    %c2_i32 = arith.constant 2 : i32
    %55 = arith.addi %1, %c2_i32 : i32
    %c0_39 = arith.constant 0 : index
    %56 = arith.index_cast %55 : i32 to index
    %c0_40 = arith.constant 0 : index
    %c0_41 = arith.constant 0 : index
    %57 = vector.load %arg2[%c0_39, %56, %c0_40, %c0_41] : memref<1x18x18x4xbf16, #tpu.memory_space<vmem>>, vector<1x16x16x4xbf16>
    %58 = vector.shape_cast %57 : vector<1x16x16x4xbf16> to vector<16x16x4xbf16>
    %59 = vector.shape_cast %58 : vector<16x16x4xbf16> to vector<256x4xbf16>
    %c6 = arith.constant 6 : index
    %c0_42 = arith.constant 0 : index
    %c0_43 = arith.constant 0 : index
    %60 = vector.load %arg3[%c6, %c0_42, %c0_43] : memref<9x4x128xbf16, #tpu.memory_space<vmem>>, vector<1x4x128xbf16>
    %61 = vector.shape_cast %60 : vector<1x4x128xbf16> to vector<4x128xbf16>
    %cst_44 = arith.constant dense<0.000000e+00> : vector<256x128xf32>
    %62 = tpu.matmul %59, %61, %cst_44 {dimension_numbers = #tpu.dot_dimension_numbers<[1], [0], [0], [1], [0, 0, 1, 1], [], []>} : vector<256x4xbf16>, vector<4x128xbf16>, vector<256x128xf32> -> vector<256x128xf32>
    %63 = arith.addf %54, %62 : vector<256x128xf32>
    %c2_i32_45 = arith.constant 2 : i32
    %64 = arith.addi %1, %c2_i32_45 : i32
    %c0_46 = arith.constant 0 : index
    %65 = arith.index_cast %64 : i32 to index
    %c1_47 = arith.constant 1 : index
    %c0_48 = arith.constant 0 : index
    %66 = vector.load %arg2[%c0_46, %65, %c1_47, %c0_48] : memref<1x18x18x4xbf16, #tpu.memory_space<vmem>>, vector<1x16x16x4xbf16>
    %67 = vector.shape_cast %66 : vector<1x16x16x4xbf16> to vector<16x16x4xbf16>
    %68 = vector.shape_cast %67 : vector<16x16x4xbf16> to vector<256x4xbf16>
    %c7 = arith.constant 7 : index
    %c0_49 = arith.constant 0 : index
    %c0_50 = arith.constant 0 : index
    %69 = vector.load %arg3[%c7, %c0_49, %c0_50] : memref<9x4x128xbf16, #tpu.memory_space<vmem>>, vector<1x4x128xbf16>
    %70 = vector.shape_cast %69 : vector<1x4x128xbf16> to vector<4x128xbf16>
    %cst_51 = arith.constant dense<0.000000e+00> : vector<256x128xf32>
    %71 = tpu.matmul %68, %70, %cst_51 {dimension_numbers = #tpu.dot_dimension_numbers<[1], [0], [0], [1], [0, 0, 1, 1], [], []>} : vector<256x4xbf16>, vector<4x128xbf16>, vector<256x128xf32> -> vector<256x128xf32>
    %72 = arith.addf %63, %71 : vector<256x128xf32>
    %c2_i32_52 = arith.constant 2 : i32
    %73 = arith.addi %1, %c2_i32_52 : i32
    %c0_53 = arith.constant 0 : index
    %74 = arith.index_cast %73 : i32 to index
    %c2_54 = arith.constant 2 : index
    %c0_55 = arith.constant 0 : index
    %75 = vector.load %arg2[%c0_53, %74, %c2_54, %c0_55] : memref<1x18x18x4xbf16, #tpu.memory_space<vmem>>, vector<1x16x16x4xbf16>
    %76 = vector.shape_cast %75 : vector<1x16x16x4xbf16> to vector<16x16x4xbf16>
    %77 = vector.shape_cast %76 : vector<16x16x4xbf16> to vector<256x4xbf16>
    %c8 = arith.constant 8 : index
    %c0_56 = arith.constant 0 : index
    %c0_57 = arith.constant 0 : index
    %78 = vector.load %arg3[%c8, %c0_56, %c0_57] : memref<9x4x128xbf16, #tpu.memory_space<vmem>>, vector<1x4x128xbf16>
    %79 = vector.shape_cast %78 : vector<1x4x128xbf16> to vector<4x128xbf16>
    %cst_58 = arith.constant dense<0.000000e+00> : vector<256x128xf32>
    %80 = tpu.matmul %77, %79, %cst_58 {dimension_numbers = #tpu.dot_dimension_numbers<[1], [0], [0], [1], [0, 0, 1, 1], [], []>} : vector<256x4xbf16>, vector<4x128xbf16>, vector<256x128xf32> -> vector<256x128xf32>
    %81 = arith.addf %72, %80 : vector<256x128xf32>
    %c0_59 = arith.constant 0 : index
    %c0_60 = arith.constant 0 : index
    %c0_61 = arith.constant 0 : index
    %82 = vector.load %arg4[%c0_59, %c0_60, %c0_61] : memref<1x256x128xf32, #tpu.memory_space<vmem>>, vector<1x256x128xf32>
    %83 = vector.shape_cast %82 : vector<1x256x128xf32> to vector<256x128xf32>
    %84 = vector.shape_cast %81 : vector<256x128xf32> to vector<1x256x128xf32>
    tpu.vector_store %arg4[%c0_59, %c0_60, %c0_61], %84 {strides = array<i32>} : memref<1x256x128xf32, #tpu.memory_space<vmem>>, vector<1x256x128xf32>,
    %cst_62 = arith.constant dense<0.000000e+00> : vector<128xf32>
    %85 = vector.multi_reduction <add>, %81, %cst_62 [0] : vector<256x128xf32> to vector<128xf32>
    %86 = vector.shape_cast %85 : vector<128xf32> to vector<1x128xf32>
    %87 = arith.mulf %81, %81 : vector<256x128xf32>
    %cst_63 = arith.constant dense<0.000000e+00> : vector<128xf32>
    %88 = vector.multi_reduction <add>, %87, %cst_63 [0] : vector<256x128xf32> to vector<128xf32>
    %89 = vector.shape_cast %88 : vector<128xf32> to vector<1x128xf32>
    %90 = tpu.concatenate %86, %89 in 0 : vector<1x128xf32>, vector<1x128xf32> -> vector<2x128xf32>
    %c0_64 = arith.constant 0 : index
    %c0_65 = arith.constant 0 : index
    %c0_66 = arith.constant 0 : index
    %91 = vector.load %arg5[%c0_64, %c0_65, %c0_66] : memref<1x2x128xf32, #tpu.memory_space<vmem>>, vector<1x2x128xf32>
    %92 = vector.shape_cast %91 : vector<1x2x128xf32> to vector<2x128xf32>
    %93 = vector.shape_cast %90 : vector<2x128xf32> to vector<1x2x128xf32>
    tpu.vector_store %arg5[%c0_64, %c0_65, %c0_66], %93 {strides = array<i32>} : memref<1x2x128xf32, #tpu.memory_space<vmem>>, vector<1x2x128xf32>,
    return
  }
  func.func @transform_0(%arg0: i32, %arg1: i32) -> (i32, i32, i32, i32) {
    %c0_i32 = arith.constant 0 : i32
    %c0_i32_0 = arith.constant 0 : i32
    %c0_i32_1 = arith.constant 0 : i32
    %c0_i32_2 = arith.constant 0 : i32
    return %arg0, %c0_i32, %c0_i32_0, %c0_i32_1 : i32, i32, i32, i32
  }
  func.func @transform_1(%arg0: i32, %arg1: i32) -> (i32, i32, i32) {
    %c0_i32 = arith.constant 0 : i32
    %c0_i32_0 = arith.constant 0 : i32
    %c0_i32_1 = arith.constant 0 : i32
    %c0_i32_2 = arith.constant 0 : i32
    return %c0_i32, %c0_i32_0, %c0_i32_1 : i32, i32, i32
  }
  func.func @transform_2(%arg0: i32, %arg1: i32) -> (i32, i32, i32) {
    %c0_i32 = arith.constant 0 : i32
    %c0_i32_0 = arith.constant 0 : i32
    return %arg0, %arg1, %c0_i32 : i32, i32, i32
  }
  func.func @transform_3(%arg0: i32, %arg1: i32) -> (i32, i32, i32) {
    %c1_i32 = arith.constant 1 : i32
    %0 = arith.muli %arg0, %c1_i32 : i32
    %1 = arith.addi %0, %arg1 : i32
    %c0_i32 = arith.constant 0 : i32
    %c0_i32_0 = arith.constant 0 : i32
    %c0_i32_1 = arith.constant 0 : i32
    return %1, %c0_i32, %c0_i32_0 : i32, i32, i32
  }
}

module attributes {stable_mosaic.version = 11 : i64} {
  func.func @conv_stats_kernel(%arg0: i32, %arg1: i32, %arg2: memref<1x18x18x8xbf16, #tpu.memory_space<vmem>>, %arg3: memref<9x8x128xbf16, #tpu.memory_space<vmem>>, %arg4: memref<1x256x128xf32, #tpu.memory_space<vmem>>, %arg5: memref<1x2x128xf32, #tpu.memory_space<vmem>>) attributes {dimension_semantics = [#tpu.dimension_semantics<parallel>, #tpu.dimension_semantics<parallel>], iteration_bounds = array<i64: 2, 1>, scalar_prefetch = 0 : i64, scratch_operands = 0 : i64, tpu.core_type = #tpu.core_type<tc>, window_params = [{transform_indices = @transform_0, window_bounds = array<i64: 1, 18, 18, 8>}, {pipeline_mode = #tpu.pipeline_mode<synchronous>, transform_indices = @transform_1, window_bounds = array<i64: 9, 8, 128>}, {transform_indices = @transform_2, window_bounds = array<i64: 1, 256, 128>}, {transform_indices = @transform_3, window_bounds = array<i64: 1, 2, 128>}]} {
    %c16_i32 = arith.constant 16 : i32
    %0 = arith.muli %arg1, %c16_i32 : i32
    %1 = tpu.assume_multiple %0, 16 : i32
    %c0_i32 = arith.constant 0 : i32
    %2 = arith.addi %1, %c0_i32 : i32
    %c0 = arith.constant 0 : index
    %3 = arith.index_cast %2 : i32 to index
    %c0_0 = arith.constant 0 : index
    %c0_1 = arith.constant 0 : index
    %4 = vector.load %arg2[%c0, %3, %c0_0, %c0_1] : memref<1x18x18x8xbf16, #tpu.memory_space<vmem>>, vector<1x16x16x8xbf16>
    %5 = vector.shape_cast %4 : vector<1x16x16x8xbf16> to vector<16x16x8xbf16>
    %6 = vector.shape_cast %5 : vector<16x16x8xbf16> to vector<256x8xbf16>
    %c0_2 = arith.constant 0 : index
    %c0_3 = arith.constant 0 : index
    %c0_4 = arith.constant 0 : index
    %7 = vector.load %arg3[%c0_2, %c0_3, %c0_4] : memref<9x8x128xbf16, #tpu.memory_space<vmem>>, vector<1x8x128xbf16>
    %8 = vector.shape_cast %7 : vector<1x8x128xbf16> to vector<8x128xbf16>
    %cst = arith.constant dense<0.000000e+00> : vector<256x128xf32>
    %9 = tpu.matmul %6, %8, %cst {dimension_numbers = #tpu.dot_dimension_numbers<[1], [0], [0], [1], [0, 0, 1, 1], [], []>} : vector<256x8xbf16>, vector<8x128xbf16>, vector<256x128xf32> -> vector<256x128xf32>
    %c0_i32_5 = arith.constant 0 : i32
    %10 = arith.addi %1, %c0_i32_5 : i32
    %c0_6 = arith.constant 0 : index
    %11 = arith.index_cast %10 : i32 to index
    %c1 = arith.constant 1 : index
    %c0_7 = arith.constant 0 : index
    %12 = vector.load %arg2[%c0_6, %11, %c1, %c0_7] : memref<1x18x18x8xbf16, #tpu.memory_space<vmem>>, vector<1x16x16x8xbf16>
    %13 = vector.shape_cast %12 : vector<1x16x16x8xbf16> to vector<16x16x8xbf16>
    %14 = vector.shape_cast %13 : vector<16x16x8xbf16> to vector<256x8xbf16>
    %c1_8 = arith.constant 1 : index
    %c0_9 = arith.constant 0 : index
    %c0_10 = arith.constant 0 : index
    %15 = vector.load %arg3[%c1_8, %c0_9, %c0_10] : memref<9x8x128xbf16, #tpu.memory_space<vmem>>, vector<1x8x128xbf16>
    %16 = vector.shape_cast %15 : vector<1x8x128xbf16> to vector<8x128xbf16>
    %cst_11 = arith.constant dense<0.000000e+00> : vector<256x128xf32>
    %17 = tpu.matmul %14, %16, %cst_11 {dimension_numbers = #tpu.dot_dimension_numbers<[1], [0], [0], [1], [0, 0, 1, 1], [], []>} : vector<256x8xbf16>, vector<8x128xbf16>, vector<256x128xf32> -> vector<256x128xf32>
    %18 = arith.addf %9, %17 : vector<256x128xf32>
    %c0_i32_12 = arith.constant 0 : i32
    %19 = arith.addi %1, %c0_i32_12 : i32
    %c0_13 = arith.constant 0 : index
    %20 = arith.index_cast %19 : i32 to index
    %c2 = arith.constant 2 : index
    %c0_14 = arith.constant 0 : index
    %21 = vector.load %arg2[%c0_13, %20, %c2, %c0_14] : memref<1x18x18x8xbf16, #tpu.memory_space<vmem>>, vector<1x16x16x8xbf16>
    %22 = vector.shape_cast %21 : vector<1x16x16x8xbf16> to vector<16x16x8xbf16>
    %23 = vector.shape_cast %22 : vector<16x16x8xbf16> to vector<256x8xbf16>
    %c2_15 = arith.constant 2 : index
    %c0_16 = arith.constant 0 : index
    %c0_17 = arith.constant 0 : index
    %24 = vector.load %arg3[%c2_15, %c0_16, %c0_17] : memref<9x8x128xbf16, #tpu.memory_space<vmem>>, vector<1x8x128xbf16>
    %25 = vector.shape_cast %24 : vector<1x8x128xbf16> to vector<8x128xbf16>
    %cst_18 = arith.constant dense<0.000000e+00> : vector<256x128xf32>
    %26 = tpu.matmul %23, %25, %cst_18 {dimension_numbers = #tpu.dot_dimension_numbers<[1], [0], [0], [1], [0, 0, 1, 1], [], []>} : vector<256x8xbf16>, vector<8x128xbf16>, vector<256x128xf32> -> vector<256x128xf32>
    %27 = arith.addf %18, %26 : vector<256x128xf32>
    %c1_i32 = arith.constant 1 : i32
    %28 = arith.addi %1, %c1_i32 : i32
    %c0_19 = arith.constant 0 : index
    %29 = arith.index_cast %28 : i32 to index
    %c0_20 = arith.constant 0 : index
    %c0_21 = arith.constant 0 : index
    %30 = vector.load %arg2[%c0_19, %29, %c0_20, %c0_21] : memref<1x18x18x8xbf16, #tpu.memory_space<vmem>>, vector<1x16x16x8xbf16>
    %31 = vector.shape_cast %30 : vector<1x16x16x8xbf16> to vector<16x16x8xbf16>
    %32 = vector.shape_cast %31 : vector<16x16x8xbf16> to vector<256x8xbf16>
    %c3 = arith.constant 3 : index
    %c0_22 = arith.constant 0 : index
    %c0_23 = arith.constant 0 : index
    %33 = vector.load %arg3[%c3, %c0_22, %c0_23] : memref<9x8x128xbf16, #tpu.memory_space<vmem>>, vector<1x8x128xbf16>
    %34 = vector.shape_cast %33 : vector<1x8x128xbf16> to vector<8x128xbf16>
    %cst_24 = arith.constant dense<0.000000e+00> : vector<256x128xf32>
    %35 = tpu.matmul %32, %34, %cst_24 {dimension_numbers = #tpu.dot_dimension_numbers<[1], [0], [0], [1], [0, 0, 1, 1], [], []>} : vector<256x8xbf16>, vector<8x128xbf16>, vector<256x128xf32> -> vector<256x128xf32>
    %36 = arith.addf %27, %35 : vector<256x128xf32>
    %c1_i32_25 = arith.constant 1 : i32
    %37 = arith.addi %1, %c1_i32_25 : i32
    %c0_26 = arith.constant 0 : index
    %38 = arith.index_cast %37 : i32 to index
    %c1_27 = arith.constant 1 : index
    %c0_28 = arith.constant 0 : index
    %39 = vector.load %arg2[%c0_26, %38, %c1_27, %c0_28] : memref<1x18x18x8xbf16, #tpu.memory_space<vmem>>, vector<1x16x16x8xbf16>
    %40 = vector.shape_cast %39 : vector<1x16x16x8xbf16> to vector<16x16x8xbf16>
    %41 = vector.shape_cast %40 : vector<16x16x8xbf16> to vector<256x8xbf16>
    %c4 = arith.constant 4 : index
    %c0_29 = arith.constant 0 : index
    %c0_30 = arith.constant 0 : index
    %42 = vector.load %arg3[%c4, %c0_29, %c0_30] : memref<9x8x128xbf16, #tpu.memory_space<vmem>>, vector<1x8x128xbf16>
    %43 = vector.shape_cast %42 : vector<1x8x128xbf16> to vector<8x128xbf16>
    %cst_31 = arith.constant dense<0.000000e+00> : vector<256x128xf32>
    %44 = tpu.matmul %41, %43, %cst_31 {dimension_numbers = #tpu.dot_dimension_numbers<[1], [0], [0], [1], [0, 0, 1, 1], [], []>} : vector<256x8xbf16>, vector<8x128xbf16>, vector<256x128xf32> -> vector<256x128xf32>
    %45 = arith.addf %36, %44 : vector<256x128xf32>
    %c1_i32_32 = arith.constant 1 : i32
    %46 = arith.addi %1, %c1_i32_32 : i32
    %c0_33 = arith.constant 0 : index
    %47 = arith.index_cast %46 : i32 to index
    %c2_34 = arith.constant 2 : index
    %c0_35 = arith.constant 0 : index
    %48 = vector.load %arg2[%c0_33, %47, %c2_34, %c0_35] : memref<1x18x18x8xbf16, #tpu.memory_space<vmem>>, vector<1x16x16x8xbf16>
    %49 = vector.shape_cast %48 : vector<1x16x16x8xbf16> to vector<16x16x8xbf16>
    %50 = vector.shape_cast %49 : vector<16x16x8xbf16> to vector<256x8xbf16>
    %c5 = arith.constant 5 : index
    %c0_36 = arith.constant 0 : index
    %c0_37 = arith.constant 0 : index
    %51 = vector.load %arg3[%c5, %c0_36, %c0_37] : memref<9x8x128xbf16, #tpu.memory_space<vmem>>, vector<1x8x128xbf16>
    %52 = vector.shape_cast %51 : vector<1x8x128xbf16> to vector<8x128xbf16>
    %cst_38 = arith.constant dense<0.000000e+00> : vector<256x128xf32>
    %53 = tpu.matmul %50, %52, %cst_38 {dimension_numbers = #tpu.dot_dimension_numbers<[1], [0], [0], [1], [0, 0, 1, 1], [], []>} : vector<256x8xbf16>, vector<8x128xbf16>, vector<256x128xf32> -> vector<256x128xf32>
    %54 = arith.addf %45, %53 : vector<256x128xf32>
    %c2_i32 = arith.constant 2 : i32
    %55 = arith.addi %1, %c2_i32 : i32
    %c0_39 = arith.constant 0 : index
    %56 = arith.index_cast %55 : i32 to index
    %c0_40 = arith.constant 0 : index
    %c0_41 = arith.constant 0 : index
    %57 = vector.load %arg2[%c0_39, %56, %c0_40, %c0_41] : memref<1x18x18x8xbf16, #tpu.memory_space<vmem>>, vector<1x16x16x8xbf16>
    %58 = vector.shape_cast %57 : vector<1x16x16x8xbf16> to vector<16x16x8xbf16>
    %59 = vector.shape_cast %58 : vector<16x16x8xbf16> to vector<256x8xbf16>
    %c6 = arith.constant 6 : index
    %c0_42 = arith.constant 0 : index
    %c0_43 = arith.constant 0 : index
    %60 = vector.load %arg3[%c6, %c0_42, %c0_43] : memref<9x8x128xbf16, #tpu.memory_space<vmem>>, vector<1x8x128xbf16>
    %61 = vector.shape_cast %60 : vector<1x8x128xbf16> to vector<8x128xbf16>
    %cst_44 = arith.constant dense<0.000000e+00> : vector<256x128xf32>
    %62 = tpu.matmul %59, %61, %cst_44 {dimension_numbers = #tpu.dot_dimension_numbers<[1], [0], [0], [1], [0, 0, 1, 1], [], []>} : vector<256x8xbf16>, vector<8x128xbf16>, vector<256x128xf32> -> vector<256x128xf32>
    %63 = arith.addf %54, %62 : vector<256x128xf32>
    %c2_i32_45 = arith.constant 2 : i32
    %64 = arith.addi %1, %c2_i32_45 : i32
    %c0_46 = arith.constant 0 : index
    %65 = arith.index_cast %64 : i32 to index
    %c1_47 = arith.constant 1 : index
    %c0_48 = arith.constant 0 : index
    %66 = vector.load %arg2[%c0_46, %65, %c1_47, %c0_48] : memref<1x18x18x8xbf16, #tpu.memory_space<vmem>>, vector<1x16x16x8xbf16>
    %67 = vector.shape_cast %66 : vector<1x16x16x8xbf16> to vector<16x16x8xbf16>
    %68 = vector.shape_cast %67 : vector<16x16x8xbf16> to vector<256x8xbf16>
    %c7 = arith.constant 7 : index
    %c0_49 = arith.constant 0 : index
    %c0_50 = arith.constant 0 : index
    %69 = vector.load %arg3[%c7, %c0_49, %c0_50] : memref<9x8x128xbf16, #tpu.memory_space<vmem>>, vector<1x8x128xbf16>
    %70 = vector.shape_cast %69 : vector<1x8x128xbf16> to vector<8x128xbf16>
    %cst_51 = arith.constant dense<0.000000e+00> : vector<256x128xf32>
    %71 = tpu.matmul %68, %70, %cst_51 {dimension_numbers = #tpu.dot_dimension_numbers<[1], [0], [0], [1], [0, 0, 1, 1], [], []>} : vector<256x8xbf16>, vector<8x128xbf16>, vector<256x128xf32> -> vector<256x128xf32>
    %72 = arith.addf %63, %71 : vector<256x128xf32>
    %c2_i32_52 = arith.constant 2 : i32
    %73 = arith.addi %1, %c2_i32_52 : i32
    %c0_53 = arith.constant 0 : index
    %74 = arith.index_cast %73 : i32 to index
    %c2_54 = arith.constant 2 : index
    %c0_55 = arith.constant 0 : index
    %75 = vector.load %arg2[%c0_53, %74, %c2_54, %c0_55] : memref<1x18x18x8xbf16, #tpu.memory_space<vmem>>, vector<1x16x16x8xbf16>
    %76 = vector.shape_cast %75 : vector<1x16x16x8xbf16> to vector<16x16x8xbf16>
    %77 = vector.shape_cast %76 : vector<16x16x8xbf16> to vector<256x8xbf16>
    %c8 = arith.constant 8 : index
    %c0_56 = arith.constant 0 : index
    %c0_57 = arith.constant 0 : index
    %78 = vector.load %arg3[%c8, %c0_56, %c0_57] : memref<9x8x128xbf16, #tpu.memory_space<vmem>>, vector<1x8x128xbf16>
    %79 = vector.shape_cast %78 : vector<1x8x128xbf16> to vector<8x128xbf16>
    %cst_58 = arith.constant dense<0.000000e+00> : vector<256x128xf32>
    %80 = tpu.matmul %77, %79, %cst_58 {dimension_numbers = #tpu.dot_dimension_numbers<[1], [0], [0], [1], [0, 0, 1, 1], [], []>} : vector<256x8xbf16>, vector<8x128xbf16>, vector<256x128xf32> -> vector<256x128xf32>
    %81 = arith.addf %72, %80 : vector<256x128xf32>
    %c0_59 = arith.constant 0 : index
    %c0_60 = arith.constant 0 : index
    %c0_61 = arith.constant 0 : index
    %82 = vector.load %arg4[%c0_59, %c0_60, %c0_61] : memref<1x256x128xf32, #tpu.memory_space<vmem>>, vector<1x256x128xf32>
    %83 = vector.shape_cast %82 : vector<1x256x128xf32> to vector<256x128xf32>
    %84 = vector.shape_cast %81 : vector<256x128xf32> to vector<1x256x128xf32>
    tpu.vector_store %arg4[%c0_59, %c0_60, %c0_61], %84 {strides = array<i32>} : memref<1x256x128xf32, #tpu.memory_space<vmem>>, vector<1x256x128xf32>,
    %cst_62 = arith.constant dense<0.000000e+00> : vector<128xf32>
    %85 = vector.multi_reduction <add>, %81, %cst_62 [0] : vector<256x128xf32> to vector<128xf32>
    %86 = vector.shape_cast %85 : vector<128xf32> to vector<1x128xf32>
    %87 = arith.mulf %81, %81 : vector<256x128xf32>
    %cst_63 = arith.constant dense<0.000000e+00> : vector<128xf32>
    %88 = vector.multi_reduction <add>, %87, %cst_63 [0] : vector<256x128xf32> to vector<128xf32>
    %89 = vector.shape_cast %88 : vector<128xf32> to vector<1x128xf32>
    %90 = tpu.concatenate %86, %89 in 0 : vector<1x128xf32>, vector<1x128xf32> -> vector<2x128xf32>
    %c0_64 = arith.constant 0 : index
    %c0_65 = arith.constant 0 : index
    %c0_66 = arith.constant 0 : index
    %91 = vector.load %arg5[%c0_64, %c0_65, %c0_66] : memref<1x2x128xf32, #tpu.memory_space<vmem>>, vector<1x2x128xf32>
    %92 = vector.shape_cast %91 : vector<1x2x128xf32> to vector<2x128xf32>
    %93 = vector.shape_cast %90 : vector<2x128xf32> to vector<1x2x128xf32>
    tpu.vector_store %arg5[%c0_64, %c0_65, %c0_66], %93 {strides = array<i32>} : memref<1x2x128xf32, #tpu.memory_space<vmem>>, vector<1x2x128xf32>,
    return
  }
  func.func @transform_0(%arg0: i32, %arg1: i32) -> (i32, i32, i32, i32) {
    %c0_i32 = arith.constant 0 : i32
    %c0_i32_0 = arith.constant 0 : i32
    %c0_i32_1 = arith.constant 0 : i32
    %c0_i32_2 = arith.constant 0 : i32
    return %arg0, %c0_i32, %c0_i32_0, %c0_i32_1 : i32, i32, i32, i32
  }
  func.func @transform_1(%arg0: i32, %arg1: i32) -> (i32, i32, i32) {
    %c0_i32 = arith.constant 0 : i32
    %c0_i32_0 = arith.constant 0 : i32
    %c0_i32_1 = arith.constant 0 : i32
    %c0_i32_2 = arith.constant 0 : i32
    return %c0_i32, %c0_i32_0, %c0_i32_1 : i32, i32, i32
  }
  func.func @transform_2(%arg0: i32, %arg1: i32) -> (i32, i32, i32) {
    %c0_i32 = arith.constant 0 : i32
    %c0_i32_0 = arith.constant 0 : i32
    return %arg0, %arg1, %c0_i32 : i32, i32, i32
  }
  func.func @transform_3(%arg0: i32, %arg1: i32) -> (i32, i32, i32) {
    %c1_i32 = arith.constant 1 : i32
    %0 = arith.muli %arg0, %c1_i32 : i32
    %1 = arith.addi %0, %arg1 : i32
    %c0_i32 = arith.constant 0 : i32
    %c0_i32_0 = arith.constant 0 : i32
    %c0_i32_1 = arith.constant 0 : i32
    return %1, %c0_i32, %c0_i32_0 : i32, i32, i32
  }
}

</mosaic_0001>

<llo_original>
// kernel: conv_block.2
$region0: #{conv_block.2}
  #allocation0 [shape = 'u32[]', space=smem, size = 0x4, offset = 0x4, fixed_abs, tag = 'smem constant byte address 0x4 - core index']
  #allocation1 [shape = 'u32[144,128]{1,0:T(1,128)}', space=vmem, size = 0x12000, scoped, tag = 'internal scratch']
  %s0 = inlined_call_operand.vmem [shape: bf16[2,18,18,4], index: 0, kind: input, shape index: {}]
  %s1 = inlined_call_operand.vmem [shape: bf16[9,4,128], index: 1, kind: input, shape index: {}]
  %s2 = inlined_call_operand.vmem [shape: f32[2,256,128], index: 2, kind: output, shape index: {0}]
  %s3 = inlined_call_operand.vmem [shape: f32[2,2,128], index: 3, kind: output, shape index: {1}]
  %4 = xla_tuple %s2, %s3
  %s5 = sld [smem:[#allocation0]]
  $region49: #{conv_block.2} parent=0
    _
  %s7 = ssub.s32 1, %s5
  %s8 = scalar_select 0, %s7, %s5
  loop: start=0, step=1, limit=4
  $region2: #{conv_block.2} parent=0 // loop_pre_header
    _
  $region3: #{conv_block.2} parent=0 // loop_header
    %s10 = sphi 0, %s14
    %p11 = scmp.ge.s32.totalorder %s10, 4
    %s17 = sphi 0, %s29
    %s18 = sphi 0, %s25
    %s19 = sphi 0, %s17
    %s20 = sphi 0, %s18
    %s21 = sphi 0, %s19
    %s22 = sphi 0, %s20
    %s32 = sphi 0, %s34
    %s35 = sphi 0, %s32
    %s36 = sphi 0, %s35
    %s52 = sphi 0, %s36
    %s56 = sphi 0, %s56
    %s58 = sphi 0, %s56
    %s59 = sphi 0, %s58
    %s73 = sphi 0, %s59
    %s81 = sphi 0, %s83
    %s84 = sphi 0, %s81
    %s85 = sphi 0, %s84
    %s101 = sphi 0, %s85
    %s109 = sphi 0, %s111
    %s112 = sphi 0, %s109
    %s113 = sphi 0, %s112
    %s129 = sphi 0, %s113
  $region4: #{conv_block.2} parent=0 // loop_header_branch
    %13 = sbr.rel (%p11) target = $region8
  $region5: #{conv_block.2} parent=0 // loop_body
    %s15 = ssub.s32 %s10, 1
    %s16 = ssub.s32 %s10, 2
    %s23 = sadd.s32 1, %s18
    %p24 = scmp.ge.s32.totalorder %s23, 1
    %s25 = scalar_select %p24, 0, %s23
    %s26 = sadd.s32 1, %s17
    %s27 = scalar_select %p24, %s26, %s17
    %p28 = scmp.ge.s32.totalorder %s27, 2
    %s29 = scalar_select %p28, 0, %s27
    %s30 = ssub.s32 %s17, %s29
    %p31 = scmp.eq.s32.totalorder %s30, 0
    %s33 = sadd.s32 %s32, 1
    %s34 = scalar_select %p31, %s32, %s33
    %p37 = pneg %p31
    %p38 = scmp.eq.s32.totalorder %s10, 1
    %p39 = por %p37, %p38
    %p40 = scmp.ne.s32.totalorder %s32, %s35
    %p41 = scmp.eq.s32.totalorder %s10, 0
    %p42 = por %p40, %p41
    %p43 = scmp.ne.s32.totalorder %s32, %s35
    %p44 = scmp.eq.s32.totalorder %s15, 1
    %p45 = por %p43, %p44
    %p46 = scmp.ne.s32.totalorder %s35, %s36
    %p47 = scmp.eq.s32.totalorder %s15, 0
    %p48 = por %p46, %p47
    %p49 = scmp.ne.s32.totalorder %s35, %s36
    %p50 = scmp.eq.s32.totalorder %s16, 1
    %p51 = por %p49, %p50
    %p53 = scmp.ne.s32.totalorder %s36, %s52
    %p54 = scmp.eq.s32.totalorder %s16, 0
    %p55 = por %p53, %p54
    %s57 = sadd.s32 %s56, 1
    %p60 = scmp.eq.s32.totalorder %s10, 1
    %p61 = scmp.ne.s32.totalorder %s56, %s58
    %p62 = scmp.eq.s32.totalorder %s10, 0
    %p63 = por %p61, %p62
    %p64 = scmp.ne.s32.totalorder %s56, %s58
    %p65 = scmp.eq.s32.totalorder %s15, 1
    %p66 = por %p64, %p65
    %p67 = scmp.ne.s32.totalorder %s58, %s59
    %p68 = scmp.eq.s32.totalorder %s15, 0
    %p69 = por %p67, %p68
    %p70 = scmp.ne.s32.totalorder %s58, %s59
    %p71 = scmp.eq.s32.totalorder %s16, 1
    %p72 = por %p70, %p71
    %p74 = scmp.ne.s32.totalorder %s59, %s73
    %p75 = scmp.eq.s32.totalorder %s16, 0
    %p76 = por %p74, %p75
    %s77 = ssub.s32 %s17, %s29
    %s78 = ssub.s32 %s18, %s25
    %s79 = sor.u32 %s77, %s78
    %p80 = scmp.eq.s32.totalorder %s79, 0
    %s82 = sadd.s32 %s81, 1
    %s83 = scalar_select %p80, %s81, %s82
    %p86 = pneg %p80
    %p87 = scmp.eq.s32.totalorder %s10, 1
    %p88 = por %p86, %p87
    %p89 = scmp.ne.s32.totalorder %s81, %s84
    %p90 = scmp.eq.s32.totalorder %s10, 0
    %p91 = por %p89, %p90
    %p92 = scmp.ne.s32.totalorder %s81, %s84
    %p93 = scmp.eq.s32.totalorder %s15, 1
    %p94 = por %p92, %p93
    %p95 = scmp.ne.s32.totalorder %s84, %s85
    %p96 = scmp.eq.s32.totalorder %s15, 0
    %p97 = por %p95, %p96
    %p98 = scmp.ne.s32.totalorder %s84, %s85
    %p99 = scmp.eq.s32.totalorder %s16, 1
    %p100 = por %p98, %p99
    %p102 = scmp.ne.s32.totalorder %s85, %s101
    %p103 = scmp.eq.s32.totalorder %s16, 0
    %p104 = por %p102, %p103
    %s105 = sadd.s32 %s17, %s18
    %s106 = sadd.s32 %s29, %s25
    %s107 = ssub.s32 %s105, %s106
    %p108 = scmp.eq.s32.totalorder %s107, 0
    %s110 = sadd.s32 %s109, 1
    %s111 = scalar_select %p108, %s109, %s110
    %p114 = pneg %p108
    %p115 = scmp.eq.s32.totalorder %s10, 1
    %p116 = por %p114, %p115
    %p117 = scmp.ne.s32.totalorder %s109, %s112
    %p118 = scmp.eq.s32.totalorder %s10, 0
    %p119 = por %p117, %p118
    %p120 = scmp.ne.s32.totalorder %s109, %s112
    %p121 = scmp.eq.s32.totalorder %s15, 1
    %p122 = por %p120, %p121
    %p123 = scmp.ne.s32.totalorder %s112, %s113
    %p124 = scmp.eq.s32.totalorder %s15, 0
    %p125 = por %p123, %p124
    %p126 = scmp.ne.s32.totalorder %s112, %s113
    %p127 = scmp.eq.s32.totalorder %s16, 1
    %p128 = por %p126, %p127
    %p130 = scmp.ne.s32.totalorder %s113, %s129
    %p131 = scmp.eq.s32.totalorder %s16, 0
    %p132 = por %p130, %p131
    %p133 = scmp.le.s32.totalorder 1, %s10
    %p134 = scmp.lt.s32.totalorder %s10, 3
    %p135 = pnand %p133, %p134
    %p136 = pneg %p135
    // Predicated region
    $region9: #{conv_block.2} parent=5 // pred_check
      _
    $region10: #{conv_block.2} parent=5 // pred_check_branch
      %138 = sbr.rel (%p135) target = $region12
    $region11: #{conv_block.2} parent=5 // pred_region
      %s139 = ssub.s32 %s10, 1
      // Predicated region
      $region13: #{conv_block.2} parent=11 // pred_check
        %p140 = pneg %p69
      $region14: #{conv_block.2} parent=11 // pred_check_branch
        %142 = sbr.rel (%p140) target = $region16
      $region15: #{conv_block.2} parent=11 // pred_region
        _
      $region16: #{conv_block.2} parent=11 // pred_fallthru
        _
    $region12: #{conv_block.2} parent=5 // pred_fallthru
      _
    %p143 = scmp.lt.s32.totalorder %s10, 2
    // Predicated region
    $region17: #{conv_block.2} parent=5 // pred_check
      %p144 = pneg %p143
    $region18: #{conv_block.2} parent=5 // pred_check_branch
      %146 = sbr.rel (%p144) target = $region20
    $region19: #{conv_block.2} parent=5 // pred_region
      // Predicated region
      $region21: #{conv_block.2} parent=19 // pred_check
        %p147 = pneg %p42
      $region22: #{conv_block.2} parent=19 // pred_check_branch
        %149 = sbr.rel (%p147) target = $region24
      $region23: #{conv_block.2} parent=19 // pred_region
        %p150 = scmp.lt.s32.totalorder %s17, 1
        %s151 = scalar_select %p150, %s17, 1
        %s152 = smul.addr %s151, 54
        %s153 = smul.addr %s152, 4
        %s154 = scalar_lea.vmem %s0, %s153
      $region24: #{conv_block.2} parent=19 // pred_fallthru
        _
    $region20: #{conv_block.2} parent=5 // pred_fallthru
      _
    %p155 = scmp.le.s32.totalorder 1, %s10
    %p156 = scmp.lt.s32.totalorder %s10, 3
    %p157 = pnand %p155, %p156
    %p158 = pneg %p157
    // Predicated region
    $region25: #{conv_block.2} parent=5 // pred_check
      _
    $region26: #{conv_block.2} parent=5 // pred_check_branch
      %160 = sbr.rel (%p157) target = $region28
    $region27: #{conv_block.2} parent=5 // pred_region
      %s161 = ssub.s32 %s10, 1
      %p162 = scmp.lt.s32.totalorder %s19, 1
      %s163 = scalar_select %p162, %s19, 1
      %s164 = smul.addr %s163, 54
      %s165 = smul.addr %s164, 4
      %s166 = scalar_lea.vmem %s0, %s165
      %p167 = pneg %p48
      %p168 = pneg %p45
      %p169 = pneg %p69
      %p170 = pneg %p66
      %p171 = pneg %p97
      %p172 = pneg %p94
      %s173 = smul.u32 32, %s20
      %p174 = scmp.lt.s32.totalorder %s19, 1
      %s175 = scalar_select %p174, %s19, 1
      %p176 = scmp.lt.s32.totalorder %s173, 31
      %s177 = scalar_select %p176, %s173, 31
      %s178 = smul.addr %s175, 32
      %s179 = sadd.s32 %s177, %s178
      %s180 = smul.addr %s179, 8
      %s181 = scalar_lea.vmem %s2, %s180
      %p182 = pneg %p125
      %p183 = pneg %p122
      %s184 = sadd.s32 %s19, %s20
      %p185 = scmp.lt.s32.totalorder %s184, 1
      %s186 = scalar_select %p185, %s184, 1
      %s187 = smul.addr %s186, 2
      %s188 = scalar_lea.vmem %s3, %s187
      %p189 = scmp.lt.s32.totalorder %s19, 1
      %s190 = scalar_select %p189, %s19, 1
      %s191 = smul.addr %s190, 54
      %s192 = smul.addr %s191, 4
      %s193 = scalar_lea.vmem %s0, %s192
      %s194 = smul.u32 32, %s20
      %p195 = scmp.lt.s32.totalorder %s19, 1
      %s196 = scalar_select %p195, %s19, 1
      %p197 = scmp.lt.s32.totalorder %s194, 31
      %s198 = scalar_select %p197, %s194, 31
      %s199 = smul.addr %s196, 32
      %s200 = sadd.s32 %s198, %s199
      %s201 = smul.addr %s200, 8
      %s202 = scalar_lea.vmem %s2, %s201
      %s203 = smul.u32 32, %s20
      %s204 = sadd.s32 %s19, %s20
      %p205 = scmp.lt.s32.totalorder %s204, 1
      %s206 = scalar_select %p205, %s204, 1
      %s207 = smul.addr %s206, 2
      %s208 = scalar_lea.vmem %s3, %s207
      %s209 = sadd.s32 %s19, %s20
      %s211 = smul.u32 %s20, 16
      %s212 = smul.u32 %s211, 3
      %s213 = smul.addr %s212, 4
      %s214 = scalar_lea.vmem %s193, %s213
      %v215 = vld [vmem:[%s214] sm:$0xf]
      %v216 = vld [vmem:[%s214 + $0x4] sm:$0xf]
      %v217 = vld [vmem:[%s214 + $0xc] sm:$0xf]
      %v218 = vld [vmem:[%s214 + $0x10] sm:$0xf]
      %v219 = vld [vmem:[%s214 + $0x18] sm:$0xf]
      %v220 = vld [vmem:[%s214 + $0x1c] sm:$0xf]
      %v221 = vld [vmem:[%s214 + $0x24] sm:$0xf]
      %v222 = vld [vmem:[%s214 + $0x28] sm:$0xf]
      %v223 = vld [vmem:[%s214 + $0x30] sm:$0xf]
      %v224 = vld [vmem:[%s214 + $0x34] sm:$0xf]
      %v225 = vld [vmem:[%s214 + $0x3c] sm:$0xf]
      %v226 = vld [vmem:[%s214 + $0x40] sm:$0xf]
      %v227 = vld [vmem:[%s214 + $0x48] sm:$0xf]
      %v228 = vld [vmem:[%s214 + $0x4c] sm:$0xf]
      %v229 = vld [vmem:[%s214 + $0x54] sm:$0xf]
      %v230 = vld [vmem:[%s214 + $0x58] sm:$0xf]
      %v231 = vld [vmem:[%s214 + $0x60] sm:$0xf]
      %v232 = vld [vmem:[%s214 + $0x64] sm:$0xf]
      %v233 = vld [vmem:[%s214 + $0x6c] sm:$0xf]
      %v234 = vld [vmem:[%s214 + $0x70] sm:$0xf]
      %v235 = vld [vmem:[%s214 + $0x78] sm:$0xf]
      %v236 = vld [vmem:[%s214 + $0x7c] sm:$0xf]
      %v237 = vld [vmem:[%s214 + $0x84] sm:$0xf]
      %v238 = vld [vmem:[%s214 + $0x88] sm:$0xf]
      %v239 = vld [vmem:[%s214 + $0x90] sm:$0xf]
      %v240 = vld [vmem:[%s214 + $0x94] sm:$0xf]
      %v241 = vld [vmem:[%s214 + $0x9c] sm:$0xf]
      %v242 = vld [vmem:[%s214 + $0xa0] sm:$0xf]
      %v243 = vld [vmem:[%s214 + $0xa8] sm:$0xf]
      %v244 = vld [vmem:[%s214 + $0xac] sm:$0xf]
      %v245 = vld [vmem:[%s214 + $0xb4] sm:$0xf]
      %v246 = vld [vmem:[%s214 + $0xb8] sm:$0xf]
      %v247 = vld [vmem:[%s1] sm:$0x3]
      %v248 = vld [vmem:[%s214 + $0x8] sm:$0x1]
      %v249 = vld [vmem:[%s214 + $0x14] sm:$0x1]
      %v250 = vld [vmem:[%s214 + $0x20] sm:$0x1]
      %v251 = vld [vmem:[%s214 + $0x2c] sm:$0x1]
      %v252 = vld [vmem:[%s214 + $0x38] sm:$0x1]
      %v253 = vld [vmem:[%s214 + $0x44] sm:$0x1]
      %v254 = vld [vmem:[%s214 + $0x50] sm:$0x1]
      %v255 = vld [vmem:[%s214 + $0x5c] sm:$0x1]
      %v256 = vld [vmem:[%s214 + $0x68] sm:$0x1]
      %v257 = vld [vmem:[%s214 + $0x74] sm:$0x1]
      %v258 = vld [vmem:[%s214 + $0x80] sm:$0x1]
      %v259 = vld [vmem:[%s214 + $0x8c] sm:$0x1]
      %v260 = vld [vmem:[%s214 + $0x98] sm:$0x1]
      %v261 = vld [vmem:[%s214 + $0xa4] sm:$0x1]
      %v262 = vld [vmem:[%s214 + $0xb0] sm:$0x1]
      %v263 = vld [vmem:[%s214 + $0xbc] sm:$0x1]
      %vm264 = vsmask.f32 3328
      %vm265 = vsmask.f32 7440
      %vm266 = vmor %vm264, %vm265
      %v268 = vshrl.u32 %v215, 16
      %v270 = vrot.slane %v268, 4
      %v271 = vshll.u32 %v215, 16
      %v273 = vrot.slane %v271, 5
      %v274 = vor.u32 %v270, %v273
      %v275 = vrot.slane %v274, 4
      %v277 = vshll.u32 %v216, 16
      %v279 = vrot.slane %v277, 5
      %v280 = vsel %vm266, %v275, %v279
      %v281 = vshrl.u32 %v216, 16
      %v283 = vrot.slane %v281, 4
      %v284 = vor.u32 %v283, %v279
      %v285 = vrot.slane %v284, 4
      %v287 = vshll.u32 %v248, 16
      %v289 = vrot.slane %v287, 5
      %v290 = vsel %vm266, %v285, %v289
      %v292 = vshrl.u32 %v217, 16
      %v294 = vrot.slane %v292, 4
      %v295 = vshll.u32 %v217, 16
      %v297 = vrot.slane %v295, 5
      %v298 = vor.u32 %v294, %v297
      %v299 = vrot.slane %v298, 4
      %v301 = vshll.u32 %v218, 16
      %v303 = vrot.slane %v301, 5
      %v304 = vsel %vm266, %v299, %v303
      %v305 = vshrl.u32 %v218, 16
      %v307 = vrot.slane %v305, 4
      %v308 = vor.u32 %v307, %v303
      %v309 = vrot.slane %v308, 4
      %v311 = vshll.u32 %v249, 16
      %v313 = vrot.slane %v311, 5
      %v314 = vsel %vm266, %v309, %v313
      %v316 = vshrl.u32 %v219, 16
      %v318 = vrot.slane %v316, 4
      %v319 = vshll.u32 %v219, 16
      %v321 = vrot.slane %v319, 5
      %v322 = vor.u32 %v318, %v321
      %v323 = vrot.slane %v322, 4
      %v325 = vshll.u32 %v220, 16
      %v327 = vrot.slane %v325, 5
      %v328 = vsel %vm266, %v323, %v327
      %v329 = vshrl.u32 %v220, 16
      %v331 = vrot.slane %v329, 4
      %v332 = vor.u32 %v331, %v327
      %v333 = vrot.slane %v332, 4
      %v335 = vshll.u32 %v250, 16
      %v337 = vrot.slane %v335, 5
      %v338 = vsel %vm266, %v333, %v337
      %v340 = vshrl.u32 %v221, 16
      %v342 = vrot.slane %v340, 4
      %v343 = vshll.u32 %v221, 16
      %v345 = vrot.slane %v343, 5
      %v346 = vor.u32 %v342, %v345
      %v347 = vrot.slane %v346, 4
      %v349 = vshll.u32 %v222, 16
      %v351 = vrot.slane %v349, 5
      %v352 = vsel %vm266, %v347, %v351
      %v353 = vshrl.u32 %v222, 16
      %v355 = vrot.slane %v353, 4
      %v356 = vor.u32 %v355, %v351
      %v357 = vrot.slane %v356, 4
      %v359 = vshll.u32 %v251, 16
      %v361 = vrot.slane %v359, 5
      %v362 = vsel %vm266, %v357, %v361
      %v364 = vshrl.u32 %v223, 16
      %v366 = vrot.slane %v364, 4
      %v367 = vshll.u32 %v223, 16
      %v369 = vrot.slane %v367, 5
      %v370 = vor.u32 %v366, %v369
      %v371 = vrot.slane %v370, 4
      %v373 = vshll.u32 %v224, 16
      %v375 = vrot.slane %v373, 5
      %v376 = vsel %vm266, %v371, %v375
      %v377 = vshrl.u32 %v224, 16
      %v379 = vrot.slane %v377, 4
      %v380 = vor.u32 %v379, %v375
      %v381 = vrot.slane %v380, 4
      %v383 = vshll.u32 %v252, 16
      %v385 = vrot.slane %v383, 5
      %v386 = vsel %vm266, %v381, %v385
      %v388 = vshrl.u32 %v225, 16
      %v390 = vrot.slane %v388, 4
      %v391 = vshll.u32 %v225, 16
      %v393 = vrot.slane %v391, 5
      %v394 = vor.u32 %v390, %v393
      %v395 = vrot.slane %v394, 4
      %v397 = vshll.u32 %v226, 16
      %v399 = vrot.slane %v397, 5
      %v400 = vsel %vm266, %v395, %v399
      %v401 = vshrl.u32 %v226, 16
      %v403 = vrot.slane %v401, 4
      %v404 = vor.u32 %v403, %v399
      %v405 = vrot.slane %v404, 4
      %v407 = vshll.u32 %v253, 16
      %v409 = vrot.slane %v407, 5
      %v410 = vsel %vm266, %v405, %v409
      %v412 = vshrl.u32 %v227, 16
      %v414 = vrot.slane %v412, 4
      %v415 = vshll.u32 %v227, 16
      %v417 = vrot.slane %v415, 5
      %v418 = vor.u32 %v414, %v417
      %v419 = vrot.slane %v418, 4
      %v421 = vshll.u32 %v228, 16
      %v423 = vrot.slane %v421, 5
      %v424 = vsel %vm266, %v419, %v423
      %v425 = vshrl.u32 %v228, 16
      %v427 = vrot.slane %v425, 4
      %v428 = vor.u32 %v427, %v423
      %v429 = vrot.slane %v428, 4
      %v431 = vshll.u32 %v254, 16
      %v433 = vrot.slane %v431, 5
      %v434 = vsel %vm266, %v429, %v433
      %v436 = vshrl.u32 %v229, 16
      %v438 = vrot.slane %v436, 4
      %v439 = vshll.u32 %v229, 16
      %v441 = vrot.slane %v439, 5
      %v442 = vor.u32 %v438, %v441
      %v443 = vrot.slane %v442, 4
      %v445 = vshll.u32 %v230, 16
      %v447 = vrot.slane %v445, 5
      %v448 = vsel %vm266, %v443, %v447
      %v449 = vshrl.u32 %v230, 16
      %v451 = vrot.slane %v449, 4
      %v452 = vor.u32 %v451, %v447
      %v453 = vrot.slane %v452, 4
      %v455 = vshll.u32 %v255, 16
      %v457 = vrot.slane %v455, 5
      %v458 = vsel %vm266, %v453, %v457
      %v460 = vshrl.u32 %v231, 16
      %v462 = vrot.slane %v460, 4
      %v463 = vshll.u32 %v231, 16
      %v465 = vrot.slane %v463, 5
      %v466 = vor.u32 %v462, %v465
      %v467 = vrot.slane %v466, 4
      %v469 = vshll.u32 %v232, 16
      %v471 = vrot.slane %v469, 5
      %v472 = vsel %vm266, %v467, %v471
      %v473 = vshrl.u32 %v232, 16
      %v475 = vrot.slane %v473, 4
      %v476 = vor.u32 %v475, %v471
      %v477 = vrot.slane %v476, 4
      %v479 = vshll.u32 %v256, 16
      %v481 = vrot.slane %v479, 5
      %v482 = vsel %vm266, %v477, %v481
      %v484 = vshrl.u32 %v233, 16
      %v486 = vrot.slane %v484, 4
      %v487 = vshll.u32 %v233, 16
      %v489 = vrot.slane %v487, 5
      %v490 = vor.u32 %v486, %v489
      %v491 = vrot.slane %v490, 4
      %v493 = vshll.u32 %v234, 16
      %v495 = vrot.slane %v493, 5
      %v496 = vsel %vm266, %v491, %v495
      %v497 = vshrl.u32 %v234, 16
      %v499 = vrot.slane %v497, 4
      %v500 = vor.u32 %v499, %v495
      %v501 = vrot.slane %v500, 4
      %v503 = vshll.u32 %v257, 16
      %v505 = vrot.slane %v503, 5
      %v506 = vsel %vm266, %v501, %v505
      %v508 = vshrl.u32 %v235, 16
      %v510 = vrot.slane %v508, 4
      %v511 = vshll.u32 %v235, 16
      %v513 = vrot.slane %v511, 5
      %v514 = vor.u32 %v510, %v513
      %v515 = vrot.slane %v514, 4
      %v517 = vshll.u32 %v236, 16
      %v519 = vrot.slane %v517, 5
      %v520 = vsel %vm266, %v515, %v519
      %v521 = vshrl.u32 %v236, 16
      %v523 = vrot.slane %v521, 4
      %v524 = vor.u32 %v523, %v519
      %v525 = vrot.slane %v524, 4
      %v527 = vshll.u32 %v258, 16
      %v529 = vrot.slane %v527, 5
      %v530 = vsel %vm266, %v525, %v529
      %v532 = vshrl.u32 %v237, 16
      %v534 = vrot.slane %v532, 4
      %v535 = vshll.u32 %v237, 16
      %v537 = vrot.slane %v535, 5
      %v538 = vor.u32 %v534, %v537
      %v539 = vrot.slane %v538, 4
      %v541 = vshll.u32 %v238, 16
      %v543 = vrot.slane %v541, 5
      %v544 = vsel %vm266, %v539, %v543
      %v545 = vshrl.u32 %v238, 16
      %v547 = vrot.slane %v545, 4
      %v548 = vor.u32 %v547, %v543
      %v549 = vrot.slane %v548, 4
      %v551 = vshll.u32 %v259, 16
      %v553 = vrot.slane %v551, 5
      %v554 = vsel %vm266, %v549, %v553
      %v556 = vshrl.u32 %v239, 16
      %v558 = vrot.slane %v556, 4
      %v559 = vshll.u32 %v239, 16
      %v561 = vrot.slane %v559, 5
      %v562 = vor.u32 %v558, %v561
      %v563 = vrot.slane %v562, 4
      %v565 = vshll.u32 %v240, 16
      %v567 = vrot.slane %v565, 5
      %v568 = vsel %vm266, %v563, %v567
      %v569 = vshrl.u32 %v240, 16
      %v571 = vrot.slane %v569, 4
      %v572 = vor.u32 %v571, %v567
      %v573 = vrot.slane %v572, 4
      %v575 = vshll.u32 %v260, 16
      %v577 = vrot.slane %v575, 5
      %v578 = vsel %vm266, %v573, %v577
      %v580 = vshrl.u32 %v241, 16
      %v582 = vrot.slane %v580, 4
      %v583 = vshll.u32 %v241, 16
      %v585 = vrot.slane %v583, 5
      %v586 = vor.u32 %v582, %v585
      %v587 = vrot.slane %v586, 4
      %v589 = vshll.u32 %v242, 16
      %v591 = vrot.slane %v589, 5
      %v592 = vsel %vm266, %v587, %v591
      %v593 = vshrl.u32 %v242, 16
      %v595 = vrot.slane %v593, 4
      %v596 = vor.u32 %v595, %v591
      %v597 = vrot.slane %v596, 4
      %v599 = vshll.u32 %v261, 16
      %v601 = vrot.slane %v599, 5
      %v602 = vsel %vm266, %v597, %v601
      %v604 = vshrl.u32 %v243, 16
      %v606 = vrot.slane %v604, 4
      %v607 = vshll.u32 %v243, 16
      %v609 = vrot.slane %v607, 5
      %v610 = vor.u32 %v606, %v609
      %v611 = vrot.slane %v610, 4
      %v613 = vshll.u32 %v244, 16
      %v615 = vrot.slane %v613, 5
      %v616 = vsel %vm266, %v611, %v615
      %v617 = vshrl.u32 %v244, 16
      %v619 = vrot.slane %v617, 4
      %v620 = vor.u32 %v619, %v615
      %v621 = vrot.slane %v620, 4
      %v623 = vshll.u32 %v262, 16
      %v625 = vrot.slane %v623, 5
      %v626 = vsel %vm266, %v621, %v625
      %v628 = vshrl.u32 %v245, 16
      %v630 = vrot.slane %v628, 4
      %v631 = vshll.u32 %v245, 16
      %v633 = vrot.slane %v631, 5
      %v634 = vor.u32 %v630, %v633
      %v635 = vrot.slane %v634, 4
      %v637 = vshll.u32 %v246, 16
      %v639 = vrot.slane %v637, 5
      %v640 = vsel %vm266, %v635, %v639
      %v641 = vshrl.u32 %v246, 16
      %v643 = vrot.slane %v641, 4
      %v644 = vor.u32 %v643, %v639
      %v645 = vrot.slane %v644, 4
      %v647 = vshll.u32 %v263, 16
      %v649 = vrot.slane %v647, 5
      %v650 = vsel %vm266, %v645, %v649
      %s651 = scalar_lea.vmem %s1, 2
      %v652 = vld [vmem:[%s651] sm:$0x3]
      %v653 = vunpack.c.l.b16 %v280
      %v654 = vunpack.c.l.b16 %v290
      %v655 = vunpack.c.l.b16 %v304
      %v656 = vunpack.c.l.b16 %v314
      %v657 = vunpack.c.l.b16 %v328
      %v658 = vunpack.c.l.b16 %v338
      %v659 = vunpack.c.l.b16 %v352
      %v660 = vunpack.c.l.b16 %v362
      %v661 = vunpack.c.l.b16 %v376
      %v662 = vunpack.c.l.b16 %v386
      %v663 = vunpack.c.l.b16 %v400
      %v664 = vunpack.c.l.b16 %v410
      %v665 = vunpack.c.l.b16 %v424
      %v666 = vunpack.c.l.b16 %v434
      %v667 = vunpack.c.l.b16 %v448
      %v668 = vunpack.c.l.b16 %v458
      %v669 = vunpack.c.l.b16 %v472
      %v670 = vunpack.c.l.b16 %v482
      %v671 = vunpack.c.l.b16 %v496
      %v672 = vunpack.c.l.b16 %v506
      %v673 = vunpack.c.l.b16 %v520
      %v674 = vunpack.c.l.b16 %v530
      %v675 = vunpack.c.l.b16 %v544
      %v676 = vunpack.c.l.b16 %v554
      %v677 = vunpack.c.l.b16 %v568
      %v678 = vunpack.c.l.b16 %v578
      %v679 = vunpack.c.l.b16 %v592
      %v680 = vunpack.c.l.b16 %v602
      %v681 = vunpack.c.l.b16 %v616
      %v682 = vunpack.c.l.b16 %v626
      %v683 = vunpack.c.l.b16 %v640
      %v684 = vunpack.c.l.b16 %v650
      %v685 = vpack.c.b16 %v654, %v653
      %v686 = vpack.c.b16 %v656, %v655
      %v687 = vpack.c.b16 %v658, %v657
      %v688 = vpack.c.b16 %v660, %v659
      %v689 = vpack.c.b16 %v662, %v661
      %v690 = vpack.c.b16 %v664, %v663
      %v691 = vpack.c.b16 %v666, %v665
      %v692 = vpack.c.b16 %v668, %v667
      %v693 = vpack.c.b16 %v670, %v669
      %v694 = vpack.c.b16 %v672, %v671
      %v695 = vpack.c.b16 %v674, %v673
      %v696 = vpack.c.b16 %v676, %v675
      %v697 = vpack.c.b16 %v678, %v677
      %v698 = vpack.c.b16 %v680, %v679
      %v699 = vpack.c.b16 %v682, %v681
      %v700 = vpack.c.b16 %v684, %v683
      %vm701 = vcmask 31744
      %v703 = vsel %vm701, %v685, 0
      %v706 = vsel %vm701, %v686, 0
      %v709 = vsel %vm701, %v687, 0
      %v712 = vsel %vm701, %v688, 0
      %v715 = vsel %vm701, %v689, 0
      %v718 = vsel %vm701, %v690, 0
      %v721 = vsel %vm701, %v691, 0
      %v724 = vsel %vm701, %v692, 0
      %v727 = vsel %vm701, %v693, 0
      %v730 = vsel %vm701, %v694, 0
      %v733 = vsel %vm701, %v695, 0
      %v736 = vsel %vm701, %v696, 0
      %v739 = vsel %vm701, %v697, 0
      %v742 = vsel %vm701, %v698, 0
      %v745 = vsel %vm701, %v699, 0
      %v748 = vsel %vm701, %v700, 0
      %vm750 = vcmask 1041408
      %v752 = vsel %vm750, %v652, 0
      %754 = vmatprep.subr.bf16.mxu0 0
      %755 = vmatpush1.bf16.msra.mxu0 %v752
      %756 = vmatprep.subr.bf16.mxu0 0
      %757 = vmatpush1.bf16.msra.mxu0 0
      %758 = vmatprep.subr.bf16.mxu0 0
      %759 = vmatpush1.bf16.msra.mxu0 0
      %760 = vmatprep.subr.bf16.mxu0 0
      %761 = vmatpush1.bf16.msra.mxu0 0
      %762 = vmatprep.subr.bf16.mxu0 0
      %763 = vmatpush1.bf16.msra.mxu0 0
      %764 = vmatprep.subr.bf16.mxu0 0
      %765 = vmatpush1.bf16.msra.mxu0 0
      %766 = vmatprep.subr.bf16.mxu0 0
      %767 = vmatpush1.bf16.msra.mxu0 0
      %768 = vmatprep.subr.bf16.mxu0 0
      %769 = vmatpush1.bf16.msra.mxu0 0
      %770 = vmatprep.subr.bf16.mxu0 0
      %771 = vmatpush1.bf16.msra.mxu0 0
      %772 = vmatprep.subr.bf16.mxu0 0
      %773 = vmatpush1.bf16.msra.mxu0 0
      %774 = vmatprep.subr.bf16.mxu0 0
      %775 = vmatpush1.bf16.msra.mxu0 0
      %776 = vmatprep.subr.bf16.mxu0 0
      %777 = vmatpush1.bf16.msra.mxu0 0
      %778 = vmatprep.subr.bf16.mxu0 0
      %779 = vmatpush1.bf16.msra.mxu0 0
      %780 = vmatprep.subr.bf16.mxu0 0
      %781 = vmatpush1.bf16.msra.mxu0 0
      %782 = vmatprep.subr.bf16.mxu0 0
      %783 = vmatpush1.bf16.msra.mxu0 0
      %784 = vmatprep.subr.bf16.mxu0 0
      %785 = vmatpush1.bf16.msra.mxu0 0
      %786 = vmatprep.mubr.bf16.mxu0 0
      %787 = vmatmul.mubr.bf16.gmra.mrb[0].mxu0 %v703
      %v788 = vpop.f32.mrb[0].mxu0
      %v789 = vadd.f32 0.0, %v788
      %v790 = vpop.f32.mrb[0].mxu0
      %v791 = vpop.f32.mrb[0].mxu0
      %v792 = vadd.f32 0.0, %v791
      %v793 = vpop.f32.mrb[0].mxu0
      %794 = vmatprep.mubr.bf16.mxu0 0
      %795 = vmatmul.mubr.bf16.gmra.mrb[0].mxu0 %v706
      %v796 = vpop.f32.mrb[0].mxu0
      %v797 = vadd.f32 0.0, %v796
      %v798 = vpop.f32.mrb[0].mxu0
      %v799 = vpop.f32.mrb[0].mxu0
      %v800 = vadd.f32 0.0, %v799
      %v801 = vpop.f32.mrb[0].mxu0
      %802 = vmatprep.mubr.bf16.mxu0 0
      %803 = vmatmul.mubr.bf16.gmra.mrb[0].mxu0 %v709
      %v804 = vpop.f32.mrb[0].mxu0
      %v805 = vadd.f32 0.0, %v804
      %v806 = vpop.f32.mrb[0].mxu0
      %v807 = vpop.f32.mrb[0].mxu0
      %v808 = vadd.f32 0.0, %v807
      %v809 = vpop.f32.mrb[0].mxu0
      %810 = vmatprep.mubr.bf16.mxu0 0
      %811 = vmatmul.mubr.bf16.gmra.mrb[0].mxu0 %v712
      %v812 = vpop.f32.mrb[0].mxu0
      %v813 = vadd.f32 0.0, %v812
      %v814 = vpop.f32.mrb[0].mxu0
      %v815 = vpop.f32.mrb[0].mxu0
      %v816 = vadd.f32 0.0, %v815
      %v817 = vpop.f32.mrb[0].mxu0
      %818 = vmatprep.mubr.bf16.mxu0 0
      %819 = vmatmul.mubr.bf16.gmra.mrb[0].mxu0 %v715
      %v820 = vpop.f32.mrb[0].mxu0
      %v821 = vadd.f32 0.0, %v820
      %v822 = vpop.f32.mrb[0].mxu0
      %v823 = vpop.f32.mrb[0].mxu0
      %v824 = vadd.f32 0.0, %v823
      %v825 = vpop.f32.mrb[0].mxu0
      %826 = vmatprep.mubr.bf16.mxu0 0
      %827 = vmatmul.mubr.bf16.gmra.mrb[0].mxu0 %v718
      %v828 = vpop.f32.mrb[0].mxu0
      %v829 = vadd.f32 0.0, %v828
      %v830 = vpop.f32.mrb[0].mxu0
      %v831 = vpop.f32.mrb[0].mxu0
      %v832 = vadd.f32 0.0, %v831
      %v833 = vpop.f32.mrb[0].mxu0
      %834 = vmatprep.mubr.bf16.mxu0 0
      %835 = vmatmul.mubr.bf16.gmra.mrb[0].mxu0 %v721
      %v836 = vpop.f32.mrb[0].mxu0
      %v837 = vadd.f32 0.0, %v836
      %v838 = vpop.f32.mrb[0].mxu0
      %v839 = vpop.f32.mrb[0].mxu0
      %v840 = vadd.f32 0.0, %v839
      %v841 = vpop.f32.mrb[0].mxu0
      %842 = vmatprep.mubr.bf16.mxu0 0
      %843 = vmatmul.mubr.bf16.gmra.mrb[0].mxu0 %v724
      %v844 = vpop.f32.mrb[0].mxu0
      %v845 = vadd.f32 0.0, %v844
      %v846 = vpop.f32.mrb[0].mxu0
      %v847 = vpop.f32.mrb[0].mxu0
      %v848 = vadd.f32 0.0, %v847
      %v849 = vpop.f32.mrb[0].mxu0
      %850 = vmatprep.mubr.bf16.mxu0 0
      %851 = vmatmul.mubr.bf16.gmra.mrb[0].mxu0 %v727
      %v852 = vpop.f32.mrb[0].mxu0
      %v853 = vadd.f32 0.0, %v852
      %v854 = vpop.f32.mrb[0].mxu0
      %v855 = vpop.f32.mrb[0].mxu0
      %v856 = vadd.f32 0.0, %v855
      %v857 = vpop.f32.mrb[0].mxu0
      %858 = vmatprep.mubr.bf16.mxu0 0
      %859 = vmatmul.mubr.bf16.gmra.mrb[0].mxu0 %v730
      %v860 = vpop.f32.mrb[0].mxu0
      %v861 = vadd.f32 0.0, %v860
      %v862 = vpop.f32.mrb[0].mxu0
      %v863 = vpop.f32.mrb[0].mxu0
      %v864 = vadd.f32 0.0, %v863
      %v865 = vpop.f32.mrb[0].mxu0
      %866 = vmatprep.mubr.bf16.mxu0 0
      %867 = vmatmul.mubr.bf16.gmra.mrb[0].mxu0 %v733
      %v868 = vpop.f32.mrb[0].mxu0
      %v869 = vadd.f32 0.0, %v868
      %v870 = vpop.f32.mrb[0].mxu0
      %v871 = vpop.f32.mrb[0].mxu0
      %v872 = vadd.f32 0.0, %v871
      %v873 = vpop.f32.mrb[0].mxu0
      %874 = vmatprep.mubr.bf16.mxu0 0
      %875 = vmatmul.mubr.bf16.gmra.mrb[0].mxu0 %v736
      %v876 = vpop.f32.mrb[0].mxu0
      %v877 = vadd.f32 0.0, %v876
      %v878 = vpop.f32.mrb[0].mxu0
      %v879 = vpop.f32.mrb[0].mxu0
      %v880 = vadd.f32 0.0, %v879
      %v881 = vpop.f32.mrb[0].mxu0
      %882 = vmatprep.mubr.bf16.mxu0 0
      %883 = vmatmul.mubr.bf16.gmra.mrb[0].mxu0 %v739
      %v884 = vpop.f32.mrb[0].mxu0
      %v885 = vadd.f32 0.0, %v884
      %v886 = vpop.f32.mrb[0].mxu0
      %v887 = vpop.f32.mrb[0].mxu0
      %v888 = vadd.f32 0.0, %v887
      %v889 = vpop.f32.mrb[0].mxu0
      %890 = vmatprep.mubr.bf16.mxu0 0
      %891 = vmatmul.mubr.bf16.gmra.mrb[0].mxu0 %v742
      %v892 = vpop.f32.mrb[0].mxu0
      %v893 = vadd.f32 0.0, %v892
      %v894 = vpop.f32.mrb[0].mxu0
      %v895 = vpop.f32.mrb[0].mxu0
      %v896 = vadd.f32 0.0, %v895
      %v897 = vpop.f32.mrb[0].mxu0
      %898 = vmatprep.mubr.bf16.mxu0 0
      %899 = vmatmul.mubr.bf16.gmra.mrb[0].mxu0 %v745
      %v900 = vpop.f32.mrb[0].mxu0
      %v901 = vadd.f32 0.0, %v900
      %v902 = vpop.f32.mrb[0].mxu0
      %v903 = vpop.f32.mrb[0].mxu0
      %v904 = vadd.f32 0.0, %v903
      %v905 = vpop.f32.mrb[0].mxu0
      %906 = vmatprep.mubr.bf16.mxu0 0
      %907 = vmatmul.mubr.bf16.gmra.mrb[0].mxu0 %v748
      %v908 = vpop.f32.mrb[0].mxu0
      %v909 = vadd.f32 0.0, %v908
      %v910 = vpop.f32.mrb[0].mxu0
      %v911 = vpop.f32.mrb[0].mxu0
      %v912 = vadd.f32 0.0, %v911
      %v913 = vpop.f32.mrb[0].mxu0
      %914 = vdwg.mxu0
      %v947 = vunpack.c.l.b16 %v215
      %v948 = vunpack.c.l.b16 %v216
      %v949 = vunpack.c.l.b16 %v217
      %v950 = vunpack.c.l.b16 %v218
      %v951 = vunpack.c.l.b16 %v219
      %v952 = vunpack.c.l.b16 %v220
      %v953 = vunpack.c.l.b16 %v221
      %v954 = vunpack.c.l.b16 %v222
      %v955 = vunpack.c.l.b16 %v223
      %v956 = vunpack.c.l.b16 %v224
      %v957 = vunpack.c.l.b16 %v225
      %v958 = vunpack.c.l.b16 %v226
      %v959 = vunpack.c.l.b16 %v227
      %v960 = vunpack.c.l.b16 %v228
      %v961 = vunpack.c.l.b16 %v229
      %v962 = vunpack.c.l.b16 %v230
      %v963 = vunpack.c.l.b16 %v231
      %v964 = vunpack.c.l.b16 %v232
      %v965 = vunpack.c.l.b16 %v233
      %v966 = vunpack.c.l.b16 %v234
      %v967 = vunpack.c.l.b16 %v235
      %v968 = vunpack.c.l.b16 %v236
      %v969 = vunpack.c.l.b16 %v237
      %v970 = vunpack.c.l.b16 %v238
      %v971 = vunpack.c.l.b16 %v239
      %v972 = vunpack.c.l.b16 %v240
      %v973 = vunpack.c.l.b16 %v241
      %v974 = vunpack.c.l.b16 %v242
      %v975 = vunpack.c.l.b16 %v243
      %v976 = vunpack.c.l.b16 %v244
      %v977 = vunpack.c.l.b16 %v245
      %v978 = vunpack.c.l.b16 %v246
      %v979 = vpack.c.b16 %v948, %v947
      %v980 = vpack.c.b16 %v950, %v949
      %v981 = vpack.c.b16 %v952, %v951
      %v982 = vpack.c.b16 %v954, %v953
      %v983 = vpack.c.b16 %v956, %v955
      %v984 = vpack.c.b16 %v958, %v957
      %v985 = vpack.c.b16 %v960, %v959
      %v986 = vpack.c.b16 %v962, %v961
      %v987 = vpack.c.b16 %v964, %v963
      %v988 = vpack.c.b16 %v966, %v965
      %v989 = vpack.c.b16 %v968, %v967
      %v990 = vpack.c.b16 %v970, %v969
      %v991 = vpack.c.b16 %v972, %v971
      %v992 = vpack.c.b16 %v974, %v973
      %v993 = vpack.c.b16 %v976, %v975
      %v994 = vpack.c.b16 %v978, %v977
      %v996 = vsel %vm701, %v979, 0
      %v999 = vsel %vm701, %v980, 0
      %v1002 = vsel %vm701, %v981, 0
      %v1005 = vsel %vm701, %v982, 0
      %v1008 = vsel %vm701, %v983, 0
      %v1011 = vsel %vm701, %v984, 0
      %v1014 = vsel %vm701, %v985, 0
      %v1017 = vsel %vm701, %v986, 0
      %v1020 = vsel %vm701, %v987, 0
      %v1023 = vsel %vm701, %v988, 0
      %v1026 = vsel %vm701, %v989, 0
      %v1029 = vsel %vm701, %v990, 0
      %v1032 = vsel %vm701, %v991, 0
      %v1035 = vsel %vm701, %v992, 0
      %v1038 = vsel %vm701, %v993, 0
      %v1041 = vsel %vm701, %v994, 0
      %v1044 = vsel %vm750, %v247, 0
      %1046 = vmatprep.subr.bf16.mxu0 0
      %1047 = vmatpush1.bf16.msra.mxu0 %v1044
      %1048 = vmatprep.subr.bf16.mxu0 0
      %1049 = vmatpush1.bf16.msra.mxu0 0
      %1050 = vmatprep.subr.bf16.mxu0 0
      %1051 = vmatpush1.bf16.msra.mxu0 0
      %1052 = vmatprep.subr.bf16.mxu0 0
      %1053 = vmatpush1.bf16.msra.mxu0 0
      %1054 = vmatprep.subr.bf16.mxu0 0
      %1055 = vmatpush1.bf16.msra.mxu0 0
      %1056 = vmatprep.subr.bf16.mxu0 0
      %1057 = vmatpush1.bf16.msra.mxu0 0
      %1058 = vmatprep.subr.bf16.mxu0 0
      %1059 = vmatpush1.bf16.msra.mxu0 0
      %1060 = vmatprep.subr.bf16.mxu0 0
      %1061 = vmatpush1.bf16.msra.mxu0 0
      %1062 = vmatprep.subr.bf16.mxu0 0
      %1063 = vmatpush1.bf16.msra.mxu0 0
      %1064 = vmatprep.subr.bf16.mxu0 0
      %1065 = vmatpush1.bf16.msra.mxu0 0
      %1066 = vmatprep.subr.bf16.mxu0 0
      %1067 = vmatpush1.bf16.msra.mxu0 0
      %1068 = vmatprep.subr.bf16.mxu0 0
      %1069 = vmatpush1.bf16.msra.mxu0 0
      %1070 = vmatprep.subr.bf16.mxu0 0
      %1071 = vmatpush1.bf16.msra.mxu0 0
      %1072 = vmatprep.subr.bf16.mxu0 0
      %1073 = vmatpush1.bf16.msra.mxu0 0
      %1074 = vmatprep.subr.bf16.mxu0 0
      %1075 = vmatpush1.bf16.msra.mxu0 0
      %1076 = vmatprep.subr.bf16.mxu0 0
      %1077 = vmatpush1.bf16.msra.mxu0 0
      %1078 = vmatprep.mubr.bf16.mxu0 0
      %1079 = vmatmul.mubr.bf16.gmra.mrb[0].mxu0 %v996
      %v1080 = vpop.f32.mrb[0].mxu0
      %v1081 = vadd.f32 %v789, %v1080
      %v1082 = vpop.f32.mrb[0].mxu0
      %v1083 = vpop.f32.mrb[0].mxu0
      %v1084 = vadd.f32 %v792, %v1083
      %v1085 = vpop.f32.mrb[0].mxu0
      %1086 = vmatprep.mubr.bf16.mxu0 0
      %1087 = vmatmul.mubr.bf16.gmra.mrb[0].mxu0 %v999
      %v1088 = vpop.f32.mrb[0].mxu0
      %v1089 = vadd.f32 %v797, %v1088
      %v1090 = vpop.f32.mrb[0].mxu0
      %v1091 = vpop.f32.mrb[0].mxu0
      %v1092 = vadd.f32 %v800, %v1091
      %v1093 = vpop.f32.mrb[0].mxu0
      %1094 = vmatprep.mubr.bf16.mxu0 0
      %1095 = vmatmul.mubr.bf16.gmra.mrb[0].mxu0 %v1002
      %v1096 = vpop.f32.mrb[0].mxu0
      %v1097 = vadd.f32 %v805, %v1096
      %v1098 = vpop.f32.mrb[0].mxu0
      %v1099 = vpop.f32.mrb[0].mxu0
      %v1100 = vadd.f32 %v808, %v1099
      %v1101 = vpop.f32.mrb[0].mxu0
      %1102 = vmatprep.mubr.bf16.mxu0 0
      %1103 = vmatmul.mubr.bf16.gmra.mrb[0].mxu0 %v1005
      %v1104 = vpop.f32.mrb[0].mxu0
      %v1105 = vadd.f32 %v813, %v1104
      %v1106 = vpop.f32.mrb[0].mxu0
      %v1107 = vpop.f32.mrb[0].mxu0
      %v1108 = vadd.f32 %v816, %v1107
      %v1109 = vpop.f32.mrb[0].mxu0
      %1110 = vmatprep.mubr.bf16.mxu0 0
      %1111 = vmatmul.mubr.bf16.gmra.mrb[0].mxu0 %v1008
      %v1112 = vpop.f32.mrb[0].mxu0
      %v1113 = vadd.f32 %v821, %v1112
      %v1114 = vpop.f32.mrb[0].mxu0
      %v1115 = vpop.f32.mrb[0].mxu0
      %v1116 = vadd.f32 %v824, %v1115
      %v1117 = vpop.f32.mrb[0].mxu0
      %1118 = vmatprep.mubr.bf16.mxu0 0
      %1119 = vmatmul.mubr.bf16.gmra.mrb[0].mxu0 %v1011
      %v1120 = vpop.f32.mrb[0].mxu0
      %v1121 = vadd.f32 %v829, %v1120
      %v1122 = vpop.f32.mrb[0].mxu0
      %v1123 = vpop.f32.mrb[0].mxu0
      %v1124 = vadd.f32 %v832, %v1123
      %v1125 = vpop.f32.mrb[0].mxu0
      %1126 = vmatprep.mubr.bf16.mxu0 0
      %1127 = vmatmul.mubr.bf16.gmra.mrb[0].mxu0 %v1014
      %v1128 = vpop.f32.mrb[0].mxu0
      %v1129 = vadd.f32 %v837, %v1128
      %v1130 = vpop.f32.mrb[0].mxu0
      %v1131 = vpop.f32.mrb[0].mxu0
      %v1132 = vadd.f32 %v840, %v1131
      %v1133 = vpop.f32.mrb[0].mxu0
      %1134 = vmatprep.mubr.bf16.mxu0 0
      %1135 = vmatmul.mubr.bf16.gmra.mrb[0].mxu0 %v1017
      %v1136 = vpop.f32.mrb[0].mxu0
      %v1137 = vadd.f32 %v845, %v1136
      %v1138 = vpop.f32.mrb[0].mxu0
      %v1139 = vpop.f32.mrb[0].mxu0
      %v1140 = vadd.f32 %v848, %v1139
      %v1141 = vpop.f32.mrb[0].mxu0
      %1142 = vmatprep.mubr.bf16.mxu0 0
      %1143 = vmatmul.mubr.bf16.gmra.mrb[0].mxu0 %v1020
      %v1144 = vpop.f32.mrb[0].mxu0
      %v1145 = vadd.f32 %v853, %v1144
      %v1146 = vpop.f32.mrb[0].mxu0
      %v1147 = vpop.f32.mrb[0].mxu0
      %v1148 = vadd.f32 %v856, %v1147
      %v1149 = vpop.f32.mrb[0].mxu0
      %1150 = vmatprep.mubr.bf16.mxu0 0
      %1151 = vmatmul.mubr.bf16.gmra.mrb[0].mxu0 %v1023
      %v1152 = vpop.f32.mrb[0].mxu0
      %v1153 = vadd.f32 %v861, %v1152
      %v1154 = vpop.f32.mrb[0].mxu0
      %v1155 = vpop.f32.mrb[0].mxu0
      %v1156 = vadd.f32 %v864, %v1155
      %v1157 = vpop.f32.mrb[0].mxu0
      %1158 = vmatprep.mubr.bf16.mxu0 0
      %1159 = vmatmul.mubr.bf16.gmra.mrb[0].mxu0 %v1026
      %v1160 = vpop.f32.mrb[0].mxu0
      %v1161 = vadd.f32 %v869, %v1160
      %v1162 = vpop.f32.mrb[0].mxu0
      %v1163 = vpop.f32.mrb[0].mxu0
      %v1164 = vadd.f32 %v872, %v1163
      %v1165 = vpop.f32.mrb[0].mxu0
      %1166 = vmatprep.mubr.bf16.mxu0 0
      %1167 = vmatmul.mubr.bf16.gmra.mrb[0].mxu0 %v1029
      %v1168 = vpop.f32.mrb[0].mxu0
      %v1169 = vadd.f32 %v877, %v1168
      %v1170 = vpop.f32.mrb[0].mxu0
      %v1171 = vpop.f32.mrb[0].mxu0
      %v1172 = vadd.f32 %v880, %v1171
      %v1173 = vpop.f32.mrb[0].mxu0
      %1174 = vmatprep.mubr.bf16.mxu0 0
      %1175 = vmatmul.mubr.bf16.gmra.mrb[0].mxu0 %v1032
      %v1176 = vpop.f32.mrb[0].mxu0
      %v1177 = vadd.f32 %v885, %v1176
      %v1178 = vpop.f32.mrb[0].mxu0
      %v1179 = vpop.f32.mrb[0].mxu0
      %v1180 = vadd.f32 %v888, %v1179
      %v1181 = vpop.f32.mrb[0].mxu0
      %1182 = vmatprep.mubr.bf16.mxu0 0
      %1183 = vmatmul.mubr.bf16.gmra.mrb[0].mxu0 %v1035
      %v1184 = vpop.f32.mrb[0].mxu0
      %v1185 = vadd.f32 %v893, %v1184
      %v1186 = vpop.f32.mrb[0].mxu0
      %v1187 = vpop.f32.mrb[0].mxu0
      %v1188 = vadd.f32 %v896, %v1187
      %v1189 = vpop.f32.mrb[0].mxu0
      %1190 = vmatprep.mubr.bf16.mxu0 0
      %1191 = vmatmul.mubr.bf16.gmra.mrb[0].mxu0 %v1038
      %v1192 = vpop.f32.mrb[0].mxu0
      %v1193 = vadd.f32 %v901, %v1192
      %v1194 = vpop.f32.mrb[0].mxu0
      %v1195 = vpop.f32.mrb[0].mxu0
      %v1196 = vadd.f32 %v904, %v1195
      %v1197 = vpop.f32.mrb[0].mxu0
      %1198 = vmatprep.mubr.bf16.mxu0 0
      %1199 = vmatmul.mubr.bf16.gmra.mrb[0].mxu0 %v1041
      %v1200 = vpop.f32.mrb[0].mxu0
      %v1201 = vadd.f32 %v909, %v1200
      %v1202 = vpop.f32.mrb[0].mxu0
      %v1203 = vpop.f32.mrb[0].mxu0
      %v1204 = vadd.f32 %v912, %v1203
      %v1205 = vpop.f32.mrb[0].mxu0
      %1206 = vdwg.mxu0
      %v1207 = vld [vmem:[%s214] sm:$0xe]
      %v1208 = vld [vmem:[%s214 + $0xc] sm:$0xe]
      %v1209 = vld [vmem:[%s214 + $0x18] sm:$0xe]
      %v1210 = vld [vmem:[%s214 + $0x24] sm:$0xe]
      %v1211 = vld [vmem:[%s214 + $0x30] sm:$0xe]
      %v1212 = vld [vmem:[%s214 + $0x3c] sm:$0xe]
      %v1213 = vld [vmem:[%s214 + $0x48] sm:$0xe]
      %v1214 = vld [vmem:[%s214 + $0x54] sm:$0xe]
      %v1215 = vld [vmem:[%s214 + $0x60] sm:$0xe]
      %v1216 = vld [vmem:[%s214 + $0x6c] sm:$0xe]
      %v1217 = vld [vmem:[%s214 + $0x78] sm:$0xe]
      %v1218 = vld [vmem:[%s214 + $0x84] sm:$0xe]
      %v1219 = vld [vmem:[%s214 + $0x90] sm:$0xe]
      %v1220 = vld [vmem:[%s214 + $0x9c] sm:$0xe]
      %v1221 = vld [vmem:[%s214 + $0xa8] sm:$0xe]
      %v1222 = vld [vmem:[%s214 + $0xb4] sm:$0xe]
      %vm1255 = vcmask 1042432
      %vm1256 = vcmask 1046532
      %vm1257 = vmor %vm1255, %vm1256
      %v1258 = vrot.slane %v1207, 5
      %v1259 = vrot.slane %v1258, 4
      %v1260 = vrot.slane %v216, 5
      %v1261 = vsel %vm1257, %v1259, %v1260
      %v1262 = vrot.slane %v1260, 4
      %v1263 = vrot.slane %v248, 5
      %v1264 = vsel %vm1257, %v1262, %v1263
      %v1265 = vrot.slane %v1208, 5
      %v1266 = vrot.slane %v1265, 4
      %v1267 = vrot.slane %v218, 5
      %v1268 = vsel %vm1257, %v1266, %v1267
      %v1269 = vrot.slane %v1267, 4
      %v1270 = vrot.slane %v249, 5
      %v1271 = vsel %vm1257, %v1269, %v1270
      %v1272 = vrot.slane %v1209, 5
      %v1273 = vrot.slane %v1272, 4
      %v1274 = vrot.slane %v220, 5
      %v1275 = vsel %vm1257, %v1273, %v1274
      %v1276 = vrot.slane %v1274, 4
      %v1277 = vrot.slane %v250, 5
      %v1278 = vsel %vm1257, %v1276, %v1277
      %v1279 = vrot.slane %v1210, 5
      %v1280 = vrot.slane %v1279, 4
      %v1281 = vrot.slane %v222, 5
      %v1282 = vsel %vm1257, %v1280, %v1281
      %v1283 = vrot.slane %v1281, 4
      %v1284 = vrot.slane %v251, 5
      %v1285 = vsel %vm1257, %v1283, %v1284
      %v1286 = vrot.slane %v1211, 5
      %v1287 = vrot.slane %v1286, 4
      %v1288 = vrot.slane %v224, 5
      %v1289 = vsel %vm1257, %v1287, %v1288
      %v1290 = vrot.slane %v1288, 4
      %v1291 = vrot.slane %v252, 5
      %v1292 = vsel %vm1257, %v1290, %v1291
      %v1293 = vrot.slane %v1212, 5
      %v1294 = vrot.slane %v1293, 4
      %v1295 = vrot.slane %v226, 5
      %v1296 = vsel %vm1257, %v1294, %v1295
      %v1297 = vrot.slane %v1295, 4
      %v1298 = vrot.slane %v253, 5
      %v1299 = vsel %vm1257, %v1297, %v1298
      %v1300 = vrot.slane %v1213, 5
      %v1301 = vrot.slane %v1300, 4
      %v1302 = vrot.slane %v228, 5
      %v1303 = vsel %vm1257, %v1301, %v1302
      %v1304 = vrot.slane %v1302, 4
      %v1305 = vrot.slane %v254, 5
      %v1306 = vsel %vm1257, %v1304, %v1305
      %v1307 = vrot.slane %v1214, 5
      %v1308 = vrot.slane %v1307, 4
      %v1309 = vrot.slane %v230, 5
      %v1310 = vsel %vm1257, %v1308, %v1309
      %v1311 = vrot.slane %v1309, 4
      %v1312 = vrot.slane %v255, 5
      %v1313 = vsel %vm1257, %v1311, %v1312
      %v1314 = vrot.slane %v1215, 5
      %v1315 = vrot.slane %v1314, 4
      %v1316 = vrot.slane %v232, 5
      %v1317 = vsel %vm1257, %v1315, %v1316
      %v1318 = vrot.slane %v1316, 4
      %v1319 = vrot.slane %v256, 5
      %v1320 = vsel %vm1257, %v1318, %v1319
      %v1321 = vrot.slane %v1216, 5
      %v1322 = vrot.slane %v1321, 4
      %v1323 = vrot.slane %v234, 5
      %v1324 = vsel %vm1257, %v1322, %v1323
      %v1325 = vrot.slane %v1323, 4
      %v1326 = vrot.slane %v257, 5
      %v1327 = vsel %vm1257, %v1325, %v1326
      %v1328 = vrot.slane %v1217, 5
      %v1329 = vrot.slane %v1328, 4
      %v1330 = vrot.slane %v236, 5
      %v1331 = vsel %vm1257, %v1329, %v1330
      %v1332 = vrot.slane %v1330, 4
      %v1333 = vrot.slane %v258, 5
      %v1334 = vsel %vm1257, %v1332, %v1333
      %v1335 = vrot.slane %v1218, 5
      %v1336 = vrot.slane %v1335, 4
      %v1337 = vrot.slane %v238, 5
      %v1338 = vsel %vm1257, %v1336, %v1337
      %v1339 = vrot.slane %v1337, 4
      %v1340 = vrot.slane %v259, 5
      %v1341 = vsel %vm1257, %v1339, %v1340
      %v1342 = vrot.slane %v1219, 5
      %v1343 = vrot.slane %v1342, 4
      %v1344 = vrot.slane %v240, 5
      %v1345 = vsel %vm1257, %v1343, %v1344
      %v1346 = vrot.slane %v1344, 4
      %v1347 = vrot.slane %v260, 5
      %v1348 = vsel %vm1257, %v1346, %v1347
      %v1349 = vrot.slane %v1220, 5
      %v1350 = vrot.slane %v1349, 4
      %v1351 = vrot.slane %v242, 5
      %v1352 = vsel %vm1257, %v1350, %v1351
      %v1353 = vrot.slane %v1351, 4
      %v1354 = vrot.slane %v261, 5
      %v1355 = vsel %vm1257, %v1353, %v1354
      %v1356 = vrot.slane %v1221, 5
      %v1357 = vrot.slane %v1356, 4
      %v1358 = vrot.slane %v244, 5
      %v1359 = vsel %vm1257, %v1357, %v1358
      %v1360 = vrot.slane %v1358, 4
      %v1361 = vrot.slane %v262, 5
      %v1362 = vsel %vm1257, %v1360, %v1361
      %v1363 = vrot.slane %v1222, 5
      %v1364 = vrot.slane %v1363, 4
      %v1365 = vrot.slane %v246, 5
      %v1366 = vsel %vm1257, %v1364, %v1365
      %v1367 = vrot.slane %v1365, 4
      %v1368 = vrot.slane %v263, 5
      %v1369 = vsel %vm1257, %v1367, %v1368
      %s1370 = scalar_lea.vmem %s1, 4
      %v1371 = vld [vmem:[%s1370] sm:$0x3]
      %v1372 = vunpack.c.l.b16 %v1261
      %v1373 = vunpack.c.l.b16 %v1264
      %v1374 = vunpack.c.l.b16 %v1268
      %v1375 = vunpack.c.l.b16 %v1271
      %v1376 = vunpack.c.l.b16 %v1275
      %v1377 = vunpack.c.l.b16 %v1278
      %v1378 = vunpack.c.l.b16 %v1282
      %v1379 = vunpack.c.l.b16 %v1285
      %v1380 = vunpack.c.l.b16 %v1289
      %v1381 = vunpack.c.l.b16 %v1292
      %v1382 = vunpack.c.l.b16 %v1296
      %v1383 = vunpack.c.l.b16 %v1299
      %v1384 = vunpack.c.l.b16 %v1303
      %v1385 = vunpack.c.l.b16 %v1306
      %v1386 = vunpack.c.l.b16 %v1310
      %v1387 = vunpack.c.l.b16 %v1313
      %v1388 = vunpack.c.l.b16 %v1317
      %v1389 = vunpack.c.l.b16 %v1320
      %v1390 = vunpack.c.l.b16 %v1324
      %v1391 = vunpack.c.l.b16 %v1327
      %v1392 = vunpack.c.l.b16 %v1331
      %v1393 = vunpack.c.l.b16 %v1334
      %v1394 = vunpack.c.l.b16 %v1338
      %v1395 = vunpack.c.l.b16 %v1341
      %v1396 = vunpack.c.l.b16 %v1345
      %v1397 = vunpack.c.l.b16 %v1348
      %v1398 = vunpack.c.l.b16 %v1352
      %v1399 = vunpack.c.l.b16 %v1355
      %v1400 = vunpack.c.l.b16 %v1359
      %v1401 = vunpack.c.l.b16 %v1362
      %v1402 = vunpack.c.l.b16 %v1366
      %v1403 = vunpack.c.l.b16 %v1369
      %v1404 = vpack.c.b16 %v1373, %v1372
      %v1405 = vpack.c.b16 %v1375, %v1374
      %v1406 = vpack.c.b16 %v1377, %v1376
      %v1407 = vpack.c.b16 %v1379, %v1378
      %v1408 = vpack.c.b16 %v1381, %v1380
      %v1409 = vpack.c.b16 %v1383, %v1382
      %v1410 = vpack.c.b16 %v1385, %v1384
      %v1411 = vpack.c.b16 %v1387, %v1386
      %v1412 = vpack.c.b16 %v1389, %v1388
      %v1413 = vpack.c.b16 %v1391, %v1390
      %v1414 = vpack.c.b16 %v1393, %v1392
      %v1415 = vpack.c.b16 %v1395, %v1394
      %v1416 = vpack.c.b16 %v1397, %v1396
      %v1417 = vpack.c.b16 %v1399, %v1398
      %v1418 = vpack.c.b16 %v1401, %v1400
      %v1419 = vpack.c.b16 %v1403, %v1402
      %v1421 = vsel %vm701, %v1404, 0
      %v1424 = vsel %vm701, %v1405, 0
      %v1427 = vsel %vm701, %v1406, 0
      %v1430 = vsel %vm701, %v1407, 0
      %v1433 = vsel %vm701, %v1408, 0
      %v1436 = vsel %vm701, %v1409, 0
      %v1439 = vsel %vm701, %v1410, 0
      %v1442 = vsel %vm701, %v1411, 0
      %v1445 = vsel %vm701, %v1412, 0
      %v1448 = vsel %vm701, %v1413, 0
      %v1451 = vsel %vm701, %v1414, 0
      %v1454 = vsel %vm701, %v1415, 0
      %v1457 = vsel %vm701, %v1416, 0
      %v1460 = vsel %vm701, %v1417, 0
      %v1463 = vsel %vm701, %v1418, 0
      %v1466 = vsel %vm701, %v1419, 0
      %v1469 = vsel %vm750, %v1371, 0
      %1471 = vmatprep.subr.bf16.mxu0 0
      %1472 = vmatpush1.bf16.msra.mxu0 %v1469
      %1473 = vmatprep.subr.bf16.mxu0 0
      %1474 = vmatpush1.bf16.msra.mxu0 0
      %1475 = vmatprep.subr.bf16.mxu0 0
      %1476 = vmatpush1.bf16.msra.mxu0 0
      %1477 = vmatprep.subr.bf16.mxu0 0
      %1478 = vmatpush1.bf16.msra.mxu0 0
      %1479 = vmatprep.subr.bf16.mxu0 0
      %1480 = vmatpush1.bf16.msra.mxu0 0
      %1481 = vmatprep.subr.bf16.mxu0 0
      %1482 = vmatpush1.bf16.msra.mxu0 0
      %1483 = vmatprep.subr.bf16.mxu0 0
      %1484 = vmatpush1.bf16.msra.mxu0 0
      %1485 = vmatprep.subr.bf16.mxu0 0
      %1486 = vmatpush1.bf16.msra.mxu0 0
      %1487 = vmatprep.subr.bf16.mxu0 0
      %1488 = vmatpush1.bf16.msra.mxu0 0
      %1489 = vmatprep.subr.bf16.mxu0 0
      %1490 = vmatpush1.bf16.msra.mxu0 0
      %1491 = vmatprep.subr.bf16.mxu0 0
      %1492 = vmatpush1.bf16.msra.mxu0 0
      %1493 = vmatprep.subr.bf16.mxu0 0
      %1494 = vmatpush1.bf16.msra.mxu0 0
      %1495 = vmatprep.subr.bf16.mxu0 0
      %1496 = vmatpush1.bf16.msra.mxu0 0
      %1497 = vmatprep.subr.bf16.mxu0 0
      %1498 = vmatpush1.bf16.msra.mxu0 0
      %1499 = vmatprep.subr.bf16.mxu0 0
      %1500 = vmatpush1.bf16.msra.mxu0 0
      %1501 = vmatprep.subr.bf16.mxu0 0
      %1502 = vmatpush1.bf16.msra.mxu0 0
      %1503 = vmatprep.mubr.bf16.mxu0 0
      %1504 = vmatmul.mubr.bf16.gmra.mrb[0].mxu0 %v1421
      %v1505 = vpop.f32.mrb[0].mxu0
      %v1506 = vadd.f32 0.0, %v1505
      %v1507 = vpop.f32.mrb[0].mxu0
      %v1508 = vpop.f32.mrb[0].mxu0
      %v1509 = vadd.f32 0.0, %v1508
      %v1510 = vpop.f32.mrb[0].mxu0
      %1511 = vmatprep.mubr.bf16.mxu0 0
      %1512 = vmatmul.mubr.bf16.gmra.mrb[0].mxu0 %v1424
      %v1513 = vpop.f32.mrb[0].mxu0
      %v1514 = vadd.f32 0.0, %v1513
      %v1515 = vpop.f32.mrb[0].mxu0
      %v1516 = vpop.f32.mrb[0].mxu0
      %v1517 = vadd.f32 0.0, %v1516
      %v1518 = vpop.f32.mrb[0].mxu0
      %1519 = vmatprep.mubr.bf16.mxu0 0
      %1520 = vmatmul.mubr.bf16.gmra.mrb[0].mxu0 %v1427
      %v1521 = vpop.f32.mrb[0].mxu0
      %v1522 = vadd.f32 0.0, %v1521
      %v1523 = vpop.f32.mrb[0].mxu0
      %v1524 = vpop.f32.mrb[0].mxu0
      %v1525 = vadd.f32 0.0, %v1524
      %v1526 = vpop.f32.mrb[0].mxu0
      %1527 = vmatprep.mubr.bf16.mxu0 0
      %1528 = vmatmul.mubr.bf16.gmra.mrb[0].mxu0 %v1430
      %v1529 = vpop.f32.mrb[0].mxu0
      %v1530 = vadd.f32 0.0, %v1529
      %v1531 = vpop.f32.mrb[0].mxu0
      %v1532 = vpop.f32.mrb[0].mxu0
      %v1533 = vadd.f32 0.0, %v1532
      %v1534 = vpop.f32.mrb[0].mxu0
      %1535 = vmatprep.mubr.bf16.mxu0 0
      %1536 = vmatmul.mubr.bf16.gmra.mrb[0].mxu0 %v1433
      %v1537 = vpop.f32.mrb[0].mxu0
      %v1538 = vadd.f32 0.0, %v1537
      %v1539 = vpop.f32.mrb[0].mxu0
      %v1540 = vpop.f32.mrb[0].mxu0
      %v1541 = vadd.f32 0.0, %v1540
      %v1542 = vpop.f32.mrb[0].mxu0
      %1543 = vmatprep.mubr.bf16.mxu0 0
      %1544 = vmatmul.mubr.bf16.gmra.mrb[0].mxu0 %v1436
      %v1545 = vpop.f32.mrb[0].mxu0
      %v1546 = vadd.f32 0.0, %v1545
      %v1547 = vpop.f32.mrb[0].mxu0
      %v1548 = vpop.f32.mrb[0].mxu0
      %v1549 = vadd.f32 0.0, %v1548
      %v1550 = vpop.f32.mrb[0].mxu0
      %1551 = vmatprep.mubr.bf16.mxu0 0
      %1552 = vmatmul.mubr.bf16.gmra.mrb[0].mxu0 %v1439
      %v1553 = vpop.f32.mrb[0].mxu0
      %v1554 = vadd.f32 0.0, %v1553
      %v1555 = vpop.f32.mrb[0].mxu0
      %v1556 = vpop.f32.mrb[0].mxu0
      %v1557 = vadd.f32 0.0, %v1556
      %v1558 = vpop.f32.mrb[0].mxu0
      %1559 = vmatprep.mubr.bf16.mxu0 0
      %1560 = vmatmul.mubr.bf16.gmra.mrb[0].mxu0 %v1442
      %v1561 = vpop.f32.mrb[0].mxu0
      %v1562 = vadd.f32 0.0, %v1561
      %v1563 = vpop.f32.mrb[0].mxu0
      %v1564 = vpop.f32.mrb[0].mxu0
      %v1565 = vadd.f32 0.0, %v1564
      %v1566 = vpop.f32.mrb[0].mxu0
      %1567 = vmatprep.mubr.bf16.mxu0 0
      %1568 = vmatmul.mubr.bf16.gmra.mrb[0].mxu0 %v1445
      %v1569 = vpop.f32.mrb[0].mxu0
      %v1570 = vadd.f32 0.0, %v1569
      %v1571 = vpop.f32.mrb[0].mxu0
      %v1572 = vpop.f32.mrb[0].mxu0
      %v1573 = vadd.f32 0.0, %v1572
      %v1574 = vpop.f32.mrb[0].mxu0
      %1575 = vmatprep.mubr.bf16.mxu0 0
      %1576 = vmatmul.mubr.bf16.gmra.mrb[0].mxu0 %v1448
      %v1577 = vpop.f32.mrb[0].mxu0
      %v1578 = vadd.f32 0.0, %v1577
      %v1579 = vpop.f32.mrb[0].mxu0
      %v1580 = vpop.f32.mrb[0].mxu0
      %v1581 = vadd.f32 0.0, %v1580
      %v1582 = vpop.f32.mrb[0].mxu0
      %1583 = vmatprep.mubr.bf16.mxu0 0
      %1584 = vmatmul.mubr.bf16.gmra.mrb[0].mxu0 %v1451
      %v1585 = vpop.f32.mrb[0].mxu0
      %v1586 = vadd.f32 0.0, %v1585
      %v1587 = vpop.f32.mrb[0].mxu0
      %v1588 = vpop.f32.mrb[0].mxu0
      %v1589 = vadd.f32 0.0, %v1588
      %v1590 = vpop.f32.mrb[0].mxu0
      %1591 = vmatprep.mubr.bf16.mxu0 0
      %1592 = vmatmul.mubr.bf16.gmra.mrb[0].mxu0 %v1454
      %v1593 = vpop.f32.mrb[0].mxu0
      %v1594 = vadd.f32 0.0, %v1593
      %v1595 = vpop.f32.mrb[0].mxu0
      %v1596 = vpop.f32.mrb[0].mxu0
      %v1597 = vadd.f32 0.0, %v1596
      %v1598 = vpop.f32.mrb[0].mxu0
      %1599 = vmatprep.mubr.bf16.mxu0 0
      %1600 = vmatmul.mubr.bf16.gmra.mrb[0].mxu0 %v1457
      %v1601 = vpop.f32.mrb[0].mxu0
      %v1602 = vadd.f32 0.0, %v1601
      %v1603 = vpop.f32.mrb[0].mxu0
      %v1604 = vpop.f32.mrb[0].mxu0
      %v1605 = vadd.f32 0.0, %v1604
      %v1606 = vpop.f32.mrb[0].mxu0
      %1607 = vmatprep.mubr.bf16.mxu0 0
      %1608 = vmatmul.mubr.bf16.gmra.mrb[0].mxu0 %v1460
      %v1609 = vpop.f32.mrb[0].mxu0
      %v1610 = vadd.f32 0.0, %v1609
      %v1611 = vpop.f32.mrb[0].mxu0
      %v1612 = vpop.f32.mrb[0].mxu0
      %v1613 = vadd.f32 0.0, %v1612
      %v1614 = vpop.f32.mrb[0].mxu0
      %1615 = vmatprep.mubr.bf16.mxu0 0
      %1616 = vmatmul.mubr.bf16.gmra.mrb[0].mxu0 %v1463
      %v1617 = vpop.f32.mrb[0].mxu0
      %v1618 = vadd.f32 0.0, %v1617
      %v1619 = vpop.f32.mrb[0].mxu0
      %v1620 = vpop.f32.mrb[0].mxu0
      %v1621 = vadd.f32 0.0, %v1620
      %v1622 = vpop.f32.mrb[0].mxu0
      %1623 = vmatprep.mubr.bf16.mxu0 0
      %1624 = vmatmul.mubr.bf16.gmra.mrb[0].mxu0 %v1466
      %v1625 = vpop.f32.mrb[0].mxu0
      %v1626 = vadd.f32 0.0, %v1625
      %v1627 = vpop.f32.mrb[0].mxu0
      %v1628 = vpop.f32.mrb[0].mxu0
      %v1629 = vadd.f32 0.0, %v1628
      %v1630 = vpop.f32.mrb[0].mxu0
      %1631 = vdwg.mxu0
      %v1632 = vadd.f32 %v1081, %v1506
      %v1633 = vadd.f32 %v1084, %v1509
      %v1634 = vadd.f32 %v1089, %v1514
      %v1635 = vadd.f32 %v1092, %v1517
      %v1636 = vadd.f32 %v1097, %v1522
      %v1637 = vadd.f32 %v1100, %v1525
      %v1638 = vadd.f32 %v1105, %v1530
      %v1639 = vadd.f32 %v1108, %v1533
      %v1640 = vadd.f32 %v1113, %v1538
      %v1641 = vadd.f32 %v1116, %v1541
      %v1642 = vadd.f32 %v1121, %v1546
      %v1643 = vadd.f32 %v1124, %v1549
      %v1644 = vadd.f32 %v1129, %v1554
      %v1645 = vadd.f32 %v1132, %v1557
      %v1646 = vadd.f32 %v1137, %v1562
      %v1647 = vadd.f32 %v1140, %v1565
      %v1648 = vadd.f32 %v1145, %v1570
      %v1649 = vadd.f32 %v1148, %v1573
      %v1650 = vadd.f32 %v1153, %v1578
      %v1651 = vadd.f32 %v1156, %v1581
      %v1652 = vadd.f32 %v1161, %v1586
      %v1653 = vadd.f32 %v1164, %v1589
      %v1654 = vadd.f32 %v1169, %v1594
      %v1655 = vadd.f32 %v1172, %v1597
      %v1656 = vadd.f32 %v1177, %v1602
      %v1657 = vadd.f32 %v1180, %v1605
      %v1658 = vadd.f32 %v1185, %v1610
      %v1659 = vadd.f32 %v1188, %v1613
      %v1660 = vadd.f32 %v1193, %v1618
      %v1661 = vadd.f32 %v1196, %v1621
      %v1662 = vadd.f32 %v1201, %v1626
      %v1663 = vadd.f32 %v1204, %v1629
      %s1664 = sadd.s32 %s211, 1
      %s1665 = smul.u32 %s1664, 3
      %s1666 = smul.addr %s1665, 4
      %s1667 = scalar_lea.vmem %s193, %s1666
      %v1668 = vld [vmem:[%s1667] sm:$0xf]
      %v1669 = vld [vmem:[%s1667 + $0x4] sm:$0xf]
      %v1670 = vld [vmem:[%s1667 + $0xc] sm:$0xf]
      %v1671 = vld [vmem:[%s1667 + $0x10] sm:$0xf]
      %v1672 = vld [vmem:[%s1667 + $0x18] sm:$0xf]
      %v1673 = vld [vmem:[%s1667 + $0x1c] sm:$0xf]
      %v1674 = vld [vmem:[%s1667 + $0x24] sm:$0xf]
      %v1675 = vld [vmem:[%s1667 + $0x28] sm:$0xf]
      %v1676 = vld [vmem:[%s1667 + $0x30] sm:$0xf]
      %v1677 = vld [vmem:[%s1667 + $0x34] sm:$0xf]
      %v1678 = vld [vmem:[%s1667 + $0x3c] sm:$0xf]
      %v1679 = vld [vmem:[%s1667 + $0x40] sm:$0xf]
      %v1680 = vld [vmem:[%s1667 + $0x48] sm:$0xf]
      %v1681 = vld [vmem:[%s1667 + $0x4c] sm:$0xf]
      %v1682 = vld [vmem:[%s1667 + $0x54] sm:$0xf]
      %v1683 = vld [vmem:[%s1667 + $0x58] sm:$0xf]
      %v1684 = vld [vmem:[%s1667 + $0x60] sm:$0xf]
      %v1685 = vld [vmem:[%s1667 + $0x64] sm:$0xf]
      %v1686 = vld [vmem:[%s1667 + $0x6c] sm:$0xf]
      %v1687 = vld [vmem:[%s1667 + $0x70] sm:$0xf]
      %v1688 = vld [vmem:[%s1667 + $0x78] sm:$0xf]
      %v1689 = vld [vmem:[%s1667 + $0x7c] sm:$0xf]
      %v1690 = vld [vmem:[%s1667 + $0x84] sm:$0xf]
      %v1691 = vld [vmem:[%s1667 + $0x88] sm:$0xf]
      %v1692 = vld [vmem:[%s1667 + $0x90] sm:$0xf]
      %v1693 = vld [vmem:[%s1667 + $0x94] sm:$0xf]
      %v1694 = vld [vmem:[%s1667 + $0x9c] sm:$0xf]
      %v1695 = vld [vmem:[%s1667 + $0xa0] sm:$0xf]
      %v1696 = vld [vmem:[%s1667 + $0xa8] sm:$0xf]
      %v1697 = vld [vmem:[%s1667 + $0xac] sm:$0xf]
      %v1698 = vld [vmem:[%s1667 + $0xb4] sm:$0xf]
      %v1699 = vld [vmem:[%s1667 + $0xb8] sm:$0xf]
      %s1700 = scalar_lea.vmem %s1, 6
      %v1701 = vld [vmem:[%s1700] sm:$0x3]
      %v1734 = vunpack.c.l.b16 %v1668
      %v1735 = vunpack.c.l.b16 %v1669
      %v1736 = vunpack.c.l.b16 %v1670
      %v1737 = vunpack.c.l.b16 %v1671
      %v1738 = vunpack.c.l.b16 %v1672
      %v1739 = vunpack.c.l.b16 %v1673
      %v1740 = vunpack.c.l.b16 %v1674
      %v1741 = vunpack.c.l.b16 %v1675
      %v1742 = vunpack.c.l.b16 %v1676
      %v1743 = vunpack.c.l.b16 %v1677
      %v1744 = vunpack.c.l.b16 %v1678
      %v1745 = vunpack.c.l.b16 %v1679
      %v1746 = vunpack.c.l.b16 %v1680
      %v1747 = vunpack.c.l.b16 %v1681
      %v1748 = vunpack.c.l.b16 %v1682
      %v1749 = vunpack.c.l.b16 %v1683
      %v1750 = vunpack.c.l.b16 %v1684
      %v1751 = vunpack.c.l.b16 %v1685
      %v1752 = vunpack.c.l.b16 %v1686
      %v1753 = vunpack.c.l.b16 %v1687
      %v1754 = vunpack.c.l.b16 %v1688
      %v1755 = vunpack.c.l.b16 %v1689
      %v1756 = vunpack.c.l.b16 %v1690
      %v1757 = vunpack.c.l.b16 %v1691
      %v1758 = vunpack.c.l.b16 %v1692
      %v1759 = vunpack.c.l.b16 %v1693
      %v1760 = vunpack.c.l.b16 %v1694
      %v1761 = vunpack.c.l.b16 %v1695
      %v1762 = vunpack.c.l.b16 %v1696
      %v1763 = vunpack.c.l.b16 %v1697
      %v1764 = vunpack.c.l.b16 %v1698
      %v1765 = vunpack.c.l.b16 %v1699
      %v1766 = vpack.c.b16 %v1735, %v1734
      %v1767 = vpack.c.b16 %v1737, %v1736
      %v1768 = vpack.c.b16 %v1739, %v1738
      %v1769 = vpack.c.b16 %v1741, %v1740
      %v1770 = vpack.c.b16 %v1743, %v1742
      %v1771 = vpack.c.b16 %v1745, %v1744
      %v1772 = vpack.c.b16 %v1747, %v1746
      %v1773 = vpack.c.b16 %v1749, %v1748
      %v1774 = vpack.c.b16 %v1751, %v1750
      %v1775 = vpack.c.b16 %v1753, %v1752
      %v1776 = vpack.c.b16 %v1755, %v1754
      %v1777 = vpack.c.b16 %v1757, %v1756
      %v1778 = vpack.c.b16 %v1759, %v1758
      %v1779 = vpack.c.b16 %v1761, %v1760
      %v1780 = vpack.c.b16 %v1763, %v1762
      %v1781 = vpack.c.b16 %v1765, %v1764
      %v1783 = vsel %vm701, %v1766, 0
      %v1786 = vsel %vm701, %v1767, 0
      %v1789 = vsel %vm701, %v1768, 0
      %v1792 = vsel %vm701, %v1769, 0
      %v1795 = vsel %vm701, %v1770, 0
      %v1798 = vsel %vm701, %v1771, 0
      %v1801 = vsel %vm701, %v1772, 0
      %v1804 = vsel %vm701, %v1773, 0
      %v1807 = vsel %vm701, %v1774, 0
      %v1810 = vsel %vm701, %v1775, 0
      %v1813 = vsel %vm701, %v1776, 0
      %v1816 = vsel %vm701, %v1777, 0
      %v1819 = vsel %vm701, %v1778, 0
      %v1822 = vsel %vm701, %v1779, 0
      %v1825 = vsel %vm701, %v1780, 0
      %v1828 = vsel %vm701, %v1781, 0
      %v1831 = vsel %vm750, %v1701, 0
      %1833 = vmatprep.subr.bf16.mxu0 0
      %1834 = vmatpush1.bf16.msra.mxu0 %v1831
      %1835 = vmatprep.subr.bf16.mxu0 0
      %1836 = vmatpush1.bf16.msra.mxu0 0
      %1837 = vmatprep.subr.bf16.mxu0 0
      %1838 = vmatpush1.bf16.msra.mxu0 0
      %1839 = vmatprep.subr.bf16.mxu0 0
      %1840 = vmatpush1.bf16.msra.mxu0 0
      %1841 = vmatprep.subr.bf16.mxu0 0
      %1842 = vmatpush1.bf16.msra.mxu0 0
      %1843 = vmatprep.subr.bf16.mxu0 0
      %1844 = vmatpush1.bf16.msra.mxu0 0
      %1845 = vmatprep.subr.bf16.mxu0 0
      %1846 = vmatpush1.bf16.msra.mxu0 0
      %1847 = vmatprep.subr.bf16.mxu0 0
      %1848 = vmatpush1.bf16.msra.mxu0 0
      %1849 = vmatprep.subr.bf16.mxu0 0
      %1850 = vmatpush1.bf16.msra.mxu0 0
      %1851 = vmatprep.subr.bf16.mxu0 0
      %1852 = vmatpush1.bf16.msra.mxu0 0
      %1853 = vmatprep.subr.bf16.mxu0 0
      %1854 = vmatpush1.bf16.msra.mxu0 0
      %1855 = vmatprep.subr.bf16.mxu0 0
      %1856 = vmatpush1.bf16.msra.mxu0 0
      %1857 = vmatprep.subr.bf16.mxu0 0
      %1858 = vmatpush1.bf16.msra.mxu0 0
      %1859 = vmatprep.subr.bf16.mxu0 0
      %1860 = vmatpush1.bf16.msra.mxu0 0
      %1861 = vmatprep.subr.bf16.mxu0 0
      %1862 = vmatpush1.bf16.msra.mxu0 0
      %1863 = vmatprep.subr.bf16.mxu0 0
      %1864 = vmatpush1.bf16.msra.mxu0 0
      %1865 = vmatprep.mubr.bf16.mxu0 0
      %1866 = vmatmul.mubr.bf16.gmra.mrb[0].mxu0 %v1783
      %v1867 = vpop.f32.mrb[0].mxu0
      %v1868 = vadd.f32 0.0, %v1867
      %v1869 = vpop.f32.mrb[0].mxu0
      %v1870 = vpop.f32.mrb[0].mxu0
      %v1871 = vadd.f32 0.0, %v1870
      %v1872 = vpop.f32.mrb[0].mxu0
      %1873 = vmatprep.mubr.bf16.mxu0 0
      %1874 = vmatmul.mubr.bf16.gmra.mrb[0].mxu0 %v1786
      %v1875 = vpop.f32.mrb[0].mxu0
      %v1876 = vadd.f32 0.0, %v1875
      %v1877 = vpop.f32.mrb[0].mxu0
      %v1878 = vpop.f32.mrb[0].mxu0
      %v1879 = vadd.f32 0.0, %v1878
      %v1880 = vpop.f32.mrb[0].mxu0
      %1881 = vmatprep.mubr.bf16.mxu0 0
      %1882 = vmatmul.mubr.bf16.gmra.mrb[0].mxu0 %v1789
      %v1883 = vpop.f32.mrb[0].mxu0
      %v1884 = vadd.f32 0.0, %v1883
      %v1885 = vpop.f32.mrb[0].mxu0
      %v1886 = vpop.f32.mrb[0].mxu0
      %v1887 = vadd.f32 0.0, %v1886
      %v1888 = vpop.f32.mrb[0].mxu0
      %1889 = vmatprep.mubr.bf16.mxu0 0
      %1890 = vmatmul.mubr.bf16.gmra.mrb[0].mxu0 %v1792
      %v1891 = vpop.f32.mrb[0].mxu0
      %v1892 = vadd.f32 0.0, %v1891
      %v1893 = vpop.f32.mrb[0].mxu0
      %v1894 = vpop.f32.mrb[0].mxu0
      %v1895 = vadd.f32 0.0, %v1894
      %v1896 = vpop.f32.mrb[0].mxu0
      %1897 = vmatprep.mubr.bf16.mxu0 0
      %1898 = vmatmul.mubr.bf16.gmra.mrb[0].mxu0 %v1795
      %v1899 = vpop.f32.mrb[0].mxu0
      %v1900 = vadd.f32 0.0, %v1899
      %v1901 = vpop.f32.mrb[0].mxu0
      %v1902 = vpop.f32.mrb[0].mxu0
      %v1903 = vadd.f32 0.0, %v1902
      %v1904 = vpop.f32.mrb[0].mxu0
      %1905 = vmatprep.mubr.bf16.mxu0 0
      %1906 = vmatmul.mubr.bf16.gmra.mrb[0].mxu0 %v1798
      %v1907 = vpop.f32.mrb[0].mxu0
      %v1908 = vadd.f32 0.0, %v1907
      %v1909 = vpop.f32.mrb[0].mxu0
      %v1910 = vpop.f32.mrb[0].mxu0
      %v1911 = vadd.f32 0.0, %v1910
      %v1912 = vpop.f32.mrb[0].mxu0
      %1913 = vmatprep.mubr.bf16.mxu0 0
      %1914 = vmatmul.mubr.bf16.gmra.mrb[0].mxu0 %v1801
      %v1915 = vpop.f32.mrb[0].mxu0
      %v1916 = vadd.f32 0.0, %v1915
      %v1917 = vpop.f32.mrb[0].mxu0
      %v1918 = vpop.f32.mrb[0].mxu0
      %v1919 = vadd.f32 0.0, %v1918
      %v1920 = vpop.f32.mrb[0].mxu0
      %1921 = vmatprep.mubr.bf16.mxu0 0
      %1922 = vmatmul.mubr.bf16.gmra.mrb[0].mxu0 %v1804
      %v1923 = vpop.f32.mrb[0].mxu0
      %v1924 = vadd.f32 0.0, %v1923
      %v1925 = vpop.f32.mrb[0].mxu0
      %v1926 = vpop.f32.mrb[0].mxu0
      %v1927 = vadd.f32 0.0, %v1926
      %v1928 = vpop.f32.mrb[0].mxu0
      %1929 = vmatprep.mubr.bf16.mxu0 0
      %1930 = vmatmul.mubr.bf16.gmra.mrb[0].mxu0 %v1807
      %v1931 = vpop.f32.mrb[0].mxu0
      %v1932 = vadd.f32 0.0, %v1931
      %v1933 = vpop.f32.mrb[0].mxu0
      %v1934 = vpop.f32.mrb[0].mxu0
      %v1935 = vadd.f32 0.0, %v1934
      %v1936 = vpop.f32.mrb[0].mxu0
      %1937 = vmatprep.mubr.bf16.mxu0 0
      %1938 = vmatmul.mubr.bf16.gmra.mrb[0].mxu0 %v1810
      %v1939 = vpop.f32.mrb[0].mxu0
      %v1940 = vadd.f32 0.0, %v1939
      %v1941 = vpop.f32.mrb[0].mxu0
      %v1942 = vpop.f32.mrb[0].mxu0
      %v1943 = vadd.f32 0.0, %v1942
      %v1944 = vpop.f32.mrb[0].mxu0
      %1945 = vmatprep.mubr.bf16.mxu0 0
      %1946 = vmatmul.mubr.bf16.gmra.mrb[0].mxu0 %v1813
      %v1947 = vpop.f32.mrb[0].mxu0
      %v1948 = vadd.f32 0.0, %v1947
      %v1949 = vpop.f32.mrb[0].mxu0
      %v1950 = vpop.f32.mrb[0].mxu0
      %v1951 = vadd.f32 0.0, %v1950
      %v1952 = vpop.f32.mrb[0].mxu0
      %1953 = vmatprep.mubr.bf16.mxu0 0
      %1954 = vmatmul.mubr.bf16.gmra.mrb[0].mxu0 %v1816
      %v1955 = vpop.f32.mrb[0].mxu0
      %v1956 = vadd.f32 0.0, %v1955
      %v1957 = vpop.f32.mrb[0].mxu0
      %v1958 = vpop.f32.mrb[0].mxu0
      %v1959 = vadd.f32 0.0, %v1958
      %v1960 = vpop.f32.mrb[0].mxu0
      %1961 = vmatprep.mubr.bf16.mxu0 0
      %1962 = vmatmul.mubr.bf16.gmra.mrb[0].mxu0 %v1819
      %v1963 = vpop.f32.mrb[0].mxu0
      %v1964 = vadd.f32 0.0, %v1963
      %v1965 = vpop.f32.mrb[0].mxu0
      %v1966 = vpop.f32.mrb[0].mxu0
      %v1967 = vadd.f32 0.0, %v1966
      %v1968 = vpop.f32.mrb[0].mxu0
      %1969 = vmatprep.mubr.bf16.mxu0 0
      %1970 = vmatmul.mubr.bf16.gmra.mrb[0].mxu0 %v1822
      %v1971 = vpop.f32.mrb[0].mxu0
      %v1972 = vadd.f32 0.0, %v1971
      %v1973 = vpop.f32.mrb[0].mxu0
      %v1974 = vpop.f32.mrb[0].mxu0
      %v1975 = vadd.f32 0.0, %v1974
      %v1976 = vpop.f32.mrb[0].mxu0
      %1977 = vmatprep.mubr.bf16.mxu0 0
      %1978 = vmatmul.mubr.bf16.gmra.mrb[0].mxu0 %v1825
      %v1979 = vpop.f32.mrb[0].mxu0
      %v1980 = vadd.f32 0.0, %v1979
      %v1981 = vpop.f32.mrb[0].mxu0
      %v1982 = vpop.f32.mrb[0].mxu0
      %v1983 = vadd.f32 0.0, %v1982
      %v1984 = vpop.f32.mrb[0].mxu0
      %1985 = vmatprep.mubr.bf16.mxu0 0
      %1986 = vmatmul.mubr.bf16.gmra.mrb[0].mxu0 %v1828
      %v1987 = vpop.f32.mrb[0].mxu0
      %v1988 = vadd.f32 0.0, %v1987
      %v1989 = vpop.f32.mrb[0].mxu0
      %v1990 = vpop.f32.mrb[0].mxu0
      %v1991 = vadd.f32 0.0, %v1990
      %v1992 = vpop.f32.mrb[0].mxu0
      %1993 = vdwg.mxu0
      %v1994 = vadd.f32 %v1632, %v1868
      %v1995 = vadd.f32 %v1633, %v1871
      %v1996 = vadd.f32 %v1634, %v1876
      %v1997 = vadd.f32 %v1635, %v1879
      %v1998 = vadd.f32 %v1636, %v1884
      %v1999 = vadd.f32 %v1637, %v1887
      %v2000 = vadd.f32 %v1638, %v1892
      %v2001 = vadd.f32 %v1639, %v1895
      %v2002 = vadd.f32 %v1640, %v1900
      %v2003 = vadd.f32 %v1641, %v1903
      %v2004 = vadd.f32 %v1642, %v1908
      %v2005 = vadd.f32 %v1643, %v1911
      %v2006 = vadd.f32 %v1644, %v1916
      %v2007 = vadd.f32 %v1645, %v1919
      %v2008 = vadd.f32 %v1646, %v1924
      %v2009 = vadd.f32 %v1647, %v1927
      %v2010 = vadd.f32 %v1648, %v1932
      %v2011 = vadd.f32 %v1649, %v1935
      %v2012 = vadd.f32 %v1650, %v1940
      %v2013 = vadd.f32 %v1651, %v1943
      %v2014 = vadd.f32 %v1652, %v1948
      %v2015 = vadd.f32 %v1653, %v1951
      %v2016 = vadd.f32 %v1654, %v1956
      %v2017 = vadd.f32 %v1655, %v1959
      %v2018 = vadd.f32 %v1656, %v1964
      %v2019 = vadd.f32 %v1657, %v1967
      %v2020 = vadd.f32 %v1658, %v1972
      %v2021 = vadd.f32 %v1659, %v1975
      %v2022 = vadd.f32 %v1660, %v1980
      %v2023 = vadd.f32 %v1661, %v1983
      %v2024 = vadd.f32 %v1662, %v1988
      %v2025 = vadd.f32 %v1663, %v1991
      %v2026 = vld [vmem:[%s1667] sm:$0xf]
      %v2027 = vld [vmem:[%s1667 + $0x4] sm:$0xf]
      %v2028 = vld [vmem:[%s1667 + $0x8] sm:$0x1]
      %v2029 = vld [vmem:[%s1667 + $0xc] sm:$0xf]
      %v2030 = vld [vmem:[%s1667 + $0x10] sm:$0xf]
      %v2031 = vld [vmem:[%s1667 + $0x14] sm:$0x1]
      %v2032 = vld [vmem:[%s1667 + $0x18] sm:$0xf]
      %v2033 = vld [vmem:[%s1667 + $0x1c] sm:$0xf]
      %v2034 = vld [vmem:[%s1667 + $0x20] sm:$0x1]
      %v2035 = vld [vmem:[%s1667 + $0x24] sm:$0xf]
      %v2036 = vld [vmem:[%s1667 + $0x28] sm:$0xf]
      %v2037 = vld [vmem:[%s1667 + $0x2c] sm:$0x1]
      %v2038 = vld [vmem:[%s1667 + $0x30] sm:$0xf]
      %v2039 = vld [vmem:[%s1667 + $0x34] sm:$0xf]
      %v2040 = vld [vmem:[%s1667 + $0x38] sm:$0x1]
      %v2041 = vld [vmem:[%s1667 + $0x3c] sm:$0xf]
      %v2042 = vld [vmem:[%s1667 + $0x40] sm:$0xf]
      %v2043 = vld [vmem:[%s1667 + $0x44] sm:$0x1]
      %v2044 = vld [vmem:[%s1667 + $0x48] sm:$0xf]
      %v2045 = vld [vmem:[%s1667 + $0x4c] sm:$0xf]
      %v2046 = vld [vmem:[%s1667 + $0x50] sm:$0x1]
      %v2047 = vld [vmem:[%s1667 + $0x54] sm:$0xf]
      %v2048 = vld [vmem:[%s1667 + $0x58] sm:$0xf]
      %v2049 = vld [vmem:[%s1667 + $0x5c] sm:$0x1]
      %v2050 = vld [vmem:[%s1667 + $0x60] sm:$0xf]
      %v2051 = vld [vmem:[%s1667 + $0x64] sm:$0xf]
      %v2052 = vld [vmem:[%s1667 + $0x68] sm:$0x1]
      %v2053 = vld [vmem:[%s1667 + $0x6c] sm:$0xf]
      %v2054 = vld [vmem:[%s1667 + $0x70] sm:$0xf]
      %v2055 = vld [vmem:[%s1667 + $0x74] sm:$0x1]
      %v2056 = vld [vmem:[%s1667 + $0x78] sm:$0xf]
      %v2057 = vld [vmem:[%s1667 + $0x7c] sm:$0xf]
      %v2058 = vld [vmem:[%s1667 + $0x80] sm:$0x1]
      %v2059 = vld [vmem:[%s1667 + $0x84] sm:$0xf]
      %v2060 = vld [vmem:[%s1667 + $0x88] sm:$0xf]
      %v2061 = vld [vmem:[%s1667 + $0x8c] sm:$0x1]
      %v2062 = vld [vmem:[%s1667 + $0x90] sm:$0xf]
      %v2063 = vld [vmem:[%s1667 + $0x94] sm:$0xf]
      %v2064 = vld [vmem:[%s1667 + $0x98] sm:$0x1]
      %v2065 = vld [vmem:[%s1667 + $0x9c] sm:$0xf]
      %v2066 = vld [vmem:[%s1667 + $0xa0] sm:$0xf]
      %v2067 = vld [vmem:[%s1667 + $0xa4] sm:$0x1]
      %v2068 = vld [vmem:[%s1667 + $0xa8] sm:$0xf]
      %v2069 = vld [vmem:[%s1667 + $0xac] sm:$0xf]
      %v2070 = vld [vmem:[%s1667 + $0xb0] sm:$0x1]
      %v2071 = vld [vmem:[%s1667 + $0xb4] sm:$0xf]
      %v2072 = vld [vmem:[%s1667 + $0xb8] sm:$0xf]
      %v2073 = vld [vmem:[%s1667 + $0xbc] sm:$0x1]
      %v2075 = vshrl.u32 %v2026, 16
      %v2077 = vrot.slane %v2075, 4
      %v2078 = vshll.u32 %v2026, 16
      %v2080 = vrot.slane %v2078, 5
      %v2081 = vor.u32 %v2077, %v2080
      %v2082 = vrot.slane %v2081, 4
      %v2084 = vshll.u32 %v2027, 16
      %v2086 = vrot.slane %v2084, 5
      %v2087 = vsel %vm266, %v2082, %v2086
      %v2088 = vshrl.u32 %v2027, 16
      %v2090 = vrot.slane %v2088, 4
      %v2091 = vor.u32 %v2090, %v2086
      %v2092 = vrot.slane %v2091, 4
      %v2094 = vshll.u32 %v2028, 16
      %v2096 = vrot.slane %v2094, 5
      %v2097 = vsel %vm266, %v2092, %v2096
      %v2099 = vshrl.u32 %v2029, 16
      %v2101 = vrot.slane %v2099, 4
      %v2102 = vshll.u32 %v2029, 16
      %v2104 = vrot.slane %v2102, 5
      %v2105 = vor.u32 %v2101, %v2104
      %v2106 = vrot.slane %v2105, 4
      %v2108 = vshll.u32 %v2030, 16
      %v2110 = vrot.slane %v2108, 5
      %v2111 = vsel %vm266, %v2106, %v2110
      %v2112 = vshrl.u32 %v2030, 16
      %v2114 = vrot.slane %v2112, 4
      %v2115 = vor.u32 %v2114, %v2110
      %v2116 = vrot.slane %v2115, 4
      %v2118 = vshll.u32 %v2031, 16
      %v2120 = vrot.slane %v2118, 5
      %v2121 = vsel %vm266, %v2116, %v2120
      %v2123 = vshrl.u32 %v2032, 16
      %v2125 = vrot.slane %v2123, 4
      %v2126 = vshll.u32 %v2032, 16
      %v2128 = vrot.slane %v2126, 5
      %v2129 = vor.u32 %v2125, %v2128
      %v2130 = vrot.slane %v2129, 4
      %v2132 = vshll.u32 %v2033, 16
      %v2134 = vrot.slane %v2132, 5
      %v2135 = vsel %vm266, %v2130, %v2134
      %v2136 = vshrl.u32 %v2033, 16
      %v2138 = vrot.slane %v2136, 4
      %v2139 = vor.u32 %v2138, %v2134
      %v2140 = vrot.slane %v2139, 4
      %v2142 = vshll.u32 %v2034, 16
      %v2144 = vrot.slane %v2142, 5
      %v2145 = vsel %vm266, %v2140, %v2144
      %v2147 = vshrl.u32 %v2035, 16
      %v2149 = vrot.slane %v2147, 4
      %v2150 = vshll.u32 %v2035, 16
      %v2152 = vrot.slane %v2150, 5
      %v2153 = vor.u32 %v2149, %v2152
      %v2154 = vrot.slane %v2153, 4
      %v2156 = vshll.u32 %v2036, 16
      %v2158 = vrot.slane %v2156, 5
      %v2159 = vsel %vm266, %v2154, %v2158
      %v2160 = vshrl.u32 %v2036, 16
      %v2162 = vrot.slane %v2160, 4
      %v2163 = vor.u32 %v2162, %v2158
      %v2164 = vrot.slane %v2163, 4
      %v2166 = vshll.u32 %v2037, 16
      %v2168 = vrot.slane %v2166, 5
      %v2169 = vsel %vm266, %v2164, %v2168
      %v2171 = vshrl.u32 %v2038, 16
      %v2173 = vrot.slane %v2171, 4
      %v2174 = vshll.u32 %v2038, 16
      %v2176 = vrot.slane %v2174, 5
      %v2177 = vor.u32 %v2173, %v2176
      %v2178 = vrot.slane %v2177, 4
      %v2180 = vshll.u32 %v2039, 16
      %v2182 = vrot.slane %v2180, 5
      %v2183 = vsel %vm266, %v2178, %v2182
      %v2184 = vshrl.u32 %v2039, 16
      %v2186 = vrot.slane %v2184, 4
      %v2187 = vor.u32 %v2186, %v2182
      %v2188 = vrot.slane %v2187, 4
      %v2190 = vshll.u32 %v2040, 16
      %v2192 = vrot.slane %v2190, 5
      %v2193 = vsel %vm266, %v2188, %v2192
      %v2195 = vshrl.u32 %v2041, 16
      %v2197 = vrot.slane %v2195, 4
      %v2198 = vshll.u32 %v2041, 16
      %v2200 = vrot.slane %v2198, 5
      %v2201 = vor.u32 %v2197, %v2200
      %v2202 = vrot.slane %v2201, 4
      %v2204 = vshll.u32 %v2042, 16
      %v2206 = vrot.slane %v2204, 5
      %v2207 = vsel %vm266, %v2202, %v2206
      %v2208 = vshrl.u32 %v2042, 16
      %v2210 = vrot.slane %v2208, 4
      %v2211 = vor.u32 %v2210, %v2206
      %v2212 = vrot.slane %v2211, 4
      %v2214 = vshll.u32 %v2043, 16
      %v2216 = vrot.slane %v2214, 5
      %v2217 = vsel %vm266, %v2212, %v2216
      %v2219 = vshrl.u32 %v2044, 16
      %v2221 = vrot.slane %v2219, 4
      %v2222 = vshll.u32 %v2044, 16
      %v2224 = vrot.slane %v2222, 5
      %v2225 = vor.u32 %v2221, %v2224
      %v2226 = vrot.slane %v2225, 4
      %v2228 = vshll.u32 %v2045, 16
      %v2230 = vrot.slane %v2228, 5
      %v2231 = vsel %vm266, %v2226, %v2230
      %v2232 = vshrl.u32 %v2045, 16
      %v2234 = vrot.slane %v2232, 4
      %v2235 = vor.u32 %v2234, %v2230
      %v2236 = vrot.slane %v2235, 4
      %v2238 = vshll.u32 %v2046, 16
      %v2240 = vrot.slane %v2238, 5
      %v2241 = vsel %vm266, %v2236, %v2240
      %v2243 = vshrl.u32 %v2047, 16
      %v2245 = vrot.slane %v2243, 4
      %v2246 = vshll.u32 %v2047, 16
      %v2248 = vrot.slane %v2246, 5
      %v2249 = vor.u32 %v2245, %v2248
      %v2250 = vrot.slane %v2249, 4
      %v2252 = vshll.u32 %v2048, 16
      %v2254 = vrot.slane %v2252, 5
      %v2255 = vsel %vm266, %v2250, %v2254
      %v2256 = vshrl.u32 %v2048, 16
      %v2258 = vrot.slane %v2256, 4
      %v2259 = vor.u32 %v2258, %v2254
      %v2260 = vrot.slane %v2259, 4
      %v2262 = vshll.u32 %v2049, 16
      %v2264 = vrot.slane %v2262, 5
      %v2265 = vsel %vm266, %v2260, %v2264
      %v2267 = vshrl.u32 %v2050, 16
      %v2269 = vrot.slane %v2267, 4
      %v2270 = vshll.u32 %v2050, 16
      %v2272 = vrot.slane %v2270, 5
      %v2273 = vor.u32 %v2269, %v2272
      %v2274 = vrot.slane %v2273, 4
      %v2276 = vshll.u32 %v2051, 16
      %v2278 = vrot.slane %v2276, 5
      %v2279 = vsel %vm266, %v2274, %v2278
      %v2280 = vshrl.u32 %v2051, 16
      %v2282 = vrot.slane %v2280, 4
      %v2283 = vor.u32 %v2282, %v2278
      %v2284 = vrot.slane %v2283, 4
      %v2286 = vshll.u32 %v2052, 16
      %v2288 = vrot.slane %v2286, 5
      %v2289 = vsel %vm266, %v2284, %v2288
      %v2291 = vshrl.u32 %v2053, 16
      %v2293 = vrot.slane %v2291, 4
      %v2294 = vshll.u32 %v2053, 16
      %v2296 = vrot.slane %v2294, 5
      %v2297 = vor.u32 %v2293, %v2296
      %v2298 = vrot.slane %v2297, 4
      %v2300 = vshll.u32 %v2054, 16
      %v2302 = vrot.slane %v2300, 5
      %v2303 = vsel %vm266, %v2298, %v2302
      %v2304 = vshrl.u32 %v2054, 16
      %v2306 = vrot.slane %v2304, 4
      %v2307 = vor.u32 %v2306, %v2302
      %v2308 = vrot.slane %v2307, 4
      %v2310 = vshll.u32 %v2055, 16
      %v2312 = vrot.slane %v2310, 5
      %v2313 = vsel %vm266, %v2308, %v2312
      %v2315 = vshrl.u32 %v2056, 16
      %v2317 = vrot.slane %v2315, 4
      %v2318 = vshll.u32 %v2056, 16
      %v2320 = vrot.slane %v2318, 5
      %v2321 = vor.u32 %v2317, %v2320
      %v2322 = vrot.slane %v2321, 4
      %v2324 = vshll.u32 %v2057, 16
      %v2326 = vrot.slane %v2324, 5
      %v2327 = vsel %vm266, %v2322, %v2326
      %v2328 = vshrl.u32 %v2057, 16
      %v2330 = vrot.slane %v2328, 4
      %v2331 = vor.u32 %v2330, %v2326
      %v2332 = vrot.slane %v2331, 4
      %v2334 = vshll.u32 %v2058, 16
      %v2336 = vrot.slane %v2334, 5
      %v2337 = vsel %vm266, %v2332, %v2336
      %v2339 = vshrl.u32 %v2059, 16
      %v2341 = vrot.slane %v2339, 4
      %v2342 = vshll.u32 %v2059, 16
      %v2344 = vrot.slane %v2342, 5
      %v2345 = vor.u32 %v2341, %v2344
      %v2346 = vrot.slane %v2345, 4
      %v2348 = vshll.u32 %v2060, 16
      %v2350 = vrot.slane %v2348, 5
      %v2351 = vsel %vm266, %v2346, %v2350
      %v2352 = vshrl.u32 %v2060, 16
      %v2354 = vrot.slane %v2352, 4
      %v2355 = vor.u32 %v2354, %v2350
      %v2356 = vrot.slane %v2355, 4
      %v2358 = vshll.u32 %v2061, 16
      %v2360 = vrot.slane %v2358, 5
      %v2361 = vsel %vm266, %v2356, %v2360
      %v2363 = vshrl.u32 %v2062, 16
      %v2365 = vrot.slane %v2363, 4
      %v2366 = vshll.u32 %v2062, 16
      %v2368 = vrot.slane %v2366, 5
      %v2369 = vor.u32 %v2365, %v2368
      %v2370 = vrot.slane %v2369, 4
      %v2372 = vshll.u32 %v2063, 16
      %v2374 = vrot.slane %v2372, 5
      %v2375 = vsel %vm266, %v2370, %v2374
      %v2376 = vshrl.u32 %v2063, 16
      %v2378 = vrot.slane %v2376, 4
      %v2379 = vor.u32 %v2378, %v2374
      %v2380 = vrot.slane %v2379, 4
      %v2382 = vshll.u32 %v2064, 16
      %v2384 = vrot.slane %v2382, 5
      %v2385 = vsel %vm266, %v2380, %v2384
      %v2387 = vshrl.u32 %v2065, 16
      %v2389 = vrot.slane %v2387, 4
      %v2390 = vshll.u32 %v2065, 16
      %v2392 = vrot.slane %v2390, 5
      %v2393 = vor.u32 %v2389, %v2392
      %v2394 = vrot.slane %v2393, 4
      %v2396 = vshll.u32 %v2066, 16
      %v2398 = vrot.slane %v2396, 5
      %v2399 = vsel %vm266, %v2394, %v2398
      %v2400 = vshrl.u32 %v2066, 16
      %v2402 = vrot.slane %v2400, 4
      %v2403 = vor.u32 %v2402, %v2398
      %v2404 = vrot.slane %v2403, 4
      %v2406 = vshll.u32 %v2067, 16
      %v2408 = vrot.slane %v2406, 5
      %v2409 = vsel %vm266, %v2404, %v2408
      %v2411 = vshrl.u32 %v2068, 16
      %v2413 = vrot.slane %v2411, 4
      %v2414 = vshll.u32 %v2068, 16
      %v2416 = vrot.slane %v2414, 5
      %v2417 = vor.u32 %v2413, %v2416
      %v2418 = vrot.slane %v2417, 4
      %v2420 = vshll.u32 %v2069, 16
      %v2422 = vrot.slane %v2420, 5
      %v2423 = vsel %vm266, %v2418, %v2422
      %v2424 = vshrl.u32 %v2069, 16
      %v2426 = vrot.slane %v2424, 4
      %v2427 = vor.u32 %v2426, %v2422
      %v2428 = vrot.slane %v2427, 4
      %v2430 = vshll.u32 %v2070, 16
      %v2432 = vrot.slane %v2430, 5
      %v2433 = vsel %vm266, %v2428, %v2432
      %v2435 = vshrl.u32 %v2071, 16
      %v2437 = vrot.slane %v2435, 4
      %v2438 = vshll.u32 %v2071, 16
      %v2440 = vrot.slane %v2438, 5
      %v2441 = vor.u32 %v2437, %v2440
      %v2442 = vrot.slane %v2441, 4
      %v2444 = vshll.u32 %v2072, 16
      %v2446 = vrot.slane %v2444, 5
      %v2447 = vsel %vm266, %v2442, %v2446
      %v2448 = vshrl.u32 %v2072, 16
      %v2450 = vrot.slane %v2448, 4
      %v2451 = vor.u32 %v2450, %v2446
      %v2452 = vrot.slane %v2451, 4
      %v2454 = vshll.u32 %v2073, 16
      %v2456 = vrot.slane %v2454, 5
      %v2457 = vsel %vm266, %v2452, %v2456
      %s2458 = scalar_lea.vmem %s1, 8
      %v2459 = vld [vmem:[%s2458] sm:$0x3]
      %v2460 = vunpack.c.l.b16 %v2087
      %v2461 = vunpack.c.l.b16 %v2097
      %v2462 = vunpack.c.l.b16 %v2111
      %v2463 = vunpack.c.l.b16 %v2121
      %v2464 = vunpack.c.l.b16 %v2135
      %v2465 = vunpack.c.l.b16 %v2145
      %v2466 = vunpack.c.l.b16 %v2159
      %v2467 = vunpack.c.l.b16 %v2169
      %v2468 = vunpack.c.l.b16 %v2183
      %v2469 = vunpack.c.l.b16 %v2193
      %v2470 = vunpack.c.l.b16 %v2207
      %v2471 = vunpack.c.l.b16 %v2217
      %v2472 = vunpack.c.l.b16 %v2231
      %v2473 = vunpack.c.l.b16 %v2241
      %v2474 = vunpack.c.l.b16 %v2255
      %v2475 = vunpack.c.l.b16 %v2265
      %v2476 = vunpack.c.l.b16 %v2279
      %v2477 = vunpack.c.l.b16 %v2289
      %v2478 = vunpack.c.l.b16 %v2303
      %v2479 = vunpack.c.l.b16 %v2313
      %v2480 = vunpack.c.l.b16 %v2327
      %v2481 = vunpack.c.l.b16 %v2337
      %v2482 = vunpack.c.l.b16 %v2351
      %v2483 = vunpack.c.l.b16 %v2361
      %v2484 = vunpack.c.l.b16 %v2375
      %v2485 = vunpack.c.l.b16 %v2385
      %v2486 = vunpack.c.l.b16 %v2399
      %v2487 = vunpack.c.l.b16 %v2409
      %v2488 = vunpack.c.l.b16 %v2423
      %v2489 = vunpack.c.l.b16 %v2433
      %v2490 = vunpack.c.l.b16 %v2447
      %v2491 = vunpack.c.l.b16 %v2457
      %v2492 = vpack.c.b16 %v2461, %v2460
      %v2493 = vpack.c.b16 %v2463, %v2462
      %v2494 = vpack.c.b16 %v2465, %v2464
      %v2495 = vpack.c.b16 %v2467, %v2466
      %v2496 = vpack.c.b16 %v2469, %v2468
      %v2497 = vpack.c.b16 %v2471, %v2470
      %v2498 = vpack.c.b16 %v2473, %v2472
      %v2499 = vpack.c.b16 %v2475, %v2474
      %v2500 = vpack.c.b16 %v2477, %v2476
      %v2501 = vpack.c.b16 %v2479, %v2478
      %v2502 = vpack.c.b16 %v2481, %v2480
      %v2503 = vpack.c.b16 %v2483, %v2482
      %v2504 = vpack.c.b16 %v2485, %v2484
      %v2505 = vpack.c.b16 %v2487, %v2486
      %v2506 = vpack.c.b16 %v2489, %v2488
      %v2507 = vpack.c.b16 %v2491, %v2490
      %v2509 = vsel %vm701, %v2492, 0
      %v2512 = vsel %vm701, %v2493, 0
      %v2515 = vsel %vm701, %v2494, 0
      %v2518 = vsel %vm701, %v2495, 0
      %v2521 = vsel %vm701, %v2496, 0
      %v2524 = vsel %vm701, %v2497, 0
      %v2527 = vsel %vm701, %v2498, 0
      %v2530 = vsel %vm701, %v2499, 0
      %v2533 = vsel %vm701, %v2500, 0
      %v2536 = vsel %vm701, %v2501, 0
      %v2539 = vsel %vm701, %v2502, 0
      %v2542 = vsel %vm701, %v2503, 0
      %v2545 = vsel %vm701, %v2504, 0
      %v2548 = vsel %vm701, %v2505, 0
      %v2551 = vsel %vm701, %v2506, 0
      %v2554 = vsel %vm701, %v2507, 0
      %v2557 = vsel %vm750, %v2459, 0
      %2559 = vmatprep.subr.bf16.mxu0 0
      %2560 = vmatpush1.bf16.msra.mxu0 %v2557
      %2561 = vmatprep.subr.bf16.mxu0 0
      %2562 = vmatpush1.bf16.msra.mxu0 0
      %2563 = vmatprep.subr.bf16.mxu0 0
      %2564 = vmatpush1.bf16.msra.mxu0 0
      %2565 = vmatprep.subr.bf16.mxu0 0
      %2566 = vmatpush1.bf16.msra.mxu0 0
      %2567 = vmatprep.subr.bf16.mxu0 0
      %2568 = vmatpush1.bf16.msra.mxu0 0
      %2569 = vmatprep.subr.bf16.mxu0 0
      %2570 = vmatpush1.bf16.msra.mxu0 0
      %2571 = vmatprep.subr.bf16.mxu0 0
      %2572 = vmatpush1.bf16.msra.mxu0 0
      %2573 = vmatprep.subr.bf16.mxu0 0
      %2574 = vmatpush1.bf16.msra.mxu0 0
      %2575 = vmatprep.subr.bf16.mxu0 0
      %2576 = vmatpush1.bf16.msra.mxu0 0
      %2577 = vmatprep.subr.bf16.mxu0 0
      %2578 = vmatpush1.bf16.msra.mxu0 0
      %2579 = vmatprep.subr.bf16.mxu0 0
      %2580 = vmatpush1.bf16.msra.mxu0 0
      %2581 = vmatprep.subr.bf16.mxu0 0
      %2582 = vmatpush1.bf16.msra.mxu0 0
      %2583 = vmatprep.subr.bf16.mxu0 0
      %2584 = vmatpush1.bf16.msra.mxu0 0
      %2585 = vmatprep.subr.bf16.mxu0 0
      %2586 = vmatpush1.bf16.msra.mxu0 0
      %2587 = vmatprep.subr.bf16.mxu0 0
      %2588 = vmatpush1.bf16.msra.mxu0 0
      %2589 = vmatprep.subr.bf16.mxu0 0
      %2590 = vmatpush1.bf16.msra.mxu0 0
      %2591 = vmatprep.mubr.bf16.mxu0 0
      %2592 = vmatmul.mubr.bf16.gmra.mrb[0].mxu0 %v2509
      %v2593 = vpop.f32.mrb[0].mxu0
      %v2594 = vadd.f32 0.0, %v2593
      %v2595 = vpop.f32.mrb[0].mxu0
      %v2596 = vpop.f32.mrb[0].mxu0
      %v2597 = vadd.f32 0.0, %v2596
      %v2598 = vpop.f32.mrb[0].mxu0
      %2599 = vmatprep.mubr.bf16.mxu0 0
      %2600 = vmatmul.mubr.bf16.gmra.mrb[0].mxu0 %v2512
      %v2601 = vpop.f32.mrb[0].mxu0
      %v2602 = vadd.f32 0.0, %v2601
      %v2603 = vpop.f32.mrb[0].mxu0
      %v2604 = vpop.f32.mrb[0].mxu0
      %v2605 = vadd.f32 0.0, %v2604
      %v2606 = vpop.f32.mrb[0].mxu0
      %2607 = vmatprep.mubr.bf16.mxu0 0
      %2608 = vmatmul.mubr.bf16.gmra.mrb[0].mxu0 %v2515
      %v2609 = vpop.f32.mrb[0].mxu0
      %v2610 = vadd.f32 0.0, %v2609
      %v2611 = vpop.f32.mrb[0].mxu0
      %v2612 = vpop.f32.mrb[0].mxu0
      %v2613 = vadd.f32 0.0, %v2612
      %v2614 = vpop.f32.mrb[0].mxu0
      %2615 = vmatprep.mubr.bf16.mxu0 0
      %2616 = vmatmul.mubr.bf16.gmra.mrb[0].mxu0 %v2518
      %v2617 = vpop.f32.mrb[0].mxu0
      %v2618 = vadd.f32 0.0, %v2617
      %v2619 = vpop.f32.mrb[0].mxu0
      %v2620 = vpop.f32.mrb[0].mxu0
      %v2621 = vadd.f32 0.0, %v2620
      %v2622 = vpop.f32.mrb[0].mxu0
      %2623 = vmatprep.mubr.bf16.mxu0 0
      %2624 = vmatmul.mubr.bf16.gmra.mrb[0].mxu0 %v2521
      %v2625 = vpop.f32.mrb[0].mxu0
      %v2626 = vadd.f32 0.0, %v2625
      %v2627 = vpop.f32.mrb[0].mxu0
      %v2628 = vpop.f32.mrb[0].mxu0
      %v2629 = vadd.f32 0.0, %v2628
      %v2630 = vpop.f32.mrb[0].mxu0
      %2631 = vmatprep.mubr.bf16.mxu0 0
      %2632 = vmatmul.mubr.bf16.gmra.mrb[0].mxu0 %v2524
      %v2633 = vpop.f32.mrb[0].mxu0
      %v2634 = vadd.f32 0.0, %v2633
      %v2635 = vpop.f32.mrb[0].mxu0
      %v2636 = vpop.f32.mrb[0].mxu0
      %v2637 = vadd.f32 0.0, %v2636
      %v2638 = vpop.f32.mrb[0].mxu0
      %2639 = vmatprep.mubr.bf16.mxu0 0
      %2640 = vmatmul.mubr.bf16.gmra.mrb[0].mxu0 %v2527
      %v2641 = vpop.f32.mrb[0].mxu0
      %v2642 = vadd.f32 0.0, %v2641
      %v2643 = vpop.f32.mrb[0].mxu0
      %v2644 = vpop.f32.mrb[0].mxu0
      %v2645 = vadd.f32 0.0, %v2644
      %v2646 = vpop.f32.mrb[0].mxu0
      %2647 = vmatprep.mubr.bf16.mxu0 0
      %2648 = vmatmul.mubr.bf16.gmra.mrb[0].mxu0 %v2530
      %v2649 = vpop.f32.mrb[0].mxu0
      %v2650 = vadd.f32 0.0, %v2649
      %v2651 = vpop.f32.mrb[0].mxu0
      %v2652 = vpop.f32.mrb[0].mxu0
      %v2653 = vadd.f32 0.0, %v2652
      %v2654 = vpop.f32.mrb[0].mxu0
      %2655 = vmatprep.mubr.bf16.mxu0 0
      %2656 = vmatmul.mubr.bf16.gmra.mrb[0].mxu0 %v2533
      %v2657 = vpop.f32.mrb[0].mxu0
      %v2658 = vadd.f32 0.0, %v2657
      %v2659 = vpop.f32.mrb[0].mxu0
      %v2660 = vpop.f32.mrb[0].mxu0
      %v2661 = vadd.f32 0.0, %v2660
      %v2662 = vpop.f32.mrb[0].mxu0
      %2663 = vmatprep.mubr.bf16.mxu0 0
      %2664 = vmatmul.mubr.bf16.gmra.mrb[0].mxu0 %v2536
      %v2665 = vpop.f32.mrb[0].mxu0
      %v2666 = vadd.f32 0.0, %v2665
      %v2667 = vpop.f32.mrb[0].mxu0
      %v2668 = vpop.f32.mrb[0].mxu0
      %v2669 = vadd.f32 0.0, %v2668
      %v2670 = vpop.f32.mrb[0].mxu0
      %2671 = vmatprep.mubr.bf16.mxu0 0
      %2672 = vmatmul.mubr.bf16.gmra.mrb[0].mxu0 %v2539
      %v2673 = vpop.f32.mrb[0].mxu0
      %v2674 = vadd.f32 0.0, %v2673
      %v2675 = vpop.f32.mrb[0].mxu0
      %v2676 = vpop.f32.mrb[0].mxu0
      %v2677 = vadd.f32 0.0, %v2676
      %v2678 = vpop.f32.mrb[0].mxu0
      %2679 = vmatprep.mubr.bf16.mxu0 0
      %2680 = vmatmul.mubr.bf16.gmra.mrb[0].mxu0 %v2542
      %v2681 = vpop.f32.mrb[0].mxu0
      %v2682 = vadd.f32 0.0, %v2681
      %v2683 = vpop.f32.mrb[0].mxu0
      %v2684 = vpop.f32.mrb[0].mxu0
      %v2685 = vadd.f32 0.0, %v2684
      %v2686 = vpop.f32.mrb[0].mxu0
      %2687 = vmatprep.mubr.bf16.mxu0 0
      %2688 = vmatmul.mubr.bf16.gmra.mrb[0].mxu0 %v2545
      %v2689 = vpop.f32.mrb[0].mxu0
      %v2690 = vadd.f32 0.0, %v2689
      %v2691 = vpop.f32.mrb[0].mxu0
      %v2692 = vpop.f32.mrb[0].mxu0
      %v2693 = vadd.f32 0.0, %v2692
      %v2694 = vpop.f32.mrb[0].mxu0
      %2695 = vmatprep.mubr.bf16.mxu0 0
      %2696 = vmatmul.mubr.bf16.gmra.mrb[0].mxu0 %v2548
      %v2697 = vpop.f32.mrb[0].mxu0
      %v2698 = vadd.f32 0.0, %v2697
      %v2699 = vpop.f32.mrb[0].mxu0
      %v2700 = vpop.f32.mrb[0].mxu0
      %v2701 = vadd.f32 0.0, %v2700
      %v2702 = vpop.f32.mrb[0].mxu0
      %2703 = vmatprep.mubr.bf16.mxu0 0
      %2704 = vmatmul.mubr.bf16.gmra.mrb[0].mxu0 %v2551
      %v2705 = vpop.f32.mrb[0].mxu0
      %v2706 = vadd.f32 0.0, %v2705
      %v2707 = vpop.f32.mrb[0].mxu0
      %v2708 = vpop.f32.mrb[0].mxu0
      %v2709 = vadd.f32 0.0, %v2708
      %v2710 = vpop.f32.mrb[0].mxu0
      %2711 = vmatprep.mubr.bf16.mxu0 0
      %2712 = vmatmul.mubr.bf16.gmra.mrb[0].mxu0 %v2554
      %v2713 = vpop.f32.mrb[0].mxu0
      %v2714 = vadd.f32 0.0, %v2713
      %v2715 = vpop.f32.mrb[0].mxu0
      %v2716 = vpop.f32.mrb[0].mxu0
      %v2717 = vadd.f32 0.0, %v2716
      %v2718 = vpop.f32.mrb[0].mxu0
      %2719 = vdwg.mxu0
      %v2720 = vadd.f32 %v1994, %v2594
      %v2721 = vadd.f32 %v1995, %v2597
      %v2722 = vadd.f32 %v1996, %v2602
      %v2723 = vadd.f32 %v1997, %v2605
      %v2724 = vadd.f32 %v1998, %v2610
      %v2725 = vadd.f32 %v1999, %v2613
      %v2726 = vadd.f32 %v2000, %v2618
      %v2727 = vadd.f32 %v2001, %v2621
      %v2728 = vadd.f32 %v2002, %v2626
      %v2729 = vadd.f32 %v2003, %v2629
      %v2730 = vadd.f32 %v2004, %v2634
      %v2731 = vadd.f32 %v2005, %v2637
      %v2732 = vadd.f32 %v2006, %v2642
      %v2733 = vadd.f32 %v2007, %v2645
      %v2734 = vadd.f32 %v2008, %v2650
      %v2735 = vadd.f32 %v2009, %v2653
      %v2736 = vadd.f32 %v2010, %v2658
      %v2737 = vadd.f32 %v2011, %v2661
      %v2738 = vadd.f32 %v2012, %v2666
      %v2739 = vadd.f32 %v2013, %v2669
      %v2740 = vadd.f32 %v2014, %v2674
      %v2741 = vadd.f32 %v2015, %v2677
      %v2742 = vadd.f32 %v2016, %v2682
      %v2743 = vadd.f32 %v2017, %v2685
      %v2744 = vadd.f32 %v2018, %v2690
      %v2745 = vadd.f32 %v2019, %v2693
      %v2746 = vadd.f32 %v2020, %v2698
      %v2747 = vadd.f32 %v2021, %v2701
      %v2748 = vadd.f32 %v2022, %v2706
      %v2749 = vadd.f32 %v2023, %v2709
      %v2750 = vadd.f32 %v2024, %v2714
      %v2751 = vadd.f32 %v2025, %v2717
      %v2752 = vld [vmem:[%s1667] sm:$0xe]
      %v2753 = vld [vmem:[%s1667 + $0xc] sm:$0xe]
      %v2754 = vld [vmem:[%s1667 + $0x18] sm:$0xe]
      %v2755 = vld [vmem:[%s1667 + $0x24] sm:$0xe]
      %v2756 = vld [vmem:[%s1667 + $0x30] sm:$0xe]
      %v2757 = vld [vmem:[%s1667 + $0x3c] sm:$0xe]
      %v2758 = vld [vmem:[%s1667 + $0x48] sm:$0xe]
      %v2759 = vld [vmem:[%s1667 + $0x54] sm:$0xe]
      %v2760 = vld [vmem:[%s1667 + $0x60] sm:$0xe]
      %v2761 = vld [vmem:[%s1667 + $0x6c] sm:$0xe]
      %v2762 = vld [vmem:[%s1667 + $0x78] sm:$0xe]
      %v2763 = vld [vmem:[%s1667 + $0x84] sm:$0xe]
      %v2764 = vld [vmem:[%s1667 + $0x90] sm:$0xe]
      %v2765 = vld [vmem:[%s1667 + $0x9c] sm:$0xe]
      %v2766 = vld [vmem:[%s1667 + $0xa8] sm:$0xe]
      %v2767 = vld [vmem:[%s1667 + $0xb4] sm:$0xe]
      %v2816 = vrot.slane %v2752, 5
      %v2817 = vrot.slane %v2816, 4
      %v2818 = vrot.slane %v2027, 5
      %v2819 = vsel %vm1257, %v2817, %v2818
      %v2820 = vrot.slane %v2818, 4
      %v2821 = vrot.slane %v2028, 5
      %v2822 = vsel %vm1257, %v2820, %v2821
      %v2823 = vrot.slane %v2753, 5
      %v2824 = vrot.slane %v2823, 4
      %v2825 = vrot.slane %v2030, 5
      %v2826 = vsel %vm1257, %v2824, %v2825
      %v2827 = vrot.slane %v2825, 4
      %v2828 = vrot.slane %v2031, 5
      %v2829 = vsel %vm1257, %v2827, %v2828
      %v2830 = vrot.slane %v2754, 5
      %v2831 = vrot.slane %v2830, 4
      %v2832 = vrot.slane %v2033, 5
      %v2833 = vsel %vm1257, %v2831, %v2832
      %v2834 = vrot.slane %v2832, 4
      %v2835 = vrot.slane %v2034, 5
      %v2836 = vsel %vm1257, %v2834, %v2835
      %v2837 = vrot.slane %v2755, 5
      %v2838 = vrot.slane %v2837, 4
      %v2839 = vrot.slane %v2036, 5
      %v2840 = vsel %vm1257, %v2838, %v2839
      %v2841 = vrot.slane %v2839, 4
      %v2842 = vrot.slane %v2037, 5
      %v2843 = vsel %vm1257, %v2841, %v2842
      %v2844 = vrot.slane %v2756, 5
      %v2845 = vrot.slane %v2844, 4
      %v2846 = vrot.slane %v2039, 5
      %v2847 = vsel %vm1257, %v2845, %v2846
      %v2848 = vrot.slane %v2846, 4
      %v2849 = vrot.slane %v2040, 5
      %v2850 = vsel %vm1257, %v2848, %v2849
      %v2851 = vrot.slane %v2757, 5
      %v2852 = vrot.slane %v2851, 4
      %v2853 = vrot.slane %v2042, 5
      %v2854 = vsel %vm1257, %v2852, %v2853
      %v2855 = vrot.slane %v2853, 4
      %v2856 = vrot.slane %v2043, 5
      %v2857 = vsel %vm1257, %v2855, %v2856
      %v2858 = vrot.slane %v2758, 5
      %v2859 = vrot.slane %v2858, 4
      %v2860 = vrot.slane %v2045, 5
      %v2861 = vsel %vm1257, %v2859, %v2860
      %v2862 = vrot.slane %v2860, 4
      %v2863 = vrot.slane %v2046, 5
      %v2864 = vsel %vm1257, %v2862, %v2863
      %v2865 = vrot.slane %v2759, 5
      %v2866 = vrot.slane %v2865, 4
      %v2867 = vrot.slane %v2048, 5
      %v2868 = vsel %vm1257, %v2866, %v2867
      %v2869 = vrot.slane %v2867, 4
      %v2870 = vrot.slane %v2049, 5
      %v2871 = vsel %vm1257, %v2869, %v2870
      %v2872 = vrot.slane %v2760, 5
      %v2873 = vrot.slane %v2872, 4
      %v2874 = vrot.slane %v2051, 5
      %v2875 = vsel %vm1257, %v2873, %v2874
      %v2876 = vrot.slane %v2874, 4
      %v2877 = vrot.slane %v2052, 5
      %v2878 = vsel %vm1257, %v2876, %v2877
      %v2879 = vrot.slane %v2761, 5
      %v2880 = vrot.slane %v2879, 4
      %v2881 = vrot.slane %v2054, 5
      %v2882 = vsel %vm1257, %v2880, %v2881
      %v2883 = vrot.slane %v2881, 4
      %v2884 = vrot.slane %v2055, 5
      %v2885 = vsel %vm1257, %v2883, %v2884
      %v2886 = vrot.slane %v2762, 5
      %v2887 = vrot.slane %v2886, 4
      %v2888 = vrot.slane %v2057, 5
      %v2889 = vsel %vm1257, %v2887, %v2888
      %v2890 = vrot.slane %v2888, 4
      %v2891 = vrot.slane %v2058, 5
      %v2892 = vsel %vm1257, %v2890, %v2891
      %v2893 = vrot.slane %v2763, 5
      %v2894 = vrot.slane %v2893, 4
      %v2895 = vrot.slane %v2060, 5
      %v2896 = vsel %vm1257, %v2894, %v2895
      %v2897 = vrot.slane %v2895, 4
      %v2898 = vrot.slane %v2061, 5
      %v2899 = vsel %vm1257, %v2897, %v2898
      %v2900 = vrot.slane %v2764, 5
      %v2901 = vrot.slane %v2900, 4
      %v2902 = vrot.slane %v2063, 5
      %v2903 = vsel %vm1257, %v2901, %v2902
      %v2904 = vrot.slane %v2902, 4
      %v2905 = vrot.slane %v2064, 5
      %v2906 = vsel %vm1257, %v2904, %v2905
      %v2907 = vrot.slane %v2765, 5
      %v2908 = vrot.slane %v2907, 4
      %v2909 = vrot.slane %v2066, 5
      %v2910 = vsel %vm1257, %v2908, %v2909
      %v2911 = vrot.slane %v2909, 4
      %v2912 = vrot.slane %v2067, 5
      %v2913 = vsel %vm1257, %v2911, %v2912
      %v2914 = vrot.slane %v2766, 5
      %v2915 = vrot.slane %v2914, 4
      %v2916 = vrot.slane %v2069, 5
      %v2917 = vsel %vm1257, %v2915, %v2916
      %v2918 = vrot.slane %v2916, 4
      %v2919 = vrot.slane %v2070, 5
      %v2920 = vsel %vm1257, %v2918, %v2919
      %v2921 = vrot.slane %v2767, 5
      %v2922 = vrot.slane %v2921, 4
      %v2923 = vrot.slane %v2072, 5
      %v2924 = vsel %vm1257, %v2922, %v2923
      %v2925 = vrot.slane %v2923, 4
      %v2926 = vrot.slane %v2073, 5
      %v2927 = vsel %vm1257, %v2925, %v2926
      %s2928 = scalar_lea.vmem %s1, 10
      %v2929 = vld [vmem:[%s2928] sm:$0x3]
      %v2930 = vunpack.c.l.b16 %v2819
      %v2931 = vunpack.c.l.b16 %v2822
      %v2932 = vunpack.c.l.b16 %v2826
      %v2933 = vunpack.c.l.b16 %v2829
      %v2934 = vunpack.c.l.b16 %v2833
      %v2935 = vunpack.c.l.b16 %v2836
      %v2936 = vunpack.c.l.b16 %v2840
      %v2937 = vunpack.c.l.b16 %v2843
      %v2938 = vunpack.c.l.b16 %v2847
      %v2939 = vunpack.c.l.b16 %v2850
      %v2940 = vunpack.c.l.b16 %v2854
      %v2941 = vunpack.c.l.b16 %v2857
      %v2942 = vunpack.c.l.b16 %v2861
      %v2943 = vunpack.c.l.b16 %v2864
      %v2944 = vunpack.c.l.b16 %v2868
      %v2945 = vunpack.c.l.b16 %v2871
      %v2946 = vunpack.c.l.b16 %v2875
      %v2947 = vunpack.c.l.b16 %v2878
      %v2948 = vunpack.c.l.b16 %v2882
      %v2949 = vunpack.c.l.b16 %v2885
      %v2950 = vunpack.c.l.b16 %v2889
      %v2951 = vunpack.c.l.b16 %v2892
      %v2952 = vunpack.c.l.b16 %v2896
      %v2953 = vunpack.c.l.b16 %v2899
      %v2954 = vunpack.c.l.b16 %v2903
      %v2955 = vunpack.c.l.b16 %v2906
      %v2956 = vunpack.c.l.b16 %v2910
      %v2957 = vunpack.c.l.b16 %v2913
      %v2958 = vunpack.c.l.b16 %v2917
      %v2959 = vunpack.c.l.b16 %v2920
      %v2960 = vunpack.c.l.b16 %v2924
      %v2961 = vunpack.c.l.b16 %v2927
      %v2962 = vpack.c.b16 %v2931, %v2930
      %v2963 = vpack.c.b16 %v2933, %v2932
      %v2964 = vpack.c.b16 %v2935, %v2934
      %v2965 = vpack.c.b16 %v2937, %v2936
      %v2966 = vpack.c.b16 %v2939, %v2938
      %v2967 = vpack.c.b16 %v2941, %v2940
      %v2968 = vpack.c.b16 %v2943, %v2942
      %v2969 = vpack.c.b16 %v2945, %v2944
      %v2970 = vpack.c.b16 %v2947, %v2946
      %v2971 = vpack.c.b16 %v2949, %v2948
      %v2972 = vpack.c.b16 %v2951, %v2950
      %v2973 = vpack.c.b16 %v2953, %v2952
      %v2974 = vpack.c.b16 %v2955, %v2954
      %v2975 = vpack.c.b16 %v2957, %v2956
      %v2976 = vpack.c.b16 %v2959, %v2958
      %v2977 = vpack.c.b16 %v2961, %v2960
      %v2979 = vsel %vm701, %v2962, 0
      %v2982 = vsel %vm701, %v2963, 0
      %v2985 = vsel %vm701, %v2964, 0
      %v2988 = vsel %vm701, %v2965, 0
      %v2991 = vsel %vm701, %v2966, 0
      %v2994 = vsel %vm701, %v2967, 0
      %v2997 = vsel %vm701, %v2968, 0
      %v3000 = vsel %vm701, %v2969, 0
      %v3003 = vsel %vm701, %v2970, 0
      %v3006 = vsel %vm701, %v2971, 0
      %v3009 = vsel %vm701, %v2972, 0
      %v3012 = vsel %vm701, %v2973, 0
      %v3015 = vsel %vm701, %v2974, 0
      %v3018 = vsel %vm701, %v2975, 0
      %v3021 = vsel %vm701, %v2976, 0
      %v3024 = vsel %vm701, %v2977, 0
      %v3027 = vsel %vm750, %v2929, 0
      %3029 = vmatprep.subr.bf16.mxu0 0
      %3030 = vmatpush1.bf16.msra.mxu0 %v3027
      %3031 = vmatprep.subr.bf16.mxu0 0
      %3032 = vmatpush1.bf16.msra.mxu0 0
      %3033 = vmatprep.subr.bf16.mxu0 0
      %3034 = vmatpush1.bf16.msra.mxu0 0
      %3035 = vmatprep.subr.bf16.mxu0 0
      %3036 = vmatpush1.bf16.msra.mxu0 0
      %3037 = vmatprep.subr.bf16.mxu0 0
      %3038 = vmatpush1.bf16.msra.mxu0 0
      %3039 = vmatprep.subr.bf16.mxu0 0
      %3040 = vmatpush1.bf16.msra.mxu0 0
      %3041 = vmatprep.subr.bf16.mxu0 0
      %3042 = vmatpush1.bf16.msra.mxu0 0
      %3043 = vmatprep.subr.bf16.mxu0 0
      %3044 = vmatpush1.bf16.msra.mxu0 0
      %3045 = vmatprep.subr.bf16.mxu0 0
      %3046 = vmatpush1.bf16.msra.mxu0 0
      %3047 = vmatprep.subr.bf16.mxu0 0
      %3048 = vmatpush1.bf16.msra.mxu0 0
      %3049 = vmatprep.subr.bf16.mxu0 0
      %3050 = vmatpush1.bf16.msra.mxu0 0
      %3051 = vmatprep.subr.bf16.mxu0 0
      %3052 = vmatpush1.bf16.msra.mxu0 0
      %3053 = vmatprep.subr.bf16.mxu0 0
      %3054 = vmatpush1.bf16.msra.mxu0 0
      %3055 = vmatprep.subr.bf16.mxu0 0
      %3056 = vmatpush1.bf16.msra.mxu0 0
      %3057 = vmatprep.subr.bf16.mxu0 0
      %3058 = vmatpush1.bf16.msra.mxu0 0
      %3059 = vmatprep.subr.bf16.mxu0 0
      %3060 = vmatpush1.bf16.msra.mxu0 0
      %3061 = vmatprep.mubr.bf16.mxu0 0
      %3062 = vmatmul.mubr.bf16.gmra.mrb[0].mxu0 %v2979
      %v3063 = vpop.f32.mrb[0].mxu0
      %v3064 = vadd.f32 0.0, %v3063
      %v3065 = vpop.f32.mrb[0].mxu0
      %v3066 = vpop.f32.mrb[0].mxu0
      %v3067 = vadd.f32 0.0, %v3066
      %v3068 = vpop.f32.mrb[0].mxu0
      %3069 = vmatprep.mubr.bf16.mxu0 0
      %3070 = vmatmul.mubr.bf16.gmra.mrb[0].mxu0 %v2982
      %v3071 = vpop.f32.mrb[0].mxu0
      %v3072 = vadd.f32 0.0, %v3071
      %v3073 = vpop.f32.mrb[0].mxu0
      %v3074 = vpop.f32.mrb[0].mxu0
      %v3075 = vadd.f32 0.0, %v3074
      %v3076 = vpop.f32.mrb[0].mxu0
      %3077 = vmatprep.mubr.bf16.mxu0 0
      %3078 = vmatmul.mubr.bf16.gmra.mrb[0].mxu0 %v2985
      %v3079 = vpop.f32.mrb[0].mxu0
      %v3080 = vadd.f32 0.0, %v3079
      %v3081 = vpop.f32.mrb[0].mxu0
      %v3082 = vpop.f32.mrb[0].mxu0
      %v3083 = vadd.f32 0.0, %v3082
      %v3084 = vpop.f32.mrb[0].mxu0
      %3085 = vmatprep.mubr.bf16.mxu0 0
      %3086 = vmatmul.mubr.bf16.gmra.mrb[0].mxu0 %v2988
      %v3087 = vpop.f32.mrb[0].mxu0
      %v3088 = vadd.f32 0.0, %v3087
      %v3089 = vpop.f32.mrb[0].mxu0
      %v3090 = vpop.f32.mrb[0].mxu0
      %v3091 = vadd.f32 0.0, %v3090
      %v3092 = vpop.f32.mrb[0].mxu0
      %3093 = vmatprep.mubr.bf16.mxu0 0
      %3094 = vmatmul.mubr.bf16.gmra.mrb[0].mxu0 %v2991
      %v3095 = vpop.f32.mrb[0].mxu0
      %v3096 = vadd.f32 0.0, %v3095
      %v3097 = vpop.f32.mrb[0].mxu0
      %v3098 = vpop.f32.mrb[0].mxu0
      %v3099 = vadd.f32 0.0, %v3098
      %v3100 = vpop.f32.mrb[0].mxu0
      %3101 = vmatprep.mubr.bf16.mxu0 0
      %3102 = vmatmul.mubr.bf16.gmra.mrb[0].mxu0 %v2994
      %v3103 = vpop.f32.mrb[0].mxu0
      %v3104 = vadd.f32 0.0, %v3103
      %v3105 = vpop.f32.mrb[0].mxu0
      %v3106 = vpop.f32.mrb[0].mxu0
      %v3107 = vadd.f32 0.0, %v3106
      %v3108 = vpop.f32.mrb[0].mxu0
      %3109 = vmatprep.mubr.bf16.mxu0 0
      %3110 = vmatmul.mubr.bf16.gmra.mrb[0].mxu0 %v2997
      %v3111 = vpop.f32.mrb[0].mxu0
      %v3112 = vadd.f32 0.0, %v3111
      %v3113 = vpop.f32.mrb[0].mxu0
      %v3114 = vpop.f32.mrb[0].mxu0
      %v3115 = vadd.f32 0.0, %v3114
      %v3116 = vpop.f32.mrb[0].mxu0
      %3117 = vmatprep.mubr.bf16.mxu0 0
      %3118 = vmatmul.mubr.bf16.gmra.mrb[0].mxu0 %v3000
      %v3119 = vpop.f32.mrb[0].mxu0
      %v3120 = vadd.f32 0.0, %v3119
      %v3121 = vpop.f32.mrb[0].mxu0
      %v3122 = vpop.f32.mrb[0].mxu0
      %v3123 = vadd.f32 0.0, %v3122
      %v3124 = vpop.f32.mrb[0].mxu0
      %3125 = vmatprep.mubr.bf16.mxu0 0
      %3126 = vmatmul.mubr.bf16.gmra.mrb[0].mxu0 %v3003
      %v3127 = vpop.f32.mrb[0].mxu0
      %v3128 = vadd.f32 0.0, %v3127
      %v3129 = vpop.f32.mrb[0].mxu0
      %v3130 = vpop.f32.mrb[0].mxu0
      %v3131 = vadd.f32 0.0, %v3130
      %v3132 = vpop.f32.mrb[0].mxu0
      %3133 = vmatprep.mubr.bf16.mxu0 0
      %3134 = vmatmul.mubr.bf16.gmra.mrb[0].mxu0 %v3006
      %v3135 = vpop.f32.mrb[0].mxu0
      %v3136 = vadd.f32 0.0, %v3135
      %v3137 = vpop.f32.mrb[0].mxu0
      %v3138 = vpop.f32.mrb[0].mxu0
      %v3139 = vadd.f32 0.0, %v3138
      %v3140 = vpop.f32.mrb[0].mxu0
      %3141 = vmatprep.mubr.bf16.mxu0 0
      %3142 = vmatmul.mubr.bf16.gmra.mrb[0].mxu0 %v3009
      %v3143 = vpop.f32.mrb[0].mxu0
      %v3144 = vadd.f32 0.0, %v3143
      %v3145 = vpop.f32.mrb[0].mxu0
      %v3146 = vpop.f32.mrb[0].mxu0
      %v3147 = vadd.f32 0.0, %v3146
      %v3148 = vpop.f32.mrb[0].mxu0
      %3149 = vmatprep.mubr.bf16.mxu0 0
      %3150 = vmatmul.mubr.bf16.gmra.mrb[0].mxu0 %v3012
      %v3151 = vpop.f32.mrb[0].mxu0
      %v3152 = vadd.f32 0.0, %v3151
      %v3153 = vpop.f32.mrb[0].mxu0
      %v3154 = vpop.f32.mrb[0].mxu0
      %v3155 = vadd.f32 0.0, %v3154
      %v3156 = vpop.f32.mrb[0].mxu0
      %3157 = vmatprep.mubr.bf16.mxu0 0
      %3158 = vmatmul.mubr.bf16.gmra.mrb[0].mxu0 %v3015
      %v3159 = vpop.f32.mrb[0].mxu0
      %v3160 = vadd.f32 0.0, %v3159
      %v3161 = vpop.f32.mrb[0].mxu0
      %v3162 = vpop.f32.mrb[0].mxu0
      %v3163 = vadd.f32 0.0, %v3162
      %v3164 = vpop.f32.mrb[0].mxu0
      %3165 = vmatprep.mubr.bf16.mxu0 0
      %3166 = vmatmul.mubr.bf16.gmra.mrb[0].mxu0 %v3018
      %v3167 = vpop.f32.mrb[0].mxu0
      %v3168 = vadd.f32 0.0, %v3167
      %v3169 = vpop.f32.mrb[0].mxu0
      %v3170 = vpop.f32.mrb[0].mxu0
      %v3171 = vadd.f32 0.0, %v3170
      %v3172 = vpop.f32.mrb[0].mxu0
      %3173 = vmatprep.mubr.bf16.mxu0 0
      %3174 = vmatmul.mubr.bf16.gmra.mrb[0].mxu0 %v3021
      %v3175 = vpop.f32.mrb[0].mxu0
      %v3176 = vadd.f32 0.0, %v3175
      %v3177 = vpop.f32.mrb[0].mxu0
      %v3178 = vpop.f32.mrb[0].mxu0
      %v3179 = vadd.f32 0.0, %v3178
      %v3180 = vpop.f32.mrb[0].mxu0
      %3181 = vmatprep.mubr.bf16.mxu0 0
      %3182 = vmatmul.mubr.bf16.gmra.mrb[0].mxu0 %v3024
      %v3183 = vpop.f32.mrb[0].mxu0
      %v3184 = vadd.f32 0.0, %v3183
      %v3185 = vpop.f32.mrb[0].mxu0
      %v3186 = vpop.f32.mrb[0].mxu0
      %v3187 = vadd.f32 0.0, %v3186
      %v3188 = vpop.f32.mrb[0].mxu0
      %3189 = vdwg.mxu0
      %v3190 = vadd.f32 %v2720, %v3064
      %v3191 = vadd.f32 %v2721, %v3067
      %v3192 = vadd.f32 %v2722, %v3072
      %v3193 = vadd.f32 %v2723, %v3075
      %v3194 = vadd.f32 %v2724, %v3080
      %v3195 = vadd.f32 %v2725, %v3083
      %v3196 = vadd.f32 %v2726, %v3088
      %v3197 = vadd.f32 %v2727, %v3091
      %v3198 = vadd.f32 %v2728, %v3096
      %v3199 = vadd.f32 %v2729, %v3099
      %v3200 = vadd.f32 %v2730, %v3104
      %v3201 = vadd.f32 %v2731, %v3107
      %v3202 = vadd.f32 %v2732, %v3112
      %v3203 = vadd.f32 %v2733, %v3115
      %v3204 = vadd.f32 %v2734, %v3120
      %v3205 = vadd.f32 %v2735, %v3123
      %v3206 = vadd.f32 %v2736, %v3128
      %v3207 = vadd.f32 %v2737, %v3131
      %v3208 = vadd.f32 %v2738, %v3136
      %v3209 = vadd.f32 %v2739, %v3139
      %v3210 = vadd.f32 %v2740, %v3144
      %v3211 = vadd.f32 %v2741, %v3147
      %v3212 = vadd.f32 %v2742, %v3152
      %v3213 = vadd.f32 %v2743, %v3155
      %v3214 = vadd.f32 %v2744, %v3160
      %v3215 = vadd.f32 %v2745, %v3163
      %v3216 = vadd.f32 %v2746, %v3168
      %v3217 = vadd.f32 %v2747, %v3171
      %v3218 = vadd.f32 %v2748, %v3176
      %v3219 = vadd.f32 %v2749, %v3179
      %v3220 = vadd.f32 %v2750, %v3184
      %v3221 = vadd.f32 %v2751, %v3187
      %s3222 = sadd.s32 %s211, 2
      %s3223 = smul.u32 %s3222, 3
      %s3224 = smul.addr %s3223, 4
      %s3225 = scalar_lea.vmem %s193, %s3224
      %v3226 = vld [vmem:[%s3225] sm:$0xf]
      %v3227 = vld [vmem:[%s3225 + $0x4] sm:$0xf]
      %v3228 = vld [vmem:[%s3225 + $0xc] sm:$0xf]
      %v3229 = vld [vmem:[%s3225 + $0x10] sm:$0xf]
      %v3230 = vld [vmem:[%s3225 + $0x18] sm:$0xf]
      %v3231 = vld [vmem:[%s3225 + $0x1c] sm:$0xf]
      %v3232 = vld [vmem:[%s3225 + $0x24] sm:$0xf]
      %v3233 = vld [vmem:[%s3225 + $0x28] sm:$0xf]
      %v3234 = vld [vmem:[%s3225 + $0x30] sm:$0xf]
      %v3235 = vld [vmem:[%s3225 + $0x34] sm:$0xf]
      %v3236 = vld [vmem:[%s3225 + $0x3c] sm:$0xf]
      %v3237 = vld [vmem:[%s3225 + $0x40] sm:$0xf]
      %v3238 = vld [vmem:[%s3225 + $0x48] sm:$0xf]
      %v3239 = vld [vmem:[%s3225 + $0x4c] sm:$0xf]
      %v3240 = vld [vmem:[%s3225 + $0x54] sm:$0xf]
      %v3241 = vld [vmem:[%s3225 + $0x58] sm:$0xf]
      %v3242 = vld [vmem:[%s3225 + $0x60] sm:$0xf]
      %v3243 = vld [vmem:[%s3225 + $0x64] sm:$0xf]
      %v3244 = vld [vmem:[%s3225 + $0x6c] sm:$0xf]
      %v3245 = vld [vmem:[%s3225 + $0x70] sm:$0xf]
      %v3246 = vld [vmem:[%s3225 + $0x78] sm:$0xf]
      %v3247 = vld [vmem:[%s3225 + $0x7c] sm:$0xf]
      %v3248 = vld [vmem:[%s3225 + $0x84] sm:$0xf]
      %v3249 = vld [vmem:[%s3225 + $0x88] sm:$0xf]
      %v3250 = vld [vmem:[%s3225 + $0x90] sm:$0xf]
      %v3251 = vld [vmem:[%s3225 + $0x94] sm:$0xf]
      %v3252 = vld [vmem:[%s3225 + $0x9c] sm:$0xf]
      %v3253 = vld [vmem:[%s3225 + $0xa0] sm:$0xf]
      %v3254 = vld [vmem:[%s3225 + $0xa8] sm:$0xf]
      %v3255 = vld [vmem:[%s3225 + $0xac] sm:$0xf]
      %v3256 = vld [vmem:[%s3225 + $0xb4] sm:$0xf]
      %v3257 = vld [vmem:[%s3225 + $0xb8] sm:$0xf]
      %s3258 = scalar_lea.vmem %s1, 12
      %v3259 = vld [vmem:[%s3258] sm:$0x3]
      %v3292 = vunpack.c.l.b16 %v3226
      %v3293 = vunpack.c.l.b16 %v3227
      %v3294 = vunpack.c.l.b16 %v3228
      %v3295 = vunpack.c.l.b16 %v3229
      %v3296 = vunpack.c.l.b16 %v3230
      %v3297 = vunpack.c.l.b16 %v3231
      %v3298 = vunpack.c.l.b16 %v3232
      %v3299 = vunpack.c.l.b16 %v3233
      %v3300 = vunpack.c.l.b16 %v3234
      %v3301 = vunpack.c.l.b16 %v3235
      %v3302 = vunpack.c.l.b16 %v3236
      %v3303 = vunpack.c.l.b16 %v3237
      %v3304 = vunpack.c.l.b16 %v3238
      %v3305 = vunpack.c.l.b16 %v3239
      %v3306 = vunpack.c.l.b16 %v3240
      %v3307 = vunpack.c.l.b16 %v3241
      %v3308 = vunpack.c.l.b16 %v3242
      %v3309 = vunpack.c.l.b16 %v3243
      %v3310 = vunpack.c.l.b16 %v3244
      %v3311 = vunpack.c.l.b16 %v3245
      %v3312 = vunpack.c.l.b16 %v3246
      %v3313 = vunpack.c.l.b16 %v3247
      %v3314 = vunpack.c.l.b16 %v3248
      %v3315 = vunpack.c.l.b16 %v3249
      %v3316 = vunpack.c.l.b16 %v3250
      %v3317 = vunpack.c.l.b16 %v3251
      %v3318 = vunpack.c.l.b16 %v3252
      %v3319 = vunpack.c.l.b16 %v3253
      %v3320 = vunpack.c.l.b16 %v3254
      %v3321 = vunpack.c.l.b16 %v3255
      %v3322 = vunpack.c.l.b16 %v3256
      %v3323 = vunpack.c.l.b16 %v3257
      %v3324 = vpack.c.b16 %v3293, %v3292
      %v3325 = vpack.c.b16 %v3295, %v3294
      %v3326 = vpack.c.b16 %v3297, %v3296
      %v3327 = vpack.c.b16 %v3299, %v3298
      %v3328 = vpack.c.b16 %v3301, %v3300
      %v3329 = vpack.c.b16 %v3303, %v3302
      %v3330 = vpack.c.b16 %v3305, %v3304
      %v3331 = vpack.c.b16 %v3307, %v3306
      %v3332 = vpack.c.b16 %v3309, %v3308
      %v3333 = vpack.c.b16 %v3311, %v3310
      %v3334 = vpack.c.b16 %v3313, %v3312
      %v3335 = vpack.c.b16 %v3315, %v3314
      %v3336 = vpack.c.b16 %v3317, %v3316
      %v3337 = vpack.c.b16 %v3319, %v3318
      %v3338 = vpack.c.b16 %v3321, %v3320
      %v3339 = vpack.c.b16 %v3323, %v3322
      %v3341 = vsel %vm701, %v3324, 0
      %v3344 = vsel %vm701, %v3325, 0
      %v3347 = vsel %vm701, %v3326, 0
      %v3350 = vsel %vm701, %v3327, 0
      %v3353 = vsel %vm701, %v3328, 0
      %v3356 = vsel %vm701, %v3329, 0
      %v3359 = vsel %vm701, %v3330, 0
      %v3362 = vsel %vm701, %v3331, 0
      %v3365 = vsel %vm701, %v3332, 0
      %v3368 = vsel %vm701, %v3333, 0
      %v3371 = vsel %vm701, %v3334, 0
      %v3374 = vsel %vm701, %v3335, 0
      %v3377 = vsel %vm701, %v3336, 0
      %v3380 = vsel %vm701, %v3337, 0
      %v3383 = vsel %vm701, %v3338, 0
      %v3386 = vsel %vm701, %v3339, 0
      %v3389 = vsel %vm750, %v3259, 0
      %3391 = vmatprep.subr.bf16.mxu0 0
      %3392 = vmatpush1.bf16.msra.mxu0 %v3389
      %3393 = vmatprep.subr.bf16.mxu0 0
      %3394 = vmatpush1.bf16.msra.mxu0 0
      %3395 = vmatprep.subr.bf16.mxu0 0
      %3396 = vmatpush1.bf16.msra.mxu0 0
      %3397 = vmatprep.subr.bf16.mxu0 0
      %3398 = vmatpush1.bf16.msra.mxu0 0
      %3399 = vmatprep.subr.bf16.mxu0 0
      %3400 = vmatpush1.bf16.msra.mxu0 0
      %3401 = vmatprep.subr.bf16.mxu0 0
      %3402 = vmatpush1.bf16.msra.mxu0 0
      %3403 = vmatprep.subr.bf16.mxu0 0
      %3404 = vmatpush1.bf16.msra.mxu0 0
      %3405 = vmatprep.subr.bf16.mxu0 0
      %3406 = vmatpush1.bf16.msra.mxu0 0
      %3407 = vmatprep.subr.bf16.mxu0 0
      %3408 = vmatpush1.bf16.msra.mxu0 0
      %3409 = vmatprep.subr.bf16.mxu0 0
      %3410 = vmatpush1.bf16.msra.mxu0 0
      %3411 = vmatprep.subr.bf16.mxu0 0
      %3412 = vmatpush1.bf16.msra.mxu0 0
      %3413 = vmatprep.subr.bf16.mxu0 0
      %3414 = vmatpush1.bf16.msra.mxu0 0
      %3415 = vmatprep.subr.bf16.mxu0 0
      %3416 = vmatpush1.bf16.msra.mxu0 0
      %3417 = vmatprep.subr.bf16.mxu0 0
      %3418 = vmatpush1.bf16.msra.mxu0 0
      %3419 = vmatprep.subr.bf16.mxu0 0
      %3420 = vmatpush1.bf16.msra.mxu0 0
      %3421 = vmatprep.subr.bf16.mxu0 0
      %3422 = vmatpush1.bf16.msra.mxu0 0
      %3423 = vmatprep.mubr.bf16.mxu0 0
      %3424 = vmatmul.mubr.bf16.gmra.mrb[0].mxu0 %v3341
      %v3425 = vpop.f32.mrb[0].mxu0
      %v3426 = vadd.f32 0.0, %v3425
      %v3427 = vpop.f32.mrb[0].mxu0
      %v3428 = vpop.f32.mrb[0].mxu0
      %v3429 = vadd.f32 0.0, %v3428
      %v3430 = vpop.f32.mrb[0].mxu0
      %3431 = vmatprep.mubr.bf16.mxu0 0
      %3432 = vmatmul.mubr.bf16.gmra.mrb[0].mxu0 %v3344
      %v3433 = vpop.f32.mrb[0].mxu0
      %v3434 = vadd.f32 0.0, %v3433
      %v3435 = vpop.f32.mrb[0].mxu0
      %v3436 = vpop.f32.mrb[0].mxu0
      %v3437 = vadd.f32 0.0, %v3436
      %v3438 = vpop.f32.mrb[0].mxu0
      %3439 = vmatprep.mubr.bf16.mxu0 0
      %3440 = vmatmul.mubr.bf16.gmra.mrb[0].mxu0 %v3347
      %v3441 = vpop.f32.mrb[0].mxu0
      %v3442 = vadd.f32 0.0, %v3441
      %v3443 = vpop.f32.mrb[0].mxu0
      %v3444 = vpop.f32.mrb[0].mxu0
      %v3445 = vadd.f32 0.0, %v3444
      %v3446 = vpop.f32.mrb[0].mxu0
      %3447 = vmatprep.mubr.bf16.mxu0 0
      %3448 = vmatmul.mubr.bf16.gmra.mrb[0].mxu0 %v3350
      %v3449 = vpop.f32.mrb[0].mxu0
      %v3450 = vadd.f32 0.0, %v3449
      %v3451 = vpop.f32.mrb[0].mxu0
      %v3452 = vpop.f32.mrb[0].mxu0
      %v3453 = vadd.f32 0.0, %v3452
      %v3454 = vpop.f32.mrb[0].mxu0
      %3455 = vmatprep.mubr.bf16.mxu0 0
      %3456 = vmatmul.mubr.bf16.gmra.mrb[0].mxu0 %v3353
      %v3457 = vpop.f32.mrb[0].mxu0
      %v3458 = vadd.f32 0.0, %v3457
      %v3459 = vpop.f32.mrb[0].mxu0
      %v3460 = vpop.f32.mrb[0].mxu0
      %v3461 = vadd.f32 0.0, %v3460
      %v3462 = vpop.f32.mrb[0].mxu0
      %3463 = vmatprep.mubr.bf16.mxu0 0
      %3464 = vmatmul.mubr.bf16.gmra.mrb[0].mxu0 %v3356
      %v3465 = vpop.f32.mrb[0].mxu0
      %v3466 = vadd.f32 0.0, %v3465
      %v3467 = vpop.f32.mrb[0].mxu0
      %v3468 = vpop.f32.mrb[0].mxu0
      %v3469 = vadd.f32 0.0, %v3468
      %v3470 = vpop.f32.mrb[0].mxu0
      %3471 = vmatprep.mubr.bf16.mxu0 0
      %3472 = vmatmul.mubr.bf16.gmra.mrb[0].mxu0 %v3359
      %v3473 = vpop.f32.mrb[0].mxu0
      %v3474 = vadd.f32 0.0, %v3473
      %v3475 = vpop.f32.mrb[0].mxu0
      %v3476 = vpop.f32.mrb[0].mxu0
      %v3477 = vadd.f32 0.0, %v3476
      %v3478 = vpop.f32.mrb[0].mxu0
      %3479 = vmatprep.mubr.bf16.mxu0 0
      %3480 = vmatmul.mubr.bf16.gmra.mrb[0].mxu0 %v3362
      %v3481 = vpop.f32.mrb[0].mxu0
      %v3482 = vadd.f32 0.0, %v3481
      %v3483 = vpop.f32.mrb[0].mxu0
      %v3484 = vpop.f32.mrb[0].mxu0
      %v3485 = vadd.f32 0.0, %v3484
      %v3486 = vpop.f32.mrb[0].mxu0
      %3487 = vmatprep.mubr.bf16.mxu0 0
      %3488 = vmatmul.mubr.bf16.gmra.mrb[0].mxu0 %v3365
      %v3489 = vpop.f32.mrb[0].mxu0
      %v3490 = vadd.f32 0.0, %v3489
      %v3491 = vpop.f32.mrb[0].mxu0
      %v3492 = vpop.f32.mrb[0].mxu0
      %v3493 = vadd.f32 0.0, %v3492
      %v3494 = vpop.f32.mrb[0].mxu0
      %3495 = vmatprep.mubr.bf16.mxu0 0
      %3496 = vmatmul.mubr.bf16.gmra.mrb[0].mxu0 %v3368
      %v3497 = vpop.f32.mrb[0].mxu0
      %v3498 = vadd.f32 0.0, %v3497
      %v3499 = vpop.f32.mrb[0].mxu0
      %v3500 = vpop.f32.mrb[0].mxu0
      %v3501 = vadd.f32 0.0, %v3500
      %v3502 = vpop.f32.mrb[0].mxu0
      %3503 = vmatprep.mubr.bf16.mxu0 0
      %3504 = vmatmul.mubr.bf16.gmra.mrb[0].mxu0 %v3371
      %v3505 = vpop.f32.mrb[0].mxu0
      %v3506 = vadd.f32 0.0, %v3505
      %v3507 = vpop.f32.mrb[0].mxu0
      %v3508 = vpop.f32.mrb[0].mxu0
      %v3509 = vadd.f32 0.0, %v3508
      %v3510 = vpop.f32.mrb[0].mxu0
      %3511 = vmatprep.mubr.bf16.mxu0 0
      %3512 = vmatmul.mubr.bf16.gmra.mrb[0].mxu0 %v3374
      %v3513 = vpop.f32.mrb[0].mxu0
      %v3514 = vadd.f32 0.0, %v3513
      %v3515 = vpop.f32.mrb[0].mxu0
      %v3516 = vpop.f32.mrb[0].mxu0
      %v3517 = vadd.f32 0.0, %v3516
      %v3518 = vpop.f32.mrb[0].mxu0
      %3519 = vmatprep.mubr.bf16.mxu0 0
      %3520 = vmatmul.mubr.bf16.gmra.mrb[0].mxu0 %v3377
      %v3521 = vpop.f32.mrb[0].mxu0
      %v3522 = vadd.f32 0.0, %v3521
      %v3523 = vpop.f32.mrb[0].mxu0
      %v3524 = vpop.f32.mrb[0].mxu0
      %v3525 = vadd.f32 0.0, %v3524
      %v3526 = vpop.f32.mrb[0].mxu0
      %3527 = vmatprep.mubr.bf16.mxu0 0
      %3528 = vmatmul.mubr.bf16.gmra.mrb[0].mxu0 %v3380
      %v3529 = vpop.f32.mrb[0].mxu0
      %v3530 = vadd.f32 0.0, %v3529
      %v3531 = vpop.f32.mrb[0].mxu0
      %v3532 = vpop.f32.mrb[0].mxu0
      %v3533 = vadd.f32 0.0, %v3532
      %v3534 = vpop.f32.mrb[0].mxu0
      %3535 = vmatprep.mubr.bf16.mxu0 0
      %3536 = vmatmul.mubr.bf16.gmra.mrb[0].mxu0 %v3383
      %v3537 = vpop.f32.mrb[0].mxu0
      %v3538 = vadd.f32 0.0, %v3537
      %v3539 = vpop.f32.mrb[0].mxu0
      %v3540 = vpop.f32.mrb[0].mxu0
      %v3541 = vadd.f32 0.0, %v3540
      %v3542 = vpop.f32.mrb[0].mxu0
      %3543 = vmatprep.mubr.bf16.mxu0 0
      %3544 = vmatmul.mubr.bf16.gmra.mrb[0].mxu0 %v3386
      %v3545 = vpop.f32.mrb[0].mxu0
      %v3546 = vadd.f32 0.0, %v3545
      %v3547 = vpop.f32.mrb[0].mxu0
      %v3548 = vpop.f32.mrb[0].mxu0
      %v3549 = vadd.f32 0.0, %v3548
      %v3550 = vpop.f32.mrb[0].mxu0
      %3551 = vdwg.mxu0
      %v3552 = vadd.f32 %v3190, %v3426
      %v3553 = vadd.f32 %v3191, %v3429
      %v3554 = vadd.f32 %v3192, %v3434
      %v3555 = vadd.f32 %v3193, %v3437
      %v3556 = vadd.f32 %v3194, %v3442
      %v3557 = vadd.f32 %v3195, %v3445
      %v3558 = vadd.f32 %v3196, %v3450
      %v3559 = vadd.f32 %v3197, %v3453
      %v3560 = vadd.f32 %v3198, %v3458
      %v3561 = vadd.f32 %v3199, %v3461
      %v3562 = vadd.f32 %v3200, %v3466
      %v3563 = vadd.f32 %v3201, %v3469
      %v3564 = vadd.f32 %v3202, %v3474
      %v3565 = vadd.f32 %v3203, %v3477
      %v3566 = vadd.f32 %v3204, %v3482
      %v3567 = vadd.f32 %v3205, %v3485
      %v3568 = vadd.f32 %v3206, %v3490
      %v3569 = vadd.f32 %v3207, %v3493
      %v3570 = vadd.f32 %v3208, %v3498
      %v3571 = vadd.f32 %v3209, %v3501
      %v3572 = vadd.f32 %v3210, %v3506
      %v3573 = vadd.f32 %v3211, %v3509
      %v3574 = vadd.f32 %v3212, %v3514
      %v3575 = vadd.f32 %v3213, %v3517
      %v3576 = vadd.f32 %v3214, %v3522
      %v3577 = vadd.f32 %v3215, %v3525
      %v3578 = vadd.f32 %v3216, %v3530
      %v3579 = vadd.f32 %v3217, %v3533
      %v3580 = vadd.f32 %v3218, %v3538
      %v3581 = vadd.f32 %v3219, %v3541
      %v3582 = vadd.f32 %v3220, %v3546
      %v3583 = vadd.f32 %v3221, %v3549
      %v3584 = vld [vmem:[%s3225] sm:$0xf]
      %v3585 = vld [vmem:[%s3225 + $0x4] sm:$0xf]
      %v3586 = vld [vmem:[%s3225 + $0x8] sm:$0x1]
      %v3587 = vld [vmem:[%s3225 + $0xc] sm:$0xf]
      %v3588 = vld [vmem:[%s3225 + $0x10] sm:$0xf]
      %v3589 = vld [vmem:[%s3225 + $0x14] sm:$0x1]
      %v3590 = vld [vmem:[%s3225 + $0x18] sm:$0xf]
      %v3591 = vld [vmem:[%s3225 + $0x1c] sm:$0xf]
      %v3592 = vld [vmem:[%s3225 + $0x20] sm:$0x1]
      %v3593 = vld [vmem:[%s3225 + $0x24] sm:$0xf]
      %v3594 = vld [vmem:[%s3225 + $0x28] sm:$0xf]
      %v3595 = vld [vmem:[%s3225 + $0x2c] sm:$0x1]
      %v3596 = vld [vmem:[%s3225 + $0x30] sm:$0xf]
      %v3597 = vld [vmem:[%s3225 + $0x34] sm:$0xf]
      %v3598 = vld [vmem:[%s3225 + $0x38] sm:$0x1]
      %v3599 = vld [vmem:[%s3225 + $0x3c] sm:$0xf]
      %v3600 = vld [vmem:[%s3225 + $0x40] sm:$0xf]
      %v3601 = vld [vmem:[%s3225 + $0x44] sm:$0x1]
      %v3602 = vld [vmem:[%s3225 + $0x48] sm:$0xf]
      %v3603 = vld [vmem:[%s3225 + $0x4c] sm:$0xf]
      %v3604 = vld [vmem:[%s3225 + $0x50] sm:$0x1]
      %v3605 = vld [vmem:[%s3225 + $0x54] sm:$0xf]
      %v3606 = vld [vmem:[%s3225 + $0x58] sm:$0xf]
      %v3607 = vld [vmem:[%s3225 + $0x5c] sm:$0x1]
      %v3608 = vld [vmem:[%s3225 + $0x60] sm:$0xf]
      %v3609 = vld [vmem:[%s3225 + $0x64] sm:$0xf]
      %v3610 = vld [vmem:[%s3225 + $0x68] sm:$0x1]
      %v3611 = vld [vmem:[%s3225 + $0x6c] sm:$0xf]
      %v3612 = vld [vmem:[%s3225 + $0x70] sm:$0xf]
      %v3613 = vld [vmem:[%s3225 + $0x74] sm:$0x1]
      %v3614 = vld [vmem:[%s3225 + $0x78] sm:$0xf]
      %v3615 = vld [vmem:[%s3225 + $0x7c] sm:$0xf]
      %v3616 = vld [vmem:[%s3225 + $0x80] sm:$0x1]
      %v3617 = vld [vmem:[%s3225 + $0x84] sm:$0xf]
      %v3618 = vld [vmem:[%s3225 + $0x88] sm:$0xf]
      %v3619 = vld [vmem:[%s3225 + $0x8c] sm:$0x1]
      %v3620 = vld [vmem:[%s3225 + $0x90] sm:$0xf]
      %v3621 = vld [vmem:[%s3225 + $0x94] sm:$0xf]
      %v3622 = vld [vmem:[%s3225 + $0x98] sm:$0x1]
      %v3623 = vld [vmem:[%s3225 + $0x9c] sm:$0xf]
      %v3624 = vld [vmem:[%s3225 + $0xa0] sm:$0xf]
      %v3625 = vld [vmem:[%s3225 + $0xa4] sm:$0x1]
      %v3626 = vld [vmem:[%s3225 + $0xa8] sm:$0xf]
      %v3627 = vld [vmem:[%s3225 + $0xac] sm:$0xf]
      %v3628 = vld [vmem:[%s3225 + $0xb0] sm:$0x1]
      %v3629 = vld [vmem:[%s3225 + $0xb4] sm:$0xf]
      %v3630 = vld [vmem:[%s3225 + $0xb8] sm:$0xf]
      %v3631 = vld [vmem:[%s3225 + $0xbc] sm:$0x1]
      %v3633 = vshrl.u32 %v3584, 16
      %v3635 = vrot.slane %v3633, 4
      %v3636 = vshll.u32 %v3584, 16
      %v3638 = vrot.slane %v3636, 5
      %v3639 = vor.u32 %v3635, %v3638
      %v3640 = vrot.slane %v3639, 4
      %v3642 = vshll.u32 %v3585, 16
      %v3644 = vrot.slane %v3642, 5
      %v3645 = vsel %vm266, %v3640, %v3644
      %v3646 = vshrl.u32 %v3585, 16
      %v3648 = vrot.slane %v3646, 4
      %v3649 = vor.u32 %v3648, %v3644
      %v3650 = vrot.slane %v3649, 4
      %v3652 = vshll.u32 %v3586, 16
      %v3654 = vrot.slane %v3652, 5
      %v3655 = vsel %vm266, %v3650, %v3654
      %v3657 = vshrl.u32 %v3587, 16
      %v3659 = vrot.slane %v3657, 4
      %v3660 = vshll.u32 %v3587, 16
      %v3662 = vrot.slane %v3660, 5
      %v3663 = vor.u32 %v3659, %v3662
      %v3664 = vrot.slane %v3663, 4
      %v3666 = vshll.u32 %v3588, 16
      %v3668 = vrot.slane %v3666, 5
      %v3669 = vsel %vm266, %v3664, %v3668
      %v3670 = vshrl.u32 %v3588, 16
      %v3672 = vrot.slane %v3670, 4
      %v3673 = vor.u32 %v3672, %v3668
      %v3674 = vrot.slane %v3673, 4
      %v3676 = vshll.u32 %v3589, 16
      %v3678 = vrot.slane %v3676, 5
      %v3679 = vsel %vm266, %v3674, %v3678
      %v3681 = vshrl.u32 %v3590, 16
      %v3683 = vrot.slane %v3681, 4
      %v3684 = vshll.u32 %v3590, 16
      %v3686 = vrot.slane %v3684, 5
      %v3687 = vor.u32 %v3683, %v3686
      %v3688 = vrot.slane %v3687, 4
      %v3690 = vshll.u32 %v3591, 16
      %v3692 = vrot.slane %v3690, 5
      %v3693 = vsel %vm266, %v3688, %v3692
      %v3694 = vshrl.u32 %v3591, 16
      %v3696 = vrot.slane %v3694, 4
      %v3697 = vor.u32 %v3696, %v3692
      %v3698 = vrot.slane %v3697, 4
      %v3700 = vshll.u32 %v3592, 16
      %v3702 = vrot.slane %v3700, 5
      %v3703 = vsel %vm266, %v3698, %v3702
      %v3705 = vshrl.u32 %v3593, 16
      %v3707 = vrot.slane %v3705, 4
      %v3708 = vshll.u32 %v3593, 16
      %v3710 = vrot.slane %v3708, 5
      %v3711 = vor.u32 %v3707, %v3710
      %v3712 = vrot.slane %v3711, 4
      %v3714 = vshll.u32 %v3594, 16
      %v3716 = vrot.slane %v3714, 5
      %v3717 = vsel %vm266, %v3712, %v3716
      %v3718 = vshrl.u32 %v3594, 16
      %v3720 = vrot.slane %v3718, 4
      %v3721 = vor.u32 %v3720, %v3716
      %v3722 = vrot.slane %v3721, 4
      %v3724 = vshll.u32 %v3595, 16
      %v3726 = vrot.slane %v3724, 5
      %v3727 = vsel %vm266, %v3722, %v3726
      %v3729 = vshrl.u32 %v3596, 16
      %v3731 = vrot.slane %v3729, 4
      %v3732 = vshll.u32 %v3596, 16
      %v3734 = vrot.slane %v3732, 5
      %v3735 = vor.u32 %v3731, %v3734
      %v3736 = vrot.slane %v3735, 4
      %v3738 = vshll.u32 %v3597, 16
      %v3740 = vrot.slane %v3738, 5
      %v3741 = vsel %vm266, %v3736, %v3740
      %v3742 = vshrl.u32 %v3597, 16
      %v3744 = vrot.slane %v3742, 4
      %v3745 = vor.u32 %v3744, %v3740
      %v3746 = vrot.slane %v3745, 4
      %v3748 = vshll.u32 %v3598, 16
      %v3750 = vrot.slane %v3748, 5
      %v3751 = vsel %vm266, %v3746, %v3750
      %v3753 = vshrl.u32 %v3599, 16
      %v3755 = vrot.slane %v3753, 4
      %v3756 = vshll.u32 %v3599, 16
      %v3758 = vrot.slane %v3756, 5
      %v3759 = vor.u32 %v3755, %v3758
      %v3760 = vrot.slane %v3759, 4
      %v3762 = vshll.u32 %v3600, 16
      %v3764 = vrot.slane %v3762, 5
      %v3765 = vsel %vm266, %v3760, %v3764
      %v3766 = vshrl.u32 %v3600, 16
      %v3768 = vrot.slane %v3766, 4
      %v3769 = vor.u32 %v3768, %v3764
      %v3770 = vrot.slane %v3769, 4
      %v3772 = vshll.u32 %v3601, 16
      %v3774 = vrot.slane %v3772, 5
      %v3775 = vsel %vm266, %v3770, %v3774
      %v3777 = vshrl.u32 %v3602, 16
      %v3779 = vrot.slane %v3777, 4
      %v3780 = vshll.u32 %v3602, 16
      %v3782 = vrot.slane %v3780, 5
      %v3783 = vor.u32 %v3779, %v3782
      %v3784 = vrot.slane %v3783, 4
      %v3786 = vshll.u32 %v3603, 16
      %v3788 = vrot.slane %v3786, 5
      %v3789 = vsel %vm266, %v3784, %v3788
      %v3790 = vshrl.u32 %v3603, 16
      %v3792 = vrot.slane %v3790, 4
      %v3793 = vor.u32 %v3792, %v3788
      %v3794 = vrot.slane %v3793, 4
      %v3796 = vshll.u32 %v3604, 16
      %v3798 = vrot.slane %v3796, 5
      %v3799 = vsel %vm266, %v3794, %v3798
      %v3801 = vshrl.u32 %v3605, 16
      %v3803 = vrot.slane %v3801, 4
      %v3804 = vshll.u32 %v3605, 16
      %v3806 = vrot.slane %v3804, 5
      %v3807 = vor.u32 %v3803, %v3806
      %v3808 = vrot.slane %v3807, 4
      %v3810 = vshll.u32 %v3606, 16
      %v3812 = vrot.slane %v3810, 5
      %v3813 = vsel %vm266, %v3808, %v3812
      %v3814 = vshrl.u32 %v3606, 16
      %v3816 = vrot.slane %v3814, 4
      %v3817 = vor.u32 %v3816, %v3812
      %v3818 = vrot.slane %v3817, 4
      %v3820 = vshll.u32 %v3607, 16
      %v3822 = vrot.slane %v3820, 5
      %v3823 = vsel %vm266, %v3818, %v3822
      %v3825 = vshrl.u32 %v3608, 16
      %v3827 = vrot.slane %v3825, 4
      %v3828 = vshll.u32 %v3608, 16
      %v3830 = vrot.slane %v3828, 5
      %v3831 = vor.u32 %v3827, %v3830
      %v3832 = vrot.slane %v3831, 4
      %v3834 = vshll.u32 %v3609, 16
      %v3836 = vrot.slane %v3834, 5
      %v3837 = vsel %vm266, %v3832, %v3836
      %v3838 = vshrl.u32 %v3609, 16
      %v3840 = vrot.slane %v3838, 4
      %v3841 = vor.u32 %v3840, %v3836
      %v3842 = vrot.slane %v3841, 4
      %v3844 = vshll.u32 %v3610, 16
      %v3846 = vrot.slane %v3844, 5
      %v3847 = vsel %vm266, %v3842, %v3846
      %v3849 = vshrl.u32 %v3611, 16
      %v3851 = vrot.slane %v3849, 4
      %v3852 = vshll.u32 %v3611, 16
      %v3854 = vrot.slane %v3852, 5
      %v3855 = vor.u32 %v3851, %v3854
      %v3856 = vrot.slane %v3855, 4
      %v3858 = vshll.u32 %v3612, 16
      %v3860 = vrot.slane %v3858, 5
      %v3861 = vsel %vm266, %v3856, %v3860
      %v3862 = vshrl.u32 %v3612, 16
      %v3864 = vrot.slane %v3862, 4
      %v3865 = vor.u32 %v3864, %v3860
      %v3866 = vrot.slane %v3865, 4
      %v3868 = vshll.u32 %v3613, 16
      %v3870 = vrot.slane %v3868, 5
      %v3871 = vsel %vm266, %v3866, %v3870
      %v3873 = vshrl.u32 %v3614, 16
      %v3875 = vrot.slane %v3873, 4
      %v3876 = vshll.u32 %v3614, 16
      %v3878 = vrot.slane %v3876, 5
      %v3879 = vor.u32 %v3875, %v3878
      %v3880 = vrot.slane %v3879, 4
      %v3882 = vshll.u32 %v3615, 16
      %v3884 = vrot.slane %v3882, 5
      %v3885 = vsel %vm266, %v3880, %v3884
      %v3886 = vshrl.u32 %v3615, 16
      %v3888 = vrot.slane %v3886, 4
      %v3889 = vor.u32 %v3888, %v3884
      %v3890 = vrot.slane %v3889, 4
      %v3892 = vshll.u32 %v3616, 16
      %v3894 = vrot.slane %v3892, 5
      %v3895 = vsel %vm266, %v3890, %v3894
      %v3897 = vshrl.u32 %v3617, 16
      %v3899 = vrot.slane %v3897, 4
      %v3900 = vshll.u32 %v3617, 16
      %v3902 = vrot.slane %v3900, 5
      %v3903 = vor.u32 %v3899, %v3902
      %v3904 = vrot.slane %v3903, 4
      %v3906 = vshll.u32 %v3618, 16
      %v3908 = vrot.slane %v3906, 5
      %v3909 = vsel %vm266, %v3904, %v3908
      %v3910 = vshrl.u32 %v3618, 16
      %v3912 = vrot.slane %v3910, 4
      %v3913 = vor.u32 %v3912, %v3908
      %v3914 = vrot.slane %v3913, 4
      %v3916 = vshll.u32 %v3619, 16
      %v3918 = vrot.slane %v3916, 5
      %v3919 = vsel %vm266, %v3914, %v3918
      %v3921 = vshrl.u32 %v3620, 16
      %v3923 = vrot.slane %v3921, 4
      %v3924 = vshll.u32 %v3620, 16
      %v3926 = vrot.slane %v3924, 5
      %v3927 = vor.u32 %v3923, %v3926
      %v3928 = vrot.slane %v3927, 4
      %v3930 = vshll.u32 %v3621, 16
      %v3932 = vrot.slane %v3930, 5
      %v3933 = vsel %vm266, %v3928, %v3932
      %v3934 = vshrl.u32 %v3621, 16
      %v3936 = vrot.slane %v3934, 4
      %v3937 = vor.u32 %v3936, %v3932
      %v3938 = vrot.slane %v3937, 4
      %v3940 = vshll.u32 %v3622, 16
      %v3942 = vrot.slane %v3940, 5
      %v3943 = vsel %vm266, %v3938, %v3942
      %v3945 = vshrl.u32 %v3623, 16
      %v3947 = vrot.slane %v3945, 4
      %v3948 = vshll.u32 %v3623, 16
      %v3950 = vrot.slane %v3948, 5
      %v3951 = vor.u32 %v3947, %v3950
      %v3952 = vrot.slane %v3951, 4
      %v3954 = vshll.u32 %v3624, 16
      %v3956 = vrot.slane %v3954, 5
      %v3957 = vsel %vm266, %v3952, %v3956
      %v3958 = vshrl.u32 %v3624, 16
      %v3960 = vrot.slane %v3958, 4
      %v3961 = vor.u32 %v3960, %v3956
      %v3962 = vrot.slane %v3961, 4
      %v3964 = vshll.u32 %v3625, 16
      %v3966 = vrot.slane %v3964, 5
      %v3967 = vsel %vm266, %v3962, %v3966
      %v3969 = vshrl.u32 %v3626, 16
      %v3971 = vrot.slane %v3969, 4
      %v3972 = vshll.u32 %v3626, 16
      %v3974 = vrot.slane %v3972, 5
      %v3975 = vor.u32 %v3971, %v3974
      %v3976 = vrot.slane %v3975, 4
      %v3978 = vshll.u32 %v3627, 16
      %v3980 = vrot.slane %v3978, 5
      %v3981 = vsel %vm266, %v3976, %v3980
      %v3982 = vshrl.u32 %v3627, 16
      %v3984 = vrot.slane %v3982, 4
      %v3985 = vor.u32 %v3984, %v3980
      %v3986 = vrot.slane %v3985, 4
      %v3988 = vshll.u32 %v3628, 16
      %v3990 = vrot.slane %v3988, 5
      %v3991 = vsel %vm266, %v3986, %v3990
      %v3993 = vshrl.u32 %v3629, 16
      %v3995 = vrot.slane %v3993, 4
      %v3996 = vshll.u32 %v3629, 16
      %v3998 = vrot.slane %v3996, 5
      %v3999 = vor.u32 %v3995, %v3998
      %v4000 = vrot.slane %v3999, 4
      %v4002 = vshll.u32 %v3630, 16
      %v4004 = vrot.slane %v4002, 5
      %v4005 = vsel %vm266, %v4000, %v4004
      %v4006 = vshrl.u32 %v3630, 16
      %v4008 = vrot.slane %v4006, 4
      %v4009 = vor.u32 %v4008, %v4004
      %v4010 = vrot.slane %v4009, 4
      %v4012 = vshll.u32 %v3631, 16
      %v4014 = vrot.slane %v4012, 5
      %v4015 = vsel %vm266, %v4010, %v4014
      %s4016 = scalar_lea.vmem %s1, 14
      %v4017 = vld [vmem:[%s4016] sm:$0x3]
      %v4018 = vunpack.c.l.b16 %v3645
      %v4019 = vunpack.c.l.b16 %v3655
      %v4020 = vunpack.c.l.b16 %v3669
      %v4021 = vunpack.c.l.b16 %v3679
      %v4022 = vunpack.c.l.b16 %v3693
      %v4023 = vunpack.c.l.b16 %v3703
      %v4024 = vunpack.c.l.b16 %v3717
      %v4025 = vunpack.c.l.b16 %v3727
      %v4026 = vunpack.c.l.b16 %v3741
      %v4027 = vunpack.c.l.b16 %v3751
      %v4028 = vunpack.c.l.b16 %v3765
      %v4029 = vunpack.c.l.b16 %v3775
      %v4030 = vunpack.c.l.b16 %v3789
      %v4031 = vunpack.c.l.b16 %v3799
      %v4032 = vunpack.c.l.b16 %v3813
      %v4033 = vunpack.c.l.b16 %v3823
      %v4034 = vunpack.c.l.b16 %v3837
      %v4035 = vunpack.c.l.b16 %v3847
      %v4036 = vunpack.c.l.b16 %v3861
      %v4037 = vunpack.c.l.b16 %v3871
      %v4038 = vunpack.c.l.b16 %v3885
      %v4039 = vunpack.c.l.b16 %v3895
      %v4040 = vunpack.c.l.b16 %v3909
      %v4041 = vunpack.c.l.b16 %v3919
      %v4042 = vunpack.c.l.b16 %v3933
      %v4043 = vunpack.c.l.b16 %v3943
      %v4044 = vunpack.c.l.b16 %v3957
      %v4045 = vunpack.c.l.b16 %v3967
      %v4046 = vunpack.c.l.b16 %v3981
      %v4047 = vunpack.c.l.b16 %v3991
      %v4048 = vunpack.c.l.b16 %v4005
      %v4049 = vunpack.c.l.b16 %v4015
      %v4050 = vpack.c.b16 %v4019, %v4018
      %v4051 = vpack.c.b16 %v4021, %v4020
      %v4052 = vpack.c.b16 %v4023, %v4022
      %v4053 = vpack.c.b16 %v4025, %v4024
      %v4054 = vpack.c.b16 %v4027, %v4026
      %v4055 = vpack.c.b16 %v4029, %v4028
      %v4056 = vpack.c.b16 %v4031, %v4030
      %v4057 = vpack.c.b16 %v4033, %v4032
      %v4058 = vpack.c.b16 %v4035, %v4034
      %v4059 = vpack.c.b16 %v4037, %v4036
      %v4060 = vpack.c.b16 %v4039, %v4038
      %v4061 = vpack.c.b16 %v4041, %v4040
      %v4062 = vpack.c.b16 %v4043, %v4042
      %v4063 = vpack.c.b16 %v4045, %v4044
      %v4064 = vpack.c.b16 %v4047, %v4046
      %v4065 = vpack.c.b16 %v4049, %v4048
      %v4067 = vsel %vm701, %v4050, 0
      %v4070 = vsel %vm701, %v4051, 0
      %v4073 = vsel %vm701, %v4052, 0
      %v4076 = vsel %vm701, %v4053, 0
      %v4079 = vsel %vm701, %v4054, 0
      %v4082 = vsel %vm701, %v4055, 0
      %v4085 = vsel %vm701, %v4056, 0
      %v4088 = vsel %vm701, %v4057, 0
      %v4091 = vsel %vm701, %v4058, 0
      %v4094 = vsel %vm701, %v4059, 0
      %v4097 = vsel %vm701, %v4060, 0
      %v4100 = vsel %vm701, %v4061, 0
      %v4103 = vsel %vm701, %v4062, 0
      %v4106 = vsel %vm701, %v4063, 0
      %v4109 = vsel %vm701, %v4064, 0
      %v4112 = vsel %vm701, %v4065, 0
      %v4115 = vsel %vm750, %v4017, 0
      %4117 = vmatprep.subr.bf16.mxu0 0
      %4118 = vmatpush1.bf16.msra.mxu0 %v4115
      %4119 = vmatprep.subr.bf16.mxu0 0
      %4120 = vmatpush1.bf16.msra.mxu0 0
      %4121 = vmatprep.subr.bf16.mxu0 0
      %4122 = vmatpush1.bf16.msra.mxu0 0
      %4123 = vmatprep.subr.bf16.mxu0 0
      %4124 = vmatpush1.bf16.msra.mxu0 0
      %4125 = vmatprep.subr.bf16.mxu0 0
      %4126 = vmatpush1.bf16.msra.mxu0 0
      %4127 = vmatprep.subr.bf16.mxu0 0
      %4128 = vmatpush1.bf16.msra.mxu0 0
      %4129 = vmatprep.subr.bf16.mxu0 0
      %4130 = vmatpush1.bf16.msra.mxu0 0
      %4131 = vmatprep.subr.bf16.mxu0 0
      %4132 = vmatpush1.bf16.msra.mxu0 0
      %4133 = vmatprep.subr.bf16.mxu0 0
      %4134 = vmatpush1.bf16.msra.mxu0 0
      %4135 = vmatprep.subr.bf16.mxu0 0
      %4136 = vmatpush1.bf16.msra.mxu0 0
      %4137 = vmatprep.subr.bf16.mxu0 0
      %4138 = vmatpush1.bf16.msra.mxu0 0
      %4139 = vmatprep.subr.bf16.mxu0 0
      %4140 = vmatpush1.bf16.msra.mxu0 0
      %4141 = vmatprep.subr.bf16.mxu0 0
      %4142 = vmatpush1.bf16.msra.mxu0 0
      %4143 = vmatprep.subr.bf16.mxu0 0
      %4144 = vmatpush1.bf16.msra.mxu0 0
      %4145 = vmatprep.subr.bf16.mxu0 0
      %4146 = vmatpush1.bf16.msra.mxu0 0
      %4147 = vmatprep.subr.bf16.mxu0 0
      %4148 = vmatpush1.bf16.msra.mxu0 0
      %4149 = vmatprep.mubr.bf16.mxu0 0
      %4150 = vmatmul.mubr.bf16.gmra.mrb[0].mxu0 %v4067
      %v4151 = vpop.f32.mrb[0].mxu0
      %v4152 = vadd.f32 0.0, %v4151
      %v4153 = vpop.f32.mrb[0].mxu0
      %v4154 = vpop.f32.mrb[0].mxu0
      %v4155 = vadd.f32 0.0, %v4154
      %v4156 = vpop.f32.mrb[0].mxu0
      %4157 = vmatprep.mubr.bf16.mxu0 0
      %4158 = vmatmul.mubr.bf16.gmra.mrb[0].mxu0 %v4070
      %v4159 = vpop.f32.mrb[0].mxu0
      %v4160 = vadd.f32 0.0, %v4159
      %v4161 = vpop.f32.mrb[0].mxu0
      %v4162 = vpop.f32.mrb[0].mxu0
      %v4163 = vadd.f32 0.0, %v4162
      %v4164 = vpop.f32.mrb[0].mxu0
      %4165 = vmatprep.mubr.bf16.mxu0 0
      %4166 = vmatmul.mubr.bf16.gmra.mrb[0].mxu0 %v4073
      %v4167 = vpop.f32.mrb[0].mxu0
      %v4168 = vadd.f32 0.0, %v4167
      %v4169 = vpop.f32.mrb[0].mxu0
      %v4170 = vpop.f32.mrb[0].mxu0
      %v4171 = vadd.f32 0.0, %v4170
      %v4172 = vpop.f32.mrb[0].mxu0
      %4173 = vmatprep.mubr.bf16.mxu0 0
      %4174 = vmatmul.mubr.bf16.gmra.mrb[0].mxu0 %v4076
      %v4175 = vpop.f32.mrb[0].mxu0
      %v4176 = vadd.f32 0.0, %v4175
      %v4177 = vpop.f32.mrb[0].mxu0
      %v4178 = vpop.f32.mrb[0].mxu0
      %v4179 = vadd.f32 0.0, %v4178
      %v4180 = vpop.f32.mrb[0].mxu0
      %4181 = vmatprep.mubr.bf16.mxu0 0
      %4182 = vmatmul.mubr.bf16.gmra.mrb[0].mxu0 %v4079
      %v4183 = vpop.f32.mrb[0].mxu0
      %v4184 = vadd.f32 0.0, %v4183
      %v4185 = vpop.f32.mrb[0].mxu0
      %v4186 = vpop.f32.mrb[0].mxu0
      %v4187 = vadd.f32 0.0, %v4186
      %v4188 = vpop.f32.mrb[0].mxu0
      %4189 = vmatprep.mubr.bf16.mxu0 0
      %4190 = vmatmul.mubr.bf16.gmra.mrb[0].mxu0 %v4082
      %v4191 = vpop.f32.mrb[0].mxu0
      %v4192 = vadd.f32 0.0, %v4191
      %v4193 = vpop.f32.mrb[0].mxu0
      %v4194 = vpop.f32.mrb[0].mxu0
      %v4195 = vadd.f32 0.0, %v4194
      %v4196 = vpop.f32.mrb[0].mxu0
      %4197 = vmatprep.mubr.bf16.mxu0 0
      %4198 = vmatmul.mubr.bf16.gmra.mrb[0].mxu0 %v4085
      %v4199 = vpop.f32.mrb[0].mxu0
      %v4200 = vadd.f32 0.0, %v4199
      %v4201 = vpop.f32.mrb[0].mxu0
      %v4202 = vpop.f32.mrb[0].mxu0
      %v4203 = vadd.f32 0.0, %v4202
      %v4204 = vpop.f32.mrb[0].mxu0
      %4205 = vmatprep.mubr.bf16.mxu0 0
      %4206 = vmatmul.mubr.bf16.gmra.mrb[0].mxu0 %v4088
      %v4207 = vpop.f32.mrb[0].mxu0
      %v4208 = vadd.f32 0.0, %v4207
      %v4209 = vpop.f32.mrb[0].mxu0
      %v4210 = vpop.f32.mrb[0].mxu0
      %v4211 = vadd.f32 0.0, %v4210
      %v4212 = vpop.f32.mrb[0].mxu0
      %4213 = vmatprep.mubr.bf16.mxu0 0
      %4214 = vmatmul.mubr.bf16.gmra.mrb[0].mxu0 %v4091
      %v4215 = vpop.f32.mrb[0].mxu0
      %v4216 = vadd.f32 0.0, %v4215
      %v4217 = vpop.f32.mrb[0].mxu0
      %v4218 = vpop.f32.mrb[0].mxu0
      %v4219 = vadd.f32 0.0, %v4218
      %v4220 = vpop.f32.mrb[0].mxu0
      %4221 = vmatprep.mubr.bf16.mxu0 0
      %4222 = vmatmul.mubr.bf16.gmra.mrb[0].mxu0 %v4094
      %v4223 = vpop.f32.mrb[0].mxu0
      %v4224 = vadd.f32 0.0, %v4223
      %v4225 = vpop.f32.mrb[0].mxu0
      %v4226 = vpop.f32.mrb[0].mxu0
      %v4227 = vadd.f32 0.0, %v4226
      %v4228 = vpop.f32.mrb[0].mxu0
      %4229 = vmatprep.mubr.bf16.mxu0 0
      %4230 = vmatmul.mubr.bf16.gmra.mrb[0].mxu0 %v4097
      %v4231 = vpop.f32.mrb[0].mxu0
      %v4232 = vadd.f32 0.0, %v4231
      %v4233 = vpop.f32.mrb[0].mxu0
      %v4234 = vpop.f32.mrb[0].mxu0
      %v4235 = vadd.f32 0.0, %v4234
      %v4236 = vpop.f32.mrb[0].mxu0
      %4237 = vmatprep.mubr.bf16.mxu0 0
      %4238 = vmatmul.mubr.bf16.gmra.mrb[0].mxu0 %v4100
      %v4239 = vpop.f32.mrb[0].mxu0
      %v4240 = vadd.f32 0.0, %v4239
      %v4241 = vpop.f32.mrb[0].mxu0
      %v4242 = vpop.f32.mrb[0].mxu0
      %v4243 = vadd.f32 0.0, %v4242
      %v4244 = vpop.f32.mrb[0].mxu0
      %4245 = vmatprep.mubr.bf16.mxu0 0
      %4246 = vmatmul.mubr.bf16.gmra.mrb[0].mxu0 %v4103
      %v4247 = vpop.f32.mrb[0].mxu0
      %v4248 = vadd.f32 0.0, %v4247
      %v4249 = vpop.f32.mrb[0].mxu0
      %v4250 = vpop.f32.mrb[0].mxu0
      %v4251 = vadd.f32 0.0, %v4250
      %v4252 = vpop.f32.mrb[0].mxu0
      %4253 = vmatprep.mubr.bf16.mxu0 0
      %4254 = vmatmul.mubr.bf16.gmra.mrb[0].mxu0 %v4106
      %v4255 = vpop.f32.mrb[0].mxu0
      %v4256 = vadd.f32 0.0, %v4255
      %v4257 = vpop.f32.mrb[0].mxu0
      %v4258 = vpop.f32.mrb[0].mxu0
      %v4259 = vadd.f32 0.0, %v4258
      %v4260 = vpop.f32.mrb[0].mxu0
      %4261 = vmatprep.mubr.bf16.mxu0 0
      %4262 = vmatmul.mubr.bf16.gmra.mrb[0].mxu0 %v4109
      %v4263 = vpop.f32.mrb[0].mxu0
      %v4264 = vadd.f32 0.0, %v4263
      %v4265 = vpop.f32.mrb[0].mxu0
      %v4266 = vpop.f32.mrb[0].mxu0
      %v4267 = vadd.f32 0.0, %v4266
      %v4268 = vpop.f32.mrb[0].mxu0
      %4269 = vmatprep.mubr.bf16.mxu0 0
      %4270 = vmatmul.mubr.bf16.gmra.mrb[0].mxu0 %v4112
      %v4271 = vpop.f32.mrb[0].mxu0
      %v4272 = vadd.f32 0.0, %v4271
      %v4273 = vpop.f32.mrb[0].mxu0
      %v4274 = vpop.f32.mrb[0].mxu0
      %v4275 = vadd.f32 0.0, %v4274
      %v4276 = vpop.f32.mrb[0].mxu0
      %4277 = vdwg.mxu0
      %v4278 = vadd.f32 %v3552, %v4152
      %v4279 = vadd.f32 %v3553, %v4155
      %v4280 = vadd.f32 %v3554, %v4160
      %v4281 = vadd.f32 %v3555, %v4163
      %v4282 = vadd.f32 %v3556, %v4168
      %v4283 = vadd.f32 %v3557, %v4171
      %v4284 = vadd.f32 %v3558, %v4176
      %v4285 = vadd.f32 %v3559, %v4179
      %v4286 = vadd.f32 %v3560, %v4184
      %v4287 = vadd.f32 %v3561, %v4187
      %v4288 = vadd.f32 %v3562, %v4192
      %v4289 = vadd.f32 %v3563, %v4195
      %v4290 = vadd.f32 %v3564, %v4200
      %v4291 = vadd.f32 %v3565, %v4203
      %v4292 = vadd.f32 %v3566, %v4208
      %v4293 = vadd.f32 %v3567, %v4211
      %v4294 = vadd.f32 %v3568, %v4216
      %v4295 = vadd.f32 %v3569, %v4219
      %v4296 = vadd.f32 %v3570, %v4224
      %v4297 = vadd.f32 %v3571, %v4227
      %v4298 = vadd.f32 %v3572, %v4232
      %v4299 = vadd.f32 %v3573, %v4235
      %v4300 = vadd.f32 %v3574, %v4240
      %v4301 = vadd.f32 %v3575, %v4243
      %v4302 = vadd.f32 %v3576, %v4248
      %v4303 = vadd.f32 %v3577, %v4251
      %v4304 = vadd.f32 %v3578, %v4256
      %v4305 = vadd.f32 %v3579, %v4259
      %v4306 = vadd.f32 %v3580, %v4264
      %v4307 = vadd.f32 %v3581, %v4267
      %v4308 = vadd.f32 %v3582, %v4272
      %v4309 = vadd.f32 %v3583, %v4275
      %v4310 = vld [vmem:[%s3225] sm:$0xe]
      %v4311 = vld [vmem:[%s3225 + $0xc] sm:$0xe]
      %v4312 = vld [vmem:[%s3225 + $0x18] sm:$0xe]
      %v4313 = vld [vmem:[%s3225 + $0x24] sm:$0xe]
      %v4314 = vld [vmem:[%s3225 + $0x30] sm:$0xe]
      %v4315 = vld [vmem:[%s3225 + $0x3c] sm:$0xe]
      %v4316 = vld [vmem:[%s3225 + $0x48] sm:$0xe]
      %v4317 = vld [vmem:[%s3225 + $0x54] sm:$0xe]
      %v4318 = vld [vmem:[%s3225 + $0x60] sm:$0xe]
      %v4319 = vld [vmem:[%s3225 + $0x6c] sm:$0xe]
      %v4320 = vld [vmem:[%s3225 + $0x78] sm:$0xe]
      %v4321 = vld [vmem:[%s3225 + $0x84] sm:$0xe]
      %v4322 = vld [vmem:[%s3225 + $0x90] sm:$0xe]
      %v4323 = vld [vmem:[%s3225 + $0x9c] sm:$0xe]
      %v4324 = vld [vmem:[%s3225 + $0xa8] sm:$0xe]
      %v4325 = vld [vmem:[%s3225 + $0xb4] sm:$0xe]
      %v4374 = vrot.slane %v4310, 5
      %v4375 = vrot.slane %v4374, 4
      %v4376 = vrot.slane %v3585, 5
      %v4377 = vsel %vm1257, %v4375, %v4376
      %v4378 = vrot.slane %v4376, 4
      %v4379 = vrot.slane %v3586, 5
      %v4380 = vsel %vm1257, %v4378, %v4379
      %v4381 = vrot.slane %v4311, 5
      %v4382 = vrot.slane %v4381, 4
      %v4383 = vrot.slane %v3588, 5
      %v4384 = vsel %vm1257, %v4382, %v4383
      %v4385 = vrot.slane %v4383, 4
      %v4386 = vrot.slane %v3589, 5
      %v4387 = vsel %vm1257, %v4385, %v4386
      %v4388 = vrot.slane %v4312, 5
      %v4389 = vrot.slane %v4388, 4
      %v4390 = vrot.slane %v3591, 5
      %v4391 = vsel %vm1257, %v4389, %v4390
      %v4392 = vrot.slane %v4390, 4
      %v4393 = vrot.slane %v3592, 5
      %v4394 = vsel %vm1257, %v4392, %v4393
      %v4395 = vrot.slane %v4313, 5
      %v4396 = vrot.slane %v4395, 4
      %v4397 = vrot.slane %v3594, 5
      %v4398 = vsel %vm1257, %v4396, %v4397
      %v4399 = vrot.slane %v4397, 4
      %v4400 = vrot.slane %v3595, 5
      %v4401 = vsel %vm1257, %v4399, %v4400
      %v4402 = vrot.slane %v4314, 5
      %v4403 = vrot.slane %v4402, 4
      %v4404 = vrot.slane %v3597, 5
      %v4405 = vsel %vm1257, %v4403, %v4404
      %v4406 = vrot.slane %v4404, 4
      %v4407 = vrot.slane %v3598, 5
      %v4408 = vsel %vm1257, %v4406, %v4407
      %v4409 = vrot.slane %v4315, 5
      %v4410 = vrot.slane %v4409, 4
      %v4411 = vrot.slane %v3600, 5
      %v4412 = vsel %vm1257, %v4410, %v4411
      %v4413 = vrot.slane %v4411, 4
      %v4414 = vrot.slane %v3601, 5
      %v4415 = vsel %vm1257, %v4413, %v4414
      %v4416 = vrot.slane %v4316, 5
      %v4417 = vrot.slane %v4416, 4
      %v4418 = vrot.slane %v3603, 5
      %v4419 = vsel %vm1257, %v4417, %v4418
      %v4420 = vrot.slane %v4418, 4
      %v4421 = vrot.slane %v3604, 5
      %v4422 = vsel %vm1257, %v4420, %v4421
      %v4423 = vrot.slane %v4317, 5
      %v4424 = vrot.slane %v4423, 4
      %v4425 = vrot.slane %v3606, 5
      %v4426 = vsel %vm1257, %v4424, %v4425
      %v4427 = vrot.slane %v4425, 4
      %v4428 = vrot.slane %v3607, 5
      %v4429 = vsel %vm1257, %v4427, %v4428
      %v4430 = vrot.slane %v4318, 5
      %v4431 = vrot.slane %v4430, 4
      %v4432 = vrot.slane %v3609, 5
      %v4433 = vsel %vm1257, %v4431, %v4432
      %v4434 = vrot.slane %v4432, 4
      %v4435 = vrot.slane %v3610, 5
      %v4436 = vsel %vm1257, %v4434, %v4435
      %v4437 = vrot.slane %v4319, 5
      %v4438 = vrot.slane %v4437, 4
      %v4439 = vrot.slane %v3612, 5
      %v4440 = vsel %vm1257, %v4438, %v4439
      %v4441 = vrot.slane %v4439, 4
      %v4442 = vrot.slane %v3613, 5
      %v4443 = vsel %vm1257, %v4441, %v4442
      %v4444 = vrot.slane %v4320, 5
      %v4445 = vrot.slane %v4444, 4
      %v4446 = vrot.slane %v3615, 5
      %v4447 = vsel %vm1257, %v4445, %v4446
      %v4448 = vrot.slane %v4446, 4
      %v4449 = vrot.slane %v3616, 5
      %v4450 = vsel %vm1257, %v4448, %v4449
      %v4451 = vrot.slane %v4321, 5
      %v4452 = vrot.slane %v4451, 4
      %v4453 = vrot.slane %v3618, 5
      %v4454 = vsel %vm1257, %v4452, %v4453
      %v4455 = vrot.slane %v4453, 4
      %v4456 = vrot.slane %v3619, 5
      %v4457 = vsel %vm1257, %v4455, %v4456
      %v4458 = vrot.slane %v4322, 5
      %v4459 = vrot.slane %v4458, 4
      %v4460 = vrot.slane %v3621, 5
      %v4461 = vsel %vm1257, %v4459, %v4460
      %v4462 = vrot.slane %v4460, 4
      %v4463 = vrot.slane %v3622, 5
      %v4464 = vsel %vm1257, %v4462, %v4463
      %v4465 = vrot.slane %v4323, 5
      %v4466 = vrot.slane %v4465, 4
      %v4467 = vrot.slane %v3624, 5
      %v4468 = vsel %vm1257, %v4466, %v4467
      %v4469 = vrot.slane %v4467, 4
      %v4470 = vrot.slane %v3625, 5
      %v4471 = vsel %vm1257, %v4469, %v4470
      %v4472 = vrot.slane %v4324, 5
      %v4473 = vrot.slane %v4472, 4
      %v4474 = vrot.slane %v3627, 5
      %v4475 = vsel %vm1257, %v4473, %v4474
      %v4476 = vrot.slane %v4474, 4
      %v4477 = vrot.slane %v3628, 5
      %v4478 = vsel %vm1257, %v4476, %v4477
      %v4479 = vrot.slane %v4325, 5
      %v4480 = vrot.slane %v4479, 4
      %v4481 = vrot.slane %v3630, 5
      %v4482 = vsel %vm1257, %v4480, %v4481
      %v4483 = vrot.slane %v4481, 4
      %v4484 = vrot.slane %v3631, 5
      %v4485 = vsel %vm1257, %v4483, %v4484
      %s4486 = scalar_lea.vmem %s1, 16
      %v4487 = vld [vmem:[%s4486] sm:$0x3]
      %v4488 = vunpack.c.l.b16 %v4377
      %v4489 = vunpack.c.l.b16 %v4380
      %v4490 = vunpack.c.l.b16 %v4384
      %v4491 = vunpack.c.l.b16 %v4387
      %v4492 = vunpack.c.l.b16 %v4391
      %v4493 = vunpack.c.l.b16 %v4394
      %v4494 = vunpack.c.l.b16 %v4398
      %v4495 = vunpack.c.l.b16 %v4401
      %v4496 = vunpack.c.l.b16 %v4405
      %v4497 = vunpack.c.l.b16 %v4408
      %v4498 = vunpack.c.l.b16 %v4412
      %v4499 = vunpack.c.l.b16 %v4415
      %v4500 = vunpack.c.l.b16 %v4419
      %v4501 = vunpack.c.l.b16 %v4422
      %v4502 = vunpack.c.l.b16 %v4426
      %v4503 = vunpack.c.l.b16 %v4429
      %v4504 = vunpack.c.l.b16 %v4433
      %v4505 = vunpack.c.l.b16 %v4436
      %v4506 = vunpack.c.l.b16 %v4440
      %v4507 = vunpack.c.l.b16 %v4443
      %v4508 = vunpack.c.l.b16 %v4447
      %v4509 = vunpack.c.l.b16 %v4450
      %v4510 = vunpack.c.l.b16 %v4454
      %v4511 = vunpack.c.l.b16 %v4457
      %v4512 = vunpack.c.l.b16 %v4461
      %v4513 = vunpack.c.l.b16 %v4464
      %v4514 = vunpack.c.l.b16 %v4468
      %v4515 = vunpack.c.l.b16 %v4471
      %v4516 = vunpack.c.l.b16 %v4475
      %v4517 = vunpack.c.l.b16 %v4478
      %v4518 = vunpack.c.l.b16 %v4482
      %v4519 = vunpack.c.l.b16 %v4485
      %v4520 = vpack.c.b16 %v4489, %v4488
      %v4521 = vpack.c.b16 %v4491, %v4490
      %v4522 = vpack.c.b16 %v4493, %v4492
      %v4523 = vpack.c.b16 %v4495, %v4494
      %v4524 = vpack.c.b16 %v4497, %v4496
      %v4525 = vpack.c.b16 %v4499, %v4498
      %v4526 = vpack.c.b16 %v4501, %v4500
      %v4527 = vpack.c.b16 %v4503, %v4502
      %v4528 = vpack.c.b16 %v4505, %v4504
      %v4529 = vpack.c.b16 %v4507, %v4506
      %v4530 = vpack.c.b16 %v4509, %v4508
      %v4531 = vpack.c.b16 %v4511, %v4510
      %v4532 = vpack.c.b16 %v4513, %v4512
      %v4533 = vpack.c.b16 %v4515, %v4514
      %v4534 = vpack.c.b16 %v4517, %v4516
      %v4535 = vpack.c.b16 %v4519, %v4518
      %v4537 = vsel %vm701, %v4520, 0
      %v4540 = vsel %vm701, %v4521, 0
      %v4543 = vsel %vm701, %v4522, 0
      %v4546 = vsel %vm701, %v4523, 0
      %v4549 = vsel %vm701, %v4524, 0
      %v4552 = vsel %vm701, %v4525, 0
      %v4555 = vsel %vm701, %v4526, 0
      %v4558 = vsel %vm701, %v4527, 0
      %v4561 = vsel %vm701, %v4528, 0
      %v4564 = vsel %vm701, %v4529, 0
      %v4567 = vsel %vm701, %v4530, 0
      %v4570 = vsel %vm701, %v4531, 0
      %v4573 = vsel %vm701, %v4532, 0
      %v4576 = vsel %vm701, %v4533, 0
      %v4579 = vsel %vm701, %v4534, 0
      %v4582 = vsel %vm701, %v4535, 0
      %v4585 = vsel %vm750, %v4487, 0
      %4587 = vmatprep.subr.bf16.mxu0 0
      %4588 = vmatpush1.bf16.msra.mxu0 %v4585
      %4589 = vmatprep.subr.bf16.mxu0 0
      %4590 = vmatpush1.bf16.msra.mxu0 0
      %4591 = vmatprep.subr.bf16.mxu0 0
      %4592 = vmatpush1.bf16.msra.mxu0 0
      %4593 = vmatprep.subr.bf16.mxu0 0
      %4594 = vmatpush1.bf16.msra.mxu0 0
      %4595 = vmatprep.subr.bf16.mxu0 0
      %4596 = vmatpush1.bf16.msra.mxu0 0
      %4597 = vmatprep.subr.bf16.mxu0 0
      %4598 = vmatpush1.bf16.msra.mxu0 0
      %4599 = vmatprep.subr.bf16.mxu0 0
      %4600 = vmatpush1.bf16.msra.mxu0 0
      %4601 = vmatprep.subr.bf16.mxu0 0
      %4602 = vmatpush1.bf16.msra.mxu0 0
      %4603 = vmatprep.subr.bf16.mxu0 0
      %4604 = vmatpush1.bf16.msra.mxu0 0
      %4605 = vmatprep.subr.bf16.mxu0 0
      %4606 = vmatpush1.bf16.msra.mxu0 0
      %4607 = vmatprep.subr.bf16.mxu0 0
      %4608 = vmatpush1.bf16.msra.mxu0 0
      %4609 = vmatprep.subr.bf16.mxu0 0
      %4610 = vmatpush1.bf16.msra.mxu0 0
      %4611 = vmatprep.subr.bf16.mxu0 0
      %4612 = vmatpush1.bf16.msra.mxu0 0
      %4613 = vmatprep.subr.bf16.mxu0 0
      %4614 = vmatpush1.bf16.msra.mxu0 0
      %4615 = vmatprep.subr.bf16.mxu0 0
      %4616 = vmatpush1.bf16.msra.mxu0 0
      %4617 = vmatprep.subr.bf16.mxu0 0
      %4618 = vmatpush1.bf16.msra.mxu0 0
      %4619 = vmatprep.mubr.bf16.mxu0 0
      %4620 = vmatmul.mubr.bf16.gmra.mrb[0].mxu0 %v4537
      %v4621 = vpop.f32.mrb[0].mxu0
      %v4622 = vadd.f32 0.0, %v4621
      %v4623 = vpop.f32.mrb[0].mxu0
      %v4624 = vpop.f32.mrb[0].mxu0
      %v4625 = vadd.f32 0.0, %v4624
      %v4626 = vpop.f32.mrb[0].mxu0
      %4627 = vmatprep.mubr.bf16.mxu0 0
      %4628 = vmatmul.mubr.bf16.gmra.mrb[0].mxu0 %v4540
      %v4629 = vpop.f32.mrb[0].mxu0
      %v4630 = vadd.f32 0.0, %v4629
      %v4631 = vpop.f32.mrb[0].mxu0
      %v4632 = vpop.f32.mrb[0].mxu0
      %v4633 = vadd.f32 0.0, %v4632
      %v4634 = vpop.f32.mrb[0].mxu0
      %4635 = vmatprep.mubr.bf16.mxu0 0
      %4636 = vmatmul.mubr.bf16.gmra.mrb[0].mxu0 %v4543
      %v4637 = vpop.f32.mrb[0].mxu0
      %v4638 = vadd.f32 0.0, %v4637
      %v4639 = vpop.f32.mrb[0].mxu0
      %v4640 = vpop.f32.mrb[0].mxu0
      %v4641 = vadd.f32 0.0, %v4640
      %v4642 = vpop.f32.mrb[0].mxu0
      %4643 = vmatprep.mubr.bf16.mxu0 0
      %4644 = vmatmul.mubr.bf16.gmra.mrb[0].mxu0 %v4546
      %v4645 = vpop.f32.mrb[0].mxu0
      %v4646 = vadd.f32 0.0, %v4645
      %v4647 = vpop.f32.mrb[0].mxu0
      %v4648 = vpop.f32.mrb[0].mxu0
      %v4649 = vadd.f32 0.0, %v4648
      %v4650 = vpop.f32.mrb[0].mxu0
      %4651 = vmatprep.mubr.bf16.mxu0 0
      %4652 = vmatmul.mubr.bf16.gmra.mrb[0].mxu0 %v4549
      %v4653 = vpop.f32.mrb[0].mxu0
      %v4654 = vadd.f32 0.0, %v4653
      %v4655 = vpop.f32.mrb[0].mxu0
      %v4656 = vpop.f32.mrb[0].mxu0
      %v4657 = vadd.f32 0.0, %v4656
      %v4658 = vpop.f32.mrb[0].mxu0
      %4659 = vmatprep.mubr.bf16.mxu0 0
      %4660 = vmatmul.mubr.bf16.gmra.mrb[0].mxu0 %v4552
      %v4661 = vpop.f32.mrb[0].mxu0
      %v4662 = vadd.f32 0.0, %v4661
      %v4663 = vpop.f32.mrb[0].mxu0
      %v4664 = vpop.f32.mrb[0].mxu0
      %v4665 = vadd.f32 0.0, %v4664
      %v4666 = vpop.f32.mrb[0].mxu0
      %4667 = vmatprep.mubr.bf16.mxu0 0
      %4668 = vmatmul.mubr.bf16.gmra.mrb[0].mxu0 %v4555
      %v4669 = vpop.f32.mrb[0].mxu0
      %v4670 = vadd.f32 0.0, %v4669
      %v4671 = vpop.f32.mrb[0].mxu0
      %v4672 = vpop.f32.mrb[0].mxu0
      %v4673 = vadd.f32 0.0, %v4672
      %v4674 = vpop.f32.mrb[0].mxu0
      %4675 = vmatprep.mubr.bf16.mxu0 0
      %4676 = vmatmul.mubr.bf16.gmra.mrb[0].mxu0 %v4558
      %v4677 = vpop.f32.mrb[0].mxu0
      %v4678 = vadd.f32 0.0, %v4677
      %v4679 = vpop.f32.mrb[0].mxu0
      %v4680 = vpop.f32.mrb[0].mxu0
      %v4681 = vadd.f32 0.0, %v4680
      %v4682 = vpop.f32.mrb[0].mxu0
      %4683 = vmatprep.mubr.bf16.mxu0 0
      %4684 = vmatmul.mubr.bf16.gmra.mrb[0].mxu0 %v4561
      %v4685 = vpop.f32.mrb[0].mxu0
      %v4686 = vadd.f32 0.0, %v4685
      %v4687 = vpop.f32.mrb[0].mxu0
      %v4688 = vpop.f32.mrb[0].mxu0
      %v4689 = vadd.f32 0.0, %v4688
      %v4690 = vpop.f32.mrb[0].mxu0
      %4691 = vmatprep.mubr.bf16.mxu0 0
      %4692 = vmatmul.mubr.bf16.gmra.mrb[0].mxu0 %v4564
      %v4693 = vpop.f32.mrb[0].mxu0
      %v4694 = vadd.f32 0.0, %v4693
      %v4695 = vpop.f32.mrb[0].mxu0
      %v4696 = vpop.f32.mrb[0].mxu0
      %v4697 = vadd.f32 0.0, %v4696
      %v4698 = vpop.f32.mrb[0].mxu0
      %4699 = vmatprep.mubr.bf16.mxu0 0
      %4700 = vmatmul.mubr.bf16.gmra.mrb[0].mxu0 %v4567
      %v4701 = vpop.f32.mrb[0].mxu0
      %v4702 = vadd.f32 0.0, %v4701
      %v4703 = vpop.f32.mrb[0].mxu0
      %v4704 = vpop.f32.mrb[0].mxu0
      %v4705 = vadd.f32 0.0, %v4704
      %v4706 = vpop.f32.mrb[0].mxu0
      %4707 = vmatprep.mubr.bf16.mxu0 0
      %4708 = vmatmul.mubr.bf16.gmra.mrb[0].mxu0 %v4570
      %v4709 = vpop.f32.mrb[0].mxu0
      %v4710 = vadd.f32 0.0, %v4709
      %v4711 = vpop.f32.mrb[0].mxu0
      %v4712 = vpop.f32.mrb[0].mxu0
      %v4713 = vadd.f32 0.0, %v4712
      %v4714 = vpop.f32.mrb[0].mxu0
      %4715 = vmatprep.mubr.bf16.mxu0 0
      %4716 = vmatmul.mubr.bf16.gmra.mrb[0].mxu0 %v4573
      %v4717 = vpop.f32.mrb[0].mxu0
      %v4718 = vadd.f32 0.0, %v4717
      %v4719 = vpop.f32.mrb[0].mxu0
      %v4720 = vpop.f32.mrb[0].mxu0
      %v4721 = vadd.f32 0.0, %v4720
      %v4722 = vpop.f32.mrb[0].mxu0
      %4723 = vmatprep.mubr.bf16.mxu0 0
      %4724 = vmatmul.mubr.bf16.gmra.mrb[0].mxu0 %v4576
      %v4725 = vpop.f32.mrb[0].mxu0
      %v4726 = vadd.f32 0.0, %v4725
      %v4727 = vpop.f32.mrb[0].mxu0
      %v4728 = vpop.f32.mrb[0].mxu0
      %v4729 = vadd.f32 0.0, %v4728
      %v4730 = vpop.f32.mrb[0].mxu0
      %4731 = vmatprep.mubr.bf16.mxu0 0
      %4732 = vmatmul.mubr.bf16.gmra.mrb[0].mxu0 %v4579
      %v4733 = vpop.f32.mrb[0].mxu0
      %v4734 = vadd.f32 0.0, %v4733
      %v4735 = vpop.f32.mrb[0].mxu0
      %v4736 = vpop.f32.mrb[0].mxu0
      %v4737 = vadd.f32 0.0, %v4736
      %v4738 = vpop.f32.mrb[0].mxu0
      %4739 = vmatprep.mubr.bf16.mxu0 0
      %4740 = vmatmul.mubr.bf16.gmra.mrb[0].mxu0 %v4582
      %v4741 = vpop.f32.mrb[0].mxu0
      %v4742 = vadd.f32 0.0, %v4741
      %v4743 = vpop.f32.mrb[0].mxu0
      %v4744 = vpop.f32.mrb[0].mxu0
      %v4745 = vadd.f32 0.0, %v4744
      %v4746 = vpop.f32.mrb[0].mxu0
      %4747 = vdwg.mxu0
      %v4748 = vadd.f32 %v4278, %v4622
      %v4749 = vadd.f32 %v4279, %v4625
      %v4750 = vadd.f32 %v4280, %v4630
      %v4751 = vadd.f32 %v4281, %v4633
      %v4752 = vadd.f32 %v4282, %v4638
      %v4753 = vadd.f32 %v4283, %v4641
      %v4754 = vadd.f32 %v4284, %v4646
      %v4755 = vadd.f32 %v4285, %v4649
      %v4756 = vadd.f32 %v4286, %v4654
      %v4757 = vadd.f32 %v4287, %v4657
      %v4758 = vadd.f32 %v4288, %v4662
      %v4759 = vadd.f32 %v4289, %v4665
      %v4760 = vadd.f32 %v4290, %v4670
      %v4761 = vadd.f32 %v4291, %v4673
      %v4762 = vadd.f32 %v4292, %v4678
      %v4763 = vadd.f32 %v4293, %v4681
      %v4764 = vadd.f32 %v4294, %v4686
      %v4765 = vadd.f32 %v4295, %v4689
      %v4766 = vadd.f32 %v4296, %v4694
      %v4767 = vadd.f32 %v4297, %v4697
      %v4768 = vadd.f32 %v4298, %v4702
      %v4769 = vadd.f32 %v4299, %v4705
      %v4770 = vadd.f32 %v4300, %v4710
      %v4771 = vadd.f32 %v4301, %v4713
      %v4772 = vadd.f32 %v4302, %v4718
      %v4773 = vadd.f32 %v4303, %v4721
      %v4774 = vadd.f32 %v4304, %v4726
      %v4775 = vadd.f32 %v4305, %v4729
      %v4776 = vadd.f32 %v4306, %v4734
      %v4777 = vadd.f32 %v4307, %v4737
      %v4778 = vadd.f32 %v4308, %v4742
      %v4779 = vadd.f32 %v4309, %v4745
      %4780 = vst [vmem:[%s202] sm:$0xff] %v4748
      %4781 = vst [vmem:[%s202 + $0x8] sm:$0xff] %v4749
      %4782 = vst [vmem:[%s202 + $0x10] sm:$0xff] %v4750
      %4783 = vst [vmem:[%s202 + $0x18] sm:$0xff] %v4751
      %4784 = vst [vmem:[%s202 + $0x20] sm:$0xff] %v4752
      %4785 = vst [vmem:[%s202 + $0x28] sm:$0xff] %v4753
      %4786 = vst [vmem:[%s202 + $0x30] sm:$0xff] %v4754
      %4787 = vst [vmem:[%s202 + $0x38] sm:$0xff] %v4755
      %4788 = vst [vmem:[%s202 + $0x40] sm:$0xff] %v4756
      %4789 = vst [vmem:[%s202 + $0x48] sm:$0xff] %v4757
      %4790 = vst [vmem:[%s202 + $0x50] sm:$0xff] %v4758
      %4791 = vst [vmem:[%s202 + $0x58] sm:$0xff] %v4759
      %4792 = vst [vmem:[%s202 + $0x60] sm:$0xff] %v4760
      %4793 = vst [vmem:[%s202 + $0x68] sm:$0xff] %v4761
      %4794 = vst [vmem:[%s202 + $0x70] sm:$0xff] %v4762
      %4795 = vst [vmem:[%s202 + $0x78] sm:$0xff] %v4763
      %4796 = vst [vmem:[%s202 + $0x80] sm:$0xff] %v4764
      %4797 = vst [vmem:[%s202 + $0x88] sm:$0xff] %v4765
      %4798 = vst [vmem:[%s202 + $0x90] sm:$0xff] %v4766
      %4799 = vst [vmem:[%s202 + $0x98] sm:$0xff] %v4767
      %4800 = vst [vmem:[%s202 + $0xa0] sm:$0xff] %v4768
      %4801 = vst [vmem:[%s202 + $0xa8] sm:$0xff] %v4769
      %4802 = vst [vmem:[%s202 + $0xb0] sm:$0xff] %v4770
      %4803 = vst [vmem:[%s202 + $0xb8] sm:$0xff] %v4771
      %4804 = vst [vmem:[%s202 + $0xc0] sm:$0xff] %v4772
      %4805 = vst [vmem:[%s202 + $0xc8] sm:$0xff] %v4773
      %4806 = vst [vmem:[%s202 + $0xd0] sm:$0xff] %v4774
      %4807 = vst [vmem:[%s202 + $0xd8] sm:$0xff] %v4775
      %4808 = vst [vmem:[%s202 + $0xe0] sm:$0xff] %v4776
      %4809 = vst [vmem:[%s202 + $0xe8] sm:$0xff] %v4777
      %4810 = vst [vmem:[%s202 + $0xf0] sm:$0xff] %v4778
      %4811 = vst [vmem:[%s202 + $0xf8] sm:$0xff] %v4779
      %v4812 = vadd.f32 %v4748, %v4749
      %v4813 = vadd.f32 %v4812, %v4750
      %v4814 = vadd.f32 %v4813, %v4751
      %v4815 = vadd.f32 %v4814, %v4752
      %v4816 = vadd.f32 %v4815, %v4753
      %v4817 = vadd.f32 %v4816, %v4754
      %v4818 = vadd.f32 %v4817, %v4755
      %v4819 = vadd.f32 %v4818, %v4756
      %v4820 = vadd.f32 %v4819, %v4757
      %v4821 = vadd.f32 %v4820, %v4758
      %v4822 = vadd.f32 %v4821, %v4759
      %v4823 = vadd.f32 %v4822, %v4760
      %v4824 = vadd.f32 %v4823, %v4761
      %v4825 = vadd.f32 %v4824, %v4762
      %v4826 = vadd.f32 %v4825, %v4763
      %v4827 = vadd.f32 %v4826, %v4764
      %v4828 = vadd.f32 %v4827, %v4765
      %v4829 = vadd.f32 %v4828, %v4766
      %v4830 = vadd.f32 %v4829, %v4767
      %v4831 = vadd.f32 %v4830, %v4768
      %v4832 = vadd.f32 %v4831, %v4769
      %v4833 = vadd.f32 %v4832, %v4770
      %v4834 = vadd.f32 %v4833, %v4771
      %v4835 = vadd.f32 %v4834, %v4772
      %v4836 = vadd.f32 %v4835, %v4773
      %v4837 = vadd.f32 %v4836, %v4774
      %v4838 = vadd.f32 %v4837, %v4775
      %v4839 = vadd.f32 %v4838, %v4776
      %v4840 = vadd.f32 %v4839, %v4777
      %v4841 = vadd.f32 %v4840, %v4778
      %v4842 = vadd.f32 %v4841, %v4779
      %v4843 = vrot.slane %v4842, 4
      %v4844 = vadd.f32 %v4842, %v4843
      %v4845 = vrot.slane %v4844, 2
      %v4846 = vadd.f32 %v4844, %v4845
      %v4847 = vrot.slane %v4846, 1
      %v4848 = vadd.f32 %v4846, %v4847
      %v4849 = vmul.f32 %v4748, %v4748
      %v4850 = vmul.f32 %v4749, %v4749
      %v4851 = vmul.f32 %v4750, %v4750
      %v4852 = vmul.f32 %v4751, %v4751
      %v4853 = vmul.f32 %v4752, %v4752
      %v4854 = vmul.f32 %v4753, %v4753
      %v4855 = vmul.f32 %v4754, %v4754
      %v4856 = vmul.f32 %v4755, %v4755
      %v4857 = vmul.f32 %v4756, %v4756
      %v4858 = vmul.f32 %v4757, %v4757
      %v4859 = vmul.f32 %v4758, %v4758
      %v4860 = vmul.f32 %v4759, %v4759
      %v4861 = vmul.f32 %v4760, %v4760
      %v4862 = vmul.f32 %v4761, %v4761
      %v4863 = vmul.f32 %v4762, %v4762
      %v4864 = vmul.f32 %v4763, %v4763
      %v4865 = vmul.f32 %v4764, %v4764
      %v4866 = vmul.f32 %v4765, %v4765
      %v4867 = vmul.f32 %v4766, %v4766
      %v4868 = vmul.f32 %v4767, %v4767
      %v4869 = vmul.f32 %v4768, %v4768
      %v4870 = vmul.f32 %v4769, %v4769
      %v4871 = vmul.f32 %v4770, %v4770
      %v4872 = vmul.f32 %v4771, %v4771
      %v4873 = vmul.f32 %v4772, %v4772
      %v4874 = vmul.f32 %v4773, %v4773
      %v4875 = vmul.f32 %v4774, %v4774
      %v4876 = vmul.f32 %v4775, %v4775
      %v4877 = vmul.f32 %v4776, %v4776
      %v4878 = vmul.f32 %v4777, %v4777
      %v4879 = vmul.f32 %v4778, %v4778
      %v4880 = vmul.f32 %v4779, %v4779
      %v4881 = vadd.f32 %v4849, %v4850
      %v4882 = vadd.f32 %v4881, %v4851
      %v4883 = vadd.f32 %v4882, %v4852
      %v4884 = vadd.f32 %v4883, %v4853
      %v4885 = vadd.f32 %v4884, %v4854
      %v4886 = vadd.f32 %v4885, %v4855
      %v4887 = vadd.f32 %v4886, %v4856
      %v4888 = vadd.f32 %v4887, %v4857
      %v4889 = vadd.f32 %v4888, %v4858
      %v4890 = vadd.f32 %v4889, %v4859
      %v4891 = vadd.f32 %v4890, %v4860
      %v4892 = vadd.f32 %v4891, %v4861
      %v4893 = vadd.f32 %v4892, %v4862
      %v4894 = vadd.f32 %v4893, %v4863
      %v4895 = vadd.f32 %v4894, %v4864
      %v4896 = vadd.f32 %v4895, %v4865
      %v4897 = vadd.f32 %v4896, %v4866
      %v4898 = vadd.f32 %v4897, %v4867
      %v4899 = vadd.f32 %v4898, %v4868
      %v4900 = vadd.f32 %v4899, %v4869
      %v4901 = vadd.f32 %v4900, %v4870
      %v4902 = vadd.f32 %v4901, %v4871
      %v4903 = vadd.f32 %v4902, %v4872
      %v4904 = vadd.f32 %v4903, %v4873
      %v4905 = vadd.f32 %v4904, %v4874
      %v4906 = vadd.f32 %v4905, %v4875
      %v4907 = vadd.f32 %v4906, %v4876
      %v4908 = vadd.f32 %v4907, %v4877
      %v4909 = vadd.f32 %v4908, %v4878
      %v4910 = vadd.f32 %v4909, %v4879
      %v4911 = vadd.f32 %v4910, %v4880
      %v4912 = vrot.slane %v4911, 4
      %v4913 = vadd.f32 %v4911, %v4912
      %v4914 = vrot.slane %v4913, 2
      %v4915 = vadd.f32 %v4913, %v4914
      %v4916 = vrot.slane %v4915, 1
      %v4917 = vadd.f32 %v4915, %v4916
      %vm4918 = vcmask 1040384
      %v4919 = vsel %vm4918, %v4848, %v4917
      %4920 = vst [vmem:[%s208] sm:$0x3] %v4919
      %s4921 = smul.u32 32, %s20
      %p4922 = scmp.lt.s32.totalorder %s19, 1
      %s4923 = scalar_select %p4922, %s19, 1
      %p4924 = scmp.lt.s32.totalorder %s4921, 31
      %s4925 = scalar_select %p4924, %s4921, 31
      %s4926 = smul.addr %s4923, 32
      %s4927 = sadd.s32 %s4925, %s4926
      %s4928 = smul.addr %s4927, 8
      %s4929 = scalar_lea.vmem %s2, %s4928
      %s4930 = sadd.s32 %s19, %s20
      %p4931 = scmp.lt.s32.totalorder %s4930, 1
      %s4932 = scalar_select %p4931, %s4930, 1
      %s4933 = smul.addr %s4932, 2
      %s4934 = scalar_lea.vmem %s3, %s4933
      // Predicated region
      $region29: #{conv_block.2} parent=27 // pred_check
        %p4935 = pneg %p94
      $region30: #{conv_block.2} parent=27 // pred_check_branch
        %4937 = sbr.rel (%p4935) target = $region32
      $region31: #{conv_block.2} parent=27 // pred_region
        %s4938 = smul.u32 32, %s20
      $region32: #{conv_block.2} parent=27 // pred_fallthru
        _
      // Predicated region
      $region33: #{conv_block.2} parent=27 // pred_check
        %p4939 = pneg %p122
      $region34: #{conv_block.2} parent=27 // pred_check_branch
        %4941 = sbr.rel (%p4939) target = $region36
      $region35: #{conv_block.2} parent=27 // pred_region
        %s4942 = sadd.s32 %s19, %s20
      $region36: #{conv_block.2} parent=27 // pred_fallthru
        _
    $region28: #{conv_block.2} parent=5 // pred_fallthru
      _
    %p4943 = scmp.le.s32.totalorder 2, %s10
    // Predicated region
    $region37: #{conv_block.2} parent=5 // pred_check
      %p4944 = pneg %p4943
    $region38: #{conv_block.2} parent=5 // pred_check_branch
      %4946 = sbr.rel (%p4944) target = $region40
    $region39: #{conv_block.2} parent=5 // pred_region
      %s4947 = ssub.s32 %s10, 2
      // Predicated region
      $region41: #{conv_block.2} parent=39 // pred_check
        %p4948 = pneg %p100
      $region42: #{conv_block.2} parent=39 // pred_check_branch
        %4950 = sbr.rel (%p4948) target = $region44
      $region43: #{conv_block.2} parent=39 // pred_region
        %s4951 = smul.u32 32, %s22
        %p4952 = scmp.lt.s32.totalorder %s21, 1
        %s4953 = scalar_select %p4952, %s21, 1
        %p4954 = scmp.lt.s32.totalorder %s4951, 31
        %s4955 = scalar_select %p4954, %s4951, 31
        %s4956 = smul.addr %s4953, 32
        %s4957 = sadd.s32 %s4955, %s4956
        %s4958 = smul.addr %s4957, 8
        %s4959 = scalar_lea.vmem %s2, %s4958
      $region44: #{conv_block.2} parent=39 // pred_fallthru
        _
      // Predicated region
      $region45: #{conv_block.2} parent=39 // pred_check
        %p4960 = pneg %p128
      $region46: #{conv_block.2} parent=39 // pred_check_branch
        %4962 = sbr.rel (%p4960) target = $region48
      $region47: #{conv_block.2} parent=39 // pred_region
        %s4963 = sadd.s32 %s21, %s22
        %p4964 = scmp.lt.s32.totalorder %s4963, 1
        %s4965 = scalar_select %p4964, %s4963, 1
        %s4966 = smul.addr %s4965, 2
        %s4967 = scalar_lea.vmem %s3, %s4966
      $region48: #{conv_block.2} parent=39 // pred_fallthru
        _
    $region40: #{conv_block.2} parent=5 // pred_fallthru
      _
  $region6: #{conv_block.2} parent=0 // loop_footer
    %s14 = sadd.s32 1, %s10
  $region7: #{conv_block.2} parent=0 // loop_footer_branch
    %9 = sbr.rel target = $region3
  $region8: #{conv_block.2} parent=0 // loop_exit
    _

// kernel: conv_block.3
$region0: #{conv_block.3}
  #allocation0 [shape = 'u32[]', space=smem, size = 0x4, offset = 0x4, fixed_abs, tag = 'smem constant byte address 0x4 - core index']
  #allocation1 [shape = 'u32[144,128]{1,0:T(1,128)}', space=vmem, size = 0x12000, scoped, tag = 'internal scratch']
  %s0 = inlined_call_operand.vmem [shape: bf16[2,18,18,8], index: 0, kind: input, shape index: {}]
  %s1 = inlined_call_operand.vmem [shape: bf16[9,8,128], index: 1, kind: input, shape index: {}]
  %s2 = inlined_call_operand.vmem [shape: f32[2,256,128], index: 2, kind: output, shape index: {0}]
  %s3 = inlined_call_operand.vmem [shape: f32[2,2,128], index: 3, kind: output, shape index: {1}]
  %4 = xla_tuple %s2, %s3
  %s5 = sld [smem:[#allocation0]]
  $region49: #{conv_block.3} parent=0
    _
  %s7 = ssub.s32 1, %s5
  %s8 = scalar_select 0, %s7, %s5
  loop: start=0, step=1, limit=4
  $region2: #{conv_block.3} parent=0 // loop_pre_header
    _
  $region3: #{conv_block.3} parent=0 // loop_header
    %s10 = sphi 0, %s14
    %p11 = scmp.ge.s32.totalorder %s10, 4
    %s17 = sphi 0, %s29
    %s18 = sphi 0, %s25
    %s19 = sphi 0, %s17
    %s20 = sphi 0, %s18
    %s21 = sphi 0, %s19
    %s22 = sphi 0, %s20
    %s32 = sphi 0, %s34
    %s35 = sphi 0, %s32
    %s36 = sphi 0, %s35
    %s52 = sphi 0, %s36
    %s56 = sphi 0, %s56
    %s58 = sphi 0, %s56
    %s59 = sphi 0, %s58
    %s73 = sphi 0, %s59
    %s81 = sphi 0, %s83
    %s84 = sphi 0, %s81
    %s85 = sphi 0, %s84
    %s101 = sphi 0, %s85
    %s109 = sphi 0, %s111
    %s112 = sphi 0, %s109
    %s113 = sphi 0, %s112
    %s129 = sphi 0, %s113
  $region4: #{conv_block.3} parent=0 // loop_header_branch
    %13 = sbr.rel (%p11) target = $region8
  $region5: #{conv_block.3} parent=0 // loop_body
    %s15 = ssub.s32 %s10, 1
    %s16 = ssub.s32 %s10, 2
    %s23 = sadd.s32 1, %s18
    %p24 = scmp.ge.s32.totalorder %s23, 1
    %s25 = scalar_select %p24, 0, %s23
    %s26 = sadd.s32 1, %s17
    %s27 = scalar_select %p24, %s26, %s17
    %p28 = scmp.ge.s32.totalorder %s27, 2
    %s29 = scalar_select %p28, 0, %s27
    %s30 = ssub.s32 %s17, %s29
    %p31 = scmp.eq.s32.totalorder %s30, 0
    %s33 = sadd.s32 %s32, 1
    %s34 = scalar_select %p31, %s32, %s33
    %p37 = pneg %p31
    %p38 = scmp.eq.s32.totalorder %s10, 1
    %p39 = por %p37, %p38
    %p40 = scmp.ne.s32.totalorder %s32, %s35
    %p41 = scmp.eq.s32.totalorder %s10, 0
    %p42 = por %p40, %p41
    %p43 = scmp.ne.s32.totalorder %s32, %s35
    %p44 = scmp.eq.s32.totalorder %s15, 1
    %p45 = por %p43, %p44
    %p46 = scmp.ne.s32.totalorder %s35, %s36
    %p47 = scmp.eq.s32.totalorder %s15, 0
    %p48 = por %p46, %p47
    %p49 = scmp.ne.s32.totalorder %s35, %s36
    %p50 = scmp.eq.s32.totalorder %s16, 1
    %p51 = por %p49, %p50
    %p53 = scmp.ne.s32.totalorder %s36, %s52
    %p54 = scmp.eq.s32.totalorder %s16, 0
    %p55 = por %p53, %p54
    %s57 = sadd.s32 %s56, 1
    %p60 = scmp.eq.s32.totalorder %s10, 1
    %p61 = scmp.ne.s32.totalorder %s56, %s58
    %p62 = scmp.eq.s32.totalorder %s10, 0
    %p63 = por %p61, %p62
    %p64 = scmp.ne.s32.totalorder %s56, %s58
    %p65 = scmp.eq.s32.totalorder %s15, 1
    %p66 = por %p64, %p65
    %p67 = scmp.ne.s32.totalorder %s58, %s59
    %p68 = scmp.eq.s32.totalorder %s15, 0
    %p69 = por %p67, %p68
    %p70 = scmp.ne.s32.totalorder %s58, %s59
    %p71 = scmp.eq.s32.totalorder %s16, 1
    %p72 = por %p70, %p71
    %p74 = scmp.ne.s32.totalorder %s59, %s73
    %p75 = scmp.eq.s32.totalorder %s16, 0
    %p76 = por %p74, %p75
    %s77 = ssub.s32 %s17, %s29
    %s78 = ssub.s32 %s18, %s25
    %s79 = sor.u32 %s77, %s78
    %p80 = scmp.eq.s32.totalorder %s79, 0
    %s82 = sadd.s32 %s81, 1
    %s83 = scalar_select %p80, %s81, %s82
    %p86 = pneg %p80
    %p87 = scmp.eq.s32.totalorder %s10, 1
    %p88 = por %p86, %p87
    %p89 = scmp.ne.s32.totalorder %s81, %s84
    %p90 = scmp.eq.s32.totalorder %s10, 0
    %p91 = por %p89, %p90
    %p92 = scmp.ne.s32.totalorder %s81, %s84
    %p93 = scmp.eq.s32.totalorder %s15, 1
    %p94 = por %p92, %p93
    %p95 = scmp.ne.s32.totalorder %s84, %s85
    %p96 = scmp.eq.s32.totalorder %s15, 0
    %p97 = por %p95, %p96
    %p98 = scmp.ne.s32.totalorder %s84, %s85
    %p99 = scmp.eq.s32.totalorder %s16, 1
    %p100 = por %p98, %p99
    %p102 = scmp.ne.s32.totalorder %s85, %s101
    %p103 = scmp.eq.s32.totalorder %s16, 0
    %p104 = por %p102, %p103
    %s105 = sadd.s32 %s17, %s18
    %s106 = sadd.s32 %s29, %s25
    %s107 = ssub.s32 %s105, %s106
    %p108 = scmp.eq.s32.totalorder %s107, 0
    %s110 = sadd.s32 %s109, 1
    %s111 = scalar_select %p108, %s109, %s110
    %p114 = pneg %p108
    %p115 = scmp.eq.s32.totalorder %s10, 1
    %p116 = por %p114, %p115
    %p117 = scmp.ne.s32.totalorder %s109, %s112
    %p118 = scmp.eq.s32.totalorder %s10, 0
    %p119 = por %p117, %p118
    %p120 = scmp.ne.s32.totalorder %s109, %s112
    %p121 = scmp.eq.s32.totalorder %s15, 1
    %p122 = por %p120, %p121
    %p123 = scmp.ne.s32.totalorder %s112, %s113
    %p124 = scmp.eq.s32.totalorder %s15, 0
    %p125 = por %p123, %p124
    %p126 = scmp.ne.s32.totalorder %s112, %s113
    %p127 = scmp.eq.s32.totalorder %s16, 1
    %p128 = por %p126, %p127
    %p130 = scmp.ne.s32.totalorder %s113, %s129
    %p131 = scmp.eq.s32.totalorder %s16, 0
    %p132 = por %p130, %p131
    %p133 = scmp.le.s32.totalorder 1, %s10
    %p134 = scmp.lt.s32.totalorder %s10, 3
    %p135 = pnand %p133, %p134
    %p136 = pneg %p135
    // Predicated region
    $region9: #{conv_block.3} parent=5 // pred_check
      _
    $region10: #{conv_block.3} parent=5 // pred_check_branch
      %138 = sbr.rel (%p135) target = $region12
    $region11: #{conv_block.3} parent=5 // pred_region
      %s139 = ssub.s32 %s10, 1
      // Predicated region
      $region13: #{conv_block.3} parent=11 // pred_check
        %p140 = pneg %p69
      $region14: #{conv_block.3} parent=11 // pred_check_branch
        %142 = sbr.rel (%p140) target = $region16
      $region15: #{conv_block.3} parent=11 // pred_region
        _
      $region16: #{conv_block.3} parent=11 // pred_fallthru
        _
    $region12: #{conv_block.3} parent=5 // pred_fallthru
      _
    %p143 = scmp.lt.s32.totalorder %s10, 2
    // Predicated region
    $region17: #{conv_block.3} parent=5 // pred_check
      %p144 = pneg %p143
    $region18: #{conv_block.3} parent=5 // pred_check_branch
      %146 = sbr.rel (%p144) target = $region20
    $region19: #{conv_block.3} parent=5 // pred_region
      // Predicated region
      $region21: #{conv_block.3} parent=19 // pred_check
        %p147 = pneg %p42
      $region22: #{conv_block.3} parent=19 // pred_check_branch
        %149 = sbr.rel (%p147) target = $region24
      $region23: #{conv_block.3} parent=19 // pred_region
        %p150 = scmp.lt.s32.totalorder %s17, 1
        %s151 = scalar_select %p150, %s17, 1
        %s152 = smul.addr %s151, 54
        %s153 = smul.addr %s152, 4
        %s154 = scalar_lea.vmem %s0, %s153
      $region24: #{conv_block.3} parent=19 // pred_fallthru
        _
    $region20: #{conv_block.3} parent=5 // pred_fallthru
      _
    %p155 = scmp.le.s32.totalorder 1, %s10
    %p156 = scmp.lt.s32.totalorder %s10, 3
    %p157 = pnand %p155, %p156
    %p158 = pneg %p157
    // Predicated region
    $region25: #{conv_block.3} parent=5 // pred_check
      _
    $region26: #{conv_block.3} parent=5 // pred_check_branch
      %160 = sbr.rel (%p157) target = $region28
    $region27: #{conv_block.3} parent=5 // pred_region
      %s161 = ssub.s32 %s10, 1
      %p162 = scmp.lt.s32.totalorder %s19, 1
      %s163 = scalar_select %p162, %s19, 1
      %s164 = smul.addr %s163, 54
      %s165 = smul.addr %s164, 4
      %s166 = scalar_lea.vmem %s0, %s165
      %p167 = pneg %p48
      %p168 = pneg %p45
      %p169 = pneg %p69
      %p170 = pneg %p66
      %p171 = pneg %p97
      %p172 = pneg %p94
      %s173 = smul.u32 32, %s20
      %p174 = scmp.lt.s32.totalorder %s19, 1
      %s175 = scalar_select %p174, %s19, 1
      %p176 = scmp.lt.s32.totalorder %s173, 31
      %s177 = scalar_select %p176, %s173, 31
      %s178 = smul.addr %s175, 32
      %s179 = sadd.s32 %s177, %s178
      %s180 = smul.addr %s179, 8
      %s181 = scalar_lea.vmem %s2, %s180
      %p182 = pneg %p125
      %p183 = pneg %p122
      %s184 = sadd.s32 %s19, %s20
      %p185 = scmp.lt.s32.totalorder %s184, 1
      %s186 = scalar_select %p185, %s184, 1
      %s187 = smul.addr %s186, 2
      %s188 = scalar_lea.vmem %s3, %s187
      %p189 = scmp.lt.s32.totalorder %s19, 1
      %s190 = scalar_select %p189, %s19, 1
      %s191 = smul.addr %s190, 54
      %s192 = smul.addr %s191, 4
      %s193 = scalar_lea.vmem %s0, %s192
      %s194 = smul.u32 32, %s20
      %p195 = scmp.lt.s32.totalorder %s19, 1
      %s196 = scalar_select %p195, %s19, 1
      %p197 = scmp.lt.s32.totalorder %s194, 31
      %s198 = scalar_select %p197, %s194, 31
      %s199 = smul.addr %s196, 32
      %s200 = sadd.s32 %s198, %s199
      %s201 = smul.addr %s200, 8
      %s202 = scalar_lea.vmem %s2, %s201
      %s203 = smul.u32 32, %s20
      %s204 = sadd.s32 %s19, %s20
      %p205 = scmp.lt.s32.totalorder %s204, 1
      %s206 = scalar_select %p205, %s204, 1
      %s207 = smul.addr %s206, 2
      %s208 = scalar_lea.vmem %s3, %s207
      %s209 = sadd.s32 %s19, %s20
      %s211 = smul.u32 %s20, 16
      %s212 = smul.u32 %s211, 3
      %s213 = smul.addr %s212, 4
      %s214 = scalar_lea.vmem %s193, %s213
      %v215 = vld [vmem:[%s214] sm:$0xf]
      %v216 = vld [vmem:[%s214 + $0x4] sm:$0xf]
      %v217 = vld [vmem:[%s214 + $0xc] sm:$0xf]
      %v218 = vld [vmem:[%s214 + $0x10] sm:$0xf]
      %v219 = vld [vmem:[%s214 + $0x18] sm:$0xf]
      %v220 = vld [vmem:[%s214 + $0x1c] sm:$0xf]
      %v221 = vld [vmem:[%s214 + $0x24] sm:$0xf]
      %v222 = vld [vmem:[%s214 + $0x28] sm:$0xf]
      %v223 = vld [vmem:[%s214 + $0x30] sm:$0xf]
      %v224 = vld [vmem:[%s214 + $0x34] sm:$0xf]
      %v225 = vld [vmem:[%s214 + $0x3c] sm:$0xf]
      %v226 = vld [vmem:[%s214 + $0x40] sm:$0xf]
      %v227 = vld [vmem:[%s214 + $0x48] sm:$0xf]
      %v228 = vld [vmem:[%s214 + $0x4c] sm:$0xf]
      %v229 = vld [vmem:[%s214 + $0x54] sm:$0xf]
      %v230 = vld [vmem:[%s214 + $0x58] sm:$0xf]
      %v231 = vld [vmem:[%s214 + $0x60] sm:$0xf]
      %v232 = vld [vmem:[%s214 + $0x64] sm:$0xf]
      %v233 = vld [vmem:[%s214 + $0x6c] sm:$0xf]
      %v234 = vld [vmem:[%s214 + $0x70] sm:$0xf]
      %v235 = vld [vmem:[%s214 + $0x78] sm:$0xf]
      %v236 = vld [vmem:[%s214 + $0x7c] sm:$0xf]
      %v237 = vld [vmem:[%s214 + $0x84] sm:$0xf]
      %v238 = vld [vmem:[%s214 + $0x88] sm:$0xf]
      %v239 = vld [vmem:[%s214 + $0x90] sm:$0xf]
      %v240 = vld [vmem:[%s214 + $0x94] sm:$0xf]
      %v241 = vld [vmem:[%s214 + $0x9c] sm:$0xf]
      %v242 = vld [vmem:[%s214 + $0xa0] sm:$0xf]
      %v243 = vld [vmem:[%s214 + $0xa8] sm:$0xf]
      %v244 = vld [vmem:[%s214 + $0xac] sm:$0xf]
      %v245 = vld [vmem:[%s214 + $0xb4] sm:$0xf]
      %v246 = vld [vmem:[%s214 + $0xb8] sm:$0xf]
      %v247 = vld [vmem:[%s1] sm:$0xf]
      %v248 = vld [vmem:[%s214 + $0x8] sm:$0x1]
      %v249 = vld [vmem:[%s214 + $0x14] sm:$0x1]
      %v250 = vld [vmem:[%s214 + $0x20] sm:$0x1]
      %v251 = vld [vmem:[%s214 + $0x2c] sm:$0x1]
      %v252 = vld [vmem:[%s214 + $0x38] sm:$0x1]
      %v253 = vld [vmem:[%s214 + $0x44] sm:$0x1]
      %v254 = vld [vmem:[%s214 + $0x50] sm:$0x1]
      %v255 = vld [vmem:[%s214 + $0x5c] sm:$0x1]
      %v256 = vld [vmem:[%s214 + $0x68] sm:$0x1]
      %v257 = vld [vmem:[%s214 + $0x74] sm:$0x1]
      %v258 = vld [vmem:[%s214 + $0x80] sm:$0x1]
      %v259 = vld [vmem:[%s214 + $0x8c] sm:$0x1]
      %v260 = vld [vmem:[%s214 + $0x98] sm:$0x1]
      %v261 = vld [vmem:[%s214 + $0xa4] sm:$0x1]
      %v262 = vld [vmem:[%s214 + $0xb0] sm:$0x1]
      %v263 = vld [vmem:[%s214 + $0xbc] sm:$0x1]
      %vm264 = vsmask.f32 3328
      %vm265 = vsmask.f32 7440
      %vm266 = vmor %vm264, %vm265
      %v268 = vshrl.u32 %v215, 16
      %v270 = vrot.slane %v268, 4
      %v271 = vshll.u32 %v215, 16
      %v273 = vrot.slane %v271, 5
      %v274 = vor.u32 %v270, %v273
      %v275 = vrot.slane %v274, 4
      %v277 = vshll.u32 %v216, 16
      %v279 = vrot.slane %v277, 5
      %v280 = vsel %vm266, %v275, %v279
      %v281 = vshrl.u32 %v216, 16
      %v283 = vrot.slane %v281, 4
      %v284 = vor.u32 %v283, %v279
      %v285 = vrot.slane %v284, 4
      %v287 = vshll.u32 %v248, 16
      %v289 = vrot.slane %v287, 5
      %v290 = vsel %vm266, %v285, %v289
      %v292 = vshrl.u32 %v217, 16
      %v294 = vrot.slane %v292, 4
      %v295 = vshll.u32 %v217, 16
      %v297 = vrot.slane %v295, 5
      %v298 = vor.u32 %v294, %v297
      %v299 = vrot.slane %v298, 4
      %v301 = vshll.u32 %v218, 16
      %v303 = vrot.slane %v301, 5
      %v304 = vsel %vm266, %v299, %v303
      %v305 = vshrl.u32 %v218, 16
      %v307 = vrot.slane %v305, 4
      %v308 = vor.u32 %v307, %v303
      %v309 = vrot.slane %v308, 4
      %v311 = vshll.u32 %v249, 16
      %v313 = vrot.slane %v311, 5
      %v314 = vsel %vm266, %v309, %v313
      %v316 = vshrl.u32 %v219, 16
      %v318 = vrot.slane %v316, 4
      %v319 = vshll.u32 %v219, 16
      %v321 = vrot.slane %v319, 5
      %v322 = vor.u32 %v318, %v321
      %v323 = vrot.slane %v322, 4
      %v325 = vshll.u32 %v220, 16
      %v327 = vrot.slane %v325, 5
      %v328 = vsel %vm266, %v323, %v327
      %v329 = vshrl.u32 %v220, 16
      %v331 = vrot.slane %v329, 4
      %v332 = vor.u32 %v331, %v327
      %v333 = vrot.slane %v332, 4
      %v335 = vshll.u32 %v250, 16
      %v337 = vrot.slane %v335, 5
      %v338 = vsel %vm266, %v333, %v337
      %v340 = vshrl.u32 %v221, 16
      %v342 = vrot.slane %v340, 4
      %v343 = vshll.u32 %v221, 16
      %v345 = vrot.slane %v343, 5
      %v346 = vor.u32 %v342, %v345
      %v347 = vrot.slane %v346, 4
      %v349 = vshll.u32 %v222, 16
      %v351 = vrot.slane %v349, 5
      %v352 = vsel %vm266, %v347, %v351
      %v353 = vshrl.u32 %v222, 16
      %v355 = vrot.slane %v353, 4
      %v356 = vor.u32 %v355, %v351
      %v357 = vrot.slane %v356, 4
      %v359 = vshll.u32 %v251, 16
      %v361 = vrot.slane %v359, 5
      %v362 = vsel %vm266, %v357, %v361
      %v364 = vshrl.u32 %v223, 16
      %v366 = vrot.slane %v364, 4
      %v367 = vshll.u32 %v223, 16
      %v369 = vrot.slane %v367, 5
      %v370 = vor.u32 %v366, %v369
      %v371 = vrot.slane %v370, 4
      %v373 = vshll.u32 %v224, 16
      %v375 = vrot.slane %v373, 5
      %v376 = vsel %vm266, %v371, %v375
      %v377 = vshrl.u32 %v224, 16
      %v379 = vrot.slane %v377, 4
      %v380 = vor.u32 %v379, %v375
      %v381 = vrot.slane %v380, 4
      %v383 = vshll.u32 %v252, 16
      %v385 = vrot.slane %v383, 5
      %v386 = vsel %vm266, %v381, %v385
      %v388 = vshrl.u32 %v225, 16
      %v390 = vrot.slane %v388, 4
      %v391 = vshll.u32 %v225, 16
      %v393 = vrot.slane %v391, 5
      %v394 = vor.u32 %v390, %v393
      %v395 = vrot.slane %v394, 4
      %v397 = vshll.u32 %v226, 16
      %v399 = vrot.slane %v397, 5
      %v400 = vsel %vm266, %v395, %v399
      %v401 = vshrl.u32 %v226, 16
      %v403 = vrot.slane %v401, 4
      %v404 = vor.u32 %v403, %v399
      %v405 = vrot.slane %v404, 4
      %v407 = vshll.u32 %v253, 16
      %v409 = vrot.slane %v407, 5
      %v410 = vsel %vm266, %v405, %v409
      %v412 = vshrl.u32 %v227, 16
      %v414 = vrot.slane %v412, 4
      %v415 = vshll.u32 %v227, 16
      %v417 = vrot.slane %v415, 5
      %v418 = vor.u32 %v414, %v417
      %v419 = vrot.slane %v418, 4
      %v421 = vshll.u32 %v228, 16
      %v423 = vrot.slane %v421, 5
      %v424 = vsel %vm266, %v419, %v423
      %v425 = vshrl.u32 %v228, 16
      %v427 = vrot.slane %v425, 4
      %v428 = vor.u32 %v427, %v423
      %v429 = vrot.slane %v428, 4
      %v431 = vshll.u32 %v254, 16
      %v433 = vrot.slane %v431, 5
      %v434 = vsel %vm266, %v429, %v433
      %v436 = vshrl.u32 %v229, 16
      %v438 = vrot.slane %v436, 4
      %v439 = vshll.u32 %v229, 16
      %v441 = vrot.slane %v439, 5
      %v442 = vor.u32 %v438, %v441
      %v443 = vrot.slane %v442, 4
      %v445 = vshll.u32 %v230, 16
      %v447 = vrot.slane %v445, 5
      %v448 = vsel %vm266, %v443, %v447
      %v449 = vshrl.u32 %v230, 16
      %v451 = vrot.slane %v449, 4
      %v452 = vor.u32 %v451, %v447
      %v453 = vrot.slane %v452, 4
      %v455 = vshll.u32 %v255, 16
      %v457 = vrot.slane %v455, 5
      %v458 = vsel %vm266, %v453, %v457
      %v460 = vshrl.u32 %v231, 16
      %v462 = vrot.slane %v460, 4
      %v463 = vshll.u32 %v231, 16
      %v465 = vrot.slane %v463, 5
      %v466 = vor.u32 %v462, %v465
      %v467 = vrot.slane %v466, 4
      %v469 = vshll.u32 %v232, 16
      %v471 = vrot.slane %v469, 5
      %v472 = vsel %vm266, %v467, %v471
      %v473 = vshrl.u32 %v232, 16
      %v475 = vrot.slane %v473, 4
      %v476 = vor.u32 %v475, %v471
      %v477 = vrot.slane %v476, 4
      %v479 = vshll.u32 %v256, 16
      %v481 = vrot.slane %v479, 5
      %v482 = vsel %vm266, %v477, %v481
      %v484 = vshrl.u32 %v233, 16
      %v486 = vrot.slane %v484, 4
      %v487 = vshll.u32 %v233, 16
      %v489 = vrot.slane %v487, 5
      %v490 = vor.u32 %v486, %v489
      %v491 = vrot.slane %v490, 4
      %v493 = vshll.u32 %v234, 16
      %v495 = vrot.slane %v493, 5
      %v496 = vsel %vm266, %v491, %v495
      %v497 = vshrl.u32 %v234, 16
      %v499 = vrot.slane %v497, 4
      %v500 = vor.u32 %v499, %v495
      %v501 = vrot.slane %v500, 4
      %v503 = vshll.u32 %v257, 16
      %v505 = vrot.slane %v503, 5
      %v506 = vsel %vm266, %v501, %v505
      %v508 = vshrl.u32 %v235, 16
      %v510 = vrot.slane %v508, 4
      %v511 = vshll.u32 %v235, 16
      %v513 = vrot.slane %v511, 5
      %v514 = vor.u32 %v510, %v513
      %v515 = vrot.slane %v514, 4
      %v517 = vshll.u32 %v236, 16
      %v519 = vrot.slane %v517, 5
      %v520 = vsel %vm266, %v515, %v519
      %v521 = vshrl.u32 %v236, 16
      %v523 = vrot.slane %v521, 4
      %v524 = vor.u32 %v523, %v519
      %v525 = vrot.slane %v524, 4
      %v527 = vshll.u32 %v258, 16
      %v529 = vrot.slane %v527, 5
      %v530 = vsel %vm266, %v525, %v529
      %v532 = vshrl.u32 %v237, 16
      %v534 = vrot.slane %v532, 4
      %v535 = vshll.u32 %v237, 16
      %v537 = vrot.slane %v535, 5
      %v538 = vor.u32 %v534, %v537
      %v539 = vrot.slane %v538, 4
      %v541 = vshll.u32 %v238, 16
      %v543 = vrot.slane %v541, 5
      %v544 = vsel %vm266, %v539, %v543
      %v545 = vshrl.u32 %v238, 16
      %v547 = vrot.slane %v545, 4
      %v548 = vor.u32 %v547, %v543
      %v549 = vrot.slane %v548, 4
      %v551 = vshll.u32 %v259, 16
      %v553 = vrot.slane %v551, 5
      %v554 = vsel %vm266, %v549, %v553
      %v556 = vshrl.u32 %v239, 16
      %v558 = vrot.slane %v556, 4
      %v559 = vshll.u32 %v239, 16
      %v561 = vrot.slane %v559, 5
      %v562 = vor.u32 %v558, %v561
      %v563 = vrot.slane %v562, 4
      %v565 = vshll.u32 %v240, 16
      %v567 = vrot.slane %v565, 5
      %v568 = vsel %vm266, %v563, %v567
      %v569 = vshrl.u32 %v240, 16
      %v571 = vrot.slane %v569, 4
      %v572 = vor.u32 %v571, %v567
      %v573 = vrot.slane %v572, 4
      %v575 = vshll.u32 %v260, 16
      %v577 = vrot.slane %v575, 5
      %v578 = vsel %vm266, %v573, %v577
      %v580 = vshrl.u32 %v241, 16
      %v582 = vrot.slane %v580, 4
      %v583 = vshll.u32 %v241, 16
      %v585 = vrot.slane %v583, 5
      %v586 = vor.u32 %v582, %v585
      %v587 = vrot.slane %v586, 4
      %v589 = vshll.u32 %v242, 16
      %v591 = vrot.slane %v589, 5
      %v592 = vsel %vm266, %v587, %v591
      %v593 = vshrl.u32 %v242, 16
      %v595 = vrot.slane %v593, 4
      %v596 = vor.u32 %v595, %v591
      %v597 = vrot.slane %v596, 4
      %v599 = vshll.u32 %v261, 16
      %v601 = vrot.slane %v599, 5
      %v602 = vsel %vm266, %v597, %v601
      %v604 = vshrl.u32 %v243, 16
      %v606 = vrot.slane %v604, 4
      %v607 = vshll.u32 %v243, 16
      %v609 = vrot.slane %v607, 5
      %v610 = vor.u32 %v606, %v609
      %v611 = vrot.slane %v610, 4
      %v613 = vshll.u32 %v244, 16
      %v615 = vrot.slane %v613, 5
      %v616 = vsel %vm266, %v611, %v615
      %v617 = vshrl.u32 %v244, 16
      %v619 = vrot.slane %v617, 4
      %v620 = vor.u32 %v619, %v615
      %v621 = vrot.slane %v620, 4
      %v623 = vshll.u32 %v262, 16
      %v625 = vrot.slane %v623, 5
      %v626 = vsel %vm266, %v621, %v625
      %v628 = vshrl.u32 %v245, 16
      %v630 = vrot.slane %v628, 4
      %v631 = vshll.u32 %v245, 16
      %v633 = vrot.slane %v631, 5
      %v634 = vor.u32 %v630, %v633
      %v635 = vrot.slane %v634, 4
      %v637 = vshll.u32 %v246, 16
      %v639 = vrot.slane %v637, 5
      %v640 = vsel %vm266, %v635, %v639
      %v641 = vshrl.u32 %v246, 16
      %v643 = vrot.slane %v641, 4
      %v644 = vor.u32 %v643, %v639
      %v645 = vrot.slane %v644, 4
      %v647 = vshll.u32 %v263, 16
      %v649 = vrot.slane %v647, 5
      %v650 = vsel %vm266, %v645, %v649
      %s651 = scalar_lea.vmem %s1, 4
      %v652 = vld [vmem:[%s651] sm:$0xf]
      %v653 = vunpack.c.l.b16 %v280
      %v654 = vunpack.c.l.b16 %v290
      %v655 = vunpack.c.l.b16 %v304
      %v656 = vunpack.c.l.b16 %v314
      %v657 = vunpack.c.l.b16 %v328
      %v658 = vunpack.c.l.b16 %v338
      %v659 = vunpack.c.l.b16 %v352
      %v660 = vunpack.c.l.b16 %v362
      %v661 = vunpack.c.l.b16 %v376
      %v662 = vunpack.c.l.b16 %v386
      %v663 = vunpack.c.l.b16 %v400
      %v664 = vunpack.c.l.b16 %v410
      %v665 = vunpack.c.l.b16 %v424
      %v666 = vunpack.c.l.b16 %v434
      %v667 = vunpack.c.l.b16 %v448
      %v668 = vunpack.c.l.b16 %v458
      %v669 = vunpack.c.l.b16 %v472
      %v670 = vunpack.c.l.b16 %v482
      %v671 = vunpack.c.l.b16 %v496
      %v672 = vunpack.c.l.b16 %v506
      %v673 = vunpack.c.l.b16 %v520
      %v674 = vunpack.c.l.b16 %v530
      %v675 = vunpack.c.l.b16 %v544
      %v676 = vunpack.c.l.b16 %v554
      %v677 = vunpack.c.l.b16 %v568
      %v678 = vunpack.c.l.b16 %v578
      %v679 = vunpack.c.l.b16 %v592
      %v680 = vunpack.c.l.b16 %v602
      %v681 = vunpack.c.l.b16 %v616
      %v682 = vunpack.c.l.b16 %v626
      %v683 = vunpack.c.l.b16 %v640
      %v684 = vunpack.c.l.b16 %v650
      %v685 = vpack.c.b16 %v654, %v653
      %v686 = vpack.c.b16 %v656, %v655
      %v687 = vpack.c.b16 %v658, %v657
      %v688 = vpack.c.b16 %v660, %v659
      %v689 = vpack.c.b16 %v662, %v661
      %v690 = vpack.c.b16 %v664, %v663
      %v691 = vpack.c.b16 %v666, %v665
      %v692 = vpack.c.b16 %v668, %v667
      %v693 = vpack.c.b16 %v670, %v669
      %v694 = vpack.c.b16 %v672, %v671
      %v695 = vpack.c.b16 %v674, %v673
      %v696 = vpack.c.b16 %v676, %v675
      %v697 = vpack.c.b16 %v678, %v677
      %v698 = vpack.c.b16 %v680, %v679
      %v699 = vpack.c.b16 %v682, %v681
      %v700 = vpack.c.b16 %v684, %v683
      %vm701 = vcmask 64512
      %v703 = vsel %vm701, %v685, 0
      %v706 = vsel %vm701, %v686, 0
      %v709 = vsel %vm701, %v687, 0
      %v712 = vsel %vm701, %v688, 0
      %v715 = vsel %vm701, %v689, 0
      %v718 = vsel %vm701, %v690, 0
      %v721 = vsel %vm701, %v691, 0
      %v724 = vsel %vm701, %v692, 0
      %v727 = vsel %vm701, %v693, 0
      %v730 = vsel %vm701, %v694, 0
      %v733 = vsel %vm701, %v695, 0
      %v736 = vsel %vm701, %v696, 0
      %v739 = vsel %vm701, %v697, 0
      %v742 = vsel %vm701, %v698, 0
      %v745 = vsel %vm701, %v699, 0
      %v748 = vsel %vm701, %v700, 0
      %vm750 = vcmask 1043456
      %v752 = vsel %vm750, %v652, 0
      %754 = vmatprep.subr.bf16.mxu0 0
      %755 = vmatpush1.bf16.msra.mxu0 %v752
      %756 = vmatprep.subr.bf16.mxu0 0
      %757 = vmatpush1.bf16.msra.mxu0 0
      %758 = vmatprep.subr.bf16.mxu0 0
      %759 = vmatpush1.bf16.msra.mxu0 0
      %760 = vmatprep.subr.bf16.mxu0 0
      %761 = vmatpush1.bf16.msra.mxu0 0
      %762 = vmatprep.subr.bf16.mxu0 0
      %763 = vmatpush1.bf16.msra.mxu0 0
      %764 = vmatprep.subr.bf16.mxu0 0
      %765 = vmatpush1.bf16.msra.mxu0 0
      %766 = vmatprep.subr.bf16.mxu0 0
      %767 = vmatpush1.bf16.msra.mxu0 0
      %768 = vmatprep.subr.bf16.mxu0 0
      %769 = vmatpush1.bf16.msra.mxu0 0
      %770 = vmatprep.subr.bf16.mxu0 0
      %771 = vmatpush1.bf16.msra.mxu0 0
      %772 = vmatprep.subr.bf16.mxu0 0
      %773 = vmatpush1.bf16.msra.mxu0 0
      %774 = vmatprep.subr.bf16.mxu0 0
      %775 = vmatpush1.bf16.msra.mxu0 0
      %776 = vmatprep.subr.bf16.mxu0 0
      %777 = vmatpush1.bf16.msra.mxu0 0
      %778 = vmatprep.subr.bf16.mxu0 0
      %779 = vmatpush1.bf16.msra.mxu0 0
      %780 = vmatprep.subr.bf16.mxu0 0
      %781 = vmatpush1.bf16.msra.mxu0 0
      %782 = vmatprep.subr.bf16.mxu0 0
      %783 = vmatpush1.bf16.msra.mxu0 0
      %784 = vmatprep.subr.bf16.mxu0 0
      %785 = vmatpush1.bf16.msra.mxu0 0
      %786 = vmatprep.mubr.bf16.mxu0 0
      %787 = vmatmul.mubr.bf16.gmra.mrb[0].mxu0 %v703
      %v788 = vpop.f32.mrb[0].mxu0
      %v789 = vadd.f32 0.0, %v788
      %v790 = vpop.f32.mrb[0].mxu0
      %v791 = vpop.f32.mrb[0].mxu0
      %v792 = vadd.f32 0.0, %v791
      %v793 = vpop.f32.mrb[0].mxu0
      %794 = vmatprep.mubr.bf16.mxu0 0
      %795 = vmatmul.mubr.bf16.gmra.mrb[0].mxu0 %v706
      %v796 = vpop.f32.mrb[0].mxu0
      %v797 = vadd.f32 0.0, %v796
      %v798 = vpop.f32.mrb[0].mxu0
      %v799 = vpop.f32.mrb[0].mxu0
      %v800 = vadd.f32 0.0, %v799
      %v801 = vpop.f32.mrb[0].mxu0
      %802 = vmatprep.mubr.bf16.mxu0 0
      %803 = vmatmul.mubr.bf16.gmra.mrb[0].mxu0 %v709
      %v804 = vpop.f32.mrb[0].mxu0
      %v805 = vadd.f32 0.0, %v804
      %v806 = vpop.f32.mrb[0].mxu0
      %v807 = vpop.f32.mrb[0].mxu0
      %v808 = vadd.f32 0.0, %v807
      %v809 = vpop.f32.mrb[0].mxu0
      %810 = vmatprep.mubr.bf16.mxu0 0
      %811 = vmatmul.mubr.bf16.gmra.mrb[0].mxu0 %v712
      %v812 = vpop.f32.mrb[0].mxu0
      %v813 = vadd.f32 0.0, %v812
      %v814 = vpop.f32.mrb[0].mxu0
      %v815 = vpop.f32.mrb[0].mxu0
      %v816 = vadd.f32 0.0, %v815
      %v817 = vpop.f32.mrb[0].mxu0
      %818 = vmatprep.mubr.bf16.mxu0 0
      %819 = vmatmul.mubr.bf16.gmra.mrb[0].mxu0 %v715
      %v820 = vpop.f32.mrb[0].mxu0
      %v821 = vadd.f32 0.0, %v820
      %v822 = vpop.f32.mrb[0].mxu0
      %v823 = vpop.f32.mrb[0].mxu0
      %v824 = vadd.f32 0.0, %v823
      %v825 = vpop.f32.mrb[0].mxu0
      %826 = vmatprep.mubr.bf16.mxu0 0
      %827 = vmatmul.mubr.bf16.gmra.mrb[0].mxu0 %v718
      %v828 = vpop.f32.mrb[0].mxu0
      %v829 = vadd.f32 0.0, %v828
      %v830 = vpop.f32.mrb[0].mxu0
      %v831 = vpop.f32.mrb[0].mxu0
      %v832 = vadd.f32 0.0, %v831
      %v833 = vpop.f32.mrb[0].mxu0
      %834 = vmatprep.mubr.bf16.mxu0 0
      %835 = vmatmul.mubr.bf16.gmra.mrb[0].mxu0 %v721
      %v836 = vpop.f32.mrb[0].mxu0
      %v837 = vadd.f32 0.0, %v836
      %v838 = vpop.f32.mrb[0].mxu0
      %v839 = vpop.f32.mrb[0].mxu0
      %v840 = vadd.f32 0.0, %v839
      %v841 = vpop.f32.mrb[0].mxu0
      %842 = vmatprep.mubr.bf16.mxu0 0
      %843 = vmatmul.mubr.bf16.gmra.mrb[0].mxu0 %v724
      %v844 = vpop.f32.mrb[0].mxu0
      %v845 = vadd.f32 0.0, %v844
      %v846 = vpop.f32.mrb[0].mxu0
      %v847 = vpop.f32.mrb[0].mxu0
      %v848 = vadd.f32 0.0, %v847
      %v849 = vpop.f32.mrb[0].mxu0
      %850 = vmatprep.mubr.bf16.mxu0 0
      %851 = vmatmul.mubr.bf16.gmra.mrb[0].mxu0 %v727
      %v852 = vpop.f32.mrb[0].mxu0
      %v853 = vadd.f32 0.0, %v852
      %v854 = vpop.f32.mrb[0].mxu0
      %v855 = vpop.f32.mrb[0].mxu0
      %v856 = vadd.f32 0.0, %v855
      %v857 = vpop.f32.mrb[0].mxu0
      %858 = vmatprep.mubr.bf16.mxu0 0
      %859 = vmatmul.mubr.bf16.gmra.mrb[0].mxu0 %v730
      %v860 = vpop.f32.mrb[0].mxu0
      %v861 = vadd.f32 0.0, %v860
      %v862 = vpop.f32.mrb[0].mxu0
      %v863 = vpop.f32.mrb[0].mxu0
      %v864 = vadd.f32 0.0, %v863
      %v865 = vpop.f32.mrb[0].mxu0
      %866 = vmatprep.mubr.bf16.mxu0 0
      %867 = vmatmul.mubr.bf16.gmra.mrb[0].mxu0 %v733
      %v868 = vpop.f32.mrb[0].mxu0
      %v869 = vadd.f32 0.0, %v868
      %v870 = vpop.f32.mrb[0].mxu0
      %v871 = vpop.f32.mrb[0].mxu0
      %v872 = vadd.f32 0.0, %v871
      %v873 = vpop.f32.mrb[0].mxu0
      %874 = vmatprep.mubr.bf16.mxu0 0
      %875 = vmatmul.mubr.bf16.gmra.mrb[0].mxu0 %v736
      %v876 = vpop.f32.mrb[0].mxu0
      %v877 = vadd.f32 0.0, %v876
      %v878 = vpop.f32.mrb[0].mxu0
      %v879 = vpop.f32.mrb[0].mxu0
      %v880 = vadd.f32 0.0, %v879
      %v881 = vpop.f32.mrb[0].mxu0
      %882 = vmatprep.mubr.bf16.mxu0 0
      %883 = vmatmul.mubr.bf16.gmra.mrb[0].mxu0 %v739
      %v884 = vpop.f32.mrb[0].mxu0
      %v885 = vadd.f32 0.0, %v884
      %v886 = vpop.f32.mrb[0].mxu0
      %v887 = vpop.f32.mrb[0].mxu0
      %v888 = vadd.f32 0.0, %v887
      %v889 = vpop.f32.mrb[0].mxu0
      %890 = vmatprep.mubr.bf16.mxu0 0
      %891 = vmatmul.mubr.bf16.gmra.mrb[0].mxu0 %v742
      %v892 = vpop.f32.mrb[0].mxu0
      %v893 = vadd.f32 0.0, %v892
      %v894 = vpop.f32.mrb[0].mxu0
      %v895 = vpop.f32.mrb[0].mxu0
      %v896 = vadd.f32 0.0, %v895
      %v897 = vpop.f32.mrb[0].mxu0
      %898 = vmatprep.mubr.bf16.mxu0 0
      %899 = vmatmul.mubr.bf16.gmra.mrb[0].mxu0 %v745
      %v900 = vpop.f32.mrb[0].mxu0
      %v901 = vadd.f32 0.0, %v900
      %v902 = vpop.f32.mrb[0].mxu0
      %v903 = vpop.f32.mrb[0].mxu0
      %v904 = vadd.f32 0.0, %v903
      %v905 = vpop.f32.mrb[0].mxu0
      %906 = vmatprep.mubr.bf16.mxu0 0
      %907 = vmatmul.mubr.bf16.gmra.mrb[0].mxu0 %v748
      %v908 = vpop.f32.mrb[0].mxu0
      %v909 = vadd.f32 0.0, %v908
      %v910 = vpop.f32.mrb[0].mxu0
      %v911 = vpop.f32.mrb[0].mxu0
      %v912 = vadd.f32 0.0, %v911
      %v913 = vpop.f32.mrb[0].mxu0
      %914 = vdwg.mxu0
      %v947 = vunpack.c.l.b16 %v215
      %v948 = vunpack.c.l.b16 %v216
      %v949 = vunpack.c.l.b16 %v217
      %v950 = vunpack.c.l.b16 %v218
      %v951 = vunpack.c.l.b16 %v219
      %v952 = vunpack.c.l.b16 %v220
      %v953 = vunpack.c.l.b16 %v221
      %v954 = vunpack.c.l.b16 %v222
      %v955 = vunpack.c.l.b16 %v223
      %v956 = vunpack.c.l.b16 %v224
      %v957 = vunpack.c.l.b16 %v225
      %v958 = vunpack.c.l.b16 %v226
      %v959 = vunpack.c.l.b16 %v227
      %v960 = vunpack.c.l.b16 %v228
      %v961 = vunpack.c.l.b16 %v229
      %v962 = vunpack.c.l.b16 %v230
      %v963 = vunpack.c.l.b16 %v231
      %v964 = vunpack.c.l.b16 %v232
      %v965 = vunpack.c.l.b16 %v233
      %v966 = vunpack.c.l.b16 %v234
      %v967 = vunpack.c.l.b16 %v235
      %v968 = vunpack.c.l.b16 %v236
      %v969 = vunpack.c.l.b16 %v237
      %v970 = vunpack.c.l.b16 %v238
      %v971 = vunpack.c.l.b16 %v239
      %v972 = vunpack.c.l.b16 %v240
      %v973 = vunpack.c.l.b16 %v241
      %v974 = vunpack.c.l.b16 %v242
      %v975 = vunpack.c.l.b16 %v243
      %v976 = vunpack.c.l.b16 %v244
      %v977 = vunpack.c.l.b16 %v245
      %v978 = vunpack.c.l.b16 %v246
      %v979 = vpack.c.b16 %v948, %v947
      %v980 = vpack.c.b16 %v950, %v949
      %v981 = vpack.c.b16 %v952, %v951
      %v982 = vpack.c.b16 %v954, %v953
      %v983 = vpack.c.b16 %v956, %v955
      %v984 = vpack.c.b16 %v958, %v957
      %v985 = vpack.c.b16 %v960, %v959
      %v986 = vpack.c.b16 %v962, %v961
      %v987 = vpack.c.b16 %v964, %v963
      %v988 = vpack.c.b16 %v966, %v965
      %v989 = vpack.c.b16 %v968, %v967
      %v990 = vpack.c.b16 %v970, %v969
      %v991 = vpack.c.b16 %v972, %v971
      %v992 = vpack.c.b16 %v974, %v973
      %v993 = vpack.c.b16 %v976, %v975
      %v994 = vpack.c.b16 %v978, %v977
      %v996 = vsel %vm701, %v979, 0
      %v999 = vsel %vm701, %v980, 0
      %v1002 = vsel %vm701, %v981, 0
      %v1005 = vsel %vm701, %v982, 0
      %v1008 = vsel %vm701, %v983, 0
      %v1011 = vsel %vm701, %v984, 0
      %v1014 = vsel %vm701, %v985, 0
      %v1017 = vsel %vm701, %v986, 0
      %v1020 = vsel %vm701, %v987, 0
      %v1023 = vsel %vm701, %v988, 0
      %v1026 = vsel %vm701, %v989, 0
      %v1029 = vsel %vm701, %v990, 0
      %v1032 = vsel %vm701, %v991, 0
      %v1035 = vsel %vm701, %v992, 0
      %v1038 = vsel %vm701, %v993, 0
      %v1041 = vsel %vm701, %v994, 0
      %v1044 = vsel %vm750, %v247, 0
      %1046 = vmatprep.subr.bf16.mxu0 0
      %1047 = vmatpush1.bf16.msra.mxu0 %v1044
      %1048 = vmatprep.subr.bf16.mxu0 0
      %1049 = vmatpush1.bf16.msra.mxu0 0
      %1050 = vmatprep.subr.bf16.mxu0 0
      %1051 = vmatpush1.bf16.msra.mxu0 0
      %1052 = vmatprep.subr.bf16.mxu0 0
      %1053 = vmatpush1.bf16.msra.mxu0 0
      %1054 = vmatprep.subr.bf16.mxu0 0
      %1055 = vmatpush1.bf16.msra.mxu0 0
      %1056 = vmatprep.subr.bf16.mxu0 0
      %1057 = vmatpush1.bf16.msra.mxu0 0
      %1058 = vmatprep.subr.bf16.mxu0 0
      %1059 = vmatpush1.bf16.msra.mxu0 0
      %1060 = vmatprep.subr.bf16.mxu0 0
      %1061 = vmatpush1.bf16.msra.mxu0 0
      %1062 = vmatprep.subr.bf16.mxu0 0
      %1063 = vmatpush1.bf16.msra.mxu0 0
      %1064 = vmatprep.subr.bf16.mxu0 0
      %1065 = vmatpush1.bf16.msra.mxu0 0
      %1066 = vmatprep.subr.bf16.mxu0 0
      %1067 = vmatpush1.bf16.msra.mxu0 0
      %1068 = vmatprep.subr.bf16.mxu0 0
      %1069 = vmatpush1.bf16.msra.mxu0 0
      %1070 = vmatprep.subr.bf16.mxu0 0
      %1071 = vmatpush1.bf16.msra.mxu0 0
      %1072 = vmatprep.subr.bf16.mxu0 0
      %1073 = vmatpush1.bf16.msra.mxu0 0
      %1074 = vmatprep.subr.bf16.mxu0 0
      %1075 = vmatpush1.bf16.msra.mxu0 0
      %1076 = vmatprep.subr.bf16.mxu0 0
      %1077 = vmatpush1.bf16.msra.mxu0 0
      %1078 = vmatprep.mubr.bf16.mxu0 0
      %1079 = vmatmul.mubr.bf16.gmra.mrb[0].mxu0 %v996
      %v1080 = vpop.f32.mrb[0].mxu0
      %v1081 = vadd.f32 %v789, %v1080
      %v1082 = vpop.f32.mrb[0].mxu0
      %v1083 = vpop.f32.mrb[0].mxu0
      %v1084 = vadd.f32 %v792, %v1083
      %v1085 = vpop.f32.mrb[0].mxu0
      %1086 = vmatprep.mubr.bf16.mxu0 0
      %1087 = vmatmul.mubr.bf16.gmra.mrb[0].mxu0 %v999
      %v1088 = vpop.f32.mrb[0].mxu0
      %v1089 = vadd.f32 %v797, %v1088
      %v1090 = vpop.f32.mrb[0].mxu0
      %v1091 = vpop.f32.mrb[0].mxu0
      %v1092 = vadd.f32 %v800, %v1091
      %v1093 = vpop.f32.mrb[0].mxu0
      %1094 = vmatprep.mubr.bf16.mxu0 0
      %1095 = vmatmul.mubr.bf16.gmra.mrb[0].mxu0 %v1002
      %v1096 = vpop.f32.mrb[0].mxu0
      %v1097 = vadd.f32 %v805, %v1096
      %v1098 = vpop.f32.mrb[0].mxu0
      %v1099 = vpop.f32.mrb[0].mxu0
      %v1100 = vadd.f32 %v808, %v1099
      %v1101 = vpop.f32.mrb[0].mxu0
      %1102 = vmatprep.mubr.bf16.mxu0 0
      %1103 = vmatmul.mubr.bf16.gmra.mrb[0].mxu0 %v1005
      %v1104 = vpop.f32.mrb[0].mxu0
      %v1105 = vadd.f32 %v813, %v1104
      %v1106 = vpop.f32.mrb[0].mxu0
      %v1107 = vpop.f32.mrb[0].mxu0
      %v1108 = vadd.f32 %v816, %v1107
      %v1109 = vpop.f32.mrb[0].mxu0
      %1110 = vmatprep.mubr.bf16.mxu0 0
      %1111 = vmatmul.mubr.bf16.gmra.mrb[0].mxu0 %v1008
      %v1112 = vpop.f32.mrb[0].mxu0
      %v1113 = vadd.f32 %v821, %v1112
      %v1114 = vpop.f32.mrb[0].mxu0
      %v1115 = vpop.f32.mrb[0].mxu0
      %v1116 = vadd.f32 %v824, %v1115
      %v1117 = vpop.f32.mrb[0].mxu0
      %1118 = vmatprep.mubr.bf16.mxu0 0
      %1119 = vmatmul.mubr.bf16.gmra.mrb[0].mxu0 %v1011
      %v1120 = vpop.f32.mrb[0].mxu0
      %v1121 = vadd.f32 %v829, %v1120
      %v1122 = vpop.f32.mrb[0].mxu0
      %v1123 = vpop.f32.mrb[0].mxu0
      %v1124 = vadd.f32 %v832, %v1123
      %v1125 = vpop.f32.mrb[0].mxu0
      %1126 = vmatprep.mubr.bf16.mxu0 0
      %1127 = vmatmul.mubr.bf16.gmra.mrb[0].mxu0 %v1014
      %v1128 = vpop.f32.mrb[0].mxu0
      %v1129 = vadd.f32 %v837, %v1128
      %v1130 = vpop.f32.mrb[0].mxu0
      %v1131 = vpop.f32.mrb[0].mxu0
      %v1132 = vadd.f32 %v840, %v1131
      %v1133 = vpop.f32.mrb[0].mxu0
      %1134 = vmatprep.mubr.bf16.mxu0 0
      %1135 = vmatmul.mubr.bf16.gmra.mrb[0].mxu0 %v1017
      %v1136 = vpop.f32.mrb[0].mxu0
      %v1137 = vadd.f32 %v845, %v1136
      %v1138 = vpop.f32.mrb[0].mxu0
      %v1139 = vpop.f32.mrb[0].mxu0
      %v1140 = vadd.f32 %v848, %v1139
      %v1141 = vpop.f32.mrb[0].mxu0
      %1142 = vmatprep.mubr.bf16.mxu0 0
      %1143 = vmatmul.mubr.bf16.gmra.mrb[0].mxu0 %v1020
      %v1144 = vpop.f32.mrb[0].mxu0
      %v1145 = vadd.f32 %v853, %v1144
      %v1146 = vpop.f32.mrb[0].mxu0
      %v1147 = vpop.f32.mrb[0].mxu0
      %v1148 = vadd.f32 %v856, %v1147
      %v1149 = vpop.f32.mrb[0].mxu0
      %1150 = vmatprep.mubr.bf16.mxu0 0
      %1151 = vmatmul.mubr.bf16.gmra.mrb[0].mxu0 %v1023
      %v1152 = vpop.f32.mrb[0].mxu0
      %v1153 = vadd.f32 %v861, %v1152
      %v1154 = vpop.f32.mrb[0].mxu0
      %v1155 = vpop.f32.mrb[0].mxu0
      %v1156 = vadd.f32 %v864, %v1155
      %v1157 = vpop.f32.mrb[0].mxu0
      %1158 = vmatprep.mubr.bf16.mxu0 0
      %1159 = vmatmul.mubr.bf16.gmra.mrb[0].mxu0 %v1026
      %v1160 = vpop.f32.mrb[0].mxu0
      %v1161 = vadd.f32 %v869, %v1160
      %v1162 = vpop.f32.mrb[0].mxu0
      %v1163 = vpop.f32.mrb[0].mxu0
      %v1164 = vadd.f32 %v872, %v1163
      %v1165 = vpop.f32.mrb[0].mxu0
      %1166 = vmatprep.mubr.bf16.mxu0 0
      %1167 = vmatmul.mubr.bf16.gmra.mrb[0].mxu0 %v1029
      %v1168 = vpop.f32.mrb[0].mxu0
      %v1169 = vadd.f32 %v877, %v1168
      %v1170 = vpop.f32.mrb[0].mxu0
      %v1171 = vpop.f32.mrb[0].mxu0
      %v1172 = vadd.f32 %v880, %v1171
      %v1173 = vpop.f32.mrb[0].mxu0
      %1174 = vmatprep.mubr.bf16.mxu0 0
      %1175 = vmatmul.mubr.bf16.gmra.mrb[0].mxu0 %v1032
      %v1176 = vpop.f32.mrb[0].mxu0
      %v1177 = vadd.f32 %v885, %v1176
      %v1178 = vpop.f32.mrb[0].mxu0
      %v1179 = vpop.f32.mrb[0].mxu0
      %v1180 = vadd.f32 %v888, %v1179
      %v1181 = vpop.f32.mrb[0].mxu0
      %1182 = vmatprep.mubr.bf16.mxu0 0
      %1183 = vmatmul.mubr.bf16.gmra.mrb[0].mxu0 %v1035
      %v1184 = vpop.f32.mrb[0].mxu0
      %v1185 = vadd.f32 %v893, %v1184
      %v1186 = vpop.f32.mrb[0].mxu0
      %v1187 = vpop.f32.mrb[0].mxu0
      %v1188 = vadd.f32 %v896, %v1187
      %v1189 = vpop.f32.mrb[0].mxu0
      %1190 = vmatprep.mubr.bf16.mxu0 0
      %1191 = vmatmul.mubr.bf16.gmra.mrb[0].mxu0 %v1038
      %v1192 = vpop.f32.mrb[0].mxu0
      %v1193 = vadd.f32 %v901, %v1192
      %v1194 = vpop.f32.mrb[0].mxu0
      %v1195 = vpop.f32.mrb[0].mxu0
      %v1196 = vadd.f32 %v904, %v1195
      %v1197 = vpop.f32.mrb[0].mxu0
      %1198 = vmatprep.mubr.bf16.mxu0 0
      %1199 = vmatmul.mubr.bf16.gmra.mrb[0].mxu0 %v1041
      %v1200 = vpop.f32.mrb[0].mxu0
      %v1201 = vadd.f32 %v909, %v1200
      %v1202 = vpop.f32.mrb[0].mxu0
      %v1203 = vpop.f32.mrb[0].mxu0
      %v1204 = vadd.f32 %v912, %v1203
      %v1205 = vpop.f32.mrb[0].mxu0
      %1206 = vdwg.mxu0
      %v1207 = vld [vmem:[%s214] sm:$0xe]
      %v1208 = vld [vmem:[%s214 + $0xc] sm:$0xe]
      %v1209 = vld [vmem:[%s214 + $0x18] sm:$0xe]
      %v1210 = vld [vmem:[%s214 + $0x24] sm:$0xe]
      %v1211 = vld [vmem:[%s214 + $0x30] sm:$0xe]
      %v1212 = vld [vmem:[%s214 + $0x3c] sm:$0xe]
      %v1213 = vld [vmem:[%s214 + $0x48] sm:$0xe]
      %v1214 = vld [vmem:[%s214 + $0x54] sm:$0xe]
      %v1215 = vld [vmem:[%s214 + $0x60] sm:$0xe]
      %v1216 = vld [vmem:[%s214 + $0x6c] sm:$0xe]
      %v1217 = vld [vmem:[%s214 + $0x78] sm:$0xe]
      %v1218 = vld [vmem:[%s214 + $0x84] sm:$0xe]
      %v1219 = vld [vmem:[%s214 + $0x90] sm:$0xe]
      %v1220 = vld [vmem:[%s214 + $0x9c] sm:$0xe]
      %v1221 = vld [vmem:[%s214 + $0xa8] sm:$0xe]
      %v1222 = vld [vmem:[%s214 + $0xb4] sm:$0xe]
      %vm1255 = vcmask 1042432
      %vm1256 = vcmask 1046532
      %vm1257 = vmor %vm1255, %vm1256
      %v1258 = vrot.slane %v1207, 5
      %v1259 = vrot.slane %v1258, 4
      %v1260 = vrot.slane %v216, 5
      %v1261 = vsel %vm1257, %v1259, %v1260
      %v1262 = vrot.slane %v1260, 4
      %v1263 = vrot.slane %v248, 5
      %v1264 = vsel %vm1257, %v1262, %v1263
      %v1265 = vrot.slane %v1208, 5
      %v1266 = vrot.slane %v1265, 4
      %v1267 = vrot.slane %v218, 5
      %v1268 = vsel %vm1257, %v1266, %v1267
      %v1269 = vrot.slane %v1267, 4
      %v1270 = vrot.slane %v249, 5
      %v1271 = vsel %vm1257, %v1269, %v1270
      %v1272 = vrot.slane %v1209, 5
      %v1273 = vrot.slane %v1272, 4
      %v1274 = vrot.slane %v220, 5
      %v1275 = vsel %vm1257, %v1273, %v1274
      %v1276 = vrot.slane %v1274, 4
      %v1277 = vrot.slane %v250, 5
      %v1278 = vsel %vm1257, %v1276, %v1277
      %v1279 = vrot.slane %v1210, 5
      %v1280 = vrot.slane %v1279, 4
      %v1281 = vrot.slane %v222, 5
      %v1282 = vsel %vm1257, %v1280, %v1281
      %v1283 = vrot.slane %v1281, 4
      %v1284 = vrot.slane %v251, 5
      %v1285 = vsel %vm1257, %v1283, %v1284
      %v1286 = vrot.slane %v1211, 5
      %v1287 = vrot.slane %v1286, 4
      %v1288 = vrot.slane %v224, 5
      %v1289 = vsel %vm1257, %v1287, %v1288
      %v1290 = vrot.slane %v1288, 4
      %v1291 = vrot.slane %v252, 5
      %v1292 = vsel %vm1257, %v1290, %v1291
      %v1293 = vrot.slane %v1212, 5
      %v1294 = vrot.slane %v1293, 4
      %v1295 = vrot.slane %v226, 5
      %v1296 = vsel %vm1257, %v1294, %v1295
      %v1297 = vrot.slane %v1295, 4
      %v1298 = vrot.slane %v253, 5
      %v1299 = vsel %vm1257, %v1297, %v1298
      %v1300 = vrot.slane %v1213, 5
      %v1301 = vrot.slane %v1300, 4
      %v1302 = vrot.slane %v228, 5
      %v1303 = vsel %vm1257, %v1301, %v1302
      %v1304 = vrot.slane %v1302, 4
      %v1305 = vrot.slane %v254, 5
      %v1306 = vsel %vm1257, %v1304, %v1305
      %v1307 = vrot.slane %v1214, 5
      %v1308 = vrot.slane %v1307, 4
      %v1309 = vrot.slane %v230, 5
      %v1310 = vsel %vm1257, %v1308, %v1309
      %v1311 = vrot.slane %v1309, 4
      %v1312 = vrot.slane %v255, 5
      %v1313 = vsel %vm1257, %v1311, %v1312
      %v1314 = vrot.slane %v1215, 5
      %v1315 = vrot.slane %v1314, 4
      %v1316 = vrot.slane %v232, 5
      %v1317 = vsel %vm1257, %v1315, %v1316
      %v1318 = vrot.slane %v1316, 4
      %v1319 = vrot.slane %v256, 5
      %v1320 = vsel %vm1257, %v1318, %v1319
      %v1321 = vrot.slane %v1216, 5
      %v1322 = vrot.slane %v1321, 4
      %v1323 = vrot.slane %v234, 5
      %v1324 = vsel %vm1257, %v1322, %v1323
      %v1325 = vrot.slane %v1323, 4
      %v1326 = vrot.slane %v257, 5
      %v1327 = vsel %vm1257, %v1325, %v1326
      %v1328 = vrot.slane %v1217, 5
      %v1329 = vrot.slane %v1328, 4
      %v1330 = vrot.slane %v236, 5
      %v1331 = vsel %vm1257, %v1329, %v1330
      %v1332 = vrot.slane %v1330, 4
      %v1333 = vrot.slane %v258, 5
      %v1334 = vsel %vm1257, %v1332, %v1333
      %v1335 = vrot.slane %v1218, 5
      %v1336 = vrot.slane %v1335, 4
      %v1337 = vrot.slane %v238, 5
      %v1338 = vsel %vm1257, %v1336, %v1337
      %v1339 = vrot.slane %v1337, 4
      %v1340 = vrot.slane %v259, 5
      %v1341 = vsel %vm1257, %v1339, %v1340
      %v1342 = vrot.slane %v1219, 5
      %v1343 = vrot.slane %v1342, 4
      %v1344 = vrot.slane %v240, 5
      %v1345 = vsel %vm1257, %v1343, %v1344
      %v1346 = vrot.slane %v1344, 4
      %v1347 = vrot.slane %v260, 5
      %v1348 = vsel %vm1257, %v1346, %v1347
      %v1349 = vrot.slane %v1220, 5
      %v1350 = vrot.slane %v1349, 4
      %v1351 = vrot.slane %v242, 5
      %v1352 = vsel %vm1257, %v1350, %v1351
      %v1353 = vrot.slane %v1351, 4
      %v1354 = vrot.slane %v261, 5
      %v1355 = vsel %vm1257, %v1353, %v1354
      %v1356 = vrot.slane %v1221, 5
      %v1357 = vrot.slane %v1356, 4
      %v1358 = vrot.slane %v244, 5
      %v1359 = vsel %vm1257, %v1357, %v1358
      %v1360 = vrot.slane %v1358, 4
      %v1361 = vrot.slane %v262, 5
      %v1362 = vsel %vm1257, %v1360, %v1361
      %v1363 = vrot.slane %v1222, 5
      %v1364 = vrot.slane %v1363, 4
      %v1365 = vrot.slane %v246, 5
      %v1366 = vsel %vm1257, %v1364, %v1365
      %v1367 = vrot.slane %v1365, 4
      %v1368 = vrot.slane %v263, 5
      %v1369 = vsel %vm1257, %v1367, %v1368
      %s1370 = scalar_lea.vmem %s1, 8
      %v1371 = vld [vmem:[%s1370] sm:$0xf]
      %v1372 = vunpack.c.l.b16 %v1261
      %v1373 = vunpack.c.l.b16 %v1264
      %v1374 = vunpack.c.l.b16 %v1268
      %v1375 = vunpack.c.l.b16 %v1271
      %v1376 = vunpack.c.l.b16 %v1275
      %v1377 = vunpack.c.l.b16 %v1278
      %v1378 = vunpack.c.l.b16 %v1282
      %v1379 = vunpack.c.l.b16 %v1285
      %v1380 = vunpack.c.l.b16 %v1289
      %v1381 = vunpack.c.l.b16 %v1292
      %v1382 = vunpack.c.l.b16 %v1296
      %v1383 = vunpack.c.l.b16 %v1299
      %v1384 = vunpack.c.l.b16 %v1303
      %v1385 = vunpack.c.l.b16 %v1306
      %v1386 = vunpack.c.l.b16 %v1310
      %v1387 = vunpack.c.l.b16 %v1313
      %v1388 = vunpack.c.l.b16 %v1317
      %v1389 = vunpack.c.l.b16 %v1320
      %v1390 = vunpack.c.l.b16 %v1324
      %v1391 = vunpack.c.l.b16 %v1327
      %v1392 = vunpack.c.l.b16 %v1331
      %v1393 = vunpack.c.l.b16 %v1334
      %v1394 = vunpack.c.l.b16 %v1338
      %v1395 = vunpack.c.l.b16 %v1341
      %v1396 = vunpack.c.l.b16 %v1345
      %v1397 = vunpack.c.l.b16 %v1348
      %v1398 = vunpack.c.l.b16 %v1352
      %v1399 = vunpack.c.l.b16 %v1355
      %v1400 = vunpack.c.l.b16 %v1359
      %v1401 = vunpack.c.l.b16 %v1362
      %v1402 = vunpack.c.l.b16 %v1366
      %v1403 = vunpack.c.l.b16 %v1369
      %v1404 = vpack.c.b16 %v1373, %v1372
      %v1405 = vpack.c.b16 %v1375, %v1374
      %v1406 = vpack.c.b16 %v1377, %v1376
      %v1407 = vpack.c.b16 %v1379, %v1378
      %v1408 = vpack.c.b16 %v1381, %v1380
      %v1409 = vpack.c.b16 %v1383, %v1382
      %v1410 = vpack.c.b16 %v1385, %v1384
      %v1411 = vpack.c.b16 %v1387, %v1386
      %v1412 = vpack.c.b16 %v1389, %v1388
      %v1413 = vpack.c.b16 %v1391, %v1390
      %v1414 = vpack.c.b16 %v1393, %v1392
      %v1415 = vpack.c.b16 %v1395, %v1394
      %v1416 = vpack.c.b16 %v1397, %v1396
      %v1417 = vpack.c.b16 %v1399, %v1398
      %v1418 = vpack.c.b16 %v1401, %v1400
      %v1419 = vpack.c.b16 %v1403, %v1402
      %v1421 = vsel %vm701, %v1404, 0
      %v1424 = vsel %vm701, %v1405, 0
      %v1427 = vsel %vm701, %v1406, 0
      %v1430 = vsel %vm701, %v1407, 0
      %v1433 = vsel %vm701, %v1408, 0
      %v1436 = vsel %vm701, %v1409, 0
      %v1439 = vsel %vm701, %v1410, 0
      %v1442 = vsel %vm701, %v1411, 0
      %v1445 = vsel %vm701, %v1412, 0
      %v1448 = vsel %vm701, %v1413, 0
      %v1451 = vsel %vm701, %v1414, 0
      %v1454 = vsel %vm701, %v1415, 0
      %v1457 = vsel %vm701, %v1416, 0
      %v1460 = vsel %vm701, %v1417, 0
      %v1463 = vsel %vm701, %v1418, 0
      %v1466 = vsel %vm701, %v1419, 0
      %v1469 = vsel %vm750, %v1371, 0
      %1471 = vmatprep.subr.bf16.mxu0 0
      %1472 = vmatpush1.bf16.msra.mxu0 %v1469
      %1473 = vmatprep.subr.bf16.mxu0 0
      %1474 = vmatpush1.bf16.msra.mxu0 0
      %1475 = vmatprep.subr.bf16.mxu0 0
      %1476 = vmatpush1.bf16.msra.mxu0 0
      %1477 = vmatprep.subr.bf16.mxu0 0
      %1478 = vmatpush1.bf16.msra.mxu0 0
      %1479 = vmatprep.subr.bf16.mxu0 0
      %1480 = vmatpush1.bf16.msra.mxu0 0
      %1481 = vmatprep.subr.bf16.mxu0 0
      %1482 = vmatpush1.bf16.msra.mxu0 0
      %1483 = vmatprep.subr.bf16.mxu0 0
      %1484 = vmatpush1.bf16.msra.mxu0 0
      %1485 = vmatprep.subr.bf16.mxu0 0
      %1486 = vmatpush1.bf16.msra.mxu0 0
      %1487 = vmatprep.subr.bf16.mxu0 0
      %1488 = vmatpush1.bf16.msra.mxu0 0
      %1489 = vmatprep.subr.bf16.mxu0 0
      %1490 = vmatpush1.bf16.msra.mxu0 0
      %1491 = vmatprep.subr.bf16.mxu0 0
      %1492 = vmatpush1.bf16.msra.mxu0 0
      %1493 = vmatprep.subr.bf16.mxu0 0
      %1494 = vmatpush1.bf16.msra.mxu0 0
      %1495 = vmatprep.subr.bf16.mxu0 0
      %1496 = vmatpush1.bf16.msra.mxu0 0
      %1497 = vmatprep.subr.bf16.mxu0 0
      %1498 = vmatpush1.bf16.msra.mxu0 0
      %1499 = vmatprep.subr.bf16.mxu0 0
      %1500 = vmatpush1.bf16.msra.mxu0 0
      %1501 = vmatprep.subr.bf16.mxu0 0
      %1502 = vmatpush1.bf16.msra.mxu0 0
      %1503 = vmatprep.mubr.bf16.mxu0 0
      %1504 = vmatmul.mubr.bf16.gmra.mrb[0].mxu0 %v1421
      %v1505 = vpop.f32.mrb[0].mxu0
      %v1506 = vadd.f32 0.0, %v1505
      %v1507 = vpop.f32.mrb[0].mxu0
      %v1508 = vpop.f32.mrb[0].mxu0
      %v1509 = vadd.f32 0.0, %v1508
      %v1510 = vpop.f32.mrb[0].mxu0
      %1511 = vmatprep.mubr.bf16.mxu0 0
      %1512 = vmatmul.mubr.bf16.gmra.mrb[0].mxu0 %v1424
      %v1513 = vpop.f32.mrb[0].mxu0
      %v1514 = vadd.f32 0.0, %v1513
      %v1515 = vpop.f32.mrb[0].mxu0
      %v1516 = vpop.f32.mrb[0].mxu0
      %v1517 = vadd.f32 0.0, %v1516
      %v1518 = vpop.f32.mrb[0].mxu0
      %1519 = vmatprep.mubr.bf16.mxu0 0
      %1520 = vmatmul.mubr.bf16.gmra.mrb[0].mxu0 %v1427
      %v1521 = vpop.f32.mrb[0].mxu0
      %v1522 = vadd.f32 0.0, %v1521
      %v1523 = vpop.f32.mrb[0].mxu0
      %v1524 = vpop.f32.mrb[0].mxu0
      %v1525 = vadd.f32 0.0, %v1524
      %v1526 = vpop.f32.mrb[0].mxu0
      %1527 = vmatprep.mubr.bf16.mxu0 0
      %1528 = vmatmul.mubr.bf16.gmra.mrb[0].mxu0 %v1430
      %v1529 = vpop.f32.mrb[0].mxu0
      %v1530 = vadd.f32 0.0, %v1529
      %v1531 = vpop.f32.mrb[0].mxu0
      %v1532 = vpop.f32.mrb[0].mxu0
      %v1533 = vadd.f32 0.0, %v1532
      %v1534 = vpop.f32.mrb[0].mxu0
      %1535 = vmatprep.mubr.bf16.mxu0 0
      %1536 = vmatmul.mubr.bf16.gmra.mrb[0].mxu0 %v1433
      %v1537 = vpop.f32.mrb[0].mxu0
      %v1538 = vadd.f32 0.0, %v1537
      %v1539 = vpop.f32.mrb[0].mxu0
      %v1540 = vpop.f32.mrb[0].mxu0
      %v1541 = vadd.f32 0.0, %v1540
      %v1542 = vpop.f32.mrb[0].mxu0
      %1543 = vmatprep.mubr.bf16.mxu0 0
      %1544 = vmatmul.mubr.bf16.gmra.mrb[0].mxu0 %v1436
      %v1545 = vpop.f32.mrb[0].mxu0
      %v1546 = vadd.f32 0.0, %v1545
      %v1547 = vpop.f32.mrb[0].mxu0
      %v1548 = vpop.f32.mrb[0].mxu0
      %v1549 = vadd.f32 0.0, %v1548
      %v1550 = vpop.f32.mrb[0].mxu0
      %1551 = vmatprep.mubr.bf16.mxu0 0
      %1552 = vmatmul.mubr.bf16.gmra.mrb[0].mxu0 %v1439
      %v1553 = vpop.f32.mrb[0].mxu0
      %v1554 = vadd.f32 0.0, %v1553
      %v1555 = vpop.f32.mrb[0].mxu0
      %v1556 = vpop.f32.mrb[0].mxu0
      %v1557 = vadd.f32 0.0, %v1556
      %v1558 = vpop.f32.mrb[0].mxu0
      %1559 = vmatprep.mubr.bf16.mxu0 0
      %1560 = vmatmul.mubr.bf16.gmra.mrb[0].mxu0 %v1442
      %v1561 = vpop.f32.mrb[0].mxu0
      %v1562 = vadd.f32 0.0, %v1561
      %v1563 = vpop.f32.mrb[0].mxu0
      %v1564 = vpop.f32.mrb[0].mxu0
      %v1565 = vadd.f32 0.0, %v1564
      %v1566 = vpop.f32.mrb[0].mxu0
      %1567 = vmatprep.mubr.bf16.mxu0 0
      %1568 = vmatmul.mubr.bf16.gmra.mrb[0].mxu0 %v1445
      %v1569 = vpop.f32.mrb[0].mxu0
      %v1570 = vadd.f32 0.0, %v1569
      %v1571 = vpop.f32.mrb[0].mxu0
      %v1572 = vpop.f32.mrb[0].mxu0
      %v1573 = vadd.f32 0.0, %v1572
      %v1574 = vpop.f32.mrb[0].mxu0
      %1575 = vmatprep.mubr.bf16.mxu0 0
      %1576 = vmatmul.mubr.bf16.gmra.mrb[0].mxu0 %v1448
      %v1577 = vpop.f32.mrb[0].mxu0
      %v1578 = vadd.f32 0.0, %v1577
      %v1579 = vpop.f32.mrb[0].mxu0
      %v1580 = vpop.f32.mrb[0].mxu0
      %v1581 = vadd.f32 0.0, %v1580
      %v1582 = vpop.f32.mrb[0].mxu0
      %1583 = vmatprep.mubr.bf16.mxu0 0
      %1584 = vmatmul.mubr.bf16.gmra.mrb[0].mxu0 %v1451
      %v1585 = vpop.f32.mrb[0].mxu0
      %v1586 = vadd.f32 0.0, %v1585
      %v1587 = vpop.f32.mrb[0].mxu0
      %v1588 = vpop.f32.mrb[0].mxu0
      %v1589 = vadd.f32 0.0, %v1588
      %v1590 = vpop.f32.mrb[0].mxu0
      %1591 = vmatprep.mubr.bf16.mxu0 0
      %1592 = vmatmul.mubr.bf16.gmra.mrb[0].mxu0 %v1454
      %v1593 = vpop.f32.mrb[0].mxu0
      %v1594 = vadd.f32 0.0, %v1593
      %v1595 = vpop.f32.mrb[0].mxu0
      %v1596 = vpop.f32.mrb[0].mxu0
      %v1597 = vadd.f32 0.0, %v1596
      %v1598 = vpop.f32.mrb[0].mxu0
      %1599 = vmatprep.mubr.bf16.mxu0 0
      %1600 = vmatmul.mubr.bf16.gmra.mrb[0].mxu0 %v1457
      %v1601 = vpop.f32.mrb[0].mxu0
      %v1602 = vadd.f32 0.0, %v1601
      %v1603 = vpop.f32.mrb[0].mxu0
      %v1604 = vpop.f32.mrb[0].mxu0
      %v1605 = vadd.f32 0.0, %v1604
      %v1606 = vpop.f32.mrb[0].mxu0
      %1607 = vmatprep.mubr.bf16.mxu0 0
      %1608 = vmatmul.mubr.bf16.gmra.mrb[0].mxu0 %v1460
      %v1609 = vpop.f32.mrb[0].mxu0
      %v1610 = vadd.f32 0.0, %v1609
      %v1611 = vpop.f32.mrb[0].mxu0
      %v1612 = vpop.f32.mrb[0].mxu0
      %v1613 = vadd.f32 0.0, %v1612
      %v1614 = vpop.f32.mrb[0].mxu0
      %1615 = vmatprep.mubr.bf16.mxu0 0
      %1616 = vmatmul.mubr.bf16.gmra.mrb[0].mxu0 %v1463
      %v1617 = vpop.f32.mrb[0].mxu0
      %v1618 = vadd.f32 0.0, %v1617
      %v1619 = vpop.f32.mrb[0].mxu0
      %v1620 = vpop.f32.mrb[0].mxu0
      %v1621 = vadd.f32 0.0, %v1620
      %v1622 = vpop.f32.mrb[0].mxu0
      %1623 = vmatprep.mubr.bf16.mxu0 0
      %1624 = vmatmul.mubr.bf16.gmra.mrb[0].mxu0 %v1466
      %v1625 = vpop.f32.mrb[0].mxu0
      %v1626 = vadd.f32 0.0, %v1625
      %v1627 = vpop.f32.mrb[0].mxu0
      %v1628 = vpop.f32.mrb[0].mxu0
      %v1629 = vadd.f32 0.0, %v1628
      %v1630 = vpop.f32.mrb[0].mxu0
      %1631 = vdwg.mxu0
      %v1632 = vadd.f32 %v1081, %v1506
      %v1633 = vadd.f32 %v1084, %v1509
      %v1634 = vadd.f32 %v1089, %v1514
      %v1635 = vadd.f32 %v1092, %v1517
      %v1636 = vadd.f32 %v1097, %v1522
      %v1637 = vadd.f32 %v1100, %v1525
      %v1638 = vadd.f32 %v1105, %v1530
      %v1639 = vadd.f32 %v1108, %v1533
      %v1640 = vadd.f32 %v1113, %v1538
      %v1641 = vadd.f32 %v1116, %v1541
      %v1642 = vadd.f32 %v1121, %v1546
      %v1643 = vadd.f32 %v1124, %v1549
      %v1644 = vadd.f32 %v1129, %v1554
      %v1645 = vadd.f32 %v1132, %v1557
      %v1646 = vadd.f32 %v1137, %v1562
      %v1647 = vadd.f32 %v1140, %v1565
      %v1648 = vadd.f32 %v1145, %v1570
      %v1649 = vadd.f32 %v1148, %v1573
      %v1650 = vadd.f32 %v1153, %v1578
      %v1651 = vadd.f32 %v1156, %v1581
      %v1652 = vadd.f32 %v1161, %v1586
      %v1653 = vadd.f32 %v1164, %v1589
      %v1654 = vadd.f32 %v1169, %v1594
      %v1655 = vadd.f32 %v1172, %v1597
      %v1656 = vadd.f32 %v1177, %v1602
      %v1657 = vadd.f32 %v1180, %v1605
      %v1658 = vadd.f32 %v1185, %v1610
      %v1659 = vadd.f32 %v1188, %v1613
      %v1660 = vadd.f32 %v1193, %v1618
      %v1661 = vadd.f32 %v1196, %v1621
      %v1662 = vadd.f32 %v1201, %v1626
      %v1663 = vadd.f32 %v1204, %v1629
      %s1664 = sadd.s32 %s211, 1
      %s1665 = smul.u32 %s1664, 3
      %s1666 = smul.addr %s1665, 4
      %s1667 = scalar_lea.vmem %s193, %s1666
      %v1668 = vld [vmem:[%s1667] sm:$0xf]
      %v1669 = vld [vmem:[%s1667 + $0x4] sm:$0xf]
      %v1670 = vld [vmem:[%s1667 + $0xc] sm:$0xf]
      %v1671 = vld [vmem:[%s1667 + $0x10] sm:$0xf]
      %v1672 = vld [vmem:[%s1667 + $0x18] sm:$0xf]
      %v1673 = vld [vmem:[%s1667 + $0x1c] sm:$0xf]
      %v1674 = vld [vmem:[%s1667 + $0x24] sm:$0xf]
      %v1675 = vld [vmem:[%s1667 + $0x28] sm:$0xf]
      %v1676 = vld [vmem:[%s1667 + $0x30] sm:$0xf]
      %v1677 = vld [vmem:[%s1667 + $0x34] sm:$0xf]
      %v1678 = vld [vmem:[%s1667 + $0x3c] sm:$0xf]
      %v1679 = vld [vmem:[%s1667 + $0x40] sm:$0xf]
      %v1680 = vld [vmem:[%s1667 + $0x48] sm:$0xf]
      %v1681 = vld [vmem:[%s1667 + $0x4c] sm:$0xf]
      %v1682 = vld [vmem:[%s1667 + $0x54] sm:$0xf]
      %v1683 = vld [vmem:[%s1667 + $0x58] sm:$0xf]
      %v1684 = vld [vmem:[%s1667 + $0x60] sm:$0xf]
      %v1685 = vld [vmem:[%s1667 + $0x64] sm:$0xf]
      %v1686 = vld [vmem:[%s1667 + $0x6c] sm:$0xf]
      %v1687 = vld [vmem:[%s1667 + $0x70] sm:$0xf]
      %v1688 = vld [vmem:[%s1667 + $0x78] sm:$0xf]
      %v1689 = vld [vmem:[%s1667 + $0x7c] sm:$0xf]
      %v1690 = vld [vmem:[%s1667 + $0x84] sm:$0xf]
      %v1691 = vld [vmem:[%s1667 + $0x88] sm:$0xf]
      %v1692 = vld [vmem:[%s1667 + $0x90] sm:$0xf]
      %v1693 = vld [vmem:[%s1667 + $0x94] sm:$0xf]
      %v1694 = vld [vmem:[%s1667 + $0x9c] sm:$0xf]
      %v1695 = vld [vmem:[%s1667 + $0xa0] sm:$0xf]
      %v1696 = vld [vmem:[%s1667 + $0xa8] sm:$0xf]
      %v1697 = vld [vmem:[%s1667 + $0xac] sm:$0xf]
      %v1698 = vld [vmem:[%s1667 + $0xb4] sm:$0xf]
      %v1699 = vld [vmem:[%s1667 + $0xb8] sm:$0xf]
      %s1700 = scalar_lea.vmem %s1, 12
      %v1701 = vld [vmem:[%s1700] sm:$0xf]
      %v1734 = vunpack.c.l.b16 %v1668
      %v1735 = vunpack.c.l.b16 %v1669
      %v1736 = vunpack.c.l.b16 %v1670
      %v1737 = vunpack.c.l.b16 %v1671
      %v1738 = vunpack.c.l.b16 %v1672
      %v1739 = vunpack.c.l.b16 %v1673
      %v1740 = vunpack.c.l.b16 %v1674
      %v1741 = vunpack.c.l.b16 %v1675
      %v1742 = vunpack.c.l.b16 %v1676
      %v1743 = vunpack.c.l.b16 %v1677
      %v1744 = vunpack.c.l.b16 %v1678
      %v1745 = vunpack.c.l.b16 %v1679
      %v1746 = vunpack.c.l.b16 %v1680
      %v1747 = vunpack.c.l.b16 %v1681
      %v1748 = vunpack.c.l.b16 %v1682
      %v1749 = vunpack.c.l.b16 %v1683
      %v1750 = vunpack.c.l.b16 %v1684
      %v1751 = vunpack.c.l.b16 %v1685
      %v1752 = vunpack.c.l.b16 %v1686
      %v1753 = vunpack.c.l.b16 %v1687
      %v1754 = vunpack.c.l.b16 %v1688
      %v1755 = vunpack.c.l.b16 %v1689
      %v1756 = vunpack.c.l.b16 %v1690
      %v1757 = vunpack.c.l.b16 %v1691
      %v1758 = vunpack.c.l.b16 %v1692
      %v1759 = vunpack.c.l.b16 %v1693
      %v1760 = vunpack.c.l.b16 %v1694
      %v1761 = vunpack.c.l.b16 %v1695
      %v1762 = vunpack.c.l.b16 %v1696
      %v1763 = vunpack.c.l.b16 %v1697
      %v1764 = vunpack.c.l.b16 %v1698
      %v1765 = vunpack.c.l.b16 %v1699
      %v1766 = vpack.c.b16 %v1735, %v1734
      %v1767 = vpack.c.b16 %v1737, %v1736
      %v1768 = vpack.c.b16 %v1739, %v1738
      %v1769 = vpack.c.b16 %v1741, %v1740
      %v1770 = vpack.c.b16 %v1743, %v1742
      %v1771 = vpack.c.b16 %v1745, %v1744
      %v1772 = vpack.c.b16 %v1747, %v1746
      %v1773 = vpack.c.b16 %v1749, %v1748
      %v1774 = vpack.c.b16 %v1751, %v1750
      %v1775 = vpack.c.b16 %v1753, %v1752
      %v1776 = vpack.c.b16 %v1755, %v1754
      %v1777 = vpack.c.b16 %v1757, %v1756
      %v1778 = vpack.c.b16 %v1759, %v1758
      %v1779 = vpack.c.b16 %v1761, %v1760
      %v1780 = vpack.c.b16 %v1763, %v1762
      %v1781 = vpack.c.b16 %v1765, %v1764
      %v1783 = vsel %vm701, %v1766, 0
      %v1786 = vsel %vm701, %v1767, 0
      %v1789 = vsel %vm701, %v1768, 0
      %v1792 = vsel %vm701, %v1769, 0
      %v1795 = vsel %vm701, %v1770, 0
      %v1798 = vsel %vm701, %v1771, 0
      %v1801 = vsel %vm701, %v1772, 0
      %v1804 = vsel %vm701, %v1773, 0
      %v1807 = vsel %vm701, %v1774, 0
      %v1810 = vsel %vm701, %v1775, 0
      %v1813 = vsel %vm701, %v1776, 0
      %v1816 = vsel %vm701, %v1777, 0
      %v1819 = vsel %vm701, %v1778, 0
      %v1822 = vsel %vm701, %v1779, 0
      %v1825 = vsel %vm701, %v1780, 0
      %v1828 = vsel %vm701, %v1781, 0
      %v1831 = vsel %vm750, %v1701, 0
      %1833 = vmatprep.subr.bf16.mxu0 0
      %1834 = vmatpush1.bf16.msra.mxu0 %v1831
      %1835 = vmatprep.subr.bf16.mxu0 0
      %1836 = vmatpush1.bf16.msra.mxu0 0
      %1837 = vmatprep.subr.bf16.mxu0 0
      %1838 = vmatpush1.bf16.msra.mxu0 0
      %1839 = vmatprep.subr.bf16.mxu0 0
      %1840 = vmatpush1.bf16.msra.mxu0 0
      %1841 = vmatprep.subr.bf16.mxu0 0
      %1842 = vmatpush1.bf16.msra.mxu0 0
      %1843 = vmatprep.subr.bf16.mxu0 0
      %1844 = vmatpush1.bf16.msra.mxu0 0
      %1845 = vmatprep.subr.bf16.mxu0 0
      %1846 = vmatpush1.bf16.msra.mxu0 0
      %1847 = vmatprep.subr.bf16.mxu0 0
      %1848 = vmatpush1.bf16.msra.mxu0 0
      %1849 = vmatprep.subr.bf16.mxu0 0
      %1850 = vmatpush1.bf16.msra.mxu0 0
      %1851 = vmatprep.subr.bf16.mxu0 0
      %1852 = vmatpush1.bf16.msra.mxu0 0
      %1853 = vmatprep.subr.bf16.mxu0 0
      %1854 = vmatpush1.bf16.msra.mxu0 0
      %1855 = vmatprep.subr.bf16.mxu0 0
      %1856 = vmatpush1.bf16.msra.mxu0 0
      %1857 = vmatprep.subr.bf16.mxu0 0
      %1858 = vmatpush1.bf16.msra.mxu0 0
      %1859 = vmatprep.subr.bf16.mxu0 0
      %1860 = vmatpush1.bf16.msra.mxu0 0
      %1861 = vmatprep.subr.bf16.mxu0 0
      %1862 = vmatpush1.bf16.msra.mxu0 0
      %1863 = vmatprep.subr.bf16.mxu0 0
      %1864 = vmatpush1.bf16.msra.mxu0 0
      %1865 = vmatprep.mubr.bf16.mxu0 0
      %1866 = vmatmul.mubr.bf16.gmra.mrb[0].mxu0 %v1783
      %v1867 = vpop.f32.mrb[0].mxu0
      %v1868 = vadd.f32 0.0, %v1867
      %v1869 = vpop.f32.mrb[0].mxu0
      %v1870 = vpop.f32.mrb[0].mxu0
      %v1871 = vadd.f32 0.0, %v1870
      %v1872 = vpop.f32.mrb[0].mxu0
      %1873 = vmatprep.mubr.bf16.mxu0 0
      %1874 = vmatmul.mubr.bf16.gmra.mrb[0].mxu0 %v1786
      %v1875 = vpop.f32.mrb[0].mxu0
      %v1876 = vadd.f32 0.0, %v1875
      %v1877 = vpop.f32.mrb[0].mxu0
      %v1878 = vpop.f32.mrb[0].mxu0
      %v1879 = vadd.f32 0.0, %v1878
      %v1880 = vpop.f32.mrb[0].mxu0
      %1881 = vmatprep.mubr.bf16.mxu0 0
      %1882 = vmatmul.mubr.bf16.gmra.mrb[0].mxu0 %v1789
      %v1883 = vpop.f32.mrb[0].mxu0
      %v1884 = vadd.f32 0.0, %v1883
      %v1885 = vpop.f32.mrb[0].mxu0
      %v1886 = vpop.f32.mrb[0].mxu0
      %v1887 = vadd.f32 0.0, %v1886
      %v1888 = vpop.f32.mrb[0].mxu0
      %1889 = vmatprep.mubr.bf16.mxu0 0
      %1890 = vmatmul.mubr.bf16.gmra.mrb[0].mxu0 %v1792
      %v1891 = vpop.f32.mrb[0].mxu0
      %v1892 = vadd.f32 0.0, %v1891
      %v1893 = vpop.f32.mrb[0].mxu0
      %v1894 = vpop.f32.mrb[0].mxu0
      %v1895 = vadd.f32 0.0, %v1894
      %v1896 = vpop.f32.mrb[0].mxu0
      %1897 = vmatprep.mubr.bf16.mxu0 0
      %1898 = vmatmul.mubr.bf16.gmra.mrb[0].mxu0 %v1795
      %v1899 = vpop.f32.mrb[0].mxu0
      %v1900 = vadd.f32 0.0, %v1899
      %v1901 = vpop.f32.mrb[0].mxu0
      %v1902 = vpop.f32.mrb[0].mxu0
      %v1903 = vadd.f32 0.0, %v1902
      %v1904 = vpop.f32.mrb[0].mxu0
      %1905 = vmatprep.mubr.bf16.mxu0 0
      %1906 = vmatmul.mubr.bf16.gmra.mrb[0].mxu0 %v1798
      %v1907 = vpop.f32.mrb[0].mxu0
      %v1908 = vadd.f32 0.0, %v1907
      %v1909 = vpop.f32.mrb[0].mxu0
      %v1910 = vpop.f32.mrb[0].mxu0
      %v1911 = vadd.f32 0.0, %v1910
      %v1912 = vpop.f32.mrb[0].mxu0
      %1913 = vmatprep.mubr.bf16.mxu0 0
      %1914 = vmatmul.mubr.bf16.gmra.mrb[0].mxu0 %v1801
      %v1915 = vpop.f32.mrb[0].mxu0
      %v1916 = vadd.f32 0.0, %v1915
      %v1917 = vpop.f32.mrb[0].mxu0
      %v1918 = vpop.f32.mrb[0].mxu0
      %v1919 = vadd.f32 0.0, %v1918
      %v1920 = vpop.f32.mrb[0].mxu0
      %1921 = vmatprep.mubr.bf16.mxu0 0
      %1922 = vmatmul.mubr.bf16.gmra.mrb[0].mxu0 %v1804
      %v1923 = vpop.f32.mrb[0].mxu0
      %v1924 = vadd.f32 0.0, %v1923
      %v1925 = vpop.f32.mrb[0].mxu0
      %v1926 = vpop.f32.mrb[0].mxu0
      %v1927 = vadd.f32 0.0, %v1926
      %v1928 = vpop.f32.mrb[0].mxu0
      %1929 = vmatprep.mubr.bf16.mxu0 0
      %1930 = vmatmul.mubr.bf16.gmra.mrb[0].mxu0 %v1807
      %v1931 = vpop.f32.mrb[0].mxu0
      %v1932 = vadd.f32 0.0, %v1931
      %v1933 = vpop.f32.mrb[0].mxu0
      %v1934 = vpop.f32.mrb[0].mxu0
      %v1935 = vadd.f32 0.0, %v1934
      %v1936 = vpop.f32.mrb[0].mxu0
      %1937 = vmatprep.mubr.bf16.mxu0 0
      %1938 = vmatmul.mubr.bf16.gmra.mrb[0].mxu0 %v1810
      %v1939 = vpop.f32.mrb[0].mxu0
      %v1940 = vadd.f32 0.0, %v1939
      %v1941 = vpop.f32.mrb[0].mxu0
      %v1942 = vpop.f32.mrb[0].mxu0
      %v1943 = vadd.f32 0.0, %v1942
      %v1944 = vpop.f32.mrb[0].mxu0
      %1945 = vmatprep.mubr.bf16.mxu0 0
      %1946 = vmatmul.mubr.bf16.gmra.mrb[0].mxu0 %v1813
      %v1947 = vpop.f32.mrb[0].mxu0
      %v1948 = vadd.f32 0.0, %v1947
      %v1949 = vpop.f32.mrb[0].mxu0
      %v1950 = vpop.f32.mrb[0].mxu0
      %v1951 = vadd.f32 0.0, %v1950
      %v1952 = vpop.f32.mrb[0].mxu0
      %1953 = vmatprep.mubr.bf16.mxu0 0
      %1954 = vmatmul.mubr.bf16.gmra.mrb[0].mxu0 %v1816
      %v1955 = vpop.f32.mrb[0].mxu0
      %v1956 = vadd.f32 0.0, %v1955
      %v1957 = vpop.f32.mrb[0].mxu0
      %v1958 = vpop.f32.mrb[0].mxu0
      %v1959 = vadd.f32 0.0, %v1958
      %v1960 = vpop.f32.mrb[0].mxu0
      %1961 = vmatprep.mubr.bf16.mxu0 0
      %1962 = vmatmul.mubr.bf16.gmra.mrb[0].mxu0 %v1819
      %v1963 = vpop.f32.mrb[0].mxu0
      %v1964 = vadd.f32 0.0, %v1963
      %v1965 = vpop.f32.mrb[0].mxu0
      %v1966 = vpop.f32.mrb[0].mxu0
      %v1967 = vadd.f32 0.0, %v1966
      %v1968 = vpop.f32.mrb[0].mxu0
      %1969 = vmatprep.mubr.bf16.mxu0 0
      %1970 = vmatmul.mubr.bf16.gmra.mrb[0].mxu0 %v1822
      %v1971 = vpop.f32.mrb[0].mxu0
      %v1972 = vadd.f32 0.0, %v1971
      %v1973 = vpop.f32.mrb[0].mxu0
      %v1974 = vpop.f32.mrb[0].mxu0
      %v1975 = vadd.f32 0.0, %v1974
      %v1976 = vpop.f32.mrb[0].mxu0
      %1977 = vmatprep.mubr.bf16.mxu0 0
      %1978 = vmatmul.mubr.bf16.gmra.mrb[0].mxu0 %v1825
      %v1979 = vpop.f32.mrb[0].mxu0
      %v1980 = vadd.f32 0.0, %v1979
      %v1981 = vpop.f32.mrb[0].mxu0
      %v1982 = vpop.f32.mrb[0].mxu0
      %v1983 = vadd.f32 0.0, %v1982
      %v1984 = vpop.f32.mrb[0].mxu0
      %1985 = vmatprep.mubr.bf16.mxu0 0
      %1986 = vmatmul.mubr.bf16.gmra.mrb[0].mxu0 %v1828
      %v1987 = vpop.f32.mrb[0].mxu0
      %v1988 = vadd.f32 0.0, %v1987
      %v1989 = vpop.f32.mrb[0].mxu0
      %v1990 = vpop.f32.mrb[0].mxu0
      %v1991 = vadd.f32 0.0, %v1990
      %v1992 = vpop.f32.mrb[0].mxu0
      %1993 = vdwg.mxu0
      %v1994 = vadd.f32 %v1632, %v1868
      %v1995 = vadd.f32 %v1633, %v1871
      %v1996 = vadd.f32 %v1634, %v1876
      %v1997 = vadd.f32 %v1635, %v1879
      %v1998 = vadd.f32 %v1636, %v1884
      %v1999 = vadd.f32 %v1637, %v1887
      %v2000 = vadd.f32 %v1638, %v1892
      %v2001 = vadd.f32 %v1639, %v1895
      %v2002 = vadd.f32 %v1640, %v1900
      %v2003 = vadd.f32 %v1641, %v1903
      %v2004 = vadd.f32 %v1642, %v1908
      %v2005 = vadd.f32 %v1643, %v1911
      %v2006 = vadd.f32 %v1644, %v1916
      %v2007 = vadd.f32 %v1645, %v1919
      %v2008 = vadd.f32 %v1646, %v1924
      %v2009 = vadd.f32 %v1647, %v1927
      %v2010 = vadd.f32 %v1648, %v1932
      %v2011 = vadd.f32 %v1649, %v1935
      %v2012 = vadd.f32 %v1650, %v1940
      %v2013 = vadd.f32 %v1651, %v1943
      %v2014 = vadd.f32 %v1652, %v1948
      %v2015 = vadd.f32 %v1653, %v1951
      %v2016 = vadd.f32 %v1654, %v1956
      %v2017 = vadd.f32 %v1655, %v1959
      %v2018 = vadd.f32 %v1656, %v1964
      %v2019 = vadd.f32 %v1657, %v1967
      %v2020 = vadd.f32 %v1658, %v1972
      %v2021 = vadd.f32 %v1659, %v1975
      %v2022 = vadd.f32 %v1660, %v1980
      %v2023 = vadd.f32 %v1661, %v1983
      %v2024 = vadd.f32 %v1662, %v1988
      %v2025 = vadd.f32 %v1663, %v1991
      %v2026 = vld [vmem:[%s1667] sm:$0xf]
      %v2027 = vld [vmem:[%s1667 + $0x4] sm:$0xf]
      %v2028 = vld [vmem:[%s1667 + $0x8] sm:$0x1]
      %v2029 = vld [vmem:[%s1667 + $0xc] sm:$0xf]
      %v2030 = vld [vmem:[%s1667 + $0x10] sm:$0xf]
      %v2031 = vld [vmem:[%s1667 + $0x14] sm:$0x1]
      %v2032 = vld [vmem:[%s1667 + $0x18] sm:$0xf]
      %v2033 = vld [vmem:[%s1667 + $0x1c] sm:$0xf]
      %v2034 = vld [vmem:[%s1667 + $0x20] sm:$0x1]
      %v2035 = vld [vmem:[%s1667 + $0x24] sm:$0xf]
      %v2036 = vld [vmem:[%s1667 + $0x28] sm:$0xf]
      %v2037 = vld [vmem:[%s1667 + $0x2c] sm:$0x1]
      %v2038 = vld [vmem:[%s1667 + $0x30] sm:$0xf]
      %v2039 = vld [vmem:[%s1667 + $0x34] sm:$0xf]
      %v2040 = vld [vmem:[%s1667 + $0x38] sm:$0x1]
      %v2041 = vld [vmem:[%s1667 + $0x3c] sm:$0xf]
      %v2042 = vld [vmem:[%s1667 + $0x40] sm:$0xf]
      %v2043 = vld [vmem:[%s1667 + $0x44] sm:$0x1]
      %v2044 = vld [vmem:[%s1667 + $0x48] sm:$0xf]
      %v2045 = vld [vmem:[%s1667 + $0x4c] sm:$0xf]
      %v2046 = vld [vmem:[%s1667 + $0x50] sm:$0x1]
      %v2047 = vld [vmem:[%s1667 + $0x54] sm:$0xf]
      %v2048 = vld [vmem:[%s1667 + $0x58] sm:$0xf]
      %v2049 = vld [vmem:[%s1667 + $0x5c] sm:$0x1]
      %v2050 = vld [vmem:[%s1667 + $0x60] sm:$0xf]
      %v2051 = vld [vmem:[%s1667 + $0x64] sm:$0xf]
      %v2052 = vld [vmem:[%s1667 + $0x68] sm:$0x1]
      %v2053 = vld [vmem:[%s1667 + $0x6c] sm:$0xf]
      %v2054 = vld [vmem:[%s1667 + $0x70] sm:$0xf]
      %v2055 = vld [vmem:[%s1667 + $0x74] sm:$0x1]
      %v2056 = vld [vmem:[%s1667 + $0x78] sm:$0xf]
      %v2057 = vld [vmem:[%s1667 + $0x7c] sm:$0xf]
      %v2058 = vld [vmem:[%s1667 + $0x80] sm:$0x1]
      %v2059 = vld [vmem:[%s1667 + $0x84] sm:$0xf]
      %v2060 = vld [vmem:[%s1667 + $0x88] sm:$0xf]
      %v2061 = vld [vmem:[%s1667 + $0x8c] sm:$0x1]
      %v2062 = vld [vmem:[%s1667 + $0x90] sm:$0xf]
      %v2063 = vld [vmem:[%s1667 + $0x94] sm:$0xf]
      %v2064 = vld [vmem:[%s1667 + $0x98] sm:$0x1]
      %v2065 = vld [vmem:[%s1667 + $0x9c] sm:$0xf]
      %v2066 = vld [vmem:[%s1667 + $0xa0] sm:$0xf]
      %v2067 = vld [vmem:[%s1667 + $0xa4] sm:$0x1]
      %v2068 = vld [vmem:[%s1667 + $0xa8] sm:$0xf]
      %v2069 = vld [vmem:[%s1667 + $0xac] sm:$0xf]
      %v2070 = vld [vmem:[%s1667 + $0xb0] sm:$0x1]
      %v2071 = vld [vmem:[%s1667 + $0xb4] sm:$0xf]
      %v2072 = vld [vmem:[%s1667 + $0xb8] sm:$0xf]
      %v2073 = vld [vmem:[%s1667 + $0xbc] sm:$0x1]
      %v2075 = vshrl.u32 %v2026, 16
      %v2077 = vrot.slane %v2075, 4
      %v2078 = vshll.u32 %v2026, 16
      %v2080 = vrot.slane %v2078, 5
      %v2081 = vor.u32 %v2077, %v2080
      %v2082 = vrot.slane %v2081, 4
      %v2084 = vshll.u32 %v2027, 16
      %v2086 = vrot.slane %v2084, 5
      %v2087 = vsel %vm266, %v2082, %v2086
      %v2088 = vshrl.u32 %v2027, 16
      %v2090 = vrot.slane %v2088, 4
      %v2091 = vor.u32 %v2090, %v2086
      %v2092 = vrot.slane %v2091, 4
      %v2094 = vshll.u32 %v2028, 16
      %v2096 = vrot.slane %v2094, 5
      %v2097 = vsel %vm266, %v2092, %v2096
      %v2099 = vshrl.u32 %v2029, 16
      %v2101 = vrot.slane %v2099, 4
      %v2102 = vshll.u32 %v2029, 16
      %v2104 = vrot.slane %v2102, 5
      %v2105 = vor.u32 %v2101, %v2104
      %v2106 = vrot.slane %v2105, 4
      %v2108 = vshll.u32 %v2030, 16
      %v2110 = vrot.slane %v2108, 5
      %v2111 = vsel %vm266, %v2106, %v2110
      %v2112 = vshrl.u32 %v2030, 16
      %v2114 = vrot.slane %v2112, 4
      %v2115 = vor.u32 %v2114, %v2110
      %v2116 = vrot.slane %v2115, 4
      %v2118 = vshll.u32 %v2031, 16
      %v2120 = vrot.slane %v2118, 5
      %v2121 = vsel %vm266, %v2116, %v2120
      %v2123 = vshrl.u32 %v2032, 16
      %v2125 = vrot.slane %v2123, 4
      %v2126 = vshll.u32 %v2032, 16
      %v2128 = vrot.slane %v2126, 5
      %v2129 = vor.u32 %v2125, %v2128
      %v2130 = vrot.slane %v2129, 4
      %v2132 = vshll.u32 %v2033, 16
      %v2134 = vrot.slane %v2132, 5
      %v2135 = vsel %vm266, %v2130, %v2134
      %v2136 = vshrl.u32 %v2033, 16
      %v2138 = vrot.slane %v2136, 4
      %v2139 = vor.u32 %v2138, %v2134
      %v2140 = vrot.slane %v2139, 4
      %v2142 = vshll.u32 %v2034, 16
      %v2144 = vrot.slane %v2142, 5
      %v2145 = vsel %vm266, %v2140, %v2144
      %v2147 = vshrl.u32 %v2035, 16
      %v2149 = vrot.slane %v2147, 4
      %v2150 = vshll.u32 %v2035, 16
      %v2152 = vrot.slane %v2150, 5
      %v2153 = vor.u32 %v2149, %v2152
      %v2154 = vrot.slane %v2153, 4
      %v2156 = vshll.u32 %v2036, 16
      %v2158 = vrot.slane %v2156, 5
      %v2159 = vsel %vm266, %v2154, %v2158
      %v2160 = vshrl.u32 %v2036, 16
      %v2162 = vrot.slane %v2160, 4
      %v2163 = vor.u32 %v2162, %v2158
      %v2164 = vrot.slane %v2163, 4
      %v2166 = vshll.u32 %v2037, 16
      %v2168 = vrot.slane %v2166, 5
      %v2169 = vsel %vm266, %v2164, %v2168
      %v2171 = vshrl.u32 %v2038, 16
      %v2173 = vrot.slane %v2171, 4
      %v2174 = vshll.u32 %v2038, 16
      %v2176 = vrot.slane %v2174, 5
      %v2177 = vor.u32 %v2173, %v2176
      %v2178 = vrot.slane %v2177, 4
      %v2180 = vshll.u32 %v2039, 16
      %v2182 = vrot.slane %v2180, 5
      %v2183 = vsel %vm266, %v2178, %v2182
      %v2184 = vshrl.u32 %v2039, 16
      %v2186 = vrot.slane %v2184, 4
      %v2187 = vor.u32 %v2186, %v2182
      %v2188 = vrot.slane %v2187, 4
      %v2190 = vshll.u32 %v2040, 16
      %v2192 = vrot.slane %v2190, 5
      %v2193 = vsel %vm266, %v2188, %v2192
      %v2195 = vshrl.u32 %v2041, 16
      %v2197 = vrot.slane %v2195, 4
      %v2198 = vshll.u32 %v2041, 16
      %v2200 = vrot.slane %v2198, 5
      %v2201 = vor.u32 %v2197, %v2200
      %v2202 = vrot.slane %v2201, 4
      %v2204 = vshll.u32 %v2042, 16
      %v2206 = vrot.slane %v2204, 5
      %v2207 = vsel %vm266, %v2202, %v2206
      %v2208 = vshrl.u32 %v2042, 16
      %v2210 = vrot.slane %v2208, 4
      %v2211 = vor.u32 %v2210, %v2206
      %v2212 = vrot.slane %v2211, 4
      %v2214 = vshll.u32 %v2043, 16
      %v2216 = vrot.slane %v2214, 5
      %v2217 = vsel %vm266, %v2212, %v2216
      %v2219 = vshrl.u32 %v2044, 16
      %v2221 = vrot.slane %v2219, 4
      %v2222 = vshll.u32 %v2044, 16
      %v2224 = vrot.slane %v2222, 5
      %v2225 = vor.u32 %v2221, %v2224
      %v2226 = vrot.slane %v2225, 4
      %v2228 = vshll.u32 %v2045, 16
      %v2230 = vrot.slane %v2228, 5
      %v2231 = vsel %vm266, %v2226, %v2230
      %v2232 = vshrl.u32 %v2045, 16
      %v2234 = vrot.slane %v2232, 4
      %v2235 = vor.u32 %v2234, %v2230
      %v2236 = vrot.slane %v2235, 4
      %v2238 = vshll.u32 %v2046, 16
      %v2240 = vrot.slane %v2238, 5
      %v2241 = vsel %vm266, %v2236, %v2240
      %v2243 = vshrl.u32 %v2047, 16
      %v2245 = vrot.slane %v2243, 4
      %v2246 = vshll.u32 %v2047, 16
      %v2248 = vrot.slane %v2246, 5
      %v2249 = vor.u32 %v2245, %v2248
      %v2250 = vrot.slane %v2249, 4
      %v2252 = vshll.u32 %v2048, 16
      %v2254 = vrot.slane %v2252, 5
      %v2255 = vsel %vm266, %v2250, %v2254
      %v2256 = vshrl.u32 %v2048, 16
      %v2258 = vrot.slane %v2256, 4
      %v2259 = vor.u32 %v2258, %v2254
      %v2260 = vrot.slane %v2259, 4
      %v2262 = vshll.u32 %v2049, 16
      %v2264 = vrot.slane %v2262, 5
      %v2265 = vsel %vm266, %v2260, %v2264
      %v2267 = vshrl.u32 %v2050, 16
      %v2269 = vrot.slane %v2267, 4
      %v2270 = vshll.u32 %v2050, 16
      %v2272 = vrot.slane %v2270, 5
      %v2273 = vor.u32 %v2269, %v2272
      %v2274 = vrot.slane %v2273, 4
      %v2276 = vshll.u32 %v2051, 16
      %v2278 = vrot.slane %v2276, 5
      %v2279 = vsel %vm266, %v2274, %v2278
      %v2280 = vshrl.u32 %v2051, 16
      %v2282 = vrot.slane %v2280, 4
      %v2283 = vor.u32 %v2282, %v2278
      %v2284 = vrot.slane %v2283, 4
      %v2286 = vshll.u32 %v2052, 16
      %v2288 = vrot.slane %v2286, 5
      %v2289 = vsel %vm266, %v2284, %v2288
      %v2291 = vshrl.u32 %v2053, 16
      %v2293 = vrot.slane %v2291, 4
      %v2294 = vshll.u32 %v2053, 16
      %v2296 = vrot.slane %v2294, 5
      %v2297 = vor.u32 %v2293, %v2296
      %v2298 = vrot.slane %v2297, 4
      %v2300 = vshll.u32 %v2054, 16
      %v2302 = vrot.slane %v2300, 5
      %v2303 = vsel %vm266, %v2298, %v2302
      %v2304 = vshrl.u32 %v2054, 16
      %v2306 = vrot.slane %v2304, 4
      %v2307 = vor.u32 %v2306, %v2302
      %v2308 = vrot.slane %v2307, 4
      %v2310 = vshll.u32 %v2055, 16
      %v2312 = vrot.slane %v2310, 5
      %v2313 = vsel %vm266, %v2308, %v2312
      %v2315 = vshrl.u32 %v2056, 16
      %v2317 = vrot.slane %v2315, 4
      %v2318 = vshll.u32 %v2056, 16
      %v2320 = vrot.slane %v2318, 5
      %v2321 = vor.u32 %v2317, %v2320
      %v2322 = vrot.slane %v2321, 4
      %v2324 = vshll.u32 %v2057, 16
      %v2326 = vrot.slane %v2324, 5
      %v2327 = vsel %vm266, %v2322, %v2326
      %v2328 = vshrl.u32 %v2057, 16
      %v2330 = vrot.slane %v2328, 4
      %v2331 = vor.u32 %v2330, %v2326
      %v2332 = vrot.slane %v2331, 4
      %v2334 = vshll.u32 %v2058, 16
      %v2336 = vrot.slane %v2334, 5
      %v2337 = vsel %vm266, %v2332, %v2336
      %v2339 = vshrl.u32 %v2059, 16
      %v2341 = vrot.slane %v2339, 4
      %v2342 = vshll.u32 %v2059, 16
      %v2344 = vrot.slane %v2342, 5
      %v2345 = vor.u32 %v2341, %v2344
      %v2346 = vrot.slane %v2345, 4
      %v2348 = vshll.u32 %v2060, 16
      %v2350 = vrot.slane %v2348, 5
      %v2351 = vsel %vm266, %v2346, %v2350
      %v2352 = vshrl.u32 %v2060, 16
      %v2354 = vrot.slane %v2352, 4
      %v2355 = vor.u32 %v2354, %v2350
      %v2356 = vrot.slane %v2355, 4
      %v2358 = vshll.u32 %v2061, 16
      %v2360 = vrot.slane %v2358, 5
      %v2361 = vsel %vm266, %v2356, %v2360
      %v2363 = vshrl.u32 %v2062, 16
      %v2365 = vrot.slane %v2363, 4
      %v2366 = vshll.u32 %v2062, 16
      %v2368 = vrot.slane %v2366, 5
      %v2369 = vor.u32 %v2365, %v2368
      %v2370 = vrot.slane %v2369, 4
      %v2372 = vshll.u32 %v2063, 16
      %v2374 = vrot.slane %v2372, 5
      %v2375 = vsel %vm266, %v2370, %v2374
      %v2376 = vshrl.u32 %v2063, 16
      %v2378 = vrot.slane %v2376, 4
      %v2379 = vor.u32 %v2378, %v2374
      %v2380 = vrot.slane %v2379, 4
      %v2382 = vshll.u32 %v2064, 16
      %v2384 = vrot.slane %v2382, 5
      %v2385 = vsel %vm266, %v2380, %v2384
      %v2387 = vshrl.u32 %v2065, 16
      %v2389 = vrot.slane %v2387, 4
      %v2390 = vshll.u32 %v2065, 16
      %v2392 = vrot.slane %v2390, 5
      %v2393 = vor.u32 %v2389, %v2392
      %v2394 = vrot.slane %v2393, 4
      %v2396 = vshll.u32 %v2066, 16
      %v2398 = vrot.slane %v2396, 5
      %v2399 = vsel %vm266, %v2394, %v2398
      %v2400 = vshrl.u32 %v2066, 16
      %v2402 = vrot.slane %v2400, 4
      %v2403 = vor.u32 %v2402, %v2398
      %v2404 = vrot.slane %v2403, 4
      %v2406 = vshll.u32 %v2067, 16
      %v2408 = vrot.slane %v2406, 5
      %v2409 = vsel %vm266, %v2404, %v2408
      %v2411 = vshrl.u32 %v2068, 16
      %v2413 = vrot.slane %v2411, 4
      %v2414 = vshll.u32 %v2068, 16
      %v2416 = vrot.slane %v2414, 5
      %v2417 = vor.u32 %v2413, %v2416
      %v2418 = vrot.slane %v2417, 4
      %v2420 = vshll.u32 %v2069, 16
      %v2422 = vrot.slane %v2420, 5
      %v2423 = vsel %vm266, %v2418, %v2422
      %v2424 = vshrl.u32 %v2069, 16
      %v2426 = vrot.slane %v2424, 4
      %v2427 = vor.u32 %v2426, %v2422
      %v2428 = vrot.slane %v2427, 4
      %v2430 = vshll.u32 %v2070, 16
      %v2432 = vrot.slane %v2430, 5
      %v2433 = vsel %vm266, %v2428, %v2432
      %v2435 = vshrl.u32 %v2071, 16
      %v2437 = vrot.slane %v2435, 4
      %v2438 = vshll.u32 %v2071, 16
      %v2440 = vrot.slane %v2438, 5
      %v2441 = vor.u32 %v2437, %v2440
      %v2442 = vrot.slane %v2441, 4
      %v2444 = vshll.u32 %v2072, 16
      %v2446 = vrot.slane %v2444, 5
      %v2447 = vsel %vm266, %v2442, %v2446
      %v2448 = vshrl.u32 %v2072, 16
      %v2450 = vrot.slane %v2448, 4
      %v2451 = vor.u32 %v2450, %v2446
      %v2452 = vrot.slane %v2451, 4
      %v2454 = vshll.u32 %v2073, 16
      %v2456 = vrot.slane %v2454, 5
      %v2457 = vsel %vm266, %v2452, %v2456
      %s2458 = scalar_lea.vmem %s1, 16
      %v2459 = vld [vmem:[%s2458] sm:$0xf]
      %v2460 = vunpack.c.l.b16 %v2087
      %v2461 = vunpack.c.l.b16 %v2097
      %v2462 = vunpack.c.l.b16 %v2111
      %v2463 = vunpack.c.l.b16 %v2121
      %v2464 = vunpack.c.l.b16 %v2135
      %v2465 = vunpack.c.l.b16 %v2145
      %v2466 = vunpack.c.l.b16 %v2159
      %v2467 = vunpack.c.l.b16 %v2169
      %v2468 = vunpack.c.l.b16 %v2183
      %v2469 = vunpack.c.l.b16 %v2193
      %v2470 = vunpack.c.l.b16 %v2207
      %v2471 = vunpack.c.l.b16 %v2217
      %v2472 = vunpack.c.l.b16 %v2231
      %v2473 = vunpack.c.l.b16 %v2241
      %v2474 = vunpack.c.l.b16 %v2255
      %v2475 = vunpack.c.l.b16 %v2265
      %v2476 = vunpack.c.l.b16 %v2279
      %v2477 = vunpack.c.l.b16 %v2289
      %v2478 = vunpack.c.l.b16 %v2303
      %v2479 = vunpack.c.l.b16 %v2313
      %v2480 = vunpack.c.l.b16 %v2327
      %v2481 = vunpack.c.l.b16 %v2337
      %v2482 = vunpack.c.l.b16 %v2351
      %v2483 = vunpack.c.l.b16 %v2361
      %v2484 = vunpack.c.l.b16 %v2375
      %v2485 = vunpack.c.l.b16 %v2385
      %v2486 = vunpack.c.l.b16 %v2399
      %v2487 = vunpack.c.l.b16 %v2409
      %v2488 = vunpack.c.l.b16 %v2423
      %v2489 = vunpack.c.l.b16 %v2433
      %v2490 = vunpack.c.l.b16 %v2447
      %v2491 = vunpack.c.l.b16 %v2457
      %v2492 = vpack.c.b16 %v2461, %v2460
      %v2493 = vpack.c.b16 %v2463, %v2462
      %v2494 = vpack.c.b16 %v2465, %v2464
      %v2495 = vpack.c.b16 %v2467, %v2466
      %v2496 = vpack.c.b16 %v2469, %v2468
      %v2497 = vpack.c.b16 %v2471, %v2470
      %v2498 = vpack.c.b16 %v2473, %v2472
      %v2499 = vpack.c.b16 %v2475, %v2474
      %v2500 = vpack.c.b16 %v2477, %v2476
      %v2501 = vpack.c.b16 %v2479, %v2478
      %v2502 = vpack.c.b16 %v2481, %v2480
      %v2503 = vpack.c.b16 %v2483, %v2482
      %v2504 = vpack.c.b16 %v2485, %v2484
      %v2505 = vpack.c.b16 %v2487, %v2486
      %v2506 = vpack.c.b16 %v2489, %v2488
      %v2507 = vpack.c.b16 %v2491, %v2490
      %v2509 = vsel %vm701, %v2492, 0
      %v2512 = vsel %vm701, %v2493, 0
      %v2515 = vsel %vm701, %v2494, 0
      %v2518 = vsel %vm701, %v2495, 0
      %v2521 = vsel %vm701, %v2496, 0
      %v2524 = vsel %vm701, %v2497, 0
      %v2527 = vsel %vm701, %v2498, 0
      %v2530 = vsel %vm701, %v2499, 0
      %v2533 = vsel %vm701, %v2500, 0
      %v2536 = vsel %vm701, %v2501, 0
      %v2539 = vsel %vm701, %v2502, 0
      %v2542 = vsel %vm701, %v2503, 0
      %v2545 = vsel %vm701, %v2504, 0
      %v2548 = vsel %vm701, %v2505, 0
      %v2551 = vsel %vm701, %v2506, 0
      %v2554 = vsel %vm701, %v2507, 0
      %v2557 = vsel %vm750, %v2459, 0
      %2559 = vmatprep.subr.bf16.mxu0 0
      %2560 = vmatpush1.bf16.msra.mxu0 %v2557
      %2561 = vmatprep.subr.bf16.mxu0 0
      %2562 = vmatpush1.bf16.msra.mxu0 0
      %2563 = vmatprep.subr.bf16.mxu0 0
      %2564 = vmatpush1.bf16.msra.mxu0 0
      %2565 = vmatprep.subr.bf16.mxu0 0
      %2566 = vmatpush1.bf16.msra.mxu0 0
      %2567 = vmatprep.subr.bf16.mxu0 0
      %2568 = vmatpush1.bf16.msra.mxu0 0
      %2569 = vmatprep.subr.bf16.mxu0 0
      %2570 = vmatpush1.bf16.msra.mxu0 0
      %2571 = vmatprep.subr.bf16.mxu0 0
      %2572 = vmatpush1.bf16.msra.mxu0 0
      %2573 = vmatprep.subr.bf16.mxu0 0
      %2574 = vmatpush1.bf16.msra.mxu0 0
      %2575 = vmatprep.subr.bf16.mxu0 0
      %2576 = vmatpush1.bf16.msra.mxu0 0
      %2577 = vmatprep.subr.bf16.mxu0 0
      %2578 = vmatpush1.bf16.msra.mxu0 0
      %2579 = vmatprep.subr.bf16.mxu0 0
      %2580 = vmatpush1.bf16.msra.mxu0 0
      %2581 = vmatprep.subr.bf16.mxu0 0
      %2582 = vmatpush1.bf16.msra.mxu0 0
      %2583 = vmatprep.subr.bf16.mxu0 0
      %2584 = vmatpush1.bf16.msra.mxu0 0
      %2585 = vmatprep.subr.bf16.mxu0 0
      %2586 = vmatpush1.bf16.msra.mxu0 0
      %2587 = vmatprep.subr.bf16.mxu0 0
      %2588 = vmatpush1.bf16.msra.mxu0 0
      %2589 = vmatprep.subr.bf16.mxu0 0
      %2590 = vmatpush1.bf16.msra.mxu0 0
      %2591 = vmatprep.mubr.bf16.mxu0 0
      %2592 = vmatmul.mubr.bf16.gmra.mrb[0].mxu0 %v2509
      %v2593 = vpop.f32.mrb[0].mxu0
      %v2594 = vadd.f32 0.0, %v2593
      %v2595 = vpop.f32.mrb[0].mxu0
      %v2596 = vpop.f32.mrb[0].mxu0
      %v2597 = vadd.f32 0.0, %v2596
      %v2598 = vpop.f32.mrb[0].mxu0
      %2599 = vmatprep.mubr.bf16.mxu0 0
      %2600 = vmatmul.mubr.bf16.gmra.mrb[0].mxu0 %v2512
      %v2601 = vpop.f32.mrb[0].mxu0
      %v2602 = vadd.f32 0.0, %v2601
      %v2603 = vpop.f32.mrb[0].mxu0
      %v2604 = vpop.f32.mrb[0].mxu0
      %v2605 = vadd.f32 0.0, %v2604
      %v2606 = vpop.f32.mrb[0].mxu0
      %2607 = vmatprep.mubr.bf16.mxu0 0
      %2608 = vmatmul.mubr.bf16.gmra.mrb[0].mxu0 %v2515
      %v2609 = vpop.f32.mrb[0].mxu0
      %v2610 = vadd.f32 0.0, %v2609
      %v2611 = vpop.f32.mrb[0].mxu0
      %v2612 = vpop.f32.mrb[0].mxu0
      %v2613 = vadd.f32 0.0, %v2612
      %v2614 = vpop.f32.mrb[0].mxu0
      %2615 = vmatprep.mubr.bf16.mxu0 0
      %2616 = vmatmul.mubr.bf16.gmra.mrb[0].mxu0 %v2518
      %v2617 = vpop.f32.mrb[0].mxu0
      %v2618 = vadd.f32 0.0, %v2617
      %v2619 = vpop.f32.mrb[0].mxu0
      %v2620 = vpop.f32.mrb[0].mxu0
      %v2621 = vadd.f32 0.0, %v2620
      %v2622 = vpop.f32.mrb[0].mxu0
      %2623 = vmatprep.mubr.bf16.mxu0 0
      %2624 = vmatmul.mubr.bf16.gmra.mrb[0].mxu0 %v2521
      %v2625 = vpop.f32.mrb[0].mxu0
      %v2626 = vadd.f32 0.0, %v2625
      %v2627 = vpop.f32.mrb[0].mxu0
      %v2628 = vpop.f32.mrb[0].mxu0
      %v2629 = vadd.f32 0.0, %v2628
      %v2630 = vpop.f32.mrb[0].mxu0
      %2631 = vmatprep.mubr.bf16.mxu0 0
      %2632 = vmatmul.mubr.bf16.gmra.mrb[0].mxu0 %v2524
      %v2633 = vpop.f32.mrb[0].mxu0
      %v2634 = vadd.f32 0.0, %v2633
      %v2635 = vpop.f32.mrb[0].mxu0
      %v2636 = vpop.f32.mrb[0].mxu0
      %v2637 = vadd.f32 0.0, %v2636
      %v2638 = vpop.f32.mrb[0].mxu0
      %2639 = vmatprep.mubr.bf16.mxu0 0
      %2640 = vmatmul.mubr.bf16.gmra.mrb[0].mxu0 %v2527
      %v2641 = vpop.f32.mrb[0].mxu0
      %v2642 = vadd.f32 0.0, %v2641
      %v2643 = vpop.f32.mrb[0].mxu0
      %v2644 = vpop.f32.mrb[0].mxu0
      %v2645 = vadd.f32 0.0, %v2644
      %v2646 = vpop.f32.mrb[0].mxu0
      %2647 = vmatprep.mubr.bf16.mxu0 0
      %2648 = vmatmul.mubr.bf16.gmra.mrb[0].mxu0 %v2530
      %v2649 = vpop.f32.mrb[0].mxu0
      %v2650 = vadd.f32 0.0, %v2649
      %v2651 = vpop.f32.mrb[0].mxu0
      %v2652 = vpop.f32.mrb[0].mxu0
      %v2653 = vadd.f32 0.0, %v2652
      %v2654 = vpop.f32.mrb[0].mxu0
      %2655 = vmatprep.mubr.bf16.mxu0 0
      %2656 = vmatmul.mubr.bf16.gmra.mrb[0].mxu0 %v2533
      %v2657 = vpop.f32.mrb[0].mxu0
      %v2658 = vadd.f32 0.0, %v2657
      %v2659 = vpop.f32.mrb[0].mxu0
      %v2660 = vpop.f32.mrb[0].mxu0
      %v2661 = vadd.f32 0.0, %v2660
      %v2662 = vpop.f32.mrb[0].mxu0
      %2663 = vmatprep.mubr.bf16.mxu0 0
      %2664 = vmatmul.mubr.bf16.gmra.mrb[0].mxu0 %v2536
      %v2665 = vpop.f32.mrb[0].mxu0
      %v2666 = vadd.f32 0.0, %v2665
      %v2667 = vpop.f32.mrb[0].mxu0
      %v2668 = vpop.f32.mrb[0].mxu0
      %v2669 = vadd.f32 0.0, %v2668
      %v2670 = vpop.f32.mrb[0].mxu0
      %2671 = vmatprep.mubr.bf16.mxu0 0
      %2672 = vmatmul.mubr.bf16.gmra.mrb[0].mxu0 %v2539
      %v2673 = vpop.f32.mrb[0].mxu0
      %v2674 = vadd.f32 0.0, %v2673
      %v2675 = vpop.f32.mrb[0].mxu0
      %v2676 = vpop.f32.mrb[0].mxu0
      %v2677 = vadd.f32 0.0, %v2676
      %v2678 = vpop.f32.mrb[0].mxu0
      %2679 = vmatprep.mubr.bf16.mxu0 0
      %2680 = vmatmul.mubr.bf16.gmra.mrb[0].mxu0 %v2542
      %v2681 = vpop.f32.mrb[0].mxu0
      %v2682 = vadd.f32 0.0, %v2681
      %v2683 = vpop.f32.mrb[0].mxu0
      %v2684 = vpop.f32.mrb[0].mxu0
      %v2685 = vadd.f32 0.0, %v2684
      %v2686 = vpop.f32.mrb[0].mxu0
      %2687 = vmatprep.mubr.bf16.mxu0 0
      %2688 = vmatmul.mubr.bf16.gmra.mrb[0].mxu0 %v2545
      %v2689 = vpop.f32.mrb[0].mxu0
      %v2690 = vadd.f32 0.0, %v2689
      %v2691 = vpop.f32.mrb[0].mxu0
      %v2692 = vpop.f32.mrb[0].mxu0
      %v2693 = vadd.f32 0.0, %v2692
      %v2694 = vpop.f32.mrb[0].mxu0
      %2695 = vmatprep.mubr.bf16.mxu0 0
      %2696 = vmatmul.mubr.bf16.gmra.mrb[0].mxu0 %v2548
      %v2697 = vpop.f32.mrb[0].mxu0
      %v2698 = vadd.f32 0.0, %v2697
      %v2699 = vpop.f32.mrb[0].mxu0
      %v2700 = vpop.f32.mrb[0].mxu0
      %v2701 = vadd.f32 0.0, %v2700
      %v2702 = vpop.f32.mrb[0].mxu0
      %2703 = vmatprep.mubr.bf16.mxu0 0
      %2704 = vmatmul.mubr.bf16.gmra.mrb[0].mxu0 %v2551
      %v2705 = vpop.f32.mrb[0].mxu0
      %v2706 = vadd.f32 0.0, %v2705
      %v2707 = vpop.f32.mrb[0].mxu0
      %v2708 = vpop.f32.mrb[0].mxu0
      %v2709 = vadd.f32 0.0, %v2708
      %v2710 = vpop.f32.mrb[0].mxu0
      %2711 = vmatprep.mubr.bf16.mxu0 0
      %2712 = vmatmul.mubr.bf16.gmra.mrb[0].mxu0 %v2554
      %v2713 = vpop.f32.mrb[0].mxu0
      %v2714 = vadd.f32 0.0, %v2713
      %v2715 = vpop.f32.mrb[0].mxu0
      %v2716 = vpop.f32.mrb[0].mxu0
      %v2717 = vadd.f32 0.0, %v2716
      %v2718 = vpop.f32.mrb[0].mxu0
      %2719 = vdwg.mxu0
      %v2720 = vadd.f32 %v1994, %v2594
      %v2721 = vadd.f32 %v1995, %v2597
      %v2722 = vadd.f32 %v1996, %v2602
      %v2723 = vadd.f32 %v1997, %v2605
      %v2724 = vadd.f32 %v1998, %v2610
      %v2725 = vadd.f32 %v1999, %v2613
      %v2726 = vadd.f32 %v2000, %v2618
      %v2727 = vadd.f32 %v2001, %v2621
      %v2728 = vadd.f32 %v2002, %v2626
      %v2729 = vadd.f32 %v2003, %v2629
      %v2730 = vadd.f32 %v2004, %v2634
      %v2731 = vadd.f32 %v2005, %v2637
      %v2732 = vadd.f32 %v2006, %v2642
      %v2733 = vadd.f32 %v2007, %v2645
      %v2734 = vadd.f32 %v2008, %v2650
      %v2735 = vadd.f32 %v2009, %v2653
      %v2736 = vadd.f32 %v2010, %v2658
      %v2737 = vadd.f32 %v2011, %v2661
      %v2738 = vadd.f32 %v2012, %v2666
      %v2739 = vadd.f32 %v2013, %v2669
      %v2740 = vadd.f32 %v2014, %v2674
      %v2741 = vadd.f32 %v2015, %v2677
      %v2742 = vadd.f32 %v2016, %v2682
      %v2743 = vadd.f32 %v2017, %v2685
      %v2744 = vadd.f32 %v2018, %v2690
      %v2745 = vadd.f32 %v2019, %v2693
      %v2746 = vadd.f32 %v2020, %v2698
      %v2747 = vadd.f32 %v2021, %v2701
      %v2748 = vadd.f32 %v2022, %v2706
      %v2749 = vadd.f32 %v2023, %v2709
      %v2750 = vadd.f32 %v2024, %v2714
      %v2751 = vadd.f32 %v2025, %v2717
      %v2752 = vld [vmem:[%s1667] sm:$0xe]
      %v2753 = vld [vmem:[%s1667 + $0xc] sm:$0xe]
      %v2754 = vld [vmem:[%s1667 + $0x18] sm:$0xe]
      %v2755 = vld [vmem:[%s1667 + $0x24] sm:$0xe]
      %v2756 = vld [vmem:[%s1667 + $0x30] sm:$0xe]
      %v2757 = vld [vmem:[%s1667 + $0x3c] sm:$0xe]
      %v2758 = vld [vmem:[%s1667 + $0x48] sm:$0xe]
      %v2759 = vld [vmem:[%s1667 + $0x54] sm:$0xe]
      %v2760 = vld [vmem:[%s1667 + $0x60] sm:$0xe]
      %v2761 = vld [vmem:[%s1667 + $0x6c] sm:$0xe]
      %v2762 = vld [vmem:[%s1667 + $0x78] sm:$0xe]
      %v2763 = vld [vmem:[%s1667 + $0x84] sm:$0xe]
      %v2764 = vld [vmem:[%s1667 + $0x90] sm:$0xe]
      %v2765 = vld [vmem:[%s1667 + $0x9c] sm:$0xe]
      %v2766 = vld [vmem:[%s1667 + $0xa8] sm:$0xe]
      %v2767 = vld [vmem:[%s1667 + $0xb4] sm:$0xe]
      %v2816 = vrot.slane %v2752, 5
      %v2817 = vrot.slane %v2816, 4
      %v2818 = vrot.slane %v2027, 5
      %v2819 = vsel %vm1257, %v2817, %v2818
      %v2820 = vrot.slane %v2818, 4
      %v2821 = vrot.slane %v2028, 5
      %v2822 = vsel %vm1257, %v2820, %v2821
      %v2823 = vrot.slane %v2753, 5
      %v2824 = vrot.slane %v2823, 4
      %v2825 = vrot.slane %v2030, 5
      %v2826 = vsel %vm1257, %v2824, %v2825
      %v2827 = vrot.slane %v2825, 4
      %v2828 = vrot.slane %v2031, 5
      %v2829 = vsel %vm1257, %v2827, %v2828
      %v2830 = vrot.slane %v2754, 5
      %v2831 = vrot.slane %v2830, 4
      %v2832 = vrot.slane %v2033, 5
      %v2833 = vsel %vm1257, %v2831, %v2832
      %v2834 = vrot.slane %v2832, 4
      %v2835 = vrot.slane %v2034, 5
      %v2836 = vsel %vm1257, %v2834, %v2835
      %v2837 = vrot.slane %v2755, 5
      %v2838 = vrot.slane %v2837, 4
      %v2839 = vrot.slane %v2036, 5
      %v2840 = vsel %vm1257, %v2838, %v2839
      %v2841 = vrot.slane %v2839, 4
      %v2842 = vrot.slane %v2037, 5
      %v2843 = vsel %vm1257, %v2841, %v2842
      %v2844 = vrot.slane %v2756, 5
      %v2845 = vrot.slane %v2844, 4
      %v2846 = vrot.slane %v2039, 5
      %v2847 = vsel %vm1257, %v2845, %v2846
      %v2848 = vrot.slane %v2846, 4
      %v2849 = vrot.slane %v2040, 5
      %v2850 = vsel %vm1257, %v2848, %v2849
      %v2851 = vrot.slane %v2757, 5
      %v2852 = vrot.slane %v2851, 4
      %v2853 = vrot.slane %v2042, 5
      %v2854 = vsel %vm1257, %v2852, %v2853
      %v2855 = vrot.slane %v2853, 4
      %v2856 = vrot.slane %v2043, 5
      %v2857 = vsel %vm1257, %v2855, %v2856
      %v2858 = vrot.slane %v2758, 5
      %v2859 = vrot.slane %v2858, 4
      %v2860 = vrot.slane %v2045, 5
      %v2861 = vsel %vm1257, %v2859, %v2860
      %v2862 = vrot.slane %v2860, 4
      %v2863 = vrot.slane %v2046, 5
      %v2864 = vsel %vm1257, %v2862, %v2863
      %v2865 = vrot.slane %v2759, 5
      %v2866 = vrot.slane %v2865, 4
      %v2867 = vrot.slane %v2048, 5
      %v2868 = vsel %vm1257, %v2866, %v2867
      %v2869 = vrot.slane %v2867, 4
      %v2870 = vrot.slane %v2049, 5
      %v2871 = vsel %vm1257, %v2869, %v2870
      %v2872 = vrot.slane %v2760, 5
      %v2873 = vrot.slane %v2872, 4
      %v2874 = vrot.slane %v2051, 5
      %v2875 = vsel %vm1257, %v2873, %v2874
      %v2876 = vrot.slane %v2874, 4
      %v2877 = vrot.slane %v2052, 5
      %v2878 = vsel %vm1257, %v2876, %v2877
      %v2879 = vrot.slane %v2761, 5
      %v2880 = vrot.slane %v2879, 4
      %v2881 = vrot.slane %v2054, 5
      %v2882 = vsel %vm1257, %v2880, %v2881
      %v2883 = vrot.slane %v2881, 4
      %v2884 = vrot.slane %v2055, 5
      %v2885 = vsel %vm1257, %v2883, %v2884
      %v2886 = vrot.slane %v2762, 5
      %v2887 = vrot.slane %v2886, 4
      %v2888 = vrot.slane %v2057, 5
      %v2889 = vsel %vm1257, %v2887, %v2888
      %v2890 = vrot.slane %v2888, 4
      %v2891 = vrot.slane %v2058, 5
      %v2892 = vsel %vm1257, %v2890, %v2891
      %v2893 = vrot.slane %v2763, 5
      %v2894 = vrot.slane %v2893, 4
      %v2895 = vrot.slane %v2060, 5
      %v2896 = vsel %vm1257, %v2894, %v2895
      %v2897 = vrot.slane %v2895, 4
      %v2898 = vrot.slane %v2061, 5
      %v2899 = vsel %vm1257, %v2897, %v2898
      %v2900 = vrot.slane %v2764, 5
      %v2901 = vrot.slane %v2900, 4
      %v2902 = vrot.slane %v2063, 5
      %v2903 = vsel %vm1257, %v2901, %v2902
      %v2904 = vrot.slane %v2902, 4
      %v2905 = vrot.slane %v2064, 5
      %v2906 = vsel %vm1257, %v2904, %v2905
      %v2907 = vrot.slane %v2765, 5
      %v2908 = vrot.slane %v2907, 4
      %v2909 = vrot.slane %v2066, 5
      %v2910 = vsel %vm1257, %v2908, %v2909
      %v2911 = vrot.slane %v2909, 4
      %v2912 = vrot.slane %v2067, 5
      %v2913 = vsel %vm1257, %v2911, %v2912
      %v2914 = vrot.slane %v2766, 5
      %v2915 = vrot.slane %v2914, 4
      %v2916 = vrot.slane %v2069, 5
      %v2917 = vsel %vm1257, %v2915, %v2916
      %v2918 = vrot.slane %v2916, 4
      %v2919 = vrot.slane %v2070, 5
      %v2920 = vsel %vm1257, %v2918, %v2919
      %v2921 = vrot.slane %v2767, 5
      %v2922 = vrot.slane %v2921, 4
      %v2923 = vrot.slane %v2072, 5
      %v2924 = vsel %vm1257, %v2922, %v2923
      %v2925 = vrot.slane %v2923, 4
      %v2926 = vrot.slane %v2073, 5
      %v2927 = vsel %vm1257, %v2925, %v2926
      %s2928 = scalar_lea.vmem %s1, 20
      %v2929 = vld [vmem:[%s2928] sm:$0xf]
      %v2930 = vunpack.c.l.b16 %v2819
      %v2931 = vunpack.c.l.b16 %v2822
      %v2932 = vunpack.c.l.b16 %v2826
      %v2933 = vunpack.c.l.b16 %v2829
      %v2934 = vunpack.c.l.b16 %v2833
      %v2935 = vunpack.c.l.b16 %v2836
      %v2936 = vunpack.c.l.b16 %v2840
      %v2937 = vunpack.c.l.b16 %v2843
      %v2938 = vunpack.c.l.b16 %v2847
      %v2939 = vunpack.c.l.b16 %v2850
      %v2940 = vunpack.c.l.b16 %v2854
      %v2941 = vunpack.c.l.b16 %v2857
      %v2942 = vunpack.c.l.b16 %v2861
      %v2943 = vunpack.c.l.b16 %v2864
      %v2944 = vunpack.c.l.b16 %v2868
      %v2945 = vunpack.c.l.b16 %v2871
      %v2946 = vunpack.c.l.b16 %v2875
      %v2947 = vunpack.c.l.b16 %v2878
      %v2948 = vunpack.c.l.b16 %v2882
      %v2949 = vunpack.c.l.b16 %v2885
      %v2950 = vunpack.c.l.b16 %v2889
      %v2951 = vunpack.c.l.b16 %v2892
      %v2952 = vunpack.c.l.b16 %v2896
      %v2953 = vunpack.c.l.b16 %v2899
      %v2954 = vunpack.c.l.b16 %v2903
      %v2955 = vunpack.c.l.b16 %v2906
      %v2956 = vunpack.c.l.b16 %v2910
      %v2957 = vunpack.c.l.b16 %v2913
      %v2958 = vunpack.c.l.b16 %v2917
      %v2959 = vunpack.c.l.b16 %v2920
      %v2960 = vunpack.c.l.b16 %v2924
      %v2961 = vunpack.c.l.b16 %v2927
      %v2962 = vpack.c.b16 %v2931, %v2930
      %v2963 = vpack.c.b16 %v2933, %v2932
      %v2964 = vpack.c.b16 %v2935, %v2934
      %v2965 = vpack.c.b16 %v2937, %v2936
      %v2966 = vpack.c.b16 %v2939, %v2938
      %v2967 = vpack.c.b16 %v2941, %v2940
      %v2968 = vpack.c.b16 %v2943, %v2942
      %v2969 = vpack.c.b16 %v2945, %v2944
      %v2970 = vpack.c.b16 %v2947, %v2946
      %v2971 = vpack.c.b16 %v2949, %v2948
      %v2972 = vpack.c.b16 %v2951, %v2950
      %v2973 = vpack.c.b16 %v2953, %v2952
      %v2974 = vpack.c.b16 %v2955, %v2954
      %v2975 = vpack.c.b16 %v2957, %v2956
      %v2976 = vpack.c.b16 %v2959, %v2958
      %v2977 = vpack.c.b16 %v2961, %v2960
      %v2979 = vsel %vm701, %v2962, 0
      %v2982 = vsel %vm701, %v2963, 0
      %v2985 = vsel %vm701, %v2964, 0
      %v2988 = vsel %vm701, %v2965, 0
      %v2991 = vsel %vm701, %v2966, 0
      %v2994 = vsel %vm701, %v2967, 0
      %v2997 = vsel %vm701, %v2968, 0
      %v3000 = vsel %vm701, %v2969, 0
      %v3003 = vsel %vm701, %v2970, 0
      %v3006 = vsel %vm701, %v2971, 0
      %v3009 = vsel %vm701, %v2972, 0
      %v3012 = vsel %vm701, %v2973, 0
      %v3015 = vsel %vm701, %v2974, 0
      %v3018 = vsel %vm701, %v2975, 0
      %v3021 = vsel %vm701, %v2976, 0
      %v3024 = vsel %vm701, %v2977, 0
      %v3027 = vsel %vm750, %v2929, 0
      %3029 = vmatprep.subr.bf16.mxu0 0
      %3030 = vmatpush1.bf16.msra.mxu0 %v3027
      %3031 = vmatprep.subr.bf16.mxu0 0
      %3032 = vmatpush1.bf16.msra.mxu0 0
      %3033 = vmatprep.subr.bf16.mxu0 0
      %3034 = vmatpush1.bf16.msra.mxu0 0
      %3035 = vmatprep.subr.bf16.mxu0 0
      %3036 = vmatpush1.bf16.msra.mxu0 0
      %3037 = vmatprep.subr.bf16.mxu0 0
      %3038 = vmatpush1.bf16.msra.mxu0 0
      %3039 = vmatprep.subr.bf16.mxu0 0
      %3040 = vmatpush1.bf16.msra.mxu0 0
      %3041 = vmatprep.subr.bf16.mxu0 0
      %3042 = vmatpush1.bf16.msra.mxu0 0
      %3043 = vmatprep.subr.bf16.mxu0 0
      %3044 = vmatpush1.bf16.msra.mxu0 0
      %3045 = vmatprep.subr.bf16.mxu0 0
      %3046 = vmatpush1.bf16.msra.mxu0 0
      %3047 = vmatprep.subr.bf16.mxu0 0
      %3048 = vmatpush1.bf16.msra.mxu0 0
      %3049 = vmatprep.subr.bf16.mxu0 0
      %3050 = vmatpush1.bf16.msra.mxu0 0
      %3051 = vmatprep.subr.bf16.mxu0 0
      %3052 = vmatpush1.bf16.msra.mxu0 0
      %3053 = vmatprep.subr.bf16.mxu0 0
      %3054 = vmatpush1.bf16.msra.mxu0 0
      %3055 = vmatprep.subr.bf16.mxu0 0
      %3056 = vmatpush1.bf16.msra.mxu0 0
      %3057 = vmatprep.subr.bf16.mxu0 0
      %3058 = vmatpush1.bf16.msra.mxu0 0
      %3059 = vmatprep.subr.bf16.mxu0 0
      %3060 = vmatpush1.bf16.msra.mxu0 0
      %3061 = vmatprep.mubr.bf16.mxu0 0
      %3062 = vmatmul.mubr.bf16.gmra.mrb[0].mxu0 %v2979
      %v3063 = vpop.f32.mrb[0].mxu0
      %v3064 = vadd.f32 0.0, %v3063
      %v3065 = vpop.f32.mrb[0].mxu0
      %v3066 = vpop.f32.mrb[0].mxu0
      %v3067 = vadd.f32 0.0, %v3066
      %v3068 = vpop.f32.mrb[0].mxu0
      %3069 = vmatprep.mubr.bf16.mxu0 0
      %3070 = vmatmul.mubr.bf16.gmra.mrb[0].mxu0 %v2982
      %v3071 = vpop.f32.mrb[0].mxu0
      %v3072 = vadd.f32 0.0, %v3071
      %v3073 = vpop.f32.mrb[0].mxu0
      %v3074 = vpop.f32.mrb[0].mxu0
      %v3075 = vadd.f32 0.0, %v3074
      %v3076 = vpop.f32.mrb[0].mxu0
      %3077 = vmatprep.mubr.bf16.mxu0 0
      %3078 = vmatmul.mubr.bf16.gmra.mrb[0].mxu0 %v2985
      %v3079 = vpop.f32.mrb[0].mxu0
      %v3080 = vadd.f32 0.0, %v3079
      %v3081 = vpop.f32.mrb[0].mxu0
      %v3082 = vpop.f32.mrb[0].mxu0
      %v3083 = vadd.f32 0.0, %v3082
      %v3084 = vpop.f32.mrb[0].mxu0
      %3085 = vmatprep.mubr.bf16.mxu0 0
      %3086 = vmatmul.mubr.bf16.gmra.mrb[0].mxu0 %v2988
      %v3087 = vpop.f32.mrb[0].mxu0
      %v3088 = vadd.f32 0.0, %v3087
      %v3089 = vpop.f32.mrb[0].mxu0
      %v3090 = vpop.f32.mrb[0].mxu0
      %v3091 = vadd.f32 0.0, %v3090
      %v3092 = vpop.f32.mrb[0].mxu0
      %3093 = vmatprep.mubr.bf16.mxu0 0
      %3094 = vmatmul.mubr.bf16.gmra.mrb[0].mxu0 %v2991
      %v3095 = vpop.f32.mrb[0].mxu0
      %v3096 = vadd.f32 0.0, %v3095
      %v3097 = vpop.f32.mrb[0].mxu0
      %v3098 = vpop.f32.mrb[0].mxu0
      %v3099 = vadd.f32 0.0, %v3098
      %v3100 = vpop.f32.mrb[0].mxu0
      %3101 = vmatprep.mubr.bf16.mxu0 0
      %3102 = vmatmul.mubr.bf16.gmra.mrb[0].mxu0 %v2994
      %v3103 = vpop.f32.mrb[0].mxu0
      %v3104 = vadd.f32 0.0, %v3103
      %v3105 = vpop.f32.mrb[0].mxu0
      %v3106 = vpop.f32.mrb[0].mxu0
      %v3107 = vadd.f32 0.0, %v3106
      %v3108 = vpop.f32.mrb[0].mxu0
      %3109 = vmatprep.mubr.bf16.mxu0 0
      %3110 = vmatmul.mubr.bf16.gmra.mrb[0].mxu0 %v2997
      %v3111 = vpop.f32.mrb[0].mxu0
      %v3112 = vadd.f32 0.0, %v3111
      %v3113 = vpop.f32.mrb[0].mxu0
      %v3114 = vpop.f32.mrb[0].mxu0
      %v3115 = vadd.f32 0.0, %v3114
      %v3116 = vpop.f32.mrb[0].mxu0
      %3117 = vmatprep.mubr.bf16.mxu0 0
      %3118 = vmatmul.mubr.bf16.gmra.mrb[0].mxu0 %v3000
      %v3119 = vpop.f32.mrb[0].mxu0
      %v3120 = vadd.f32 0.0, %v3119
      %v3121 = vpop.f32.mrb[0].mxu0
      %v3122 = vpop.f32.mrb[0].mxu0
      %v3123 = vadd.f32 0.0, %v3122
      %v3124 = vpop.f32.mrb[0].mxu0
      %3125 = vmatprep.mubr.bf16.mxu0 0
      %3126 = vmatmul.mubr.bf16.gmra.mrb[0].mxu0 %v3003
      %v3127 = vpop.f32.mrb[0].mxu0
      %v3128 = vadd.f32 0.0, %v3127
      %v3129 = vpop.f32.mrb[0].mxu0
      %v3130 = vpop.f32.mrb[0].mxu0
      %v3131 = vadd.f32 0.0, %v3130
      %v3132 = vpop.f32.mrb[0].mxu0
      %3133 = vmatprep.mubr.bf16.mxu0 0
      %3134 = vmatmul.mubr.bf16.gmra.mrb[0].mxu0 %v3006
      %v3135 = vpop.f32.mrb[0].mxu0
      %v3136 = vadd.f32 0.0, %v3135
      %v3137 = vpop.f32.mrb[0].mxu0
      %v3138 = vpop.f32.mrb[0].mxu0
      %v3139 = vadd.f32 0.0, %v3138
      %v3140 = vpop.f32.mrb[0].mxu0
      %3141 = vmatprep.mubr.bf16.mxu0 0
      %3142 = vmatmul.mubr.bf16.gmra.mrb[0].mxu0 %v3009
      %v3143 = vpop.f32.mrb[0].mxu0
      %v3144 = vadd.f32 0.0, %v3143
      %v3145 = vpop.f32.mrb[0].mxu0
      %v3146 = vpop.f32.mrb[0].mxu0
      %v3147 = vadd.f32 0.0, %v3146
      %v3148 = vpop.f32.mrb[0].mxu0
      %3149 = vmatprep.mubr.bf16.mxu0 0
      %3150 = vmatmul.mubr.bf16.gmra.mrb[0].mxu0 %v3012
      %v3151 = vpop.f32.mrb[0].mxu0
      %v3152 = vadd.f32 0.0, %v3151
      %v3153 = vpop.f32.mrb[0].mxu0
      %v3154 = vpop.f32.mrb[0].mxu0
      %v3155 = vadd.f32 0.0, %v3154
      %v3156 = vpop.f32.mrb[0].mxu0
      %3157 = vmatprep.mubr.bf16.mxu0 0
      %3158 = vmatmul.mubr.bf16.gmra.mrb[0].mxu0 %v3015
      %v3159 = vpop.f32.mrb[0].mxu0
      %v3160 = vadd.f32 0.0, %v3159
      %v3161 = vpop.f32.mrb[0].mxu0
      %v3162 = vpop.f32.mrb[0].mxu0
      %v3163 = vadd.f32 0.0, %v3162
      %v3164 = vpop.f32.mrb[0].mxu0
      %3165 = vmatprep.mubr.bf16.mxu0 0
      %3166 = vmatmul.mubr.bf16.gmra.mrb[0].mxu0 %v3018
      %v3167 = vpop.f32.mrb[0].mxu0
      %v3168 = vadd.f32 0.0, %v3167
      %v3169 = vpop.f32.mrb[0].mxu0
      %v3170 = vpop.f32.mrb[0].mxu0
      %v3171 = vadd.f32 0.0, %v3170
      %v3172 = vpop.f32.mrb[0].mxu0
      %3173 = vmatprep.mubr.bf16.mxu0 0
      %3174 = vmatmul.mubr.bf16.gmra.mrb[0].mxu0 %v3021
      %v3175 = vpop.f32.mrb[0].mxu0
      %v3176 = vadd.f32 0.0, %v3175
      %v3177 = vpop.f32.mrb[0].mxu0
      %v3178 = vpop.f32.mrb[0].mxu0
      %v3179 = vadd.f32 0.0, %v3178
      %v3180 = vpop.f32.mrb[0].mxu0
      %3181 = vmatprep.mubr.bf16.mxu0 0
      %3182 = vmatmul.mubr.bf16.gmra.mrb[0].mxu0 %v3024
      %v3183 = vpop.f32.mrb[0].mxu0
      %v3184 = vadd.f32 0.0, %v3183
      %v3185 = vpop.f32.mrb[0].mxu0
      %v3186 = vpop.f32.mrb[0].mxu0
      %v3187 = vadd.f32 0.0, %v3186
      %v3188 = vpop.f32.mrb[0].mxu0
      %3189 = vdwg.mxu0
      %v3190 = vadd.f32 %v2720, %v3064
      %v3191 = vadd.f32 %v2721, %v3067
      %v3192 = vadd.f32 %v2722, %v3072
      %v3193 = vadd.f32 %v2723, %v3075
      %v3194 = vadd.f32 %v2724, %v3080
      %v3195 = vadd.f32 %v2725, %v3083
      %v3196 = vadd.f32 %v2726, %v3088
      %v3197 = vadd.f32 %v2727, %v3091
      %v3198 = vadd.f32 %v2728, %v3096
      %v3199 = vadd.f32 %v2729, %v3099
      %v3200 = vadd.f32 %v2730, %v3104
      %v3201 = vadd.f32 %v2731, %v3107
      %v3202 = vadd.f32 %v2732, %v3112
      %v3203 = vadd.f32 %v2733, %v3115
      %v3204 = vadd.f32 %v2734, %v3120
      %v3205 = vadd.f32 %v2735, %v3123
      %v3206 = vadd.f32 %v2736, %v3128
      %v3207 = vadd.f32 %v2737, %v3131
      %v3208 = vadd.f32 %v2738, %v3136
      %v3209 = vadd.f32 %v2739, %v3139
      %v3210 = vadd.f32 %v2740, %v3144
      %v3211 = vadd.f32 %v2741, %v3147
      %v3212 = vadd.f32 %v2742, %v3152
      %v3213 = vadd.f32 %v2743, %v3155
      %v3214 = vadd.f32 %v2744, %v3160
      %v3215 = vadd.f32 %v2745, %v3163
      %v3216 = vadd.f32 %v2746, %v3168
      %v3217 = vadd.f32 %v2747, %v3171
      %v3218 = vadd.f32 %v2748, %v3176
      %v3219 = vadd.f32 %v2749, %v3179
      %v3220 = vadd.f32 %v2750, %v3184
      %v3221 = vadd.f32 %v2751, %v3187
      %s3222 = sadd.s32 %s211, 2
      %s3223 = smul.u32 %s3222, 3
      %s3224 = smul.addr %s3223, 4
      %s3225 = scalar_lea.vmem %s193, %s3224
      %v3226 = vld [vmem:[%s3225] sm:$0xf]
      %v3227 = vld [vmem:[%s3225 + $0x4] sm:$0xf]
      %v3228 = vld [vmem:[%s3225 + $0xc] sm:$0xf]
      %v3229 = vld [vmem:[%s3225 + $0x10] sm:$0xf]
      %v3230 = vld [vmem:[%s3225 + $0x18] sm:$0xf]
      %v3231 = vld [vmem:[%s3225 + $0x1c] sm:$0xf]
      %v3232 = vld [vmem:[%s3225 + $0x24] sm:$0xf]
      %v3233 = vld [vmem:[%s3225 + $0x28] sm:$0xf]
      %v3234 = vld [vmem:[%s3225 + $0x30] sm:$0xf]
      %v3235 = vld [vmem:[%s3225 + $0x34] sm:$0xf]
      %v3236 = vld [vmem:[%s3225 + $0x3c] sm:$0xf]
      %v3237 = vld [vmem:[%s3225 + $0x40] sm:$0xf]
      %v3238 = vld [vmem:[%s3225 + $0x48] sm:$0xf]
      %v3239 = vld [vmem:[%s3225 + $0x4c] sm:$0xf]
      %v3240 = vld [vmem:[%s3225 + $0x54] sm:$0xf]
      %v3241 = vld [vmem:[%s3225 + $0x58] sm:$0xf]
      %v3242 = vld [vmem:[%s3225 + $0x60] sm:$0xf]
      %v3243 = vld [vmem:[%s3225 + $0x64] sm:$0xf]
      %v3244 = vld [vmem:[%s3225 + $0x6c] sm:$0xf]
      %v3245 = vld [vmem:[%s3225 + $0x70] sm:$0xf]
      %v3246 = vld [vmem:[%s3225 + $0x78] sm:$0xf]
      %v3247 = vld [vmem:[%s3225 + $0x7c] sm:$0xf]
      %v3248 = vld [vmem:[%s3225 + $0x84] sm:$0xf]
      %v3249 = vld [vmem:[%s3225 + $0x88] sm:$0xf]
      %v3250 = vld [vmem:[%s3225 + $0x90] sm:$0xf]
      %v3251 = vld [vmem:[%s3225 + $0x94] sm:$0xf]
      %v3252 = vld [vmem:[%s3225 + $0x9c] sm:$0xf]
      %v3253 = vld [vmem:[%s3225 + $0xa0] sm:$0xf]
      %v3254 = vld [vmem:[%s3225 + $0xa8] sm:$0xf]
      %v3255 = vld [vmem:[%s3225 + $0xac] sm:$0xf]
      %v3256 = vld [vmem:[%s3225 + $0xb4] sm:$0xf]
      %v3257 = vld [vmem:[%s3225 + $0xb8] sm:$0xf]
      %s3258 = scalar_lea.vmem %s1, 24
      %v3259 = vld [vmem:[%s3258] sm:$0xf]
      %v3292 = vunpack.c.l.b16 %v3226
      %v3293 = vunpack.c.l.b16 %v3227
      %v3294 = vunpack.c.l.b16 %v3228
      %v3295 = vunpack.c.l.b16 %v3229
      %v3296 = vunpack.c.l.b16 %v3230
      %v3297 = vunpack.c.l.b16 %v3231
      %v3298 = vunpack.c.l.b16 %v3232
      %v3299 = vunpack.c.l.b16 %v3233
      %v3300 = vunpack.c.l.b16 %v3234
      %v3301 = vunpack.c.l.b16 %v3235
      %v3302 = vunpack.c.l.b16 %v3236
      %v3303 = vunpack.c.l.b16 %v3237
      %v3304 = vunpack.c.l.b16 %v3238
      %v3305 = vunpack.c.l.b16 %v3239
      %v3306 = vunpack.c.l.b16 %v3240
      %v3307 = vunpack.c.l.b16 %v3241
      %v3308 = vunpack.c.l.b16 %v3242
      %v3309 = vunpack.c.l.b16 %v3243
      %v3310 = vunpack.c.l.b16 %v3244
      %v3311 = vunpack.c.l.b16 %v3245
      %v3312 = vunpack.c.l.b16 %v3246
      %v3313 = vunpack.c.l.b16 %v3247
      %v3314 = vunpack.c.l.b16 %v3248
      %v3315 = vunpack.c.l.b16 %v3249
      %v3316 = vunpack.c.l.b16 %v3250
      %v3317 = vunpack.c.l.b16 %v3251
      %v3318 = vunpack.c.l.b16 %v3252
      %v3319 = vunpack.c.l.b16 %v3253
      %v3320 = vunpack.c.l.b16 %v3254
      %v3321 = vunpack.c.l.b16 %v3255
      %v3322 = vunpack.c.l.b16 %v3256
      %v3323 = vunpack.c.l.b16 %v3257
      %v3324 = vpack.c.b16 %v3293, %v3292
      %v3325 = vpack.c.b16 %v3295, %v3294
      %v3326 = vpack.c.b16 %v3297, %v3296
      %v3327 = vpack.c.b16 %v3299, %v3298
      %v3328 = vpack.c.b16 %v3301, %v3300
      %v3329 = vpack.c.b16 %v3303, %v3302
      %v3330 = vpack.c.b16 %v3305, %v3304
      %v3331 = vpack.c.b16 %v3307, %v3306
      %v3332 = vpack.c.b16 %v3309, %v3308
      %v3333 = vpack.c.b16 %v3311, %v3310
      %v3334 = vpack.c.b16 %v3313, %v3312
      %v3335 = vpack.c.b16 %v3315, %v3314
      %v3336 = vpack.c.b16 %v3317, %v3316
      %v3337 = vpack.c.b16 %v3319, %v3318
      %v3338 = vpack.c.b16 %v3321, %v3320
      %v3339 = vpack.c.b16 %v3323, %v3322
      %v3341 = vsel %vm701, %v3324, 0
      %v3344 = vsel %vm701, %v3325, 0
      %v3347 = vsel %vm701, %v3326, 0
      %v3350 = vsel %vm701, %v3327, 0
      %v3353 = vsel %vm701, %v3328, 0
      %v3356 = vsel %vm701, %v3329, 0
      %v3359 = vsel %vm701, %v3330, 0
      %v3362 = vsel %vm701, %v3331, 0
      %v3365 = vsel %vm701, %v3332, 0
      %v3368 = vsel %vm701, %v3333, 0
      %v3371 = vsel %vm701, %v3334, 0
      %v3374 = vsel %vm701, %v3335, 0
      %v3377 = vsel %vm701, %v3336, 0
      %v3380 = vsel %vm701, %v3337, 0
      %v3383 = vsel %vm701, %v3338, 0
      %v3386 = vsel %vm701, %v3339, 0
      %v3389 = vsel %vm750, %v3259, 0
      %3391 = vmatprep.subr.bf16.mxu0 0
      %3392 = vmatpush1.bf16.msra.mxu0 %v3389
      %3393 = vmatprep.subr.bf16.mxu0 0
      %3394 = vmatpush1.bf16.msra.mxu0 0
      %3395 = vmatprep.subr.bf16.mxu0 0
      %3396 = vmatpush1.bf16.msra.mxu0 0
      %3397 = vmatprep.subr.bf16.mxu0 0
      %3398 = vmatpush1.bf16.msra.mxu0 0
      %3399 = vmatprep.subr.bf16.mxu0 0
      %3400 = vmatpush1.bf16.msra.mxu0 0
      %3401 = vmatprep.subr.bf16.mxu0 0
      %3402 = vmatpush1.bf16.msra.mxu0 0
      %3403 = vmatprep.subr.bf16.mxu0 0
      %3404 = vmatpush1.bf16.msra.mxu0 0
      %3405 = vmatprep.subr.bf16.mxu0 0
      %3406 = vmatpush1.bf16.msra.mxu0 0
      %3407 = vmatprep.subr.bf16.mxu0 0
      %3408 = vmatpush1.bf16.msra.mxu0 0
      %3409 = vmatprep.subr.bf16.mxu0 0
      %3410 = vmatpush1.bf16.msra.mxu0 0
      %3411 = vmatprep.subr.bf16.mxu0 0
      %3412 = vmatpush1.bf16.msra.mxu0 0
      %3413 = vmatprep.subr.bf16.mxu0 0
      %3414 = vmatpush1.bf16.msra.mxu0 0
      %3415 = vmatprep.subr.bf16.mxu0 0
      %3416 = vmatpush1.bf16.msra.mxu0 0
      %3417 = vmatprep.subr.bf16.mxu0 0
      %3418 = vmatpush1.bf16.msra.mxu0 0
      %3419 = vmatprep.subr.bf16.mxu0 0
      %3420 = vmatpush1.bf16.msra.mxu0 0
      %3421 = vmatprep.subr.bf16.mxu0 0
      %3422 = vmatpush1.bf16.msra.mxu0 0
      %3423 = vmatprep.mubr.bf16.mxu0 0
      %3424 = vmatmul.mubr.bf16.gmra.mrb[0].mxu0 %v3341
      %v3425 = vpop.f32.mrb[0].mxu0
      %v3426 = vadd.f32 0.0, %v3425
      %v3427 = vpop.f32.mrb[0].mxu0
      %v3428 = vpop.f32.mrb[0].mxu0
      %v3429 = vadd.f32 0.0, %v3428
      %v3430 = vpop.f32.mrb[0].mxu0
      %3431 = vmatprep.mubr.bf16.mxu0 0
      %3432 = vmatmul.mubr.bf16.gmra.mrb[0].mxu0 %v3344
      %v3433 = vpop.f32.mrb[0].mxu0
      %v3434 = vadd.f32 0.0, %v3433
      %v3435 = vpop.f32.mrb[0].mxu0
      %v3436 = vpop.f32.mrb[0].mxu0
      %v3437 = vadd.f32 0.0, %v3436
      %v3438 = vpop.f32.mrb[0].mxu0
      %3439 = vmatprep.mubr.bf16.mxu0 0
      %3440 = vmatmul.mubr.bf16.gmra.mrb[0].mxu0 %v3347
      %v3441 = vpop.f32.mrb[0].mxu0
      %v3442 = vadd.f32 0.0, %v3441
      %v3443 = vpop.f32.mrb[0].mxu0
      %v3444 = vpop.f32.mrb[0].mxu0
      %v3445 = vadd.f32 0.0, %v3444
      %v3446 = vpop.f32.mrb[0].mxu0
      %3447 = vmatprep.mubr.bf16.mxu0 0
      %3448 = vmatmul.mubr.bf16.gmra.mrb[0].mxu0 %v3350
      %v3449 = vpop.f32.mrb[0].mxu0
      %v3450 = vadd.f32 0.0, %v3449
      %v3451 = vpop.f32.mrb[0].mxu0
      %v3452 = vpop.f32.mrb[0].mxu0
      %v3453 = vadd.f32 0.0, %v3452
      %v3454 = vpop.f32.mrb[0].mxu0
      %3455 = vmatprep.mubr.bf16.mxu0 0
      %3456 = vmatmul.mubr.bf16.gmra.mrb[0].mxu0 %v3353
      %v3457 = vpop.f32.mrb[0].mxu0
      %v3458 = vadd.f32 0.0, %v3457
      %v3459 = vpop.f32.mrb[0].mxu0
      %v3460 = vpop.f32.mrb[0].mxu0
      %v3461 = vadd.f32 0.0, %v3460
      %v3462 = vpop.f32.mrb[0].mxu0
      %3463 = vmatprep.mubr.bf16.mxu0 0
      %3464 = vmatmul.mubr.bf16.gmra.mrb[0].mxu0 %v3356
      %v3465 = vpop.f32.mrb[0].mxu0
      %v3466 = vadd.f32 0.0, %v3465
      %v3467 = vpop.f32.mrb[0].mxu0
      %v3468 = vpop.f32.mrb[0].mxu0
      %v3469 = vadd.f32 0.0, %v3468
      %v3470 = vpop.f32.mrb[0].mxu0
      %3471 = vmatprep.mubr.bf16.mxu0 0
      %3472 = vmatmul.mubr.bf16.gmra.mrb[0].mxu0 %v3359
      %v3473 = vpop.f32.mrb[0].mxu0
      %v3474 = vadd.f32 0.0, %v3473
      %v3475 = vpop.f32.mrb[0].mxu0
      %v3476 = vpop.f32.mrb[0].mxu0
      %v3477 = vadd.f32 0.0, %v3476
      %v3478 = vpop.f32.mrb[0].mxu0
      %3479 = vmatprep.mubr.bf16.mxu0 0
      %3480 = vmatmul.mubr.bf16.gmra.mrb[0].mxu0 %v3362
      %v3481 = vpop.f32.mrb[0].mxu0
      %v3482 = vadd.f32 0.0, %v3481
      %v3483 = vpop.f32.mrb[0].mxu0
      %v3484 = vpop.f32.mrb[0].mxu0
      %v3485 = vadd.f32 0.0, %v3484
      %v3486 = vpop.f32.mrb[0].mxu0
      %3487 = vmatprep.mubr.bf16.mxu0 0
      %3488 = vmatmul.mubr.bf16.gmra.mrb[0].mxu0 %v3365
      %v3489 = vpop.f32.mrb[0].mxu0
      %v3490 = vadd.f32 0.0, %v3489
      %v3491 = vpop.f32.mrb[0].mxu0
      %v3492 = vpop.f32.mrb[0].mxu0
      %v3493 = vadd.f32 0.0, %v3492
      %v3494 = vpop.f32.mrb[0].mxu0
      %3495 = vmatprep.mubr.bf16.mxu0 0
      %3496 = vmatmul.mubr.bf16.gmra.mrb[0].mxu0 %v3368
      %v3497 = vpop.f32.mrb[0].mxu0
      %v3498 = vadd.f32 0.0, %v3497
      %v3499 = vpop.f32.mrb[0].mxu0
      %v3500 = vpop.f32.mrb[0].mxu0
      %v3501 = vadd.f32 0.0, %v3500
      %v3502 = vpop.f32.mrb[0].mxu0
      %3503 = vmatprep.mubr.bf16.mxu0 0
      %3504 = vmatmul.mubr.bf16.gmra.mrb[0].mxu0 %v3371
      %v3505 = vpop.f32.mrb[0].mxu0
      %v3506 = vadd.f32 0.0, %v3505
      %v3507 = vpop.f32.mrb[0].mxu0
      %v3508 = vpop.f32.mrb[0].mxu0
      %v3509 = vadd.f32 0.0, %v3508
      %v3510 = vpop.f32.mrb[0].mxu0
      %3511 = vmatprep.mubr.bf16.mxu0 0
      %3512 = vmatmul.mubr.bf16.gmra.mrb[0].mxu0 %v3374
      %v3513 = vpop.f32.mrb[0].mxu0
      %v3514 = vadd.f32 0.0, %v3513
      %v3515 = vpop.f32.mrb[0].mxu0
      %v3516 = vpop.f32.mrb[0].mxu0
      %v3517 = vadd.f32 0.0, %v3516
      %v3518 = vpop.f32.mrb[0].mxu0
      %3519 = vmatprep.mubr.bf16.mxu0 0
      %3520 = vmatmul.mubr.bf16.gmra.mrb[0].mxu0 %v3377
      %v3521 = vpop.f32.mrb[0].mxu0
      %v3522 = vadd.f32 0.0, %v3521
      %v3523 = vpop.f32.mrb[0].mxu0
      %v3524 = vpop.f32.mrb[0].mxu0
      %v3525 = vadd.f32 0.0, %v3524
      %v3526 = vpop.f32.mrb[0].mxu0
      %3527 = vmatprep.mubr.bf16.mxu0 0
      %3528 = vmatmul.mubr.bf16.gmra.mrb[0].mxu0 %v3380
      %v3529 = vpop.f32.mrb[0].mxu0
      %v3530 = vadd.f32 0.0, %v3529
      %v3531 = vpop.f32.mrb[0].mxu0
      %v3532 = vpop.f32.mrb[0].mxu0
      %v3533 = vadd.f32 0.0, %v3532
      %v3534 = vpop.f32.mrb[0].mxu0
      %3535 = vmatprep.mubr.bf16.mxu0 0
      %3536 = vmatmul.mubr.bf16.gmra.mrb[0].mxu0 %v3383
      %v3537 = vpop.f32.mrb[0].mxu0
      %v3538 = vadd.f32 0.0, %v3537
      %v3539 = vpop.f32.mrb[0].mxu0
      %v3540 = vpop.f32.mrb[0].mxu0
      %v3541 = vadd.f32 0.0, %v3540
      %v3542 = vpop.f32.mrb[0].mxu0
      %3543 = vmatprep.mubr.bf16.mxu0 0
      %3544 = vmatmul.mubr.bf16.gmra.mrb[0].mxu0 %v3386
      %v3545 = vpop.f32.mrb[0].mxu0
      %v3546 = vadd.f32 0.0, %v3545
      %v3547 = vpop.f32.mrb[0].mxu0
      %v3548 = vpop.f32.mrb[0].mxu0
      %v3549 = vadd.f32 0.0, %v3548
      %v3550 = vpop.f32.mrb[0].mxu0
      %3551 = vdwg.mxu0
      %v3552 = vadd.f32 %v3190, %v3426
      %v3553 = vadd.f32 %v3191, %v3429
      %v3554 = vadd.f32 %v3192, %v3434
      %v3555 = vadd.f32 %v3193, %v3437
      %v3556 = vadd.f32 %v3194, %v3442
      %v3557 = vadd.f32 %v3195, %v3445
      %v3558 = vadd.f32 %v3196, %v3450
      %v3559 = vadd.f32 %v3197, %v3453
      %v3560 = vadd.f32 %v3198, %v3458
      %v3561 = vadd.f32 %v3199, %v3461
      %v3562 = vadd.f32 %v3200, %v3466
      %v3563 = vadd.f32 %v3201, %v3469
      %v3564 = vadd.f32 %v3202, %v3474
      %v3565 = vadd.f32 %v3203, %v3477
      %v3566 = vadd.f32 %v3204, %v3482
      %v3567 = vadd.f32 %v3205, %v3485
      %v3568 = vadd.f32 %v3206, %v3490
      %v3569 = vadd.f32 %v3207, %v3493
      %v3570 = vadd.f32 %v3208, %v3498
      %v3571 = vadd.f32 %v3209, %v3501
      %v3572 = vadd.f32 %v3210, %v3506
      %v3573 = vadd.f32 %v3211, %v3509
      %v3574 = vadd.f32 %v3212, %v3514
      %v3575 = vadd.f32 %v3213, %v3517
      %v3576 = vadd.f32 %v3214, %v3522
      %v3577 = vadd.f32 %v3215, %v3525
      %v3578 = vadd.f32 %v3216, %v3530
      %v3579 = vadd.f32 %v3217, %v3533
      %v3580 = vadd.f32 %v3218, %v3538
      %v3581 = vadd.f32 %v3219, %v3541
      %v3582 = vadd.f32 %v3220, %v3546
      %v3583 = vadd.f32 %v3221, %v3549
      %v3584 = vld [vmem:[%s3225] sm:$0xf]
      %v3585 = vld [vmem:[%s3225 + $0x4] sm:$0xf]
      %v3586 = vld [vmem:[%s3225 + $0x8] sm:$0x1]
      %v3587 = vld [vmem:[%s3225 + $0xc] sm:$0xf]
      %v3588 = vld [vmem:[%s3225 + $0x10] sm:$0xf]
      %v3589 = vld [vmem:[%s3225 + $0x14] sm:$0x1]
      %v3590 = vld [vmem:[%s3225 + $0x18] sm:$0xf]
      %v3591 = vld [vmem:[%s3225 + $0x1c] sm:$0xf]
      %v3592 = vld [vmem:[%s3225 + $0x20] sm:$0x1]
      %v3593 = vld [vmem:[%s3225 + $0x24] sm:$0xf]
      %v3594 = vld [vmem:[%s3225 + $0x28] sm:$0xf]
      %v3595 = vld [vmem:[%s3225 + $0x2c] sm:$0x1]
      %v3596 = vld [vmem:[%s3225 + $0x30] sm:$0xf]
      %v3597 = vld [vmem:[%s3225 + $0x34] sm:$0xf]
      %v3598 = vld [vmem:[%s3225 + $0x38] sm:$0x1]
      %v3599 = vld [vmem:[%s3225 + $0x3c] sm:$0xf]
      %v3600 = vld [vmem:[%s3225 + $0x40] sm:$0xf]
      %v3601 = vld [vmem:[%s3225 + $0x44] sm:$0x1]
      %v3602 = vld [vmem:[%s3225 + $0x48] sm:$0xf]
      %v3603 = vld [vmem:[%s3225 + $0x4c] sm:$0xf]
      %v3604 = vld [vmem:[%s3225 + $0x50] sm:$0x1]
      %v3605 = vld [vmem:[%s3225 + $0x54] sm:$0xf]
      %v3606 = vld [vmem:[%s3225 + $0x58] sm:$0xf]
      %v3607 = vld [vmem:[%s3225 + $0x5c] sm:$0x1]
      %v3608 = vld [vmem:[%s3225 + $0x60] sm:$0xf]
      %v3609 = vld [vmem:[%s3225 + $0x64] sm:$0xf]
      %v3610 = vld [vmem:[%s3225 + $0x68] sm:$0x1]
      %v3611 = vld [vmem:[%s3225 + $0x6c] sm:$0xf]
      %v3612 = vld [vmem:[%s3225 + $0x70] sm:$0xf]
      %v3613 = vld [vmem:[%s3225 + $0x74] sm:$0x1]
      %v3614 = vld [vmem:[%s3225 + $0x78] sm:$0xf]
      %v3615 = vld [vmem:[%s3225 + $0x7c] sm:$0xf]
      %v3616 = vld [vmem:[%s3225 + $0x80] sm:$0x1]
      %v3617 = vld [vmem:[%s3225 + $0x84] sm:$0xf]
      %v3618 = vld [vmem:[%s3225 + $0x88] sm:$0xf]
      %v3619 = vld [vmem:[%s3225 + $0x8c] sm:$0x1]
      %v3620 = vld [vmem:[%s3225 + $0x90] sm:$0xf]
      %v3621 = vld [vmem:[%s3225 + $0x94] sm:$0xf]
      %v3622 = vld [vmem:[%s3225 + $0x98] sm:$0x1]
      %v3623 = vld [vmem:[%s3225 + $0x9c] sm:$0xf]
      %v3624 = vld [vmem:[%s3225 + $0xa0] sm:$0xf]
      %v3625 = vld [vmem:[%s3225 + $0xa4] sm:$0x1]
      %v3626 = vld [vmem:[%s3225 + $0xa8] sm:$0xf]
      %v3627 = vld [vmem:[%s3225 + $0xac] sm:$0xf]
      %v3628 = vld [vmem:[%s3225 + $0xb0] sm:$0x1]
      %v3629 = vld [vmem:[%s3225 + $0xb4] sm:$0xf]
      %v3630 = vld [vmem:[%s3225 + $0xb8] sm:$0xf]
      %v3631 = vld [vmem:[%s3225 + $0xbc] sm:$0x1]
      %v3633 = vshrl.u32 %v3584, 16
      %v3635 = vrot.slane %v3633, 4
      %v3636 = vshll.u32 %v3584, 16
      %v3638 = vrot.slane %v3636, 5
      %v3639 = vor.u32 %v3635, %v3638
      %v3640 = vrot.slane %v3639, 4
      %v3642 = vshll.u32 %v3585, 16
      %v3644 = vrot.slane %v3642, 5
      %v3645 = vsel %vm266, %v3640, %v3644
      %v3646 = vshrl.u32 %v3585, 16
      %v3648 = vrot.slane %v3646, 4
      %v3649 = vor.u32 %v3648, %v3644
      %v3650 = vrot.slane %v3649, 4
      %v3652 = vshll.u32 %v3586, 16
      %v3654 = vrot.slane %v3652, 5
      %v3655 = vsel %vm266, %v3650, %v3654
      %v3657 = vshrl.u32 %v3587, 16
      %v3659 = vrot.slane %v3657, 4
      %v3660 = vshll.u32 %v3587, 16
      %v3662 = vrot.slane %v3660, 5
      %v3663 = vor.u32 %v3659, %v3662
      %v3664 = vrot.slane %v3663, 4
      %v3666 = vshll.u32 %v3588, 16
      %v3668 = vrot.slane %v3666, 5
      %v3669 = vsel %vm266, %v3664, %v3668
      %v3670 = vshrl.u32 %v3588, 16
      %v3672 = vrot.slane %v3670, 4
      %v3673 = vor.u32 %v3672, %v3668
      %v3674 = vrot.slane %v3673, 4
      %v3676 = vshll.u32 %v3589, 16
      %v3678 = vrot.slane %v3676, 5
      %v3679 = vsel %vm266, %v3674, %v3678
      %v3681 = vshrl.u32 %v3590, 16
      %v3683 = vrot.slane %v3681, 4
      %v3684 = vshll.u32 %v3590, 16
      %v3686 = vrot.slane %v3684, 5
      %v3687 = vor.u32 %v3683, %v3686
      %v3688 = vrot.slane %v3687, 4
      %v3690 = vshll.u32 %v3591, 16
      %v3692 = vrot.slane %v3690, 5
      %v3693 = vsel %vm266, %v3688, %v3692
      %v3694 = vshrl.u32 %v3591, 16
      %v3696 = vrot.slane %v3694, 4
      %v3697 = vor.u32 %v3696, %v3692
      %v3698 = vrot.slane %v3697, 4
      %v3700 = vshll.u32 %v3592, 16
      %v3702 = vrot.slane %v3700, 5
      %v3703 = vsel %vm266, %v3698, %v3702
      %v3705 = vshrl.u32 %v3593, 16
      %v3707 = vrot.slane %v3705, 4
      %v3708 = vshll.u32 %v3593, 16
      %v3710 = vrot.slane %v3708, 5
      %v3711 = vor.u32 %v3707, %v3710
      %v3712 = vrot.slane %v3711, 4
      %v3714 = vshll.u32 %v3594, 16
      %v3716 = vrot.slane %v3714, 5
      %v3717 = vsel %vm266, %v3712, %v3716
      %v3718 = vshrl.u32 %v3594, 16
      %v3720 = vrot.slane %v3718, 4
      %v3721 = vor.u32 %v3720, %v3716
      %v3722 = vrot.slane %v3721, 4
      %v3724 = vshll.u32 %v3595, 16
      %v3726 = vrot.slane %v3724, 5
      %v3727 = vsel %vm266, %v3722, %v3726
      %v3729 = vshrl.u32 %v3596, 16
      %v3731 = vrot.slane %v3729, 4
      %v3732 = vshll.u32 %v3596, 16
      %v3734 = vrot.slane %v3732, 5
      %v3735 = vor.u32 %v3731, %v3734
      %v3736 = vrot.slane %v3735, 4
      %v3738 = vshll.u32 %v3597, 16
      %v3740 = vrot.slane %v3738, 5
      %v3741 = vsel %vm266, %v3736, %v3740
      %v3742 = vshrl.u32 %v3597, 16
      %v3744 = vrot.slane %v3742, 4
      %v3745 = vor.u32 %v3744, %v3740
      %v3746 = vrot.slane %v3745, 4
      %v3748 = vshll.u32 %v3598, 16
      %v3750 = vrot.slane %v3748, 5
      %v3751 = vsel %vm266, %v3746, %v3750
      %v3753 = vshrl.u32 %v3599, 16
      %v3755 = vrot.slane %v3753, 4
      %v3756 = vshll.u32 %v3599, 16
      %v3758 = vrot.slane %v3756, 5
      %v3759 = vor.u32 %v3755, %v3758
      %v3760 = vrot.slane %v3759, 4
      %v3762 = vshll.u32 %v3600, 16
      %v3764 = vrot.slane %v3762, 5
      %v3765 = vsel %vm266, %v3760, %v3764
      %v3766 = vshrl.u32 %v3600, 16
      %v3768 = vrot.slane %v3766, 4
      %v3769 = vor.u32 %v3768, %v3764
      %v3770 = vrot.slane %v3769, 4
      %v3772 = vshll.u32 %v3601, 16
      %v3774 = vrot.slane %v3772, 5
      %v3775 = vsel %vm266, %v3770, %v3774
      %v3777 = vshrl.u32 %v3602, 16
      %v3779 = vrot.slane %v3777, 4
      %v3780 = vshll.u32 %v3602, 16
      %v3782 = vrot.slane %v3780, 5
      %v3783 = vor.u32 %v3779, %v3782
      %v3784 = vrot.slane %v3783, 4
      %v3786 = vshll.u32 %v3603, 16
      %v3788 = vrot.slane %v3786, 5
      %v3789 = vsel %vm266, %v3784, %v3788
      %v3790 = vshrl.u32 %v3603, 16
      %v3792 = vrot.slane %v3790, 4
      %v3793 = vor.u32 %v3792, %v3788
      %v3794 = vrot.slane %v3793, 4
      %v3796 = vshll.u32 %v3604, 16
      %v3798 = vrot.slane %v3796, 5
      %v3799 = vsel %vm266, %v3794, %v3798
      %v3801 = vshrl.u32 %v3605, 16
      %v3803 = vrot.slane %v3801, 4
      %v3804 = vshll.u32 %v3605, 16
      %v3806 = vrot.slane %v3804, 5
      %v3807 = vor.u32 %v3803, %v3806
      %v3808 = vrot.slane %v3807, 4
      %v3810 = vshll.u32 %v3606, 16
      %v3812 = vrot.slane %v3810, 5
      %v3813 = vsel %vm266, %v3808, %v3812
      %v3814 = vshrl.u32 %v3606, 16
      %v3816 = vrot.slane %v3814, 4
      %v3817 = vor.u32 %v3816, %v3812
      %v3818 = vrot.slane %v3817, 4
      %v3820 = vshll.u32 %v3607, 16
      %v3822 = vrot.slane %v3820, 5
      %v3823 = vsel %vm266, %v3818, %v3822
      %v3825 = vshrl.u32 %v3608, 16
      %v3827 = vrot.slane %v3825, 4
      %v3828 = vshll.u32 %v3608, 16
      %v3830 = vrot.slane %v3828, 5
      %v3831 = vor.u32 %v3827, %v3830
      %v3832 = vrot.slane %v3831, 4
      %v3834 = vshll.u32 %v3609, 16
      %v3836 = vrot.slane %v3834, 5
      %v3837 = vsel %vm266, %v3832, %v3836
      %v3838 = vshrl.u32 %v3609, 16
      %v3840 = vrot.slane %v3838, 4
      %v3841 = vor.u32 %v3840, %v3836
      %v3842 = vrot.slane %v3841, 4
      %v3844 = vshll.u32 %v3610, 16
      %v3846 = vrot.slane %v3844, 5
      %v3847 = vsel %vm266, %v3842, %v3846
      %v3849 = vshrl.u32 %v3611, 16
      %v3851 = vrot.slane %v3849, 4
      %v3852 = vshll.u32 %v3611, 16
      %v3854 = vrot.slane %v3852, 5
      %v3855 = vor.u32 %v3851, %v3854
      %v3856 = vrot.slane %v3855, 4
      %v3858 = vshll.u32 %v3612, 16
      %v3860 = vrot.slane %v3858, 5
      %v3861 = vsel %vm266, %v3856, %v3860
      %v3862 = vshrl.u32 %v3612, 16
      %v3864 = vrot.slane %v3862, 4
      %v3865 = vor.u32 %v3864, %v3860
      %v3866 = vrot.slane %v3865, 4
      %v3868 = vshll.u32 %v3613, 16
      %v3870 = vrot.slane %v3868, 5
      %v3871 = vsel %vm266, %v3866, %v3870
      %v3873 = vshrl.u32 %v3614, 16
      %v3875 = vrot.slane %v3873, 4
      %v3876 = vshll.u32 %v3614, 16
      %v3878 = vrot.slane %v3876, 5
      %v3879 = vor.u32 %v3875, %v3878
      %v3880 = vrot.slane %v3879, 4
      %v3882 = vshll.u32 %v3615, 16
      %v3884 = vrot.slane %v3882, 5
      %v3885 = vsel %vm266, %v3880, %v3884
      %v3886 = vshrl.u32 %v3615, 16
      %v3888 = vrot.slane %v3886, 4
      %v3889 = vor.u32 %v3888, %v3884
      %v3890 = vrot.slane %v3889, 4
      %v3892 = vshll.u32 %v3616, 16
      %v3894 = vrot.slane %v3892, 5
      %v3895 = vsel %vm266, %v3890, %v3894
      %v3897 = vshrl.u32 %v3617, 16
      %v3899 = vrot.slane %v3897, 4
      %v3900 = vshll.u32 %v3617, 16
      %v3902 = vrot.slane %v3900, 5
      %v3903 = vor.u32 %v3899, %v3902
      %v3904 = vrot.slane %v3903, 4
      %v3906 = vshll.u32 %v3618, 16
      %v3908 = vrot.slane %v3906, 5
      %v3909 = vsel %vm266, %v3904, %v3908
      %v3910 = vshrl.u32 %v3618, 16
      %v3912 = vrot.slane %v3910, 4
      %v3913 = vor.u32 %v3912, %v3908
      %v3914 = vrot.slane %v3913, 4
      %v3916 = vshll.u32 %v3619, 16
      %v3918 = vrot.slane %v3916, 5
      %v3919 = vsel %vm266, %v3914, %v3918
      %v3921 = vshrl.u32 %v3620, 16
      %v3923 = vrot.slane %v3921, 4
      %v3924 = vshll.u32 %v3620, 16
      %v3926 = vrot.slane %v3924, 5
      %v3927 = vor.u32 %v3923, %v3926
      %v3928 = vrot.slane %v3927, 4
      %v3930 = vshll.u32 %v3621, 16
      %v3932 = vrot.slane %v3930, 5
      %v3933 = vsel %vm266, %v3928, %v3932
      %v3934 = vshrl.u32 %v3621, 16
      %v3936 = vrot.slane %v3934, 4
      %v3937 = vor.u32 %v3936, %v3932
      %v3938 = vrot.slane %v3937, 4
      %v3940 = vshll.u32 %v3622, 16
      %v3942 = vrot.slane %v3940, 5
      %v3943 = vsel %vm266, %v3938, %v3942
      %v3945 = vshrl.u32 %v3623, 16
      %v3947 = vrot.slane %v3945, 4
      %v3948 = vshll.u32 %v3623, 16
      %v3950 = vrot.slane %v3948, 5
      %v3951 = vor.u32 %v3947, %v3950
      %v3952 = vrot.slane %v3951, 4
      %v3954 = vshll.u32 %v3624, 16
      %v3956 = vrot.slane %v3954, 5
      %v3957 = vsel %vm266, %v3952, %v3956
      %v3958 = vshrl.u32 %v3624, 16
      %v3960 = vrot.slane %v3958, 4
      %v3961 = vor.u32 %v3960, %v3956
      %v3962 = vrot.slane %v3961, 4
      %v3964 = vshll.u32 %v3625, 16
      %v3966 = vrot.slane %v3964, 5
      %v3967 = vsel %vm266, %v3962, %v3966
      %v3969 = vshrl.u32 %v3626, 16
      %v3971 = vrot.slane %v3969, 4
      %v3972 = vshll.u32 %v3626, 16
      %v3974 = vrot.slane %v3972, 5
      %v3975 = vor.u32 %v3971, %v3974
      %v3976 = vrot.slane %v3975, 4
      %v3978 = vshll.u32 %v3627, 16
      %v3980 = vrot.slane %v3978, 5
      %v3981 = vsel %vm266, %v3976, %v3980
      %v3982 = vshrl.u32 %v3627, 16
      %v3984 = vrot.slane %v3982, 4
      %v3985 = vor.u32 %v3984, %v3980
      %v3986 = vrot.slane %v3985, 4
      %v3988 = vshll.u32 %v3628, 16
      %v3990 = vrot.slane %v3988, 5
      %v3991 = vsel %vm266, %v3986, %v3990
      %v3993 = vshrl.u32 %v3629, 16
      %v3995 = vrot.slane %v3993, 4
      %v3996 = vshll.u32 %v3629, 16
      %v3998 = vrot.slane %v3996, 5
      %v3999 = vor.u32 %v3995, %v3998
      %v4000 = vrot.slane %v3999, 4
      %v4002 = vshll.u32 %v3630, 16
      %v4004 = vrot.slane %v4002, 5
      %v4005 = vsel %vm266, %v4000, %v4004
      %v4006 = vshrl.u32 %v3630, 16
      %v4008 = vrot.slane %v4006, 4
      %v4009 = vor.u32 %v4008, %v4004
      %v4010 = vrot.slane %v4009, 4
      %v4012 = vshll.u32 %v3631, 16
      %v4014 = vrot.slane %v4012, 5
      %v4015 = vsel %vm266, %v4010, %v4014
      %s4016 = scalar_lea.vmem %s1, 28
      %v4017 = vld [vmem:[%s4016] sm:$0xf]
      %v4018 = vunpack.c.l.b16 %v3645
      %v4019 = vunpack.c.l.b16 %v3655
      %v4020 = vunpack.c.l.b16 %v3669
      %v4021 = vunpack.c.l.b16 %v3679
      %v4022 = vunpack.c.l.b16 %v3693
      %v4023 = vunpack.c.l.b16 %v3703
      %v4024 = vunpack.c.l.b16 %v3717
      %v4025 = vunpack.c.l.b16 %v3727
      %v4026 = vunpack.c.l.b16 %v3741
      %v4027 = vunpack.c.l.b16 %v3751
      %v4028 = vunpack.c.l.b16 %v3765
      %v4029 = vunpack.c.l.b16 %v3775
      %v4030 = vunpack.c.l.b16 %v3789
      %v4031 = vunpack.c.l.b16 %v3799
      %v4032 = vunpack.c.l.b16 %v3813
      %v4033 = vunpack.c.l.b16 %v3823
      %v4034 = vunpack.c.l.b16 %v3837
      %v4035 = vunpack.c.l.b16 %v3847
      %v4036 = vunpack.c.l.b16 %v3861
      %v4037 = vunpack.c.l.b16 %v3871
      %v4038 = vunpack.c.l.b16 %v3885
      %v4039 = vunpack.c.l.b16 %v3895
      %v4040 = vunpack.c.l.b16 %v3909
      %v4041 = vunpack.c.l.b16 %v3919
      %v4042 = vunpack.c.l.b16 %v3933
      %v4043 = vunpack.c.l.b16 %v3943
      %v4044 = vunpack.c.l.b16 %v3957
      %v4045 = vunpack.c.l.b16 %v3967
      %v4046 = vunpack.c.l.b16 %v3981
      %v4047 = vunpack.c.l.b16 %v3991
      %v4048 = vunpack.c.l.b16 %v4005
      %v4049 = vunpack.c.l.b16 %v4015
      %v4050 = vpack.c.b16 %v4019, %v4018
      %v4051 = vpack.c.b16 %v4021, %v4020
      %v4052 = vpack.c.b16 %v4023, %v4022
      %v4053 = vpack.c.b16 %v4025, %v4024
      %v4054 = vpack.c.b16 %v4027, %v4026
      %v4055 = vpack.c.b16 %v4029, %v4028
      %v4056 = vpack.c.b16 %v4031, %v4030
      %v4057 = vpack.c.b16 %v4033, %v4032
      %v4058 = vpack.c.b16 %v4035, %v4034
      %v4059 = vpack.c.b16 %v4037, %v4036
      %v4060 = vpack.c.b16 %v4039, %v4038
      %v4061 = vpack.c.b16 %v4041, %v4040
      %v4062 = vpack.c.b16 %v4043, %v4042
      %v4063 = vpack.c.b16 %v4045, %v4044
      %v4064 = vpack.c.b16 %v4047, %v4046
      %v4065 = vpack.c.b16 %v4049, %v4048
      %v4067 = vsel %vm701, %v4050, 0
      %v4070 = vsel %vm701, %v4051, 0
      %v4073 = vsel %vm701, %v4052, 0
      %v4076 = vsel %vm701, %v4053, 0
      %v4079 = vsel %vm701, %v4054, 0
      %v4082 = vsel %vm701, %v4055, 0
      %v4085 = vsel %vm701, %v4056, 0
      %v4088 = vsel %vm701, %v4057, 0
      %v4091 = vsel %vm701, %v4058, 0
      %v4094 = vsel %vm701, %v4059, 0
      %v4097 = vsel %vm701, %v4060, 0
      %v4100 = vsel %vm701, %v4061, 0
      %v4103 = vsel %vm701, %v4062, 0
      %v4106 = vsel %vm701, %v4063, 0
      %v4109 = vsel %vm701, %v4064, 0
      %v4112 = vsel %vm701, %v4065, 0
      %v4115 = vsel %vm750, %v4017, 0
      %4117 = vmatprep.subr.bf16.mxu0 0
      %4118 = vmatpush1.bf16.msra.mxu0 %v4115
      %4119 = vmatprep.subr.bf16.mxu0 0
      %4120 = vmatpush1.bf16.msra.mxu0 0
      %4121 = vmatprep.subr.bf16.mxu0 0
      %4122 = vmatpush1.bf16.msra.mxu0 0
      %4123 = vmatprep.subr.bf16.mxu0 0
      %4124 = vmatpush1.bf16.msra.mxu0 0
      %4125 = vmatprep.subr.bf16.mxu0 0
      %4126 = vmatpush1.bf16.msra.mxu0 0
      %4127 = vmatprep.subr.bf16.mxu0 0
      %4128 = vmatpush1.bf16.msra.mxu0 0
      %4129 = vmatprep.subr.bf16.mxu0 0
      %4130 = vmatpush1.bf16.msra.mxu0 0
      %4131 = vmatprep.subr.bf16.mxu0 0
      %4132 = vmatpush1.bf16.msra.mxu0 0
      %4133 = vmatprep.subr.bf16.mxu0 0
      %4134 = vmatpush1.bf16.msra.mxu0 0
      %4135 = vmatprep.subr.bf16.mxu0 0
      %4136 = vmatpush1.bf16.msra.mxu0 0
      %4137 = vmatprep.subr.bf16.mxu0 0
      %4138 = vmatpush1.bf16.msra.mxu0 0
      %4139 = vmatprep.subr.bf16.mxu0 0
      %4140 = vmatpush1.bf16.msra.mxu0 0
      %4141 = vmatprep.subr.bf16.mxu0 0
      %4142 = vmatpush1.bf16.msra.mxu0 0
      %4143 = vmatprep.subr.bf16.mxu0 0
      %4144 = vmatpush1.bf16.msra.mxu0 0
      %4145 = vmatprep.subr.bf16.mxu0 0
      %4146 = vmatpush1.bf16.msra.mxu0 0
      %4147 = vmatprep.subr.bf16.mxu0 0
      %4148 = vmatpush1.bf16.msra.mxu0 0
      %4149 = vmatprep.mubr.bf16.mxu0 0
      %4150 = vmatmul.mubr.bf16.gmra.mrb[0].mxu0 %v4067
      %v4151 = vpop.f32.mrb[0].mxu0
      %v4152 = vadd.f32 0.0, %v4151
      %v4153 = vpop.f32.mrb[0].mxu0
      %v4154 = vpop.f32.mrb[0].mxu0
      %v4155 = vadd.f32 0.0, %v4154
      %v4156 = vpop.f32.mrb[0].mxu0
      %4157 = vmatprep.mubr.bf16.mxu0 0
      %4158 = vmatmul.mubr.bf16.gmra.mrb[0].mxu0 %v4070
      %v4159 = vpop.f32.mrb[0].mxu0
      %v4160 = vadd.f32 0.0, %v4159
      %v4161 = vpop.f32.mrb[0].mxu0
      %v4162 = vpop.f32.mrb[0].mxu0
      %v4163 = vadd.f32 0.0, %v4162
      %v4164 = vpop.f32.mrb[0].mxu0
      %4165 = vmatprep.mubr.bf16.mxu0 0
      %4166 = vmatmul.mubr.bf16.gmra.mrb[0].mxu0 %v4073
      %v4167 = vpop.f32.mrb[0].mxu0
      %v4168 = vadd.f32 0.0, %v4167
      %v4169 = vpop.f32.mrb[0].mxu0
      %v4170 = vpop.f32.mrb[0].mxu0
      %v4171 = vadd.f32 0.0, %v4170
      %v4172 = vpop.f32.mrb[0].mxu0
      %4173 = vmatprep.mubr.bf16.mxu0 0
      %4174 = vmatmul.mubr.bf16.gmra.mrb[0].mxu0 %v4076
      %v4175 = vpop.f32.mrb[0].mxu0
      %v4176 = vadd.f32 0.0, %v4175
      %v4177 = vpop.f32.mrb[0].mxu0
      %v4178 = vpop.f32.mrb[0].mxu0
      %v4179 = vadd.f32 0.0, %v4178
      %v4180 = vpop.f32.mrb[0].mxu0
      %4181 = vmatprep.mubr.bf16.mxu0 0
      %4182 = vmatmul.mubr.bf16.gmra.mrb[0].mxu0 %v4079
      %v4183 = vpop.f32.mrb[0].mxu0
      %v4184 = vadd.f32 0.0, %v4183
      %v4185 = vpop.f32.mrb[0].mxu0
      %v4186 = vpop.f32.mrb[0].mxu0
      %v4187 = vadd.f32 0.0, %v4186
      %v4188 = vpop.f32.mrb[0].mxu0
      %4189 = vmatprep.mubr.bf16.mxu0 0
      %4190 = vmatmul.mubr.bf16.gmra.mrb[0].mxu0 %v4082
      %v4191 = vpop.f32.mrb[0].mxu0
      %v4192 = vadd.f32 0.0, %v4191
      %v4193 = vpop.f32.mrb[0].mxu0
      %v4194 = vpop.f32.mrb[0].mxu0
      %v4195 = vadd.f32 0.0, %v4194
      %v4196 = vpop.f32.mrb[0].mxu0
      %4197 = vmatprep.mubr.bf16.mxu0 0
      %4198 = vmatmul.mubr.bf16.gmra.mrb[0].mxu0 %v4085
      %v4199 = vpop.f32.mrb[0].mxu0
      %v4200 = vadd.f32 0.0, %v4199
      %v4201 = vpop.f32.mrb[0].mxu0
      %v4202 = vpop.f32.mrb[0].mxu0
      %v4203 = vadd.f32 0.0, %v4202
      %v4204 = vpop.f32.mrb[0].mxu0
      %4205 = vmatprep.mubr.bf16.mxu0 0
      %4206 = vmatmul.mubr.bf16.gmra.mrb[0].mxu0 %v4088
      %v4207 = vpop.f32.mrb[0].mxu0
      %v4208 = vadd.f32 0.0, %v4207
      %v4209 = vpop.f32.mrb[0].mxu0
      %v4210 = vpop.f32.mrb[0].mxu0
      %v4211 = vadd.f32 0.0, %v4210
      %v4212 = vpop.f32.mrb[0].mxu0
      %4213 = vmatprep.mubr.bf16.mxu0 0
      %4214 = vmatmul.mubr.bf16.gmra.mrb[0].mxu0 %v4091
      %v4215 = vpop.f32.mrb[0].mxu0
      %v4216 = vadd.f32 0.0, %v4215
      %v4217 = vpop.f32.mrb[0].mxu0
      %v4218 = vpop.f32.mrb[0].mxu0
      %v4219 = vadd.f32 0.0, %v4218
      %v4220 = vpop.f32.mrb[0].mxu0
      %4221 = vmatprep.mubr.bf16.mxu0 0
      %4222 = vmatmul.mubr.bf16.gmra.mrb[0].mxu0 %v4094
      %v4223 = vpop.f32.mrb[0].mxu0
      %v4224 = vadd.f32 0.0, %v4223
      %v4225 = vpop.f32.mrb[0].mxu0
      %v4226 = vpop.f32.mrb[0].mxu0
      %v4227 = vadd.f32 0.0, %v4226
      %v4228 = vpop.f32.mrb[0].mxu0
      %4229 = vmatprep.mubr.bf16.mxu0 0
      %4230 = vmatmul.mubr.bf16.gmra.mrb[0].mxu0 %v4097
      %v4231 = vpop.f32.mrb[0].mxu0
      %v4232 = vadd.f32 0.0, %v4231
      %v4233 = vpop.f32.mrb[0].mxu0
      %v4234 = vpop.f32.mrb[0].mxu0
      %v4235 = vadd.f32 0.0, %v4234
      %v4236 = vpop.f32.mrb[0].mxu0
      %4237 = vmatprep.mubr.bf16.mxu0 0
      %4238 = vmatmul.mubr.bf16.gmra.mrb[0].mxu0 %v4100
      %v4239 = vpop.f32.mrb[0].mxu0
      %v4240 = vadd.f32 0.0, %v4239
      %v4241 = vpop.f32.mrb[0].mxu0
      %v4242 = vpop.f32.mrb[0].mxu0
      %v4243 = vadd.f32 0.0, %v4242
      %v4244 = vpop.f32.mrb[0].mxu0
      %4245 = vmatprep.mubr.bf16.mxu0 0
      %4246 = vmatmul.mubr.bf16.gmra.mrb[0].mxu0 %v4103
      %v4247 = vpop.f32.mrb[0].mxu0
      %v4248 = vadd.f32 0.0, %v4247
      %v4249 = vpop.f32.mrb[0].mxu0
      %v4250 = vpop.f32.mrb[0].mxu0
      %v4251 = vadd.f32 0.0, %v4250
      %v4252 = vpop.f32.mrb[0].mxu0
      %4253 = vmatprep.mubr.bf16.mxu0 0
      %4254 = vmatmul.mubr.bf16.gmra.mrb[0].mxu0 %v4106
      %v4255 = vpop.f32.mrb[0].mxu0
      %v4256 = vadd.f32 0.0, %v4255
      %v4257 = vpop.f32.mrb[0].mxu0
      %v4258 = vpop.f32.mrb[0].mxu0
      %v4259 = vadd.f32 0.0, %v4258
      %v4260 = vpop.f32.mrb[0].mxu0
      %4261 = vmatprep.mubr.bf16.mxu0 0
      %4262 = vmatmul.mubr.bf16.gmra.mrb[0].mxu0 %v4109
      %v4263 = vpop.f32.mrb[0].mxu0
      %v4264 = vadd.f32 0.0, %v4263
      %v4265 = vpop.f32.mrb[0].mxu0
      %v4266 = vpop.f32.mrb[0].mxu0
      %v4267 = vadd.f32 0.0, %v4266
      %v4268 = vpop.f32.mrb[0].mxu0
      %4269 = vmatprep.mubr.bf16.mxu0 0
      %4270 = vmatmul.mubr.bf16.gmra.mrb[0].mxu0 %v4112
      %v4271 = vpop.f32.mrb[0].mxu0
      %v4272 = vadd.f32 0.0, %v4271
      %v4273 = vpop.f32.mrb[0].mxu0
      %v4274 = vpop.f32.mrb[0].mxu0
      %v4275 = vadd.f32 0.0, %v4274
      %v4276 = vpop.f32.mrb[0].mxu0
      %4277 = vdwg.mxu0
      %v4278 = vadd.f32 %v3552, %v4152
      %v4279 = vadd.f32 %v3553, %v4155
      %v4280 = vadd.f32 %v3554, %v4160
      %v4281 = vadd.f32 %v3555, %v4163
      %v4282 = vadd.f32 %v3556, %v4168
      %v4283 = vadd.f32 %v3557, %v4171
      %v4284 = vadd.f32 %v3558, %v4176
      %v4285 = vadd.f32 %v3559, %v4179
      %v4286 = vadd.f32 %v3560, %v4184
      %v4287 = vadd.f32 %v3561, %v4187
      %v4288 = vadd.f32 %v3562, %v4192
      %v4289 = vadd.f32 %v3563, %v4195
      %v4290 = vadd.f32 %v3564, %v4200
      %v4291 = vadd.f32 %v3565, %v4203
      %v4292 = vadd.f32 %v3566, %v4208
      %v4293 = vadd.f32 %v3567, %v4211
      %v4294 = vadd.f32 %v3568, %v4216
      %v4295 = vadd.f32 %v3569, %v4219
      %v4296 = vadd.f32 %v3570, %v4224
      %v4297 = vadd.f32 %v3571, %v4227
      %v4298 = vadd.f32 %v3572, %v4232
      %v4299 = vadd.f32 %v3573, %v4235
      %v4300 = vadd.f32 %v3574, %v4240
      %v4301 = vadd.f32 %v3575, %v4243
      %v4302 = vadd.f32 %v3576, %v4248
      %v4303 = vadd.f32 %v3577, %v4251
      %v4304 = vadd.f32 %v3578, %v4256
      %v4305 = vadd.f32 %v3579, %v4259
      %v4306 = vadd.f32 %v3580, %v4264
      %v4307 = vadd.f32 %v3581, %v4267
      %v4308 = vadd.f32 %v3582, %v4272
      %v4309 = vadd.f32 %v3583, %v4275
      %v4310 = vld [vmem:[%s3225] sm:$0xe]
      %v4311 = vld [vmem:[%s3225 + $0xc] sm:$0xe]
      %v4312 = vld [vmem:[%s3225 + $0x18] sm:$0xe]
      %v4313 = vld [vmem:[%s3225 + $0x24] sm:$0xe]
      %v4314 = vld [vmem:[%s3225 + $0x30] sm:$0xe]
      %v4315 = vld [vmem:[%s3225 + $0x3c] sm:$0xe]
      %v4316 = vld [vmem:[%s3225 + $0x48] sm:$0xe]
      %v4317 = vld [vmem:[%s3225 + $0x54] sm:$0xe]
      %v4318 = vld [vmem:[%s3225 + $0x60] sm:$0xe]
      %v4319 = vld [vmem:[%s3225 + $0x6c] sm:$0xe]
      %v4320 = vld [vmem:[%s3225 + $0x78] sm:$0xe]
      %v4321 = vld [vmem:[%s3225 + $0x84] sm:$0xe]
      %v4322 = vld [vmem:[%s3225 + $0x90] sm:$0xe]
      %v4323 = vld [vmem:[%s3225 + $0x9c] sm:$0xe]
      %v4324 = vld [vmem:[%s3225 + $0xa8] sm:$0xe]
      %v4325 = vld [vmem:[%s3225 + $0xb4] sm:$0xe]
      %v4374 = vrot.slane %v4310, 5
      %v4375 = vrot.slane %v4374, 4
      %v4376 = vrot.slane %v3585, 5
      %v4377 = vsel %vm1257, %v4375, %v4376
      %v4378 = vrot.slane %v4376, 4
      %v4379 = vrot.slane %v3586, 5
      %v4380 = vsel %vm1257, %v4378, %v4379
      %v4381 = vrot.slane %v4311, 5
      %v4382 = vrot.slane %v4381, 4
      %v4383 = vrot.slane %v3588, 5
      %v4384 = vsel %vm1257, %v4382, %v4383
      %v4385 = vrot.slane %v4383, 4
      %v4386 = vrot.slane %v3589, 5
      %v4387 = vsel %vm1257, %v4385, %v4386
      %v4388 = vrot.slane %v4312, 5
      %v4389 = vrot.slane %v4388, 4
      %v4390 = vrot.slane %v3591, 5
      %v4391 = vsel %vm1257, %v4389, %v4390
      %v4392 = vrot.slane %v4390, 4
      %v4393 = vrot.slane %v3592, 5
      %v4394 = vsel %vm1257, %v4392, %v4393
      %v4395 = vrot.slane %v4313, 5
      %v4396 = vrot.slane %v4395, 4
      %v4397 = vrot.slane %v3594, 5
      %v4398 = vsel %vm1257, %v4396, %v4397
      %v4399 = vrot.slane %v4397, 4
      %v4400 = vrot.slane %v3595, 5
      %v4401 = vsel %vm1257, %v4399, %v4400
      %v4402 = vrot.slane %v4314, 5
      %v4403 = vrot.slane %v4402, 4
      %v4404 = vrot.slane %v3597, 5
      %v4405 = vsel %vm1257, %v4403, %v4404
      %v4406 = vrot.slane %v4404, 4
      %v4407 = vrot.slane %v3598, 5
      %v4408 = vsel %vm1257, %v4406, %v4407
      %v4409 = vrot.slane %v4315, 5
      %v4410 = vrot.slane %v4409, 4
      %v4411 = vrot.slane %v3600, 5
      %v4412 = vsel %vm1257, %v4410, %v4411
      %v4413 = vrot.slane %v4411, 4
      %v4414 = vrot.slane %v3601, 5
      %v4415 = vsel %vm1257, %v4413, %v4414
      %v4416 = vrot.slane %v4316, 5
      %v4417 = vrot.slane %v4416, 4
      %v4418 = vrot.slane %v3603, 5
      %v4419 = vsel %vm1257, %v4417, %v4418
      %v4420 = vrot.slane %v4418, 4
      %v4421 = vrot.slane %v3604, 5
      %v4422 = vsel %vm1257, %v4420, %v4421
      %v4423 = vrot.slane %v4317, 5
      %v4424 = vrot.slane %v4423, 4
      %v4425 = vrot.slane %v3606, 5
      %v4426 = vsel %vm1257, %v4424, %v4425
      %v4427 = vrot.slane %v4425, 4
      %v4428 = vrot.slane %v3607, 5
      %v4429 = vsel %vm1257, %v4427, %v4428
      %v4430 = vrot.slane %v4318, 5
      %v4431 = vrot.slane %v4430, 4
      %v4432 = vrot.slane %v3609, 5
      %v4433 = vsel %vm1257, %v4431, %v4432
      %v4434 = vrot.slane %v4432, 4
      %v4435 = vrot.slane %v3610, 5
      %v4436 = vsel %vm1257, %v4434, %v4435
      %v4437 = vrot.slane %v4319, 5
      %v4438 = vrot.slane %v4437, 4
      %v4439 = vrot.slane %v3612, 5
      %v4440 = vsel %vm1257, %v4438, %v4439
      %v4441 = vrot.slane %v4439, 4
      %v4442 = vrot.slane %v3613, 5
      %v4443 = vsel %vm1257, %v4441, %v4442
      %v4444 = vrot.slane %v4320, 5
      %v4445 = vrot.slane %v4444, 4
      %v4446 = vrot.slane %v3615, 5
      %v4447 = vsel %vm1257, %v4445, %v4446
      %v4448 = vrot.slane %v4446, 4
      %v4449 = vrot.slane %v3616, 5
      %v4450 = vsel %vm1257, %v4448, %v4449
      %v4451 = vrot.slane %v4321, 5
      %v4452 = vrot.slane %v4451, 4
      %v4453 = vrot.slane %v3618, 5
      %v4454 = vsel %vm1257, %v4452, %v4453
      %v4455 = vrot.slane %v4453, 4
      %v4456 = vrot.slane %v3619, 5
      %v4457 = vsel %vm1257, %v4455, %v4456
      %v4458 = vrot.slane %v4322, 5
      %v4459 = vrot.slane %v4458, 4
      %v4460 = vrot.slane %v3621, 5
      %v4461 = vsel %vm1257, %v4459, %v4460
      %v4462 = vrot.slane %v4460, 4
      %v4463 = vrot.slane %v3622, 5
      %v4464 = vsel %vm1257, %v4462, %v4463
      %v4465 = vrot.slane %v4323, 5
      %v4466 = vrot.slane %v4465, 4
      %v4467 = vrot.slane %v3624, 5
      %v4468 = vsel %vm1257, %v4466, %v4467
      %v4469 = vrot.slane %v4467, 4
      %v4470 = vrot.slane %v3625, 5
      %v4471 = vsel %vm1257, %v4469, %v4470
      %v4472 = vrot.slane %v4324, 5
      %v4473 = vrot.slane %v4472, 4
      %v4474 = vrot.slane %v3627, 5
      %v4475 = vsel %vm1257, %v4473, %v4474
      %v4476 = vrot.slane %v4474, 4
      %v4477 = vrot.slane %v3628, 5
      %v4478 = vsel %vm1257, %v4476, %v4477
      %v4479 = vrot.slane %v4325, 5
      %v4480 = vrot.slane %v4479, 4
      %v4481 = vrot.slane %v3630, 5
      %v4482 = vsel %vm1257, %v4480, %v4481
      %v4483 = vrot.slane %v4481, 4
      %v4484 = vrot.slane %v3631, 5
      %v4485 = vsel %vm1257, %v4483, %v4484
      %s4486 = scalar_lea.vmem %s1, 32
      %v4487 = vld [vmem:[%s4486] sm:$0xf]
      %v4488 = vunpack.c.l.b16 %v4377
      %v4489 = vunpack.c.l.b16 %v4380
      %v4490 = vunpack.c.l.b16 %v4384
      %v4491 = vunpack.c.l.b16 %v4387
      %v4492 = vunpack.c.l.b16 %v4391
      %v4493 = vunpack.c.l.b16 %v4394
      %v4494 = vunpack.c.l.b16 %v4398
      %v4495 = vunpack.c.l.b16 %v4401
      %v4496 = vunpack.c.l.b16 %v4405
      %v4497 = vunpack.c.l.b16 %v4408
      %v4498 = vunpack.c.l.b16 %v4412
      %v4499 = vunpack.c.l.b16 %v4415
      %v4500 = vunpack.c.l.b16 %v4419
      %v4501 = vunpack.c.l.b16 %v4422
      %v4502 = vunpack.c.l.b16 %v4426
      %v4503 = vunpack.c.l.b16 %v4429
      %v4504 = vunpack.c.l.b16 %v4433
      %v4505 = vunpack.c.l.b16 %v4436
      %v4506 = vunpack.c.l.b16 %v4440
      %v4507 = vunpack.c.l.b16 %v4443
      %v4508 = vunpack.c.l.b16 %v4447
      %v4509 = vunpack.c.l.b16 %v4450
      %v4510 = vunpack.c.l.b16 %v4454
      %v4511 = vunpack.c.l.b16 %v4457
      %v4512 = vunpack.c.l.b16 %v4461
      %v4513 = vunpack.c.l.b16 %v4464
      %v4514 = vunpack.c.l.b16 %v4468
      %v4515 = vunpack.c.l.b16 %v4471
      %v4516 = vunpack.c.l.b16 %v4475
      %v4517 = vunpack.c.l.b16 %v4478
      %v4518 = vunpack.c.l.b16 %v4482
      %v4519 = vunpack.c.l.b16 %v4485
      %v4520 = vpack.c.b16 %v4489, %v4488
      %v4521 = vpack.c.b16 %v4491, %v4490
      %v4522 = vpack.c.b16 %v4493, %v4492
      %v4523 = vpack.c.b16 %v4495, %v4494
      %v4524 = vpack.c.b16 %v4497, %v4496
      %v4525 = vpack.c.b16 %v4499, %v4498
      %v4526 = vpack.c.b16 %v4501, %v4500
      %v4527 = vpack.c.b16 %v4503, %v4502
      %v4528 = vpack.c.b16 %v4505, %v4504
      %v4529 = vpack.c.b16 %v4507, %v4506
      %v4530 = vpack.c.b16 %v4509, %v4508
      %v4531 = vpack.c.b16 %v4511, %v4510
      %v4532 = vpack.c.b16 %v4513, %v4512
      %v4533 = vpack.c.b16 %v4515, %v4514
      %v4534 = vpack.c.b16 %v4517, %v4516
      %v4535 = vpack.c.b16 %v4519, %v4518
      %v4537 = vsel %vm701, %v4520, 0
      %v4540 = vsel %vm701, %v4521, 0
      %v4543 = vsel %vm701, %v4522, 0
      %v4546 = vsel %vm701, %v4523, 0
      %v4549 = vsel %vm701, %v4524, 0
      %v4552 = vsel %vm701, %v4525, 0
      %v4555 = vsel %vm701, %v4526, 0
      %v4558 = vsel %vm701, %v4527, 0
      %v4561 = vsel %vm701, %v4528, 0
      %v4564 = vsel %vm701, %v4529, 0
      %v4567 = vsel %vm701, %v4530, 0
      %v4570 = vsel %vm701, %v4531, 0
      %v4573 = vsel %vm701, %v4532, 0
      %v4576 = vsel %vm701, %v4533, 0
      %v4579 = vsel %vm701, %v4534, 0
      %v4582 = vsel %vm701, %v4535, 0
      %v4585 = vsel %vm750, %v4487, 0
      %4587 = vmatprep.subr.bf16.mxu0 0
      %4588 = vmatpush1.bf16.msra.mxu0 %v4585
      %4589 = vmatprep.subr.bf16.mxu0 0
      %4590 = vmatpush1.bf16.msra.mxu0 0
      %4591 = vmatprep.subr.bf16.mxu0 0
      %4592 = vmatpush1.bf16.msra.mxu0 0
      %4593 = vmatprep.subr.bf16.mxu0 0
      %4594 = vmatpush1.bf16.msra.mxu0 0
      %4595 = vmatprep.subr.bf16.mxu0 0
      %4596 = vmatpush1.bf16.msra.mxu0 0
      %4597 = vmatprep.subr.bf16.mxu0 0
      %4598 = vmatpush1.bf16.msra.mxu0 0
      %4599 = vmatprep.subr.bf16.mxu0 0
      %4600 = vmatpush1.bf16.msra.mxu0 0
      %4601 = vmatprep.subr.bf16.mxu0 0
      %4602 = vmatpush1.bf16.msra.mxu0 0
      %4603 = vmatprep.subr.bf16.mxu0 0
      %4604 = vmatpush1.bf16.msra.mxu0 0
      %4605 = vmatprep.subr.bf16.mxu0 0
      %4606 = vmatpush1.bf16.msra.mxu0 0
      %4607 = vmatprep.subr.bf16.mxu0 0
      %4608 = vmatpush1.bf16.msra.mxu0 0
      %4609 = vmatprep.subr.bf16.mxu0 0
      %4610 = vmatpush1.bf16.msra.mxu0 0
      %4611 = vmatprep.subr.bf16.mxu0 0
      %4612 = vmatpush1.bf16.msra.mxu0 0
      %4613 = vmatprep.subr.bf16.mxu0 0
      %4614 = vmatpush1.bf16.msra.mxu0 0
      %4615 = vmatprep.subr.bf16.mxu0 0
      %4616 = vmatpush1.bf16.msra.mxu0 0
      %4617 = vmatprep.subr.bf16.mxu0 0
      %4618 = vmatpush1.bf16.msra.mxu0 0
      %4619 = vmatprep.mubr.bf16.mxu0 0
      %4620 = vmatmul.mubr.bf16.gmra.mrb[0].mxu0 %v4537
      %v4621 = vpop.f32.mrb[0].mxu0
      %v4622 = vadd.f32 0.0, %v4621
      %v4623 = vpop.f32.mrb[0].mxu0
      %v4624 = vpop.f32.mrb[0].mxu0
      %v4625 = vadd.f32 0.0, %v4624
      %v4626 = vpop.f32.mrb[0].mxu0
      %4627 = vmatprep.mubr.bf16.mxu0 0
      %4628 = vmatmul.mubr.bf16.gmra.mrb[0].mxu0 %v4540
      %v4629 = vpop.f32.mrb[0].mxu0
      %v4630 = vadd.f32 0.0, %v4629
      %v4631 = vpop.f32.mrb[0].mxu0
      %v4632 = vpop.f32.mrb[0].mxu0
      %v4633 = vadd.f32 0.0, %v4632
      %v4634 = vpop.f32.mrb[0].mxu0
      %4635 = vmatprep.mubr.bf16.mxu0 0
      %4636 = vmatmul.mubr.bf16.gmra.mrb[0].mxu0 %v4543
      %v4637 = vpop.f32.mrb[0].mxu0
      %v4638 = vadd.f32 0.0, %v4637
      %v4639 = vpop.f32.mrb[0].mxu0
      %v4640 = vpop.f32.mrb[0].mxu0
      %v4641 = vadd.f32 0.0, %v4640
      %v4642 = vpop.f32.mrb[0].mxu0
      %4643 = vmatprep.mubr.bf16.mxu0 0
      %4644 = vmatmul.mubr.bf16.gmra.mrb[0].mxu0 %v4546
      %v4645 = vpop.f32.mrb[0].mxu0
      %v4646 = vadd.f32 0.0, %v4645
      %v4647 = vpop.f32.mrb[0].mxu0
      %v4648 = vpop.f32.mrb[0].mxu0
      %v4649 = vadd.f32 0.0, %v4648
      %v4650 = vpop.f32.mrb[0].mxu0
      %4651 = vmatprep.mubr.bf16.mxu0 0
      %4652 = vmatmul.mubr.bf16.gmra.mrb[0].mxu0 %v4549
      %v4653 = vpop.f32.mrb[0].mxu0
      %v4654 = vadd.f32 0.0, %v4653
      %v4655 = vpop.f32.mrb[0].mxu0
      %v4656 = vpop.f32.mrb[0].mxu0
      %v4657 = vadd.f32 0.0, %v4656
      %v4658 = vpop.f32.mrb[0].mxu0
      %4659 = vmatprep.mubr.bf16.mxu0 0
      %4660 = vmatmul.mubr.bf16.gmra.mrb[0].mxu0 %v4552
      %v4661 = vpop.f32.mrb[0].mxu0
      %v4662 = vadd.f32 0.0, %v4661
      %v4663 = vpop.f32.mrb[0].mxu0
      %v4664 = vpop.f32.mrb[0].mxu0
      %v4665 = vadd.f32 0.0, %v4664
      %v4666 = vpop.f32.mrb[0].mxu0
      %4667 = vmatprep.mubr.bf16.mxu0 0
      %4668 = vmatmul.mubr.bf16.gmra.mrb[0].mxu0 %v4555
      %v4669 = vpop.f32.mrb[0].mxu0
      %v4670 = vadd.f32 0.0, %v4669
      %v4671 = vpop.f32.mrb[0].mxu0
      %v4672 = vpop.f32.mrb[0].mxu0
      %v4673 = vadd.f32 0.0, %v4672
      %v4674 = vpop.f32.mrb[0].mxu0
      %4675 = vmatprep.mubr.bf16.mxu0 0
      %4676 = vmatmul.mubr.bf16.gmra.mrb[0].mxu0 %v4558
      %v4677 = vpop.f32.mrb[0].mxu0
      %v4678 = vadd.f32 0.0, %v4677
      %v4679 = vpop.f32.mrb[0].mxu0
      %v4680 = vpop.f32.mrb[0].mxu0
      %v4681 = vadd.f32 0.0, %v4680
      %v4682 = vpop.f32.mrb[0].mxu0
      %4683 = vmatprep.mubr.bf16.mxu0 0
      %4684 = vmatmul.mubr.bf16.gmra.mrb[0].mxu0 %v4561
      %v4685 = vpop.f32.mrb[0].mxu0
      %v4686 = vadd.f32 0.0, %v4685
      %v4687 = vpop.f32.mrb[0].mxu0
      %v4688 = vpop.f32.mrb[0].mxu0
      %v4689 = vadd.f32 0.0, %v4688
      %v4690 = vpop.f32.mrb[0].mxu0
      %4691 = vmatprep.mubr.bf16.mxu0 0
      %4692 = vmatmul.mubr.bf16.gmra.mrb[0].mxu0 %v4564
      %v4693 = vpop.f32.mrb[0].mxu0
      %v4694 = vadd.f32 0.0, %v4693
      %v4695 = vpop.f32.mrb[0].mxu0
      %v4696 = vpop.f32.mrb[0].mxu0
      %v4697 = vadd.f32 0.0, %v4696
      %v4698 = vpop.f32.mrb[0].mxu0
      %4699 = vmatprep.mubr.bf16.mxu0 0
      %4700 = vmatmul.mubr.bf16.gmra.mrb[0].mxu0 %v4567
      %v4701 = vpop.f32.mrb[0].mxu0
      %v4702 = vadd.f32 0.0, %v4701
      %v4703 = vpop.f32.mrb[0].mxu0
      %v4704 = vpop.f32.mrb[0].mxu0
      %v4705 = vadd.f32 0.0, %v4704
      %v4706 = vpop.f32.mrb[0].mxu0
      %4707 = vmatprep.mubr.bf16.mxu0 0
      %4708 = vmatmul.mubr.bf16.gmra.mrb[0].mxu0 %v4570
      %v4709 = vpop.f32.mrb[0].mxu0
      %v4710 = vadd.f32 0.0, %v4709
      %v4711 = vpop.f32.mrb[0].mxu0
      %v4712 = vpop.f32.mrb[0].mxu0
      %v4713 = vadd.f32 0.0, %v4712
      %v4714 = vpop.f32.mrb[0].mxu0
      %4715 = vmatprep.mubr.bf16.mxu0 0
      %4716 = vmatmul.mubr.bf16.gmra.mrb[0].mxu0 %v4573
      %v4717 = vpop.f32.mrb[0].mxu0
      %v4718 = vadd.f32 0.0, %v4717
      %v4719 = vpop.f32.mrb[0].mxu0
      %v4720 = vpop.f32.mrb[0].mxu0
      %v4721 = vadd.f32 0.0, %v4720
      %v4722 = vpop.f32.mrb[0].mxu0
      %4723 = vmatprep.mubr.bf16.mxu0 0
      %4724 = vmatmul.mubr.bf16.gmra.mrb[0].mxu0 %v4576
      %v4725 = vpop.f32.mrb[0].mxu0
      %v4726 = vadd.f32 0.0, %v4725
      %v4727 = vpop.f32.mrb[0].mxu0
      %v4728 = vpop.f32.mrb[0].mxu0
      %v4729 = vadd.f32 0.0, %v4728
      %v4730 = vpop.f32.mrb[0].mxu0
      %4731 = vmatprep.mubr.bf16.mxu0 0
      %4732 = vmatmul.mubr.bf16.gmra.mrb[0].mxu0 %v4579
      %v4733 = vpop.f32.mrb[0].mxu0
      %v4734 = vadd.f32 0.0, %v4733
      %v4735 = vpop.f32.mrb[0].mxu0
      %v4736 = vpop.f32.mrb[0].mxu0
      %v4737 = vadd.f32 0.0, %v4736
      %v4738 = vpop.f32.mrb[0].mxu0
      %4739 = vmatprep.mubr.bf16.mxu0 0
      %4740 = vmatmul.mubr.bf16.gmra.mrb[0].mxu0 %v4582
      %v4741 = vpop.f32.mrb[0].mxu0
      %v4742 = vadd.f32 0.0, %v4741
      %v4743 = vpop.f32.mrb[0].mxu0
      %v4744 = vpop.f32.mrb[0].mxu0
      %v4745 = vadd.f32 0.0, %v4744
      %v4746 = vpop.f32.mrb[0].mxu0
      %4747 = vdwg.mxu0
      %v4748 = vadd.f32 %v4278, %v4622
      %v4749 = vadd.f32 %v4279, %v4625
      %v4750 = vadd.f32 %v4280, %v4630
      %v4751 = vadd.f32 %v4281, %v4633
      %v4752 = vadd.f32 %v4282, %v4638
      %v4753 = vadd.f32 %v4283, %v4641
      %v4754 = vadd.f32 %v4284, %v4646
      %v4755 = vadd.f32 %v4285, %v4649
      %v4756 = vadd.f32 %v4286, %v4654
      %v4757 = vadd.f32 %v4287, %v4657
      %v4758 = vadd.f32 %v4288, %v4662
      %v4759 = vadd.f32 %v4289, %v4665
      %v4760 = vadd.f32 %v4290, %v4670
      %v4761 = vadd.f32 %v4291, %v4673
      %v4762 = vadd.f32 %v4292, %v4678
      %v4763 = vadd.f32 %v4293, %v4681
      %v4764 = vadd.f32 %v4294, %v4686
      %v4765 = vadd.f32 %v4295, %v4689
      %v4766 = vadd.f32 %v4296, %v4694
      %v4767 = vadd.f32 %v4297, %v4697
      %v4768 = vadd.f32 %v4298, %v4702
      %v4769 = vadd.f32 %v4299, %v4705
      %v4770 = vadd.f32 %v4300, %v4710
      %v4771 = vadd.f32 %v4301, %v4713
      %v4772 = vadd.f32 %v4302, %v4718
      %v4773 = vadd.f32 %v4303, %v4721
      %v4774 = vadd.f32 %v4304, %v4726
      %v4775 = vadd.f32 %v4305, %v4729
      %v4776 = vadd.f32 %v4306, %v4734
      %v4777 = vadd.f32 %v4307, %v4737
      %v4778 = vadd.f32 %v4308, %v4742
      %v4779 = vadd.f32 %v4309, %v4745
      %4780 = vst [vmem:[%s202] sm:$0xff] %v4748
      %4781 = vst [vmem:[%s202 + $0x8] sm:$0xff] %v4749
      %4782 = vst [vmem:[%s202 + $0x10] sm:$0xff] %v4750
      %4783 = vst [vmem:[%s202 + $0x18] sm:$0xff] %v4751
      %4784 = vst [vmem:[%s202 + $0x20] sm:$0xff] %v4752
      %4785 = vst [vmem:[%s202 + $0x28] sm:$0xff] %v4753
      %4786 = vst [vmem:[%s202 + $0x30] sm:$0xff] %v4754
      %4787 = vst [vmem:[%s202 + $0x38] sm:$0xff] %v4755
      %4788 = vst [vmem:[%s202 + $0x40] sm:$0xff] %v4756
      %4789 = vst [vmem:[%s202 + $0x48] sm:$0xff] %v4757
      %4790 = vst [vmem:[%s202 + $0x50] sm:$0xff] %v4758
      %4791 = vst [vmem:[%s202 + $0x58] sm:$0xff] %v4759
      %4792 = vst [vmem:[%s202 + $0x60] sm:$0xff] %v4760
      %4793 = vst [vmem:[%s202 + $0x68] sm:$0xff] %v4761
      %4794 = vst [vmem:[%s202 + $0x70] sm:$0xff] %v4762
      %4795 = vst [vmem:[%s202 + $0x78] sm:$0xff] %v4763
      %4796 = vst [vmem:[%s202 + $0x80] sm:$0xff] %v4764
      %4797 = vst [vmem:[%s202 + $0x88] sm:$0xff] %v4765
      %4798 = vst [vmem:[%s202 + $0x90] sm:$0xff] %v4766
      %4799 = vst [vmem:[%s202 + $0x98] sm:$0xff] %v4767
      %4800 = vst [vmem:[%s202 + $0xa0] sm:$0xff] %v4768
      %4801 = vst [vmem:[%s202 + $0xa8] sm:$0xff] %v4769
      %4802 = vst [vmem:[%s202 + $0xb0] sm:$0xff] %v4770
      %4803 = vst [vmem:[%s202 + $0xb8] sm:$0xff] %v4771
      %4804 = vst [vmem:[%s202 + $0xc0] sm:$0xff] %v4772
      %4805 = vst [vmem:[%s202 + $0xc8] sm:$0xff] %v4773
      %4806 = vst [vmem:[%s202 + $0xd0] sm:$0xff] %v4774
      %4807 = vst [vmem:[%s202 + $0xd8] sm:$0xff] %v4775
      %4808 = vst [vmem:[%s202 + $0xe0] sm:$0xff] %v4776
      %4809 = vst [vmem:[%s202 + $0xe8] sm:$0xff] %v4777
      %4810 = vst [vmem:[%s202 + $0xf0] sm:$0xff] %v4778
      %4811 = vst [vmem:[%s202 + $0xf8] sm:$0xff] %v4779
      %v4812 = vadd.f32 %v4748, %v4749
      %v4813 = vadd.f32 %v4812, %v4750
      %v4814 = vadd.f32 %v4813, %v4751
      %v4815 = vadd.f32 %v4814, %v4752
      %v4816 = vadd.f32 %v4815, %v4753
      %v4817 = vadd.f32 %v4816, %v4754
      %v4818 = vadd.f32 %v4817, %v4755
      %v4819 = vadd.f32 %v4818, %v4756
      %v4820 = vadd.f32 %v4819, %v4757
      %v4821 = vadd.f32 %v4820, %v4758
      %v4822 = vadd.f32 %v4821, %v4759
      %v4823 = vadd.f32 %v4822, %v4760
      %v4824 = vadd.f32 %v4823, %v4761
      %v4825 = vadd.f32 %v4824, %v4762
      %v4826 = vadd.f32 %v4825, %v4763
      %v4827 = vadd.f32 %v4826, %v4764
      %v4828 = vadd.f32 %v4827, %v4765
      %v4829 = vadd.f32 %v4828, %v4766
      %v4830 = vadd.f32 %v4829, %v4767
      %v4831 = vadd.f32 %v4830, %v4768
      %v4832 = vadd.f32 %v4831, %v4769
      %v4833 = vadd.f32 %v4832, %v4770
      %v4834 = vadd.f32 %v4833, %v4771
      %v4835 = vadd.f32 %v4834, %v4772
      %v4836 = vadd.f32 %v4835, %v4773
      %v4837 = vadd.f32 %v4836, %v4774
      %v4838 = vadd.f32 %v4837, %v4775
      %v4839 = vadd.f32 %v4838, %v4776
      %v4840 = vadd.f32 %v4839, %v4777
      %v4841 = vadd.f32 %v4840, %v4778
      %v4842 = vadd.f32 %v4841, %v4779
      %v4843 = vrot.slane %v4842, 4
      %v4844 = vadd.f32 %v4842, %v4843
      %v4845 = vrot.slane %v4844, 2
      %v4846 = vadd.f32 %v4844, %v4845
      %v4847 = vrot.slane %v4846, 1
      %v4848 = vadd.f32 %v4846, %v4847
      %v4849 = vmul.f32 %v4748, %v4748
      %v4850 = vmul.f32 %v4749, %v4749
      %v4851 = vmul.f32 %v4750, %v4750
      %v4852 = vmul.f32 %v4751, %v4751
      %v4853 = vmul.f32 %v4752, %v4752
      %v4854 = vmul.f32 %v4753, %v4753
      %v4855 = vmul.f32 %v4754, %v4754
      %v4856 = vmul.f32 %v4755, %v4755
      %v4857 = vmul.f32 %v4756, %v4756
      %v4858 = vmul.f32 %v4757, %v4757
      %v4859 = vmul.f32 %v4758, %v4758
      %v4860 = vmul.f32 %v4759, %v4759
      %v4861 = vmul.f32 %v4760, %v4760
      %v4862 = vmul.f32 %v4761, %v4761
      %v4863 = vmul.f32 %v4762, %v4762
      %v4864 = vmul.f32 %v4763, %v4763
      %v4865 = vmul.f32 %v4764, %v4764
      %v4866 = vmul.f32 %v4765, %v4765
      %v4867 = vmul.f32 %v4766, %v4766
      %v4868 = vmul.f32 %v4767, %v4767
      %v4869 = vmul.f32 %v4768, %v4768
      %v4870 = vmul.f32 %v4769, %v4769
      %v4871 = vmul.f32 %v4770, %v4770
      %v4872 = vmul.f32 %v4771, %v4771
      %v4873 = vmul.f32 %v4772, %v4772
      %v4874 = vmul.f32 %v4773, %v4773
      %v4875 = vmul.f32 %v4774, %v4774
      %v4876 = vmul.f32 %v4775, %v4775
      %v4877 = vmul.f32 %v4776, %v4776
      %v4878 = vmul.f32 %v4777, %v4777
      %v4879 = vmul.f32 %v4778, %v4778
      %v4880 = vmul.f32 %v4779, %v4779
      %v4881 = vadd.f32 %v4849, %v4850
      %v4882 = vadd.f32 %v4881, %v4851
      %v4883 = vadd.f32 %v4882, %v4852
      %v4884 = vadd.f32 %v4883, %v4853
      %v4885 = vadd.f32 %v4884, %v4854
      %v4886 = vadd.f32 %v4885, %v4855
      %v4887 = vadd.f32 %v4886, %v4856
      %v4888 = vadd.f32 %v4887, %v4857
      %v4889 = vadd.f32 %v4888, %v4858
      %v4890 = vadd.f32 %v4889, %v4859
      %v4891 = vadd.f32 %v4890, %v4860
      %v4892 = vadd.f32 %v4891, %v4861
      %v4893 = vadd.f32 %v4892, %v4862
      %v4894 = vadd.f32 %v4893, %v4863
      %v4895 = vadd.f32 %v4894, %v4864
      %v4896 = vadd.f32 %v4895, %v4865
      %v4897 = vadd.f32 %v4896, %v4866
      %v4898 = vadd.f32 %v4897, %v4867
      %v4899 = vadd.f32 %v4898, %v4868
      %v4900 = vadd.f32 %v4899, %v4869
      %v4901 = vadd.f32 %v4900, %v4870
      %v4902 = vadd.f32 %v4901, %v4871
      %v4903 = vadd.f32 %v4902, %v4872
      %v4904 = vadd.f32 %v4903, %v4873
      %v4905 = vadd.f32 %v4904, %v4874
      %v4906 = vadd.f32 %v4905, %v4875
      %v4907 = vadd.f32 %v4906, %v4876
      %v4908 = vadd.f32 %v4907, %v4877
      %v4909 = vadd.f32 %v4908, %v4878
      %v4910 = vadd.f32 %v4909, %v4879
      %v4911 = vadd.f32 %v4910, %v4880
      %v4912 = vrot.slane %v4911, 4
      %v4913 = vadd.f32 %v4911, %v4912
      %v4914 = vrot.slane %v4913, 2
      %v4915 = vadd.f32 %v4913, %v4914
      %v4916 = vrot.slane %v4915, 1
      %v4917 = vadd.f32 %v4915, %v4916
      %vm4918 = vcmask 1040384
      %v4919 = vsel %vm4918, %v4848, %v4917
      %4920 = vst [vmem:[%s208] sm:$0x3] %v4919
      %s4921 = smul.u32 32, %s20
      %p4922 = scmp.lt.s32.totalorder %s19, 1
      %s4923 = scalar_select %p4922, %s19, 1
      %p4924 = scmp.lt.s32.totalorder %s4921, 31
      %s4925 = scalar_select %p4924, %s4921, 31
      %s4926 = smul.addr %s4923, 32
      %s4927 = sadd.s32 %s4925, %s4926
      %s4928 = smul.addr %s4927, 8
      %s4929 = scalar_lea.vmem %s2, %s4928
      %s4930 = sadd.s32 %s19, %s20
      %p4931 = scmp.lt.s32.totalorder %s4930, 1
      %s4932 = scalar_select %p4931, %s4930, 1
      %s4933 = smul.addr %s4932, 2
      %s4934 = scalar_lea.vmem %s3, %s4933
      // Predicated region
      $region29: #{conv_block.3} parent=27 // pred_check
        %p4935 = pneg %p94
      $region30: #{conv_block.3} parent=27 // pred_check_branch
        %4937 = sbr.rel (%p4935) target = $region32
      $region31: #{conv_block.3} parent=27 // pred_region
        %s4938 = smul.u32 32, %s20
      $region32: #{conv_block.3} parent=27 // pred_fallthru
        _
      // Predicated region
      $region33: #{conv_block.3} parent=27 // pred_check
        %p4939 = pneg %p122
      $region34: #{conv_block.3} parent=27 // pred_check_branch
        %4941 = sbr.rel (%p4939) target = $region36
      $region35: #{conv_block.3} parent=27 // pred_region
        %s4942 = sadd.s32 %s19, %s20
      $region36: #{conv_block.3} parent=27 // pred_fallthru
        _
    $region28: #{conv_block.3} parent=5 // pred_fallthru
      _
    %p4943 = scmp.le.s32.totalorder 2, %s10
    // Predicated region
    $region37: #{conv_block.3} parent=5 // pred_check
      %p4944 = pneg %p4943
    $region38: #{conv_block.3} parent=5 // pred_check_branch
      %4946 = sbr.rel (%p4944) target = $region40
    $region39: #{conv_block.3} parent=5 // pred_region
      %s4947 = ssub.s32 %s10, 2
      // Predicated region
      $region41: #{conv_block.3} parent=39 // pred_check
        %p4948 = pneg %p100
      $region42: #{conv_block.3} parent=39 // pred_check_branch
        %4950 = sbr.rel (%p4948) target = $region44
      $region43: #{conv_block.3} parent=39 // pred_region
        %s4951 = smul.u32 32, %s22
        %p4952 = scmp.lt.s32.totalorder %s21, 1
        %s4953 = scalar_select %p4952, %s21, 1
        %p4954 = scmp.lt.s32.totalorder %s4951, 31
        %s4955 = scalar_select %p4954, %s4951, 31
        %s4956 = smul.addr %s4953, 32
        %s4957 = sadd.s32 %s4955, %s4956
        %s4958 = smul.addr %s4957, 8
        %s4959 = scalar_lea.vmem %s2, %s4958
      $region44: #{conv_block.3} parent=39 // pred_fallthru
        _
      // Predicated region
      $region45: #{conv_block.3} parent=39 // pred_check
        %p4960 = pneg %p128
      $region46: #{conv_block.3} parent=39 // pred_check_branch
        %4962 = sbr.rel (%p4960) target = $region48
      $region47: #{conv_block.3} parent=39 // pred_region
        %s4963 = sadd.s32 %s21, %s22
        %p4964 = scmp.lt.s32.totalorder %s4963, 1
        %s4965 = scalar_select %p4964, %s4963, 1
        %s4966 = smul.addr %s4965, 2
        %s4967 = scalar_lea.vmem %s3, %s4966
      $region48: #{conv_block.3} parent=39 // pred_fallthru
        _
    $region40: #{conv_block.3} parent=5 // pred_fallthru
      _
  $region6: #{conv_block.3} parent=0 // loop_footer
    %s14 = sadd.s32 1, %s10
  $region7: #{conv_block.3} parent=0 // loop_footer_branch
    %9 = sbr.rel target = $region3
  $region8: #{conv_block.3} parent=0 // loop_exit
    _

</llo_original>
